<compile_context>
chip_gen: v7x
topology: tpu7x:2x2x1
jax: 0.10.0
libtpu: 0.0.40
codegen_flags: <defaults>
</compile_context>

<pallas_src>
import functools

import jax
import jax.numpy as jnp
from jax import lax
from jax.experimental import pallas as pl
from jax.experimental.pallas import tpu as pltpu


def _round_up(x, m):
    return (x + m - 1) // m * m


def _tensorcores_per_device():
    """Best-effort multi-TC detection (v7x, v4/v5p megacore => 2 TCs/device)."""
    try:
        kind = jax.devices()[0].device_kind.lower()
    except Exception:
        return 1
    for tag in ("v7", "v5p", "v4"):
        if tag in kind:
            return 2
    return 1


def siren_kernel(x_ref, *refs, num_layers, last_is_linear, chunk):
    """refs = (w0, b0, ..., w_{L-1}, b_{L-1}, out_ref).

    x_ref:  (in_features, tile_m)   -- batch rows on the 128-wide lane axis
    w_l:    (d_out, d_in)           -- PyTorch orientation, omega pre-folded
    b_l:    (d_out, 1)              -- omega pre-folded, broadcasts over lanes
    out:    (out_features, tile_m)

    The tile is strip-mined in `chunk`-lane slices so the live activations
    stay well inside the 64-vreg file even for very large tile_m.
    """
    out_ref = refs[-1]
    param_refs = refs[:-1]
    n_chunks = x_ref.shape[1] // chunk  # static

    def body(c, carry):
        start = pl.multiple_of(c * chunk, chunk)
        h = x_ref[:, pl.ds(start, chunk)]            # (in_features, chunk) f32
        for l in range(num_layers):
            w = param_refs[2 * l][...]
            b = param_refs[2 * l + 1][...]
            y = jnp.dot(w, h, preferred_element_type=jnp.float32) + b
            if last_is_linear and l == num_layers - 1:
                h = y                                # outermost_linear=True
            else:
                h = jnp.sin(y)                       # sin(omega*(Wx+b)) via folding
        out_ref[:, pl.ds(start, chunk)] = h.astype(out_ref.dtype)
        return carry

    # Fully unrolled: static trip count, gives the LLO scheduler visibility.
    lax.fori_loop(0, n_chunks, body, 0, unroll=True)


@functools.partial(jax.jit, static_argnames=("last_is_linear", "tile_m", "chunk"))
def siren_forward(coords, weights, biases, omegas, last_is_linear,
                  tile_m=4096, chunk=512):
    """coords: (N, in_features) f32 (PyTorch layout).
    weights[l]: (d_out, d_in) (PyTorch layout).  biases[l]: (d_out,).
    Returns (N, out_features), matching the PyTorch module's forward."""
    N, in_features = coords.shape
    out_features = weights[-1].shape[0]
    num_layers = len(weights)

    # ---- fold omega into the parameters (removes a full-vreg VALU multiply
    #      per element per layer; sin is the binding VALU cost, keep f32) ----
    params = []
    for l, (w, b, om) in enumerate(zip(weights, biases, omegas)):
        if last_is_linear and l == num_layers - 1:
            wf, bf = w, b
        else:
            wf, bf = w * om, b * om
        params.append(wf.astype(jnp.float32))
        params.append(bf.astype(jnp.float32).reshape(-1, 1))

    # ---- tiling --------------------------------------------------------------
    # chunk: inner strip width (multiple of 128 lanes), shrunk for tiny N.
    chunk = max(128, min(int(chunk), _round_up(max(N, 1), 128)))
    chunk = _round_up(chunk, 128)
    total_chunks = pl.cdiv(N, chunk)
    max_chunks_per_tile = max(1, int(tile_m) // chunk)

    n_tiles = pl.cdiv(total_chunks, max_chunks_per_tile)
    if _tensorcores_per_device() >= 2 and total_chunks >= 2:
        # v7x / megacore: keep >= 2 grid steps so ("parallel",) feeds both TCs.
        n_tiles = max(n_tiles, 2)
    chunks_per_tile = pl.cdiv(total_chunks, n_tiles)   # balance chunks per step
    n_tiles = pl.cdiv(total_chunks, chunks_per_tile)
    tile_m_eff = chunks_per_tile * chunk
    n_pad = n_tiles * tile_m_eff

    # ---- lane-major layout: batch rows on the (fast) 128-wide lane axis ----
    # transpose + pad fuse into a single relayout copy under this jit.
    x_t = jnp.pad(coords.T.astype(jnp.float32), ((0, 0), (0, n_pad - N)))

    in_specs = [pl.BlockSpec((in_features, tile_m_eff), lambda i: (0, i))]
    for p in params:
        # Constant index_map => block is grid-resident; Pallas elides re-DMA.
        in_specs.append(pl.BlockSpec(p.shape, lambda i: (0, 0)))
    out_specs = pl.BlockSpec((out_features, tile_m_eff), lambda i: (0, i))

    # Advisory cost estimate so XLA schedules the surrounding relayout sanely.
    flops = 2 * n_pad * sum(int(w.shape[0]) * int(w.shape[1]) for w in weights)
    transcendentals = n_pad * sum(
        int(w.shape[0]) for l, w in enumerate(weights)
        if not (last_is_linear and l == num_layers - 1))
    bytes_accessed = 4 * (n_pad * (in_features + out_features)
                          + sum(int(w.size) + int(b.size)
                                for w, b in zip(weights, biases)))

    kernel = functools.partial(
        siren_kernel,
        num_layers=num_layers,
        last_is_linear=bool(last_is_linear),
        chunk=chunk,
    )

    out_t = pl.pallas_call(
        kernel,
        out_shape=jax.ShapeDtypeStruct((out_features, n_pad), jnp.float32),
        grid_spec=pltpu.PrefetchScalarGridSpec(
            num_scalar_prefetch=0,
            grid=(n_tiles,),
            in_specs=in_specs,
            out_specs=out_specs,
        ),
        compiler_params=pltpu.CompilerParams(
            dimension_semantics=("parallel",),
        ),
        cost_estimate=pl.CostEstimate(
            flops=flops,
            transcendentals=transcendentals,
            bytes_accessed=bytes_accessed,
        ),
    )(x_t, *params)

    # layout plumbing back to the PyTorch-facing (N, out_features) shape
    return out_t[:, :N].T.astype(coords.dtype)


def init_siren_params(key, in_features, hidden_features, hidden_layers,
                      out_features, outermost_linear, first_omega_0, hidden_omega_0):
    """Deterministic init mirroring the PyTorch module's __init__.

    Weights in PyTorch orientation (d_out, d_in); biases as (d_out,)."""
    dims = ([in_features]
            + [hidden_features] * (hidden_layers + 1)
            + [out_features])
    num_layers = len(dims) - 1
    weights, biases, omegas = [], [], []
    for l in range(num_layers):
        d_in, d_out = dims[l], dims[l + 1]
        key, kw, kb = jax.random.split(key, 3)
        if l == 0:
            w_bound = 1.0 / d_in
            omega = first_omega_0
        else:
            w_bound = (6.0 / d_in) ** 0.5 / hidden_omega_0
            omega = hidden_omega_0
        w = jax.random.uniform(kw, (d_out, d_in), jnp.float32, -w_bound, w_bound)
        # nn.Linear default bias init: U(-1/sqrt(fan_in), 1/sqrt(fan_in))
        b_bound = 1.0 / (d_in ** 0.5)
        b = jax.random.uniform(kb, (d_out,), jnp.float32, -b_bound, b_bound)
        weights.append(w)
        biases.append(b)
        omegas.append(float(omega))
    return weights, biases, omegas, bool(outermost_linear)


def siren_reference(coords, weights, biases, omegas, last_is_linear):
    """Pure-JAX reference matching the PyTorch forward exactly (no folding)."""
    h = coords
    L = len(weights)
    for l in range(L):
        y = h @ weights[l].T + biases[l]
        if last_is_linear and l == L - 1:
            h = y
        else:
            h = jnp.sin(omegas[l] * y)
    return h


if __name__ == "__main__":
    # Small shapes consistent with a SIREN coordinate network.
    in_features = 2
    hidden_features = 32
    hidden_layers = 2
    out_features = 1
    outermost_linear = False
    first_omega_0 = 30.0
    hidden_omega_0 = 30.0

    key = jax.random.PRNGKey(0)
    key, kc = jax.random.split(key)
    N = 1000  # deliberately not a multiple of 128 -> exercises pad/slice path
    coords = jax.random.uniform(kc, (N, in_features), jnp.float32, -1.0, 1.0)

    weights, biases, omegas, last_is_linear = init_siren_params(
        key, in_features, hidden_features, hidden_layers, out_features,
        outermost_linear, first_omega_0, hidden_omega_0)

    out = siren_forward(coords, weights, biases, omegas,
                        last_is_linear=last_is_linear, tile_m=4096, chunk=512)
    out = jax.block_until_ready(out)

    ref = siren_reference(coords, weights, biases, omegas, last_is_linear)
    assert out.shape == (N, out_features)
    # omega-folding reorders a couple of f32 roundings; tolerance reflects that.
    max_err = float(jnp.max(jnp.abs(out - ref)))
    assert jnp.allclose(out, ref, atol=1e-4, rtol=1e-4), max_err

    print("KERNEL_OK")
</pallas_src>

<mosaic_0001>
module attributes {stable_mosaic.version = 11 : i64} {
  func.func @siren_kernel(%arg0: i32, %arg1: memref<2x1024xf32, #tpu.memory_space<vmem>>, %arg2: memref<32x2xf32, #tpu.memory_space<vmem>>, %arg3: memref<32x1xf32, #tpu.memory_space<vmem>>, %arg4: memref<32x32xf32, #tpu.memory_space<vmem>>, %arg5: memref<32x1xf32, #tpu.memory_space<vmem>>, %arg6: memref<32x32xf32, #tpu.memory_space<vmem>>, %arg7: memref<32x1xf32, #tpu.memory_space<vmem>>, %arg8: memref<1x32xf32, #tpu.memory_space<vmem>>, %arg9: memref<1x1xf32, #tpu.memory_space<vmem>>, %arg10: memref<1x1024xf32, #tpu.memory_space<vmem>>) attributes {dimension_semantics = [#tpu.dimension_semantics<parallel>], iteration_bounds = array<i64: 1>, scalar_prefetch = 0 : i64, scratch_operands = 0 : i64, tpu.core_type = #tpu.core_type<tc>, window_params = [{transform_indices = @transform_0, window_bounds = array<i64: 2, 1024>}, {pipeline_mode = #tpu.pipeline_mode<synchronous>, transform_indices = @transform_1, window_bounds = array<i64: 32, 2>}, {pipeline_mode = #tpu.pipeline_mode<synchronous>, transform_indices = @transform_2, window_bounds = array<i64: 32, 1>}, {pipeline_mode = #tpu.pipeline_mode<synchronous>, transform_indices = @transform_3, window_bounds = array<i64: 32, 32>}, {pipeline_mode = #tpu.pipeline_mode<synchronous>, transform_indices = @transform_4, window_bounds = array<i64: 32, 1>}, {pipeline_mode = #tpu.pipeline_mode<synchronous>, transform_indices = @transform_5, window_bounds = array<i64: 32, 32>}, {pipeline_mode = #tpu.pipeline_mode<synchronous>, transform_indices = @transform_6, window_bounds = array<i64: 32, 1>}, {pipeline_mode = #tpu.pipeline_mode<synchronous>, transform_indices = @transform_7, window_bounds = array<i64: 1, 32>}, {pipeline_mode = #tpu.pipeline_mode<synchronous>, transform_indices = @transform_8, window_bounds = array<i64: 1, 1>}, {transform_indices = @transform_9, window_bounds = array<i64: 1, 1024>}]} {
    %c0_i32 = arith.constant 0 : i32
    %c512_i32 = arith.constant 512 : i32
    %0 = arith.muli %c0_i32, %c512_i32 : i32
    %1 = tpu.assume_multiple %0, 512 : i32
    %c0 = arith.constant 0 : index
    %2 = arith.index_cast %1 : i32 to index
    %3 = vector.load %arg1[%c0, %2] : memref<2x1024xf32, #tpu.memory_space<vmem>>, vector<2x512xf32>
    %c0_0 = arith.constant 0 : index
    %c0_1 = arith.constant 0 : index
    %4 = vector.load %arg2[%c0_0, %c0_1] : memref<32x2xf32, #tpu.memory_space<vmem>>, vector<32x2xf32>
    %c0_2 = arith.constant 0 : index
    %c0_3 = arith.constant 0 : index
    %5 = vector.load %arg3[%c0_2, %c0_3] : memref<32x1xf32, #tpu.memory_space<vmem>>, vector<32x1xf32>
    %cst = arith.constant dense<0.000000e+00> : vector<32x512xf32>
    %6 = tpu.matmul %4, %3, %cst {dimension_numbers = #tpu.dot_dimension_numbers<[1], [0], [0], [1], [0, 0, 1, 1], [], []>} : vector<32x2xf32>, vector<2x512xf32>, vector<32x512xf32> -> vector<32x512xf32>
    %7 = vector.broadcast %5 : vector<32x1xf32> to vector<32x512xf32>
    %8 = arith.addf %6, %7 : vector<32x512xf32>
    %9 = math.sin %8 : vector<32x512xf32>
    %c0_4 = arith.constant 0 : index
    %c0_5 = arith.constant 0 : index
    %10 = vector.load %arg4[%c0_4, %c0_5] : memref<32x32xf32, #tpu.memory_space<vmem>>, vector<32x32xf32>
    %c0_6 = arith.constant 0 : index
    %c0_7 = arith.constant 0 : index
    %11 = vector.load %arg5[%c0_6, %c0_7] : memref<32x1xf32, #tpu.memory_space<vmem>>, vector<32x1xf32>
    %cst_8 = arith.constant dense<0.000000e+00> : vector<32x512xf32>
    %12 = tpu.matmul %10, %9, %cst_8 {dimension_numbers = #tpu.dot_dimension_numbers<[1], [0], [0], [1], [0, 0, 1, 1], [], []>} : vector<32x32xf32>, vector<32x512xf32>, vector<32x512xf32> -> vector<32x512xf32>
    %13 = vector.broadcast %11 : vector<32x1xf32> to vector<32x512xf32>
    %14 = arith.addf %12, %13 : vector<32x512xf32>
    %15 = math.sin %14 : vector<32x512xf32>
    %c0_9 = arith.constant 0 : index
    %c0_10 = arith.constant 0 : index
    %16 = vector.load %arg6[%c0_9, %c0_10] : memref<32x32xf32, #tpu.memory_space<vmem>>, vector<32x32xf32>
    %c0_11 = arith.constant 0 : index
    %c0_12 = arith.constant 0 : index
    %17 = vector.load %arg7[%c0_11, %c0_12] : memref<32x1xf32, #tpu.memory_space<vmem>>, vector<32x1xf32>
    %cst_13 = arith.constant dense<0.000000e+00> : vector<32x512xf32>
    %18 = tpu.matmul %16, %15, %cst_13 {dimension_numbers = #tpu.dot_dimension_numbers<[1], [0], [0], [1], [0, 0, 1, 1], [], []>} : vector<32x32xf32>, vector<32x512xf32>, vector<32x512xf32> -> vector<32x512xf32>
    %19 = vector.broadcast %17 : vector<32x1xf32> to vector<32x512xf32>
    %20 = arith.addf %18, %19 : vector<32x512xf32>
    %21 = math.sin %20 : vector<32x512xf32>
    %c0_14 = arith.constant 0 : index
    %c0_15 = arith.constant 0 : index
    %22 = vector.load %arg8[%c0_14, %c0_15] : memref<1x32xf32, #tpu.memory_space<vmem>>, vector<1x32xf32>
    %c0_16 = arith.constant 0 : index
    %c0_17 = arith.constant 0 : index
    %23 = vector.load %arg9[%c0_16, %c0_17] : memref<1x1xf32, #tpu.memory_space<vmem>>, vector<1x1xf32>
    %cst_18 = arith.constant dense<0.000000e+00> : vector<1x512xf32>
    %24 = tpu.matmul %22, %21, %cst_18 {dimension_numbers = #tpu.dot_dimension_numbers<[1], [0], [0], [1], [0, 0, 1, 1], [], []>} : vector<1x32xf32>, vector<32x512xf32>, vector<1x512xf32> -> vector<1x512xf32>
    %25 = vector.broadcast %23 : vector<1x1xf32> to vector<1x512xf32>
    %26 = arith.addf %24, %25 : vector<1x512xf32>
    %27 = math.sin %26 : vector<1x512xf32>
    %c0_19 = arith.constant 0 : index
    %28 = arith.index_cast %1 : i32 to index
    %29 = vector.load %arg10[%c0_19, %28] : memref<1x1024xf32, #tpu.memory_space<vmem>>, vector<1x512xf32>
    tpu.vector_store %arg10[%c0_19, %28], %27 {strides = array<i32>} : memref<1x1024xf32, #tpu.memory_space<vmem>>, vector<1x512xf32>,
    %c1_i32 = arith.constant 1 : i32
    %c512_i32_20 = arith.constant 512 : i32
    %30 = arith.muli %c1_i32, %c512_i32_20 : i32
    %31 = tpu.assume_multiple %30, 512 : i32
    %c0_21 = arith.constant 0 : index
    %32 = arith.index_cast %31 : i32 to index
    %33 = vector.load %arg1[%c0_21, %32] : memref<2x1024xf32, #tpu.memory_space<vmem>>, vector<2x512xf32>
    %c0_22 = arith.constant 0 : index
    %c0_23 = arith.constant 0 : index
    %34 = vector.load %arg2[%c0_22, %c0_23] : memref<32x2xf32, #tpu.memory_space<vmem>>, vector<32x2xf32>
    %c0_24 = arith.constant 0 : index
    %c0_25 = arith.constant 0 : index
    %35 = vector.load %arg3[%c0_24, %c0_25] : memref<32x1xf32, #tpu.memory_space<vmem>>, vector<32x1xf32>
    %cst_26 = arith.constant dense<0.000000e+00> : vector<32x512xf32>
    %36 = tpu.matmul %34, %33, %cst_26 {dimension_numbers = #tpu.dot_dimension_numbers<[1], [0], [0], [1], [0, 0, 1, 1], [], []>} : vector<32x2xf32>, vector<2x512xf32>, vector<32x512xf32> -> vector<32x512xf32>
    %37 = vector.broadcast %35 : vector<32x1xf32> to vector<32x512xf32>
    %38 = arith.addf %36, %37 : vector<32x512xf32>
    %39 = math.sin %38 : vector<32x512xf32>
    %c0_27 = arith.constant 0 : index
    %c0_28 = arith.constant 0 : index
    %40 = vector.load %arg4[%c0_27, %c0_28] : memref<32x32xf32, #tpu.memory_space<vmem>>, vector<32x32xf32>
    %c0_29 = arith.constant 0 : index
    %c0_30 = arith.constant 0 : index
    %41 = vector.load %arg5[%c0_29, %c0_30] : memref<32x1xf32, #tpu.memory_space<vmem>>, vector<32x1xf32>
    %cst_31 = arith.constant dense<0.000000e+00> : vector<32x512xf32>
    %42 = tpu.matmul %40, %39, %cst_31 {dimension_numbers = #tpu.dot_dimension_numbers<[1], [0], [0], [1], [0, 0, 1, 1], [], []>} : vector<32x32xf32>, vector<32x512xf32>, vector<32x512xf32> -> vector<32x512xf32>
    %43 = vector.broadcast %41 : vector<32x1xf32> to vector<32x512xf32>
    %44 = arith.addf %42, %43 : vector<32x512xf32>
    %45 = math.sin %44 : vector<32x512xf32>
    %c0_32 = arith.constant 0 : index
    %c0_33 = arith.constant 0 : index
    %46 = vector.load %arg6[%c0_32, %c0_33] : memref<32x32xf32, #tpu.memory_space<vmem>>, vector<32x32xf32>
    %c0_34 = arith.constant 0 : index
    %c0_35 = arith.constant 0 : index
    %47 = vector.load %arg7[%c0_34, %c0_35] : memref<32x1xf32, #tpu.memory_space<vmem>>, vector<32x1xf32>
    %cst_36 = arith.constant dense<0.000000e+00> : vector<32x512xf32>
    %48 = tpu.matmul %46, %45, %cst_36 {dimension_numbers = #tpu.dot_dimension_numbers<[1], [0], [0], [1], [0, 0, 1, 1], [], []>} : vector<32x32xf32>, vector<32x512xf32>, vector<32x512xf32> -> vector<32x512xf32>
    %49 = vector.broadcast %47 : vector<32x1xf32> to vector<32x512xf32>
    %50 = arith.addf %48, %49 : vector<32x512xf32>
    %51 = math.sin %50 : vector<32x512xf32>
    %c0_37 = arith.constant 0 : index
    %c0_38 = arith.constant 0 : index
    %52 = vector.load %arg8[%c0_37, %c0_38] : memref<1x32xf32, #tpu.memory_space<vmem>>, vector<1x32xf32>
    %c0_39 = arith.constant 0 : index
    %c0_40 = arith.constant 0 : index
    %53 = vector.load %arg9[%c0_39, %c0_40] : memref<1x1xf32, #tpu.memory_space<vmem>>, vector<1x1xf32>
    %cst_41 = arith.constant dense<0.000000e+00> : vector<1x512xf32>
    %54 = tpu.matmul %52, %51, %cst_41 {dimension_numbers = #tpu.dot_dimension_numbers<[1], [0], [0], [1], [0, 0, 1, 1], [], []>} : vector<1x32xf32>, vector<32x512xf32>, vector<1x512xf32> -> vector<1x512xf32>
    %55 = vector.broadcast %53 : vector<1x1xf32> to vector<1x512xf32>
    %56 = arith.addf %54, %55 : vector<1x512xf32>
    %57 = math.sin %56 : vector<1x512xf32>
    %c0_42 = arith.constant 0 : index
    %58 = arith.index_cast %31 : i32 to index
    %59 = vector.load %arg10[%c0_42, %58] : memref<1x1024xf32, #tpu.memory_space<vmem>>, vector<1x512xf32>
    tpu.vector_store %arg10[%c0_42, %58], %57 {strides = array<i32>} : memref<1x1024xf32, #tpu.memory_space<vmem>>, vector<1x512xf32>,
    %c2_i32 = arith.constant 2 : i32
    return
  }
  func.func @transform_0(%arg0: i32) -> (i32, i32) {
    %c0_i32 = arith.constant 0 : i32
    %c0_i32_0 = arith.constant 0 : i32
    return %c0_i32, %arg0 : i32, i32
  }
  func.func @transform_1(%arg0: i32) -> (i32, i32) {
    %c0_i32 = arith.constant 0 : i32
    %c0_i32_0 = arith.constant 0 : i32
    %c0_i32_1 = arith.constant 0 : i32
    return %c0_i32, %c0_i32_0 : i32, i32
  }
  func.func @transform_2(%arg0: i32) -> (i32, i32) {
    %c0_i32 = arith.constant 0 : i32
    %c0_i32_0 = arith.constant 0 : i32
    %c0_i32_1 = arith.constant 0 : i32
    return %c0_i32, %c0_i32_0 : i32, i32
  }
  func.func @transform_3(%arg0: i32) -> (i32, i32) {
    %c0_i32 = arith.constant 0 : i32
    %c0_i32_0 = arith.constant 0 : i32
    %c0_i32_1 = arith.constant 0 : i32
    return %c0_i32, %c0_i32_0 : i32, i32
  }
  func.func @transform_4(%arg0: i32) -> (i32, i32) {
    %c0_i32 = arith.constant 0 : i32
    %c0_i32_0 = arith.constant 0 : i32
    %c0_i32_1 = arith.constant 0 : i32
    return %c0_i32, %c0_i32_0 : i32, i32
  }
  func.func @transform_5(%arg0: i32) -> (i32, i32) {
    %c0_i32 = arith.constant 0 : i32
    %c0_i32_0 = arith.constant 0 : i32
    %c0_i32_1 = arith.constant 0 : i32
    return %c0_i32, %c0_i32_0 : i32, i32
  }
  func.func @transform_6(%arg0: i32) -> (i32, i32) {
    %c0_i32 = arith.constant 0 : i32
    %c0_i32_0 = arith.constant 0 : i32
    %c0_i32_1 = arith.constant 0 : i32
    return %c0_i32, %c0_i32_0 : i32, i32
  }
  func.func @transform_7(%arg0: i32) -> (i32, i32) {
    %c0_i32 = arith.constant 0 : i32
    %c0_i32_0 = arith.constant 0 : i32
    %c0_i32_1 = arith.constant 0 : i32
    return %c0_i32, %c0_i32_0 : i32, i32
  }
  func.func @transform_8(%arg0: i32) -> (i32, i32) {
    %c0_i32 = arith.constant 0 : i32
    %c0_i32_0 = arith.constant 0 : i32
    %c0_i32_1 = arith.constant 0 : i32
    return %c0_i32, %c0_i32_0 : i32, i32
  }
  func.func @transform_9(%arg0: i32) -> (i32, i32) {
    %c0_i32 = arith.constant 0 : i32
    %c0_i32_0 = arith.constant 0 : i32
    return %c0_i32, %arg0 : i32, i32
  }
}

</mosaic_0001>

<llo_original>
// kernel: siren_forward.1
$region0: #{siren_forward.1}
  #allocation0 [shape = 'u32[]', space=smem, size = 0x4, offset = 0x4, fixed_abs, tag = 'smem constant byte address 0x4 - core index']
  #allocation1 [shape = 'u32[144,128]{1,0:T(1,128)}', space=vmem, size = 0x12000, scoped, tag = 'internal scratch']
  #allocation2 [shape = 'f32[1,1]{1,0:T(1,128)S(1)}', space=vmem, size = 0x200, scoped, tag = 'scoped memory for siren_forward.1']
  %s0 = inlined_call_operand.vmem [shape: f32[2,1024], index: 0, kind: input, shape index: {}]
  %s1 = inlined_call_operand.vmem [shape: f32[32,2], index: 1, kind: input, shape index: {}]
  %s2 = inlined_call_operand.vmem [shape: f32[32,1], index: 2, kind: input, shape index: {}]
  %s3 = inlined_call_operand.vmem [shape: f32[32,32], index: 3, kind: input, shape index: {}]
  %s4 = inlined_call_operand.vmem [shape: f32[32,1], index: 4, kind: input, shape index: {}]
  %s5 = inlined_call_operand.vmem [shape: f32[32,32], index: 5, kind: input, shape index: {}]
  %s6 = inlined_call_operand.vmem [shape: f32[32,1], index: 6, kind: input, shape index: {}]
  %s7 = inlined_call_operand.vmem [shape: f32[1,32], index: 7, kind: input, shape index: {}]
  %s8 = inlined_call_operand.<no memory space> [shape: f32[1,1], index: 8, kind: input, shape index: {}]
  %s9 = inlined_call_operand.vmem [shape: f32[1,1024], index: 9, kind: output, shape index: {}]
  %s10 = sld [smem:[#allocation0]]
  $region46: #{siren_forward.1} parent=0
    _
  %s12 = ssub.s32 1, %s10
  %s13 = scalar_select 0, %s12, %s10
  %v14 = vstv %s8
  %15 = vst [vmem:[#allocation2] sm:$0x1] %v14
  // Predicated region
  $region2: #{siren_forward.1} parent=0 // pred_check
    _
  $region3: #{siren_forward.1} parent=0 // pred_check_branch
    %17 = sbr.rel (0) target = $region5
  $region4: #{siren_forward.1} parent=0 // pred_region
    _
  $region5: #{siren_forward.1} parent=0 // pred_fallthru
    _
  // Predicated region
  $region6: #{siren_forward.1} parent=0 // pred_check
    _
  $region7: #{siren_forward.1} parent=0 // pred_check_branch
    %19 = sbr.rel (0) target = $region9
  $region8: #{siren_forward.1} parent=0 // pred_region
    _
  $region9: #{siren_forward.1} parent=0 // pred_fallthru
    _
  // Predicated region
  $region10: #{siren_forward.1} parent=0 // pred_check
    _
  $region11: #{siren_forward.1} parent=0 // pred_check_branch
    %21 = sbr.rel (0) target = $region13
  $region12: #{siren_forward.1} parent=0 // pred_region
    _
  $region13: #{siren_forward.1} parent=0 // pred_fallthru
    _
  // Predicated region
  $region14: #{siren_forward.1} parent=0 // pred_check
    _
  $region15: #{siren_forward.1} parent=0 // pred_check_branch
    %23 = sbr.rel (0) target = $region17
  $region16: #{siren_forward.1} parent=0 // pred_region
    _
  $region17: #{siren_forward.1} parent=0 // pred_fallthru
    _
  // Predicated region
  $region18: #{siren_forward.1} parent=0 // pred_check
    _
  $region19: #{siren_forward.1} parent=0 // pred_check_branch
    %25 = sbr.rel (0) target = $region21
  $region20: #{siren_forward.1} parent=0 // pred_region
    _
  $region21: #{siren_forward.1} parent=0 // pred_fallthru
    _
  // Predicated region
  $region22: #{siren_forward.1} parent=0 // pred_check
    _
  $region23: #{siren_forward.1} parent=0 // pred_check_branch
    %27 = sbr.rel (0) target = $region25
  $region24: #{siren_forward.1} parent=0 // pred_region
    _
  $region25: #{siren_forward.1} parent=0 // pred_fallthru
    _
  // Predicated region
  $region26: #{siren_forward.1} parent=0 // pred_check
    _
  $region27: #{siren_forward.1} parent=0 // pred_check_branch
    %29 = sbr.rel (0) target = $region29
  $region28: #{siren_forward.1} parent=0 // pred_region
    _
  $region29: #{siren_forward.1} parent=0 // pred_fallthru
    _
  // Predicated region
  $region30: #{siren_forward.1} parent=0 // pred_check
    _
  $region31: #{siren_forward.1} parent=0 // pred_check_branch
    %31 = sbr.rel (0) target = $region33
  $region32: #{siren_forward.1} parent=0 // pred_region
    _
  $region33: #{siren_forward.1} parent=0 // pred_fallthru
    _
  // Predicated region
  $region34: #{siren_forward.1} parent=0 // pred_check
    _
  $region35: #{siren_forward.1} parent=0 // pred_check_branch
    %33 = sbr.rel (0) target = $region37
  $region36: #{siren_forward.1} parent=0 // pred_region
    _
  $region37: #{siren_forward.1} parent=0 // pred_fallthru
    _
  %v34 = vld [vmem:[%s0] sm:$0xff]
  %v35 = vld [vmem:[%s1] sm:$0xff]
  %v36 = vld [vmem:[%s1 + $0x8] sm:$0xff]
  %v37 = vld [vmem:[%s1 + $0x10] sm:$0xff]
  %v38 = vld [vmem:[%s1 + $0x18] sm:$0xff]
  %v39 = vld [vmem:[%s2] sm:$0xff]
  %v40 = vld [vmem:[%s2 + $0x8] sm:$0xff]
  %v41 = vld [vmem:[%s2 + $0x10] sm:$0xff]
  %v42 = vld [vmem:[%s2 + $0x18] sm:$0xff]
  %44 = vset.pattern.permute.xlu0 0
  %45 = vperm.xlu0 %44, %v39
  %v46 = vpop.permute.xlu0 %45
  %49 = vset.pattern.permute.xlu0 0
  %50 = vperm.xlu0 %49, %v40
  %v51 = vpop.permute.xlu0 %50
  %54 = vset.pattern.permute.xlu0 0
  %55 = vperm.xlu0 %54, %v41
  %v56 = vpop.permute.xlu0 %55
  %59 = vset.pattern.permute.xlu0 0
  %60 = vperm.xlu0 %59, %v42
  %v61 = vpop.permute.xlu0 %60
  %v64 = vcombine.high %v34, %v34
  %v66 = vunpack.c.l.s4 1983009808
  %v67 = vunpack.c.0.s8 %v66
  %v68 = vlaneseq
  %v69 = vshrl.u32 %v68, 7
  %v70 = vsub.s32 %v67, %v69
  %v71 = vrot.slane %v34, %v70
  %v73 = vunpack.c.l.s4 1983009808
  %v74 = vunpack.c.0.s8 %v73
  %v75 = vlaneseq
  %v76 = vshrl.u32 %v75, 7
  %v77 = vsub.s32 %v74, %v76
  %v78 = vrot.slane %v64, %v77
  %v79 = vcombine.high %v71, %v71
  %v80 = vcombine.high %v78, %v78
  %vm81 = vcmask 15360
  %v83 = vsel %vm81, %v35, 0
  %v86 = vsel %vm81, %v36, 0
  %v89 = vsel %vm81, %v37, 0
  %v92 = vsel %vm81, %v38, 0
  %vm94 = vcmask 1041408
  %v95 = vsel %vm94, %v71, 0
  %v97 = vsel %vm94, %v79, 0
  %v99 = vsel %vm94, %v78, 0
  %v101 = vsel %vm94, %v80, 0
  %103 = vmatprep.subr.mxu0 %v97
  %104 = vmatpush1.msra.mxu0 %v95
  %105 = vmatprep.subr.mxu0 0.0
  %106 = vmatpush1.msra.mxu0 0.0
  %107 = vmatprep.subr.mxu0 0.0
  %108 = vmatpush1.msra.mxu0 0.0
  %109 = vmatprep.subr.mxu0 0.0
  %110 = vmatpush1.msra.mxu0 0.0
  %111 = vmatprep.subr.mxu0 0.0
  %112 = vmatpush1.msra.mxu0 0.0
  %113 = vmatprep.subr.mxu0 0.0
  %114 = vmatpush1.msra.mxu0 0.0
  %115 = vmatprep.subr.mxu0 0.0
  %116 = vmatpush1.msra.mxu0 0.0
  %117 = vmatprep.subr.mxu0 0.0
  %118 = vmatpush1.msra.mxu0 0.0
  %119 = vmatprep.subr.mxu0 0.0
  %120 = vmatpush1.msra.mxu0 0.0
  %121 = vmatprep.subr.mxu0 0.0
  %122 = vmatpush1.msra.mxu0 0.0
  %123 = vmatprep.subr.mxu0 0.0
  %124 = vmatpush1.msra.mxu0 0.0
  %125 = vmatprep.subr.mxu0 0.0
  %126 = vmatpush1.msra.mxu0 0.0
  %127 = vmatprep.subr.mxu0 0.0
  %128 = vmatpush1.msra.mxu0 0.0
  %129 = vmatprep.subr.mxu0 0.0
  %130 = vmatpush1.msra.mxu0 0.0
  %131 = vmatprep.subr.mxu0 0.0
  %132 = vmatpush1.msra.mxu0 0.0
  %133 = vmatprep.subr.mxu0 0.0
  %134 = vmatpush1.msra.mxu0 0.0
  %135 = vmatprep.subr.mxu0 0.0
  %136 = vmatpush1.msra.mxu0 0.0
  %137 = vmatprep.subr.mxu0 0.0
  %138 = vmatpush1.msra.mxu0 0.0
  %139 = vmatprep.subr.mxu0 0.0
  %140 = vmatpush1.msra.mxu0 0.0
  %141 = vmatprep.subr.mxu0 0.0
  %142 = vmatpush1.msra.mxu0 0.0
  %143 = vmatprep.subr.mxu0 0.0
  %144 = vmatpush1.msra.mxu0 0.0
  %145 = vmatprep.subr.mxu0 0.0
  %146 = vmatpush1.msra.mxu0 0.0
  %147 = vmatprep.subr.mxu0 0.0
  %148 = vmatpush1.msra.mxu0 0.0
  %149 = vmatprep.subr.mxu0 0.0
  %150 = vmatpush1.msra.mxu0 0.0
  %151 = vmatprep.subr.mxu0 0.0
  %152 = vmatpush1.msra.mxu0 0.0
  %153 = vmatprep.subr.mxu0 0.0
  %154 = vmatpush1.msra.mxu0 0.0
  %155 = vmatprep.subr.mxu0 0.0
  %156 = vmatpush1.msra.mxu0 0.0
  %157 = vmatprep.subr.mxu0 0.0
  %158 = vmatpush1.msra.mxu0 0.0
  %159 = vmatprep.subr.mxu0 0.0
  %160 = vmatpush1.msra.mxu0 0.0
  %161 = vmatprep.subr.mxu0 0.0
  %162 = vmatpush1.msra.mxu0 0.0
  %163 = vmatprep.subr.mxu0 0.0
  %164 = vmatpush1.msra.mxu0 0.0
  %165 = vmatprep.subr.mxu0 0.0
  %166 = vmatpush1.msra.mxu0 0.0
  %167 = vmatprep.mubr.f32.mxu0 0.0
  %168 = vmatmul.mubr.f32.gmra.mrb[0].mxu0 %v83
  %v169 = vpop.f32.mrb[0].mxu0
  %v170 = vadd.f32 %v46, %v169
  %v171 = vpop.f32.mrb[0].mxu0
  %v172 = vadd.f32 %v46, %v171
  %173 = vmatprep.mubr.f32.mxu0 0.0
  %174 = vmatmul.mubr.f32.gmra.mrb[0].mxu0 %v86
  %v175 = vpop.f32.mrb[0].mxu0
  %v176 = vadd.f32 %v51, %v175
  %v177 = vpop.f32.mrb[0].mxu0
  %v178 = vadd.f32 %v51, %v177
  %179 = vmatprep.mubr.f32.mxu0 0.0
  %180 = vmatmul.mubr.f32.gmra.mrb[0].mxu0 %v89
  %v181 = vpop.f32.mrb[0].mxu0
  %v182 = vadd.f32 %v56, %v181
  %v183 = vpop.f32.mrb[0].mxu0
  %v184 = vadd.f32 %v56, %v183
  %185 = vmatprep.mubr.f32.mxu0 0.0
  %186 = vmatmul.mubr.f32.gmra.mrb[0].mxu0 %v92
  %v187 = vpop.f32.mrb[0].mxu0
  %v188 = vadd.f32 %v61, %v187
  %v189 = vpop.f32.mrb[0].mxu0
  %v190 = vadd.f32 %v61, %v189
  %191 = vdwg.mxu0
  %192 = vmatprep.subr.mxu0 %v101
  %193 = vmatpush1.msra.mxu0 %v99
  %194 = vmatprep.subr.mxu0 0.0
  %195 = vmatpush1.msra.mxu0 0.0
  %196 = vmatprep.subr.mxu0 0.0
  %197 = vmatpush1.msra.mxu0 0.0
  %198 = vmatprep.subr.mxu0 0.0
  %199 = vmatpush1.msra.mxu0 0.0
  %200 = vmatprep.subr.mxu0 0.0
  %201 = vmatpush1.msra.mxu0 0.0
  %202 = vmatprep.subr.mxu0 0.0
  %203 = vmatpush1.msra.mxu0 0.0
  %204 = vmatprep.subr.mxu0 0.0
  %205 = vmatpush1.msra.mxu0 0.0
  %206 = vmatprep.subr.mxu0 0.0
  %207 = vmatpush1.msra.mxu0 0.0
  %208 = vmatprep.subr.mxu0 0.0
  %209 = vmatpush1.msra.mxu0 0.0
  %210 = vmatprep.subr.mxu0 0.0
  %211 = vmatpush1.msra.mxu0 0.0
  %212 = vmatprep.subr.mxu0 0.0
  %213 = vmatpush1.msra.mxu0 0.0
  %214 = vmatprep.subr.mxu0 0.0
  %215 = vmatpush1.msra.mxu0 0.0
  %216 = vmatprep.subr.mxu0 0.0
  %217 = vmatpush1.msra.mxu0 0.0
  %218 = vmatprep.subr.mxu0 0.0
  %219 = vmatpush1.msra.mxu0 0.0
  %220 = vmatprep.subr.mxu0 0.0
  %221 = vmatpush1.msra.mxu0 0.0
  %222 = vmatprep.subr.mxu0 0.0
  %223 = vmatpush1.msra.mxu0 0.0
  %224 = vmatprep.subr.mxu0 0.0
  %225 = vmatpush1.msra.mxu0 0.0
  %226 = vmatprep.subr.mxu0 0.0
  %227 = vmatpush1.msra.mxu0 0.0
  %228 = vmatprep.subr.mxu0 0.0
  %229 = vmatpush1.msra.mxu0 0.0
  %230 = vmatprep.subr.mxu0 0.0
  %231 = vmatpush1.msra.mxu0 0.0
  %232 = vmatprep.subr.mxu0 0.0
  %233 = vmatpush1.msra.mxu0 0.0
  %234 = vmatprep.subr.mxu0 0.0
  %235 = vmatpush1.msra.mxu0 0.0
  %236 = vmatprep.subr.mxu0 0.0
  %237 = vmatpush1.msra.mxu0 0.0
  %238 = vmatprep.subr.mxu0 0.0
  %239 = vmatpush1.msra.mxu0 0.0
  %240 = vmatprep.subr.mxu0 0.0
  %241 = vmatpush1.msra.mxu0 0.0
  %242 = vmatprep.subr.mxu0 0.0
  %243 = vmatpush1.msra.mxu0 0.0
  %244 = vmatprep.subr.mxu0 0.0
  %245 = vmatpush1.msra.mxu0 0.0
  %246 = vmatprep.subr.mxu0 0.0
  %247 = vmatpush1.msra.mxu0 0.0
  %248 = vmatprep.subr.mxu0 0.0
  %249 = vmatpush1.msra.mxu0 0.0
  %250 = vmatprep.subr.mxu0 0.0
  %251 = vmatpush1.msra.mxu0 0.0
  %252 = vmatprep.subr.mxu0 0.0
  %253 = vmatpush1.msra.mxu0 0.0
  %254 = vmatprep.subr.mxu0 0.0
  %255 = vmatpush1.msra.mxu0 0.0
  %256 = vmatprep.mubr.f32.mxu0 0.0
  %257 = vmatmul.mubr.f32.gmra.mrb[0].mxu0 %v83
  %v258 = vpop.f32.mrb[0].mxu0
  %v259 = vadd.f32 %v46, %v258
  %v260 = vpop.f32.mrb[0].mxu0
  %v261 = vadd.f32 %v46, %v260
  %262 = vmatprep.mubr.f32.mxu0 0.0
  %263 = vmatmul.mubr.f32.gmra.mrb[0].mxu0 %v86
  %v264 = vpop.f32.mrb[0].mxu0
  %v265 = vadd.f32 %v51, %v264
  %v266 = vpop.f32.mrb[0].mxu0
  %v267 = vadd.f32 %v51, %v266
  %268 = vmatprep.mubr.f32.mxu0 0.0
  %269 = vmatmul.mubr.f32.gmra.mrb[0].mxu0 %v89
  %v270 = vpop.f32.mrb[0].mxu0
  %v271 = vadd.f32 %v56, %v270
  %v272 = vpop.f32.mrb[0].mxu0
  %v273 = vadd.f32 %v56, %v272
  %274 = vmatprep.mubr.f32.mxu0 0.0
  %275 = vmatmul.mubr.f32.gmra.mrb[0].mxu0 %v92
  %v276 = vpop.f32.mrb[0].mxu0
  %v277 = vadd.f32 %v61, %v276
  %v278 = vpop.f32.mrb[0].mxu0
  %v279 = vadd.f32 %v61, %v278
  %280 = vdwg.mxu0
  %v281 = vand.u32 2147483647, %v170
  %vm282 = vcmp.le.f32.partialorder %v281, 0.7853982
  %vm283 = vcmp.lt.s32.totalorder %v170, 0
  %v284 = vand.u32 %v170, 2139095040
  %v285 = vshrl.u32 %v284, 23
  %v286 = vsub.s32 %v285, 127
  %v287 = vand.u32 2147483647, %v170
  %v288 = vand.u32 %v287, 8388607
  %v289 = vor.u32 %v288, 8388608
  %v290 = vsub.s32 0, %v289
  %v291 = vadd.s32 %v286, 1
  %vm292 = vcmp.gt.s32.totalorder %v291, 0
  %v293 = vsel %vm292, %v291, 0
  %v294 = vshrl.u32 %v293, 5
  %v295 = vand.u32 %v293, 31
  %v296 = vsub.s32 32, %v295
  %v297 = vshrl.u32 683565275, %v296
  %v298 = vshll.u32 683565275, %v295
  %v299 = vshrl.u32 2475754826, %v296
  %v300 = vor.u32 %v298, %v299
  %v301 = vshll.u32 2475754826, %v295
  %v302 = vshrl.u32 2131351028, %v296
  %v303 = vor.u32 %v301, %v302
  %v304 = vshll.u32 2131351028, %v295
  %v305 = vshrl.u32 2102212464, %v296
  %v306 = vor.u32 %v304, %v305
  %v307 = vshll.u32 2102212464, %v295
  %v308 = vshrl.u32 920167782, %v296
  %v309 = vor.u32 %v307, %v308
  %v310 = vshll.u32 920167782, %v295
  %v311 = vshrl.u32 1326507024, %v296
  %v312 = vor.u32 %v310, %v311
  %vm313 = vcmp.lt.s32.totalorder %v294, 1
  %vm314 = vcmp.lt.s32.totalorder %v294, 2
  %vm315 = vcmp.lt.s32.totalorder %v294, 3
  %vm316 = vcmp.lt.s32.totalorder %v294, 4
  %v317 = vsel %vm313, %v297, %v300
  %v318 = vsel %vm316, %v306, 2102212464
  %v319 = vsel %vm315, %v303, %v318
  %v320 = vsel %vm314, %v317, %v319
  %v321 = vsel %vm313, %v300, %v303
  %v322 = vsel %vm316, %v309, 920167782
  %v323 = vsel %vm315, %v306, %v322
  %v324 = vsel %vm314, %v321, %v323
  %v325 = vsel %vm313, %v303, %v306
  %v326 = vsel %vm316, %v312, 1326507024
  %v327 = vsel %vm315, %v309, %v326
  %v328 = vsel %vm314, %v325, %v327
  %v329 = vshll.u32 %v289, 8
  %v330 = vmul.u32.u64.compose %v329, %v328
  %v331 = vextract.low.u32 %v330
  %v332 = vextract.high.u32 %v330
  %v333 = vmul.u32.u64.compose %v329, %v324
  %v334 = vextract.low.u32 %v333
  %v335 = vextract.high.u32 %v333
  %v336 = vmul.u32 %v329, %v320
  %v337 = vadd.s32 %v332, %v334
  %vm338 = vc.u32 %v332, %v334
  %v339 = vadd.s32 %v335, 1
  %v340 = vsel %vm338, %v339, %v335
  %v341 = vadd.s32 %v336, %v340
  %v342 = vadd.s32 %v341, 536870912
  %v343 = vshrl.u32 %v342, 30
  %v344 = vshll.u32 %v343, 30
  %v345 = vsub.s32 %v341, %v344
  %vm346 = vcmp.lt.s32.totalorder %v345, 0
  %v347 = vsub.s32 0, %v345
  %v348 = vsel %vm346, %v347, %v345
  %v349 = vclz %v348
  %v350 = vsub.s32 %v349, 2
  %vm351 = vcmp.gt.s32.totalorder 0, %v350
  %v352 = vsel %vm351, 0, %v350
  %v353 = vsub.s32 32, %v352
  %v354 = vshll.u32 %v345, %v352
  %v355 = vshrl.u32 %v337, %v353
  %v356 = vor.u32 %v354, %v355
  %v357 = vsub.s32 4294967266, %v352
  %v358 = vadd.s32 %v357, 127
  %v359 = vshll.u32 %v358, 23
  %v360 = vor.u32 4788187, %v359
  %v361 = vand.u32 2147483647, %v360
  %v363 = vcvt.s32.f32 %v356
  %v364 = vmul.f32 %v363, %v361
  %v365 = vxor.u32 %v364, 2147483648
  %v366 = vsel %vm283, %v365, %v364
  %v367 = vsub.s32 4, %v343
  %v368 = vsel %vm283, %v367, %v343
  %v369 = vsel %vm282, %v170, %v366
  %v370 = vsel %vm282, 0, %v368
  %v371 = vcosq.f32.pop %v369
  %v372 = vsinq.f32.pop %v369
  %vm373 = vweird.f32 %v170
  %v374 = vadd.s32 %v370, 3
  %v375 = vand.u32 %v374, 3
  %vm376 = vcmp.lt.s32.totalorder %v375, 2
  %vm377 = vcmp.eq.s32.totalorder %v375, 0
  %v378 = vxor.u32 %v372, 2147483648
  %v379 = vsel %vm377, %v371, %v378
  %vm380 = vcmp.eq.s32.totalorder %v375, 2
  %v381 = vxor.u32 %v371, 2147483648
  %v382 = vsel %vm380, %v381, %v372
  %v383 = vsel %vm376, %v379, %v382
  %v384 = vsel %vm373, nan, %v383
  %v385 = vand.u32 2147483647, %v172
  %vm386 = vcmp.le.f32.partialorder %v385, 0.7853982
  %vm387 = vcmp.lt.s32.totalorder %v172, 0
  %v388 = vand.u32 %v172, 2139095040
  %v389 = vshrl.u32 %v388, 23
  %v390 = vsub.s32 %v389, 127
  %v391 = vand.u32 2147483647, %v172
  %v392 = vand.u32 %v391, 8388607
  %v393 = vor.u32 %v392, 8388608
  %v394 = vsub.s32 0, %v393
  %v395 = vadd.s32 %v390, 1
  %vm396 = vcmp.gt.s32.totalorder %v395, 0
  %v397 = vsel %vm396, %v395, 0
  %v398 = vshrl.u32 %v397, 5
  %v399 = vand.u32 %v397, 31
  %v400 = vsub.s32 32, %v399
  %v401 = vshrl.u32 683565275, %v400
  %v402 = vshll.u32 683565275, %v399
  %v403 = vshrl.u32 2475754826, %v400
  %v404 = vor.u32 %v402, %v403
  %v405 = vshll.u32 2475754826, %v399
  %v406 = vshrl.u32 2131351028, %v400
  %v407 = vor.u32 %v405, %v406
  %v408 = vshll.u32 2131351028, %v399
  %v409 = vshrl.u32 2102212464, %v400
  %v410 = vor.u32 %v408, %v409
  %v411 = vshll.u32 2102212464, %v399
  %v412 = vshrl.u32 920167782, %v400
  %v413 = vor.u32 %v411, %v412
  %v414 = vshll.u32 920167782, %v399
  %v415 = vshrl.u32 1326507024, %v400
  %v416 = vor.u32 %v414, %v415
  %vm417 = vcmp.lt.s32.totalorder %v398, 1
  %vm418 = vcmp.lt.s32.totalorder %v398, 2
  %vm419 = vcmp.lt.s32.totalorder %v398, 3
  %vm420 = vcmp.lt.s32.totalorder %v398, 4
  %v421 = vsel %vm417, %v401, %v404
  %v422 = vsel %vm420, %v410, 2102212464
  %v423 = vsel %vm419, %v407, %v422
  %v424 = vsel %vm418, %v421, %v423
  %v425 = vsel %vm417, %v404, %v407
  %v426 = vsel %vm420, %v413, 920167782
  %v427 = vsel %vm419, %v410, %v426
  %v428 = vsel %vm418, %v425, %v427
  %v429 = vsel %vm417, %v407, %v410
  %v430 = vsel %vm420, %v416, 1326507024
  %v431 = vsel %vm419, %v413, %v430
  %v432 = vsel %vm418, %v429, %v431
  %v433 = vshll.u32 %v393, 8
  %v434 = vmul.u32.u64.compose %v433, %v432
  %v435 = vextract.low.u32 %v434
  %v436 = vextract.high.u32 %v434
  %v437 = vmul.u32.u64.compose %v433, %v428
  %v438 = vextract.low.u32 %v437
  %v439 = vextract.high.u32 %v437
  %v440 = vmul.u32 %v433, %v424
  %v441 = vadd.s32 %v436, %v438
  %vm442 = vc.u32 %v436, %v438
  %v443 = vadd.s32 %v439, 1
  %v444 = vsel %vm442, %v443, %v439
  %v445 = vadd.s32 %v440, %v444
  %v446 = vadd.s32 %v445, 536870912
  %v447 = vshrl.u32 %v446, 30
  %v448 = vshll.u32 %v447, 30
  %v449 = vsub.s32 %v445, %v448
  %vm450 = vcmp.lt.s32.totalorder %v449, 0
  %v451 = vsub.s32 0, %v449
  %v452 = vsel %vm450, %v451, %v449
  %v453 = vclz %v452
  %v454 = vsub.s32 %v453, 2
  %vm455 = vcmp.gt.s32.totalorder 0, %v454
  %v456 = vsel %vm455, 0, %v454
  %v457 = vsub.s32 32, %v456
  %v458 = vshll.u32 %v449, %v456
  %v459 = vshrl.u32 %v441, %v457
  %v460 = vor.u32 %v458, %v459
  %v461 = vsub.s32 4294967266, %v456
  %v462 = vadd.s32 %v461, 127
  %v463 = vshll.u32 %v462, 23
  %v464 = vor.u32 4788187, %v463
  %v465 = vand.u32 2147483647, %v464
  %v467 = vcvt.s32.f32 %v460
  %v468 = vmul.f32 %v467, %v465
  %v469 = vxor.u32 %v468, 2147483648
  %v470 = vsel %vm387, %v469, %v468
  %v471 = vsub.s32 4, %v447
  %v472 = vsel %vm387, %v471, %v447
  %v473 = vsel %vm386, %v172, %v470
  %v474 = vsel %vm386, 0, %v472
  %v475 = vcosq.f32.pop %v473
  %v476 = vsinq.f32.pop %v473
  %vm477 = vweird.f32 %v172
  %v478 = vadd.s32 %v474, 3
  %v479 = vand.u32 %v478, 3
  %vm480 = vcmp.lt.s32.totalorder %v479, 2
  %vm481 = vcmp.eq.s32.totalorder %v479, 0
  %v482 = vxor.u32 %v476, 2147483648
  %v483 = vsel %vm481, %v475, %v482
  %vm484 = vcmp.eq.s32.totalorder %v479, 2
  %v485 = vxor.u32 %v475, 2147483648
  %v486 = vsel %vm484, %v485, %v476
  %v487 = vsel %vm480, %v483, %v486
  %v488 = vsel %vm477, nan, %v487
  %v489 = vand.u32 2147483647, %v259
  %vm490 = vcmp.le.f32.partialorder %v489, 0.7853982
  %vm491 = vcmp.lt.s32.totalorder %v259, 0
  %v492 = vand.u32 %v259, 2139095040
  %v493 = vshrl.u32 %v492, 23
  %v494 = vsub.s32 %v493, 127
  %v495 = vand.u32 2147483647, %v259
  %v496 = vand.u32 %v495, 8388607
  %v497 = vor.u32 %v496, 8388608
  %v498 = vsub.s32 0, %v497
  %v499 = vadd.s32 %v494, 1
  %vm500 = vcmp.gt.s32.totalorder %v499, 0
  %v501 = vsel %vm500, %v499, 0
  %v502 = vshrl.u32 %v501, 5
  %v503 = vand.u32 %v501, 31
  %v504 = vsub.s32 32, %v503
  %v505 = vshrl.u32 683565275, %v504
  %v506 = vshll.u32 683565275, %v503
  %v507 = vshrl.u32 2475754826, %v504
  %v508 = vor.u32 %v506, %v507
  %v509 = vshll.u32 2475754826, %v503
  %v510 = vshrl.u32 2131351028, %v504
  %v511 = vor.u32 %v509, %v510
  %v512 = vshll.u32 2131351028, %v503
  %v513 = vshrl.u32 2102212464, %v504
  %v514 = vor.u32 %v512, %v513
  %v515 = vshll.u32 2102212464, %v503
  %v516 = vshrl.u32 920167782, %v504
  %v517 = vor.u32 %v515, %v516
  %v518 = vshll.u32 920167782, %v503
  %v519 = vshrl.u32 1326507024, %v504
  %v520 = vor.u32 %v518, %v519
  %vm521 = vcmp.lt.s32.totalorder %v502, 1
  %vm522 = vcmp.lt.s32.totalorder %v502, 2
  %vm523 = vcmp.lt.s32.totalorder %v502, 3
  %vm524 = vcmp.lt.s32.totalorder %v502, 4
  %v525 = vsel %vm521, %v505, %v508
  %v526 = vsel %vm524, %v514, 2102212464
  %v527 = vsel %vm523, %v511, %v526
  %v528 = vsel %vm522, %v525, %v527
  %v529 = vsel %vm521, %v508, %v511
  %v530 = vsel %vm524, %v517, 920167782
  %v531 = vsel %vm523, %v514, %v530
  %v532 = vsel %vm522, %v529, %v531
  %v533 = vsel %vm521, %v511, %v514
  %v534 = vsel %vm524, %v520, 1326507024
  %v535 = vsel %vm523, %v517, %v534
  %v536 = vsel %vm522, %v533, %v535
  %v537 = vshll.u32 %v497, 8
  %v538 = vmul.u32.u64.compose %v537, %v536
  %v539 = vextract.low.u32 %v538
  %v540 = vextract.high.u32 %v538
  %v541 = vmul.u32.u64.compose %v537, %v532
  %v542 = vextract.low.u32 %v541
  %v543 = vextract.high.u32 %v541
  %v544 = vmul.u32 %v537, %v528
  %v545 = vadd.s32 %v540, %v542
  %vm546 = vc.u32 %v540, %v542
  %v547 = vadd.s32 %v543, 1
  %v548 = vsel %vm546, %v547, %v543
  %v549 = vadd.s32 %v544, %v548
  %v550 = vadd.s32 %v549, 536870912
  %v551 = vshrl.u32 %v550, 30
  %v552 = vshll.u32 %v551, 30
  %v553 = vsub.s32 %v549, %v552
  %vm554 = vcmp.lt.s32.totalorder %v553, 0
  %v555 = vsub.s32 0, %v553
  %v556 = vsel %vm554, %v555, %v553
  %v557 = vclz %v556
  %v558 = vsub.s32 %v557, 2
  %vm559 = vcmp.gt.s32.totalorder 0, %v558
  %v560 = vsel %vm559, 0, %v558
  %v561 = vsub.s32 32, %v560
  %v562 = vshll.u32 %v553, %v560
  %v563 = vshrl.u32 %v545, %v561
  %v564 = vor.u32 %v562, %v563
  %v565 = vsub.s32 4294967266, %v560
  %v566 = vadd.s32 %v565, 127
  %v567 = vshll.u32 %v566, 23
  %v568 = vor.u32 4788187, %v567
  %v569 = vand.u32 2147483647, %v568
  %v571 = vcvt.s32.f32 %v564
  %v572 = vmul.f32 %v571, %v569
  %v573 = vxor.u32 %v572, 2147483648
  %v574 = vsel %vm491, %v573, %v572
  %v575 = vsub.s32 4, %v551
  %v576 = vsel %vm491, %v575, %v551
  %v577 = vsel %vm490, %v259, %v574
  %v578 = vsel %vm490, 0, %v576
  %v579 = vcosq.f32.pop %v577
  %v580 = vsinq.f32.pop %v577
  %vm581 = vweird.f32 %v259
  %v582 = vadd.s32 %v578, 3
  %v583 = vand.u32 %v582, 3
  %vm584 = vcmp.lt.s32.totalorder %v583, 2
  %vm585 = vcmp.eq.s32.totalorder %v583, 0
  %v586 = vxor.u32 %v580, 2147483648
  %v587 = vsel %vm585, %v579, %v586
  %vm588 = vcmp.eq.s32.totalorder %v583, 2
  %v589 = vxor.u32 %v579, 2147483648
  %v590 = vsel %vm588, %v589, %v580
  %v591 = vsel %vm584, %v587, %v590
  %v592 = vsel %vm581, nan, %v591
  %v593 = vand.u32 2147483647, %v261
  %vm594 = vcmp.le.f32.partialorder %v593, 0.7853982
  %vm595 = vcmp.lt.s32.totalorder %v261, 0
  %v596 = vand.u32 %v261, 2139095040
  %v597 = vshrl.u32 %v596, 23
  %v598 = vsub.s32 %v597, 127
  %v599 = vand.u32 2147483647, %v261
  %v600 = vand.u32 %v599, 8388607
  %v601 = vor.u32 %v600, 8388608
  %v602 = vsub.s32 0, %v601
  %v603 = vadd.s32 %v598, 1
  %vm604 = vcmp.gt.s32.totalorder %v603, 0
  %v605 = vsel %vm604, %v603, 0
  %v606 = vshrl.u32 %v605, 5
  %v607 = vand.u32 %v605, 31
  %v608 = vsub.s32 32, %v607
  %v609 = vshrl.u32 683565275, %v608
  %v610 = vshll.u32 683565275, %v607
  %v611 = vshrl.u32 2475754826, %v608
  %v612 = vor.u32 %v610, %v611
  %v613 = vshll.u32 2475754826, %v607
  %v614 = vshrl.u32 2131351028, %v608
  %v615 = vor.u32 %v613, %v614
  %v616 = vshll.u32 2131351028, %v607
  %v617 = vshrl.u32 2102212464, %v608
  %v618 = vor.u32 %v616, %v617
  %v619 = vshll.u32 2102212464, %v607
  %v620 = vshrl.u32 920167782, %v608
  %v621 = vor.u32 %v619, %v620
  %v622 = vshll.u32 920167782, %v607
  %v623 = vshrl.u32 1326507024, %v608
  %v624 = vor.u32 %v622, %v623
  %vm625 = vcmp.lt.s32.totalorder %v606, 1
  %vm626 = vcmp.lt.s32.totalorder %v606, 2
  %vm627 = vcmp.lt.s32.totalorder %v606, 3
  %vm628 = vcmp.lt.s32.totalorder %v606, 4
  %v629 = vsel %vm625, %v609, %v612
  %v630 = vsel %vm628, %v618, 2102212464
  %v631 = vsel %vm627, %v615, %v630
  %v632 = vsel %vm626, %v629, %v631
  %v633 = vsel %vm625, %v612, %v615
  %v634 = vsel %vm628, %v621, 920167782
  %v635 = vsel %vm627, %v618, %v634
  %v636 = vsel %vm626, %v633, %v635
  %v637 = vsel %vm625, %v615, %v618
  %v638 = vsel %vm628, %v624, 1326507024
  %v639 = vsel %vm627, %v621, %v638
  %v640 = vsel %vm626, %v637, %v639
  %v641 = vshll.u32 %v601, 8
  %v642 = vmul.u32.u64.compose %v641, %v640
  %v643 = vextract.low.u32 %v642
  %v644 = vextract.high.u32 %v642
  %v645 = vmul.u32.u64.compose %v641, %v636
  %v646 = vextract.low.u32 %v645
  %v647 = vextract.high.u32 %v645
  %v648 = vmul.u32 %v641, %v632
  %v649 = vadd.s32 %v644, %v646
  %vm650 = vc.u32 %v644, %v646
  %v651 = vadd.s32 %v647, 1
  %v652 = vsel %vm650, %v651, %v647
  %v653 = vadd.s32 %v648, %v652
  %v654 = vadd.s32 %v653, 536870912
  %v655 = vshrl.u32 %v654, 30
  %v656 = vshll.u32 %v655, 30
  %v657 = vsub.s32 %v653, %v656
  %vm658 = vcmp.lt.s32.totalorder %v657, 0
  %v659 = vsub.s32 0, %v657
  %v660 = vsel %vm658, %v659, %v657
  %v661 = vclz %v660
  %v662 = vsub.s32 %v661, 2
  %vm663 = vcmp.gt.s32.totalorder 0, %v662
  %v664 = vsel %vm663, 0, %v662
  %v665 = vsub.s32 32, %v664
  %v666 = vshll.u32 %v657, %v664
  %v667 = vshrl.u32 %v649, %v665
  %v668 = vor.u32 %v666, %v667
  %v669 = vsub.s32 4294967266, %v664
  %v670 = vadd.s32 %v669, 127
  %v671 = vshll.u32 %v670, 23
  %v672 = vor.u32 4788187, %v671
  %v673 = vand.u32 2147483647, %v672
  %v675 = vcvt.s32.f32 %v668
  %v676 = vmul.f32 %v675, %v673
  %v677 = vxor.u32 %v676, 2147483648
  %v678 = vsel %vm595, %v677, %v676
  %v679 = vsub.s32 4, %v655
  %v680 = vsel %vm595, %v679, %v655
  %v681 = vsel %vm594, %v261, %v678
  %v682 = vsel %vm594, 0, %v680
  %v683 = vcosq.f32.pop %v681
  %v684 = vsinq.f32.pop %v681
  %vm685 = vweird.f32 %v261
  %v686 = vadd.s32 %v682, 3
  %v687 = vand.u32 %v686, 3
  %vm688 = vcmp.lt.s32.totalorder %v687, 2
  %vm689 = vcmp.eq.s32.totalorder %v687, 0
  %v690 = vxor.u32 %v684, 2147483648
  %v691 = vsel %vm689, %v683, %v690
  %vm692 = vcmp.eq.s32.totalorder %v687, 2
  %v693 = vxor.u32 %v683, 2147483648
  %v694 = vsel %vm692, %v693, %v684
  %v695 = vsel %vm688, %v691, %v694
  %v696 = vsel %vm685, nan, %v695
  %v697 = vand.u32 2147483647, %v176
  %vm698 = vcmp.le.f32.partialorder %v697, 0.7853982
  %vm699 = vcmp.lt.s32.totalorder %v176, 0
  %v700 = vand.u32 %v176, 2139095040
  %v701 = vshrl.u32 %v700, 23
  %v702 = vsub.s32 %v701, 127
  %v703 = vand.u32 2147483647, %v176
  %v704 = vand.u32 %v703, 8388607
  %v705 = vor.u32 %v704, 8388608
  %v706 = vsub.s32 0, %v705
  %v707 = vadd.s32 %v702, 1
  %vm708 = vcmp.gt.s32.totalorder %v707, 0
  %v709 = vsel %vm708, %v707, 0
  %v710 = vshrl.u32 %v709, 5
  %v711 = vand.u32 %v709, 31
  %v712 = vsub.s32 32, %v711
  %v713 = vshrl.u32 683565275, %v712
  %v714 = vshll.u32 683565275, %v711
  %v715 = vshrl.u32 2475754826, %v712
  %v716 = vor.u32 %v714, %v715
  %v717 = vshll.u32 2475754826, %v711
  %v718 = vshrl.u32 2131351028, %v712
  %v719 = vor.u32 %v717, %v718
  %v720 = vshll.u32 2131351028, %v711
  %v721 = vshrl.u32 2102212464, %v712
  %v722 = vor.u32 %v720, %v721
  %v723 = vshll.u32 2102212464, %v711
  %v724 = vshrl.u32 920167782, %v712
  %v725 = vor.u32 %v723, %v724
  %v726 = vshll.u32 920167782, %v711
  %v727 = vshrl.u32 1326507024, %v712
  %v728 = vor.u32 %v726, %v727
  %vm729 = vcmp.lt.s32.totalorder %v710, 1
  %vm730 = vcmp.lt.s32.totalorder %v710, 2
  %vm731 = vcmp.lt.s32.totalorder %v710, 3
  %vm732 = vcmp.lt.s32.totalorder %v710, 4
  %v733 = vsel %vm729, %v713, %v716
  %v734 = vsel %vm732, %v722, 2102212464
  %v735 = vsel %vm731, %v719, %v734
  %v736 = vsel %vm730, %v733, %v735
  %v737 = vsel %vm729, %v716, %v719
  %v738 = vsel %vm732, %v725, 920167782
  %v739 = vsel %vm731, %v722, %v738
  %v740 = vsel %vm730, %v737, %v739
  %v741 = vsel %vm729, %v719, %v722
  %v742 = vsel %vm732, %v728, 1326507024
  %v743 = vsel %vm731, %v725, %v742
  %v744 = vsel %vm730, %v741, %v743
  %v745 = vshll.u32 %v705, 8
  %v746 = vmul.u32.u64.compose %v745, %v744
  %v747 = vextract.low.u32 %v746
  %v748 = vextract.high.u32 %v746
  %v749 = vmul.u32.u64.compose %v745, %v740
  %v750 = vextract.low.u32 %v749
  %v751 = vextract.high.u32 %v749
  %v752 = vmul.u32 %v745, %v736
  %v753 = vadd.s32 %v748, %v750
  %vm754 = vc.u32 %v748, %v750
  %v755 = vadd.s32 %v751, 1
  %v756 = vsel %vm754, %v755, %v751
  %v757 = vadd.s32 %v752, %v756
  %v758 = vadd.s32 %v757, 536870912
  %v759 = vshrl.u32 %v758, 30
  %v760 = vshll.u32 %v759, 30
  %v761 = vsub.s32 %v757, %v760
  %vm762 = vcmp.lt.s32.totalorder %v761, 0
  %v763 = vsub.s32 0, %v761
  %v764 = vsel %vm762, %v763, %v761
  %v765 = vclz %v764
  %v766 = vsub.s32 %v765, 2
  %vm767 = vcmp.gt.s32.totalorder 0, %v766
  %v768 = vsel %vm767, 0, %v766
  %v769 = vsub.s32 32, %v768
  %v770 = vshll.u32 %v761, %v768
  %v771 = vshrl.u32 %v753, %v769
  %v772 = vor.u32 %v770, %v771
  %v773 = vsub.s32 4294967266, %v768
  %v774 = vadd.s32 %v773, 127
  %v775 = vshll.u32 %v774, 23
  %v776 = vor.u32 4788187, %v775
  %v777 = vand.u32 2147483647, %v776
  %v779 = vcvt.s32.f32 %v772
  %v780 = vmul.f32 %v779, %v777
  %v781 = vxor.u32 %v780, 2147483648
  %v782 = vsel %vm699, %v781, %v780
  %v783 = vsub.s32 4, %v759
  %v784 = vsel %vm699, %v783, %v759
  %v785 = vsel %vm698, %v176, %v782
  %v786 = vsel %vm698, 0, %v784
  %v787 = vcosq.f32.pop %v785
  %v788 = vsinq.f32.pop %v785
  %vm789 = vweird.f32 %v176
  %v790 = vadd.s32 %v786, 3
  %v791 = vand.u32 %v790, 3
  %vm792 = vcmp.lt.s32.totalorder %v791, 2
  %vm793 = vcmp.eq.s32.totalorder %v791, 0
  %v794 = vxor.u32 %v788, 2147483648
  %v795 = vsel %vm793, %v787, %v794
  %vm796 = vcmp.eq.s32.totalorder %v791, 2
  %v797 = vxor.u32 %v787, 2147483648
  %v798 = vsel %vm796, %v797, %v788
  %v799 = vsel %vm792, %v795, %v798
  %v800 = vsel %vm789, nan, %v799
  %v801 = vand.u32 2147483647, %v178
  %vm802 = vcmp.le.f32.partialorder %v801, 0.7853982
  %vm803 = vcmp.lt.s32.totalorder %v178, 0
  %v804 = vand.u32 %v178, 2139095040
  %v805 = vshrl.u32 %v804, 23
  %v806 = vsub.s32 %v805, 127
  %v807 = vand.u32 2147483647, %v178
  %v808 = vand.u32 %v807, 8388607
  %v809 = vor.u32 %v808, 8388608
  %v810 = vsub.s32 0, %v809
  %v811 = vadd.s32 %v806, 1
  %vm812 = vcmp.gt.s32.totalorder %v811, 0
  %v813 = vsel %vm812, %v811, 0
  %v814 = vshrl.u32 %v813, 5
  %v815 = vand.u32 %v813, 31
  %v816 = vsub.s32 32, %v815
  %v817 = vshrl.u32 683565275, %v816
  %v818 = vshll.u32 683565275, %v815
  %v819 = vshrl.u32 2475754826, %v816
  %v820 = vor.u32 %v818, %v819
  %v821 = vshll.u32 2475754826, %v815
  %v822 = vshrl.u32 2131351028, %v816
  %v823 = vor.u32 %v821, %v822
  %v824 = vshll.u32 2131351028, %v815
  %v825 = vshrl.u32 2102212464, %v816
  %v826 = vor.u32 %v824, %v825
  %v827 = vshll.u32 2102212464, %v815
  %v828 = vshrl.u32 920167782, %v816
  %v829 = vor.u32 %v827, %v828
  %v830 = vshll.u32 920167782, %v815
  %v831 = vshrl.u32 1326507024, %v816
  %v832 = vor.u32 %v830, %v831
  %vm833 = vcmp.lt.s32.totalorder %v814, 1
  %vm834 = vcmp.lt.s32.totalorder %v814, 2
  %vm835 = vcmp.lt.s32.totalorder %v814, 3
  %vm836 = vcmp.lt.s32.totalorder %v814, 4
  %v837 = vsel %vm833, %v817, %v820
  %v838 = vsel %vm836, %v826, 2102212464
  %v839 = vsel %vm835, %v823, %v838
  %v840 = vsel %vm834, %v837, %v839
  %v841 = vsel %vm833, %v820, %v823
  %v842 = vsel %vm836, %v829, 920167782
  %v843 = vsel %vm835, %v826, %v842
  %v844 = vsel %vm834, %v841, %v843
  %v845 = vsel %vm833, %v823, %v826
  %v846 = vsel %vm836, %v832, 1326507024
  %v847 = vsel %vm835, %v829, %v846
  %v848 = vsel %vm834, %v845, %v847
  %v849 = vshll.u32 %v809, 8
  %v850 = vmul.u32.u64.compose %v849, %v848
  %v851 = vextract.low.u32 %v850
  %v852 = vextract.high.u32 %v850
  %v853 = vmul.u32.u64.compose %v849, %v844
  %v854 = vextract.low.u32 %v853
  %v855 = vextract.high.u32 %v853
  %v856 = vmul.u32 %v849, %v840
  %v857 = vadd.s32 %v852, %v854
  %vm858 = vc.u32 %v852, %v854
  %v859 = vadd.s32 %v855, 1
  %v860 = vsel %vm858, %v859, %v855
  %v861 = vadd.s32 %v856, %v860
  %v862 = vadd.s32 %v861, 536870912
  %v863 = vshrl.u32 %v862, 30
  %v864 = vshll.u32 %v863, 30
  %v865 = vsub.s32 %v861, %v864
  %vm866 = vcmp.lt.s32.totalorder %v865, 0
  %v867 = vsub.s32 0, %v865
  %v868 = vsel %vm866, %v867, %v865
  %v869 = vclz %v868
  %v870 = vsub.s32 %v869, 2
  %vm871 = vcmp.gt.s32.totalorder 0, %v870
  %v872 = vsel %vm871, 0, %v870
  %v873 = vsub.s32 32, %v872
  %v874 = vshll.u32 %v865, %v872
  %v875 = vshrl.u32 %v857, %v873
  %v876 = vor.u32 %v874, %v875
  %v877 = vsub.s32 4294967266, %v872
  %v878 = vadd.s32 %v877, 127
  %v879 = vshll.u32 %v878, 23
  %v880 = vor.u32 4788187, %v879
  %v881 = vand.u32 2147483647, %v880
  %v883 = vcvt.s32.f32 %v876
  %v884 = vmul.f32 %v883, %v881
  %v885 = vxor.u32 %v884, 2147483648
  %v886 = vsel %vm803, %v885, %v884
  %v887 = vsub.s32 4, %v863
  %v888 = vsel %vm803, %v887, %v863
  %v889 = vsel %vm802, %v178, %v886
  %v890 = vsel %vm802, 0, %v888
  %v891 = vcosq.f32.pop %v889
  %v892 = vsinq.f32.pop %v889
  %vm893 = vweird.f32 %v178
  %v894 = vadd.s32 %v890, 3
  %v895 = vand.u32 %v894, 3
  %vm896 = vcmp.lt.s32.totalorder %v895, 2
  %vm897 = vcmp.eq.s32.totalorder %v895, 0
  %v898 = vxor.u32 %v892, 2147483648
  %v899 = vsel %vm897, %v891, %v898
  %vm900 = vcmp.eq.s32.totalorder %v895, 2
  %v901 = vxor.u32 %v891, 2147483648
  %v902 = vsel %vm900, %v901, %v892
  %v903 = vsel %vm896, %v899, %v902
  %v904 = vsel %vm893, nan, %v903
  %v905 = vand.u32 2147483647, %v265
  %vm906 = vcmp.le.f32.partialorder %v905, 0.7853982
  %vm907 = vcmp.lt.s32.totalorder %v265, 0
  %v908 = vand.u32 %v265, 2139095040
  %v909 = vshrl.u32 %v908, 23
  %v910 = vsub.s32 %v909, 127
  %v911 = vand.u32 2147483647, %v265
  %v912 = vand.u32 %v911, 8388607
  %v913 = vor.u32 %v912, 8388608
  %v914 = vsub.s32 0, %v913
  %v915 = vadd.s32 %v910, 1
  %vm916 = vcmp.gt.s32.totalorder %v915, 0
  %v917 = vsel %vm916, %v915, 0
  %v918 = vshrl.u32 %v917, 5
  %v919 = vand.u32 %v917, 31
  %v920 = vsub.s32 32, %v919
  %v921 = vshrl.u32 683565275, %v920
  %v922 = vshll.u32 683565275, %v919
  %v923 = vshrl.u32 2475754826, %v920
  %v924 = vor.u32 %v922, %v923
  %v925 = vshll.u32 2475754826, %v919
  %v926 = vshrl.u32 2131351028, %v920
  %v927 = vor.u32 %v925, %v926
  %v928 = vshll.u32 2131351028, %v919
  %v929 = vshrl.u32 2102212464, %v920
  %v930 = vor.u32 %v928, %v929
  %v931 = vshll.u32 2102212464, %v919
  %v932 = vshrl.u32 920167782, %v920
  %v933 = vor.u32 %v931, %v932
  %v934 = vshll.u32 920167782, %v919
  %v935 = vshrl.u32 1326507024, %v920
  %v936 = vor.u32 %v934, %v935
  %vm937 = vcmp.lt.s32.totalorder %v918, 1
  %vm938 = vcmp.lt.s32.totalorder %v918, 2
  %vm939 = vcmp.lt.s32.totalorder %v918, 3
  %vm940 = vcmp.lt.s32.totalorder %v918, 4
  %v941 = vsel %vm937, %v921, %v924
  %v942 = vsel %vm940, %v930, 2102212464
  %v943 = vsel %vm939, %v927, %v942
  %v944 = vsel %vm938, %v941, %v943
  %v945 = vsel %vm937, %v924, %v927
  %v946 = vsel %vm940, %v933, 920167782
  %v947 = vsel %vm939, %v930, %v946
  %v948 = vsel %vm938, %v945, %v947
  %v949 = vsel %vm937, %v927, %v930
  %v950 = vsel %vm940, %v936, 1326507024
  %v951 = vsel %vm939, %v933, %v950
  %v952 = vsel %vm938, %v949, %v951
  %v953 = vshll.u32 %v913, 8
  %v954 = vmul.u32.u64.compose %v953, %v952
  %v955 = vextract.low.u32 %v954
  %v956 = vextract.high.u32 %v954
  %v957 = vmul.u32.u64.compose %v953, %v948
  %v958 = vextract.low.u32 %v957
  %v959 = vextract.high.u32 %v957
  %v960 = vmul.u32 %v953, %v944
  %v961 = vadd.s32 %v956, %v958
  %vm962 = vc.u32 %v956, %v958
  %v963 = vadd.s32 %v959, 1
  %v964 = vsel %vm962, %v963, %v959
  %v965 = vadd.s32 %v960, %v964
  %v966 = vadd.s32 %v965, 536870912
  %v967 = vshrl.u32 %v966, 30
  %v968 = vshll.u32 %v967, 30
  %v969 = vsub.s32 %v965, %v968
  %vm970 = vcmp.lt.s32.totalorder %v969, 0
  %v971 = vsub.s32 0, %v969
  %v972 = vsel %vm970, %v971, %v969
  %v973 = vclz %v972
  %v974 = vsub.s32 %v973, 2
  %vm975 = vcmp.gt.s32.totalorder 0, %v974
  %v976 = vsel %vm975, 0, %v974
  %v977 = vsub.s32 32, %v976
  %v978 = vshll.u32 %v969, %v976
  %v979 = vshrl.u32 %v961, %v977
  %v980 = vor.u32 %v978, %v979
  %v981 = vsub.s32 4294967266, %v976
  %v982 = vadd.s32 %v981, 127
  %v983 = vshll.u32 %v982, 23
  %v984 = vor.u32 4788187, %v983
  %v985 = vand.u32 2147483647, %v984
  %v987 = vcvt.s32.f32 %v980
  %v988 = vmul.f32 %v987, %v985
  %v989 = vxor.u32 %v988, 2147483648
  %v990 = vsel %vm907, %v989, %v988
  %v991 = vsub.s32 4, %v967
  %v992 = vsel %vm907, %v991, %v967
  %v993 = vsel %vm906, %v265, %v990
  %v994 = vsel %vm906, 0, %v992
  %v995 = vcosq.f32.pop %v993
  %v996 = vsinq.f32.pop %v993
  %vm997 = vweird.f32 %v265
  %v998 = vadd.s32 %v994, 3
  %v999 = vand.u32 %v998, 3
  %vm1000 = vcmp.lt.s32.totalorder %v999, 2
  %vm1001 = vcmp.eq.s32.totalorder %v999, 0
  %v1002 = vxor.u32 %v996, 2147483648
  %v1003 = vsel %vm1001, %v995, %v1002
  %vm1004 = vcmp.eq.s32.totalorder %v999, 2
  %v1005 = vxor.u32 %v995, 2147483648
  %v1006 = vsel %vm1004, %v1005, %v996
  %v1007 = vsel %vm1000, %v1003, %v1006
  %v1008 = vsel %vm997, nan, %v1007
  %v1009 = vand.u32 2147483647, %v267
  %vm1010 = vcmp.le.f32.partialorder %v1009, 0.7853982
  %vm1011 = vcmp.lt.s32.totalorder %v267, 0
  %v1012 = vand.u32 %v267, 2139095040
  %v1013 = vshrl.u32 %v1012, 23
  %v1014 = vsub.s32 %v1013, 127
  %v1015 = vand.u32 2147483647, %v267
  %v1016 = vand.u32 %v1015, 8388607
  %v1017 = vor.u32 %v1016, 8388608
  %v1018 = vsub.s32 0, %v1017
  %v1019 = vadd.s32 %v1014, 1
  %vm1020 = vcmp.gt.s32.totalorder %v1019, 0
  %v1021 = vsel %vm1020, %v1019, 0
  %v1022 = vshrl.u32 %v1021, 5
  %v1023 = vand.u32 %v1021, 31
  %v1024 = vsub.s32 32, %v1023
  %v1025 = vshrl.u32 683565275, %v1024
  %v1026 = vshll.u32 683565275, %v1023
  %v1027 = vshrl.u32 2475754826, %v1024
  %v1028 = vor.u32 %v1026, %v1027
  %v1029 = vshll.u32 2475754826, %v1023
  %v1030 = vshrl.u32 2131351028, %v1024
  %v1031 = vor.u32 %v1029, %v1030
  %v1032 = vshll.u32 2131351028, %v1023
  %v1033 = vshrl.u32 2102212464, %v1024
  %v1034 = vor.u32 %v1032, %v1033
  %v1035 = vshll.u32 2102212464, %v1023
  %v1036 = vshrl.u32 920167782, %v1024
  %v1037 = vor.u32 %v1035, %v1036
  %v1038 = vshll.u32 920167782, %v1023
  %v1039 = vshrl.u32 1326507024, %v1024
  %v1040 = vor.u32 %v1038, %v1039
  %vm1041 = vcmp.lt.s32.totalorder %v1022, 1
  %vm1042 = vcmp.lt.s32.totalorder %v1022, 2
  %vm1043 = vcmp.lt.s32.totalorder %v1022, 3
  %vm1044 = vcmp.lt.s32.totalorder %v1022, 4
  %v1045 = vsel %vm1041, %v1025, %v1028
  %v1046 = vsel %vm1044, %v1034, 2102212464
  %v1047 = vsel %vm1043, %v1031, %v1046
  %v1048 = vsel %vm1042, %v1045, %v1047
  %v1049 = vsel %vm1041, %v1028, %v1031
  %v1050 = vsel %vm1044, %v1037, 920167782
  %v1051 = vsel %vm1043, %v1034, %v1050
  %v1052 = vsel %vm1042, %v1049, %v1051
  %v1053 = vsel %vm1041, %v1031, %v1034
  %v1054 = vsel %vm1044, %v1040, 1326507024
  %v1055 = vsel %vm1043, %v1037, %v1054
  %v1056 = vsel %vm1042, %v1053, %v1055
  %v1057 = vshll.u32 %v1017, 8
  %v1058 = vmul.u32.u64.compose %v1057, %v1056
  %v1059 = vextract.low.u32 %v1058
  %v1060 = vextract.high.u32 %v1058
  %v1061 = vmul.u32.u64.compose %v1057, %v1052
  %v1062 = vextract.low.u32 %v1061
  %v1063 = vextract.high.u32 %v1061
  %v1064 = vmul.u32 %v1057, %v1048
  %v1065 = vadd.s32 %v1060, %v1062
  %vm1066 = vc.u32 %v1060, %v1062
  %v1067 = vadd.s32 %v1063, 1
  %v1068 = vsel %vm1066, %v1067, %v1063
  %v1069 = vadd.s32 %v1064, %v1068
  %v1070 = vadd.s32 %v1069, 536870912
  %v1071 = vshrl.u32 %v1070, 30
  %v1072 = vshll.u32 %v1071, 30
  %v1073 = vsub.s32 %v1069, %v1072
  %vm1074 = vcmp.lt.s32.totalorder %v1073, 0
  %v1075 = vsub.s32 0, %v1073
  %v1076 = vsel %vm1074, %v1075, %v1073
  %v1077 = vclz %v1076
  %v1078 = vsub.s32 %v1077, 2
  %vm1079 = vcmp.gt.s32.totalorder 0, %v1078
  %v1080 = vsel %vm1079, 0, %v1078
  %v1081 = vsub.s32 32, %v1080
  %v1082 = vshll.u32 %v1073, %v1080
  %v1083 = vshrl.u32 %v1065, %v1081
  %v1084 = vor.u32 %v1082, %v1083
  %v1085 = vsub.s32 4294967266, %v1080
  %v1086 = vadd.s32 %v1085, 127
  %v1087 = vshll.u32 %v1086, 23
  %v1088 = vor.u32 4788187, %v1087
  %v1089 = vand.u32 2147483647, %v1088
  %v1091 = vcvt.s32.f32 %v1084
  %v1092 = vmul.f32 %v1091, %v1089
  %v1093 = vxor.u32 %v1092, 2147483648
  %v1094 = vsel %vm1011, %v1093, %v1092
  %v1095 = vsub.s32 4, %v1071
  %v1096 = vsel %vm1011, %v1095, %v1071
  %v1097 = vsel %vm1010, %v267, %v1094
  %v1098 = vsel %vm1010, 0, %v1096
  %v1099 = vcosq.f32.pop %v1097
  %v1100 = vsinq.f32.pop %v1097
  %vm1101 = vweird.f32 %v267
  %v1102 = vadd.s32 %v1098, 3
  %v1103 = vand.u32 %v1102, 3
  %vm1104 = vcmp.lt.s32.totalorder %v1103, 2
  %vm1105 = vcmp.eq.s32.totalorder %v1103, 0
  %v1106 = vxor.u32 %v1100, 2147483648
  %v1107 = vsel %vm1105, %v1099, %v1106
  %vm1108 = vcmp.eq.s32.totalorder %v1103, 2
  %v1109 = vxor.u32 %v1099, 2147483648
  %v1110 = vsel %vm1108, %v1109, %v1100
  %v1111 = vsel %vm1104, %v1107, %v1110
  %v1112 = vsel %vm1101, nan, %v1111
  %v1113 = vand.u32 2147483647, %v182
  %vm1114 = vcmp.le.f32.partialorder %v1113, 0.7853982
  %vm1115 = vcmp.lt.s32.totalorder %v182, 0
  %v1116 = vand.u32 %v182, 2139095040
  %v1117 = vshrl.u32 %v1116, 23
  %v1118 = vsub.s32 %v1117, 127
  %v1119 = vand.u32 2147483647, %v182
  %v1120 = vand.u32 %v1119, 8388607
  %v1121 = vor.u32 %v1120, 8388608
  %v1122 = vsub.s32 0, %v1121
  %v1123 = vadd.s32 %v1118, 1
  %vm1124 = vcmp.gt.s32.totalorder %v1123, 0
  %v1125 = vsel %vm1124, %v1123, 0
  %v1126 = vshrl.u32 %v1125, 5
  %v1127 = vand.u32 %v1125, 31
  %v1128 = vsub.s32 32, %v1127
  %v1129 = vshrl.u32 683565275, %v1128
  %v1130 = vshll.u32 683565275, %v1127
  %v1131 = vshrl.u32 2475754826, %v1128
  %v1132 = vor.u32 %v1130, %v1131
  %v1133 = vshll.u32 2475754826, %v1127
  %v1134 = vshrl.u32 2131351028, %v1128
  %v1135 = vor.u32 %v1133, %v1134
  %v1136 = vshll.u32 2131351028, %v1127
  %v1137 = vshrl.u32 2102212464, %v1128
  %v1138 = vor.u32 %v1136, %v1137
  %v1139 = vshll.u32 2102212464, %v1127
  %v1140 = vshrl.u32 920167782, %v1128
  %v1141 = vor.u32 %v1139, %v1140
  %v1142 = vshll.u32 920167782, %v1127
  %v1143 = vshrl.u32 1326507024, %v1128
  %v1144 = vor.u32 %v1142, %v1143
  %vm1145 = vcmp.lt.s32.totalorder %v1126, 1
  %vm1146 = vcmp.lt.s32.totalorder %v1126, 2
  %vm1147 = vcmp.lt.s32.totalorder %v1126, 3
  %vm1148 = vcmp.lt.s32.totalorder %v1126, 4
  %v1149 = vsel %vm1145, %v1129, %v1132
  %v1150 = vsel %vm1148, %v1138, 2102212464
  %v1151 = vsel %vm1147, %v1135, %v1150
  %v1152 = vsel %vm1146, %v1149, %v1151
  %v1153 = vsel %vm1145, %v1132, %v1135
  %v1154 = vsel %vm1148, %v1141, 920167782
  %v1155 = vsel %vm1147, %v1138, %v1154
  %v1156 = vsel %vm1146, %v1153, %v1155
  %v1157 = vsel %vm1145, %v1135, %v1138
  %v1158 = vsel %vm1148, %v1144, 1326507024
  %v1159 = vsel %vm1147, %v1141, %v1158
  %v1160 = vsel %vm1146, %v1157, %v1159
  %v1161 = vshll.u32 %v1121, 8
  %v1162 = vmul.u32.u64.compose %v1161, %v1160
  %v1163 = vextract.low.u32 %v1162
  %v1164 = vextract.high.u32 %v1162
  %v1165 = vmul.u32.u64.compose %v1161, %v1156
  %v1166 = vextract.low.u32 %v1165
  %v1167 = vextract.high.u32 %v1165
  %v1168 = vmul.u32 %v1161, %v1152
  %v1169 = vadd.s32 %v1164, %v1166
  %vm1170 = vc.u32 %v1164, %v1166
  %v1171 = vadd.s32 %v1167, 1
  %v1172 = vsel %vm1170, %v1171, %v1167
  %v1173 = vadd.s32 %v1168, %v1172
  %v1174 = vadd.s32 %v1173, 536870912
  %v1175 = vshrl.u32 %v1174, 30
  %v1176 = vshll.u32 %v1175, 30
  %v1177 = vsub.s32 %v1173, %v1176
  %vm1178 = vcmp.lt.s32.totalorder %v1177, 0
  %v1179 = vsub.s32 0, %v1177
  %v1180 = vsel %vm1178, %v1179, %v1177
  %v1181 = vclz %v1180
  %v1182 = vsub.s32 %v1181, 2
  %vm1183 = vcmp.gt.s32.totalorder 0, %v1182
  %v1184 = vsel %vm1183, 0, %v1182
  %v1185 = vsub.s32 32, %v1184
  %v1186 = vshll.u32 %v1177, %v1184
  %v1187 = vshrl.u32 %v1169, %v1185
  %v1188 = vor.u32 %v1186, %v1187
  %v1189 = vsub.s32 4294967266, %v1184
  %v1190 = vadd.s32 %v1189, 127
  %v1191 = vshll.u32 %v1190, 23
  %v1192 = vor.u32 4788187, %v1191
  %v1193 = vand.u32 2147483647, %v1192
  %v1195 = vcvt.s32.f32 %v1188
  %v1196 = vmul.f32 %v1195, %v1193
  %v1197 = vxor.u32 %v1196, 2147483648
  %v1198 = vsel %vm1115, %v1197, %v1196
  %v1199 = vsub.s32 4, %v1175
  %v1200 = vsel %vm1115, %v1199, %v1175
  %v1201 = vsel %vm1114, %v182, %v1198
  %v1202 = vsel %vm1114, 0, %v1200
  %v1203 = vcosq.f32.pop %v1201
  %v1204 = vsinq.f32.pop %v1201
  %vm1205 = vweird.f32 %v182
  %v1206 = vadd.s32 %v1202, 3
  %v1207 = vand.u32 %v1206, 3
  %vm1208 = vcmp.lt.s32.totalorder %v1207, 2
  %vm1209 = vcmp.eq.s32.totalorder %v1207, 0
  %v1210 = vxor.u32 %v1204, 2147483648
  %v1211 = vsel %vm1209, %v1203, %v1210
  %vm1212 = vcmp.eq.s32.totalorder %v1207, 2
  %v1213 = vxor.u32 %v1203, 2147483648
  %v1214 = vsel %vm1212, %v1213, %v1204
  %v1215 = vsel %vm1208, %v1211, %v1214
  %v1216 = vsel %vm1205, nan, %v1215
  %v1217 = vand.u32 2147483647, %v184
  %vm1218 = vcmp.le.f32.partialorder %v1217, 0.7853982
  %vm1219 = vcmp.lt.s32.totalorder %v184, 0
  %v1220 = vand.u32 %v184, 2139095040
  %v1221 = vshrl.u32 %v1220, 23
  %v1222 = vsub.s32 %v1221, 127
  %v1223 = vand.u32 2147483647, %v184
  %v1224 = vand.u32 %v1223, 8388607
  %v1225 = vor.u32 %v1224, 8388608
  %v1226 = vsub.s32 0, %v1225
  %v1227 = vadd.s32 %v1222, 1
  %vm1228 = vcmp.gt.s32.totalorder %v1227, 0
  %v1229 = vsel %vm1228, %v1227, 0
  %v1230 = vshrl.u32 %v1229, 5
  %v1231 = vand.u32 %v1229, 31
  %v1232 = vsub.s32 32, %v1231
  %v1233 = vshrl.u32 683565275, %v1232
  %v1234 = vshll.u32 683565275, %v1231
  %v1235 = vshrl.u32 2475754826, %v1232
  %v1236 = vor.u32 %v1234, %v1235
  %v1237 = vshll.u32 2475754826, %v1231
  %v1238 = vshrl.u32 2131351028, %v1232
  %v1239 = vor.u32 %v1237, %v1238
  %v1240 = vshll.u32 2131351028, %v1231
  %v1241 = vshrl.u32 2102212464, %v1232
  %v1242 = vor.u32 %v1240, %v1241
  %v1243 = vshll.u32 2102212464, %v1231
  %v1244 = vshrl.u32 920167782, %v1232
  %v1245 = vor.u32 %v1243, %v1244
  %v1246 = vshll.u32 920167782, %v1231
  %v1247 = vshrl.u32 1326507024, %v1232
  %v1248 = vor.u32 %v1246, %v1247
  %vm1249 = vcmp.lt.s32.totalorder %v1230, 1
  %vm1250 = vcmp.lt.s32.totalorder %v1230, 2
  %vm1251 = vcmp.lt.s32.totalorder %v1230, 3
  %vm1252 = vcmp.lt.s32.totalorder %v1230, 4
  %v1253 = vsel %vm1249, %v1233, %v1236
  %v1254 = vsel %vm1252, %v1242, 2102212464
  %v1255 = vsel %vm1251, %v1239, %v1254
  %v1256 = vsel %vm1250, %v1253, %v1255
  %v1257 = vsel %vm1249, %v1236, %v1239
  %v1258 = vsel %vm1252, %v1245, 920167782
  %v1259 = vsel %vm1251, %v1242, %v1258
  %v1260 = vsel %vm1250, %v1257, %v1259
  %v1261 = vsel %vm1249, %v1239, %v1242
  %v1262 = vsel %vm1252, %v1248, 1326507024
  %v1263 = vsel %vm1251, %v1245, %v1262
  %v1264 = vsel %vm1250, %v1261, %v1263
  %v1265 = vshll.u32 %v1225, 8
  %v1266 = vmul.u32.u64.compose %v1265, %v1264
  %v1267 = vextract.low.u32 %v1266
  %v1268 = vextract.high.u32 %v1266
  %v1269 = vmul.u32.u64.compose %v1265, %v1260
  %v1270 = vextract.low.u32 %v1269
  %v1271 = vextract.high.u32 %v1269
  %v1272 = vmul.u32 %v1265, %v1256
  %v1273 = vadd.s32 %v1268, %v1270
  %vm1274 = vc.u32 %v1268, %v1270
  %v1275 = vadd.s32 %v1271, 1
  %v1276 = vsel %vm1274, %v1275, %v1271
  %v1277 = vadd.s32 %v1272, %v1276
  %v1278 = vadd.s32 %v1277, 536870912
  %v1279 = vshrl.u32 %v1278, 30
  %v1280 = vshll.u32 %v1279, 30
  %v1281 = vsub.s32 %v1277, %v1280
  %vm1282 = vcmp.lt.s32.totalorder %v1281, 0
  %v1283 = vsub.s32 0, %v1281
  %v1284 = vsel %vm1282, %v1283, %v1281
  %v1285 = vclz %v1284
  %v1286 = vsub.s32 %v1285, 2
  %vm1287 = vcmp.gt.s32.totalorder 0, %v1286
  %v1288 = vsel %vm1287, 0, %v1286
  %v1289 = vsub.s32 32, %v1288
  %v1290 = vshll.u32 %v1281, %v1288
  %v1291 = vshrl.u32 %v1273, %v1289
  %v1292 = vor.u32 %v1290, %v1291
  %v1293 = vsub.s32 4294967266, %v1288
  %v1294 = vadd.s32 %v1293, 127
  %v1295 = vshll.u32 %v1294, 23
  %v1296 = vor.u32 4788187, %v1295
  %v1297 = vand.u32 2147483647, %v1296
  %v1299 = vcvt.s32.f32 %v1292
  %v1300 = vmul.f32 %v1299, %v1297
  %v1301 = vxor.u32 %v1300, 2147483648
  %v1302 = vsel %vm1219, %v1301, %v1300
  %v1303 = vsub.s32 4, %v1279
  %v1304 = vsel %vm1219, %v1303, %v1279
  %v1305 = vsel %vm1218, %v184, %v1302
  %v1306 = vsel %vm1218, 0, %v1304
  %v1307 = vcosq.f32.pop %v1305
  %v1308 = vsinq.f32.pop %v1305
  %vm1309 = vweird.f32 %v184
  %v1310 = vadd.s32 %v1306, 3
  %v1311 = vand.u32 %v1310, 3
  %vm1312 = vcmp.lt.s32.totalorder %v1311, 2
  %vm1313 = vcmp.eq.s32.totalorder %v1311, 0
  %v1314 = vxor.u32 %v1308, 2147483648
  %v1315 = vsel %vm1313, %v1307, %v1314
  %vm1316 = vcmp.eq.s32.totalorder %v1311, 2
  %v1317 = vxor.u32 %v1307, 2147483648
  %v1318 = vsel %vm1316, %v1317, %v1308
  %v1319 = vsel %vm1312, %v1315, %v1318
  %v1320 = vsel %vm1309, nan, %v1319
  %v1321 = vand.u32 2147483647, %v271
  %vm1322 = vcmp.le.f32.partialorder %v1321, 0.7853982
  %vm1323 = vcmp.lt.s32.totalorder %v271, 0
  %v1324 = vand.u32 %v271, 2139095040
  %v1325 = vshrl.u32 %v1324, 23
  %v1326 = vsub.s32 %v1325, 127
  %v1327 = vand.u32 2147483647, %v271
  %v1328 = vand.u32 %v1327, 8388607
  %v1329 = vor.u32 %v1328, 8388608
  %v1330 = vsub.s32 0, %v1329
  %v1331 = vadd.s32 %v1326, 1
  %vm1332 = vcmp.gt.s32.totalorder %v1331, 0
  %v1333 = vsel %vm1332, %v1331, 0
  %v1334 = vshrl.u32 %v1333, 5
  %v1335 = vand.u32 %v1333, 31
  %v1336 = vsub.s32 32, %v1335
  %v1337 = vshrl.u32 683565275, %v1336
  %v1338 = vshll.u32 683565275, %v1335
  %v1339 = vshrl.u32 2475754826, %v1336
  %v1340 = vor.u32 %v1338, %v1339
  %v1341 = vshll.u32 2475754826, %v1335
  %v1342 = vshrl.u32 2131351028, %v1336
  %v1343 = vor.u32 %v1341, %v1342
  %v1344 = vshll.u32 2131351028, %v1335
  %v1345 = vshrl.u32 2102212464, %v1336
  %v1346 = vor.u32 %v1344, %v1345
  %v1347 = vshll.u32 2102212464, %v1335
  %v1348 = vshrl.u32 920167782, %v1336
  %v1349 = vor.u32 %v1347, %v1348
  %v1350 = vshll.u32 920167782, %v1335
  %v1351 = vshrl.u32 1326507024, %v1336
  %v1352 = vor.u32 %v1350, %v1351
  %vm1353 = vcmp.lt.s32.totalorder %v1334, 1
  %vm1354 = vcmp.lt.s32.totalorder %v1334, 2
  %vm1355 = vcmp.lt.s32.totalorder %v1334, 3
  %vm1356 = vcmp.lt.s32.totalorder %v1334, 4
  %v1357 = vsel %vm1353, %v1337, %v1340
  %v1358 = vsel %vm1356, %v1346, 2102212464
  %v1359 = vsel %vm1355, %v1343, %v1358
  %v1360 = vsel %vm1354, %v1357, %v1359
  %v1361 = vsel %vm1353, %v1340, %v1343
  %v1362 = vsel %vm1356, %v1349, 920167782
  %v1363 = vsel %vm1355, %v1346, %v1362
  %v1364 = vsel %vm1354, %v1361, %v1363
  %v1365 = vsel %vm1353, %v1343, %v1346
  %v1366 = vsel %vm1356, %v1352, 1326507024
  %v1367 = vsel %vm1355, %v1349, %v1366
  %v1368 = vsel %vm1354, %v1365, %v1367
  %v1369 = vshll.u32 %v1329, 8
  %v1370 = vmul.u32.u64.compose %v1369, %v1368
  %v1371 = vextract.low.u32 %v1370
  %v1372 = vextract.high.u32 %v1370
  %v1373 = vmul.u32.u64.compose %v1369, %v1364
  %v1374 = vextract.low.u32 %v1373
  %v1375 = vextract.high.u32 %v1373
  %v1376 = vmul.u32 %v1369, %v1360
  %v1377 = vadd.s32 %v1372, %v1374
  %vm1378 = vc.u32 %v1372, %v1374
  %v1379 = vadd.s32 %v1375, 1
  %v1380 = vsel %vm1378, %v1379, %v1375
  %v1381 = vadd.s32 %v1376, %v1380
  %v1382 = vadd.s32 %v1381, 536870912
  %v1383 = vshrl.u32 %v1382, 30
  %v1384 = vshll.u32 %v1383, 30
  %v1385 = vsub.s32 %v1381, %v1384
  %vm1386 = vcmp.lt.s32.totalorder %v1385, 0
  %v1387 = vsub.s32 0, %v1385
  %v1388 = vsel %vm1386, %v1387, %v1385
  %v1389 = vclz %v1388
  %v1390 = vsub.s32 %v1389, 2
  %vm1391 = vcmp.gt.s32.totalorder 0, %v1390
  %v1392 = vsel %vm1391, 0, %v1390
  %v1393 = vsub.s32 32, %v1392
  %v1394 = vshll.u32 %v1385, %v1392
  %v1395 = vshrl.u32 %v1377, %v1393
  %v1396 = vor.u32 %v1394, %v1395
  %v1397 = vsub.s32 4294967266, %v1392
  %v1398 = vadd.s32 %v1397, 127
  %v1399 = vshll.u32 %v1398, 23
  %v1400 = vor.u32 4788187, %v1399
  %v1401 = vand.u32 2147483647, %v1400
  %v1403 = vcvt.s32.f32 %v1396
  %v1404 = vmul.f32 %v1403, %v1401
  %v1405 = vxor.u32 %v1404, 2147483648
  %v1406 = vsel %vm1323, %v1405, %v1404
  %v1407 = vsub.s32 4, %v1383
  %v1408 = vsel %vm1323, %v1407, %v1383
  %v1409 = vsel %vm1322, %v271, %v1406
  %v1410 = vsel %vm1322, 0, %v1408
  %v1411 = vcosq.f32.pop %v1409
  %v1412 = vsinq.f32.pop %v1409
  %vm1413 = vweird.f32 %v271
  %v1414 = vadd.s32 %v1410, 3
  %v1415 = vand.u32 %v1414, 3
  %vm1416 = vcmp.lt.s32.totalorder %v1415, 2
  %vm1417 = vcmp.eq.s32.totalorder %v1415, 0
  %v1418 = vxor.u32 %v1412, 2147483648
  %v1419 = vsel %vm1417, %v1411, %v1418
  %vm1420 = vcmp.eq.s32.totalorder %v1415, 2
  %v1421 = vxor.u32 %v1411, 2147483648
  %v1422 = vsel %vm1420, %v1421, %v1412
  %v1423 = vsel %vm1416, %v1419, %v1422
  %v1424 = vsel %vm1413, nan, %v1423
  %v1425 = vand.u32 2147483647, %v273
  %vm1426 = vcmp.le.f32.partialorder %v1425, 0.7853982
  %vm1427 = vcmp.lt.s32.totalorder %v273, 0
  %v1428 = vand.u32 %v273, 2139095040
  %v1429 = vshrl.u32 %v1428, 23
  %v1430 = vsub.s32 %v1429, 127
  %v1431 = vand.u32 2147483647, %v273
  %v1432 = vand.u32 %v1431, 8388607
  %v1433 = vor.u32 %v1432, 8388608
  %v1434 = vsub.s32 0, %v1433
  %v1435 = vadd.s32 %v1430, 1
  %vm1436 = vcmp.gt.s32.totalorder %v1435, 0
  %v1437 = vsel %vm1436, %v1435, 0
  %v1438 = vshrl.u32 %v1437, 5
  %v1439 = vand.u32 %v1437, 31
  %v1440 = vsub.s32 32, %v1439
  %v1441 = vshrl.u32 683565275, %v1440
  %v1442 = vshll.u32 683565275, %v1439
  %v1443 = vshrl.u32 2475754826, %v1440
  %v1444 = vor.u32 %v1442, %v1443
  %v1445 = vshll.u32 2475754826, %v1439
  %v1446 = vshrl.u32 2131351028, %v1440
  %v1447 = vor.u32 %v1445, %v1446
  %v1448 = vshll.u32 2131351028, %v1439
  %v1449 = vshrl.u32 2102212464, %v1440
  %v1450 = vor.u32 %v1448, %v1449
  %v1451 = vshll.u32 2102212464, %v1439
  %v1452 = vshrl.u32 920167782, %v1440
  %v1453 = vor.u32 %v1451, %v1452
  %v1454 = vshll.u32 920167782, %v1439
  %v1455 = vshrl.u32 1326507024, %v1440
  %v1456 = vor.u32 %v1454, %v1455
  %vm1457 = vcmp.lt.s32.totalorder %v1438, 1
  %vm1458 = vcmp.lt.s32.totalorder %v1438, 2
  %vm1459 = vcmp.lt.s32.totalorder %v1438, 3
  %vm1460 = vcmp.lt.s32.totalorder %v1438, 4
  %v1461 = vsel %vm1457, %v1441, %v1444
  %v1462 = vsel %vm1460, %v1450, 2102212464
  %v1463 = vsel %vm1459, %v1447, %v1462
  %v1464 = vsel %vm1458, %v1461, %v1463
  %v1465 = vsel %vm1457, %v1444, %v1447
  %v1466 = vsel %vm1460, %v1453, 920167782
  %v1467 = vsel %vm1459, %v1450, %v1466
  %v1468 = vsel %vm1458, %v1465, %v1467
  %v1469 = vsel %vm1457, %v1447, %v1450
  %v1470 = vsel %vm1460, %v1456, 1326507024
  %v1471 = vsel %vm1459, %v1453, %v1470
  %v1472 = vsel %vm1458, %v1469, %v1471
  %v1473 = vshll.u32 %v1433, 8
  %v1474 = vmul.u32.u64.compose %v1473, %v1472
  %v1475 = vextract.low.u32 %v1474
  %v1476 = vextract.high.u32 %v1474
  %v1477 = vmul.u32.u64.compose %v1473, %v1468
  %v1478 = vextract.low.u32 %v1477
  %v1479 = vextract.high.u32 %v1477
  %v1480 = vmul.u32 %v1473, %v1464
  %v1481 = vadd.s32 %v1476, %v1478
  %vm1482 = vc.u32 %v1476, %v1478
  %v1483 = vadd.s32 %v1479, 1
  %v1484 = vsel %vm1482, %v1483, %v1479
  %v1485 = vadd.s32 %v1480, %v1484
  %v1486 = vadd.s32 %v1485, 536870912
  %v1487 = vshrl.u32 %v1486, 30
  %v1488 = vshll.u32 %v1487, 30
  %v1489 = vsub.s32 %v1485, %v1488
  %vm1490 = vcmp.lt.s32.totalorder %v1489, 0
  %v1491 = vsub.s32 0, %v1489
  %v1492 = vsel %vm1490, %v1491, %v1489
  %v1493 = vclz %v1492
  %v1494 = vsub.s32 %v1493, 2
  %vm1495 = vcmp.gt.s32.totalorder 0, %v1494
  %v1496 = vsel %vm1495, 0, %v1494
  %v1497 = vsub.s32 32, %v1496
  %v1498 = vshll.u32 %v1489, %v1496
  %v1499 = vshrl.u32 %v1481, %v1497
  %v1500 = vor.u32 %v1498, %v1499
  %v1501 = vsub.s32 4294967266, %v1496
  %v1502 = vadd.s32 %v1501, 127
  %v1503 = vshll.u32 %v1502, 23
  %v1504 = vor.u32 4788187, %v1503
  %v1505 = vand.u32 2147483647, %v1504
  %v1507 = vcvt.s32.f32 %v1500
  %v1508 = vmul.f32 %v1507, %v1505
  %v1509 = vxor.u32 %v1508, 2147483648
  %v1510 = vsel %vm1427, %v1509, %v1508
  %v1511 = vsub.s32 4, %v1487
  %v1512 = vsel %vm1427, %v1511, %v1487
  %v1513 = vsel %vm1426, %v273, %v1510
  %v1514 = vsel %vm1426, 0, %v1512
  %v1515 = vcosq.f32.pop %v1513
  %v1516 = vsinq.f32.pop %v1513
  %vm1517 = vweird.f32 %v273
  %v1518 = vadd.s32 %v1514, 3
  %v1519 = vand.u32 %v1518, 3
  %vm1520 = vcmp.lt.s32.totalorder %v1519, 2
  %vm1521 = vcmp.eq.s32.totalorder %v1519, 0
  %v1522 = vxor.u32 %v1516, 2147483648
  %v1523 = vsel %vm1521, %v1515, %v1522
  %vm1524 = vcmp.eq.s32.totalorder %v1519, 2
  %v1525 = vxor.u32 %v1515, 2147483648
  %v1526 = vsel %vm1524, %v1525, %v1516
  %v1527 = vsel %vm1520, %v1523, %v1526
  %v1528 = vsel %vm1517, nan, %v1527
  %v1529 = vand.u32 2147483647, %v188
  %vm1530 = vcmp.le.f32.partialorder %v1529, 0.7853982
  %vm1531 = vcmp.lt.s32.totalorder %v188, 0
  %v1532 = vand.u32 %v188, 2139095040
  %v1533 = vshrl.u32 %v1532, 23
  %v1534 = vsub.s32 %v1533, 127
  %v1535 = vand.u32 2147483647, %v188
  %v1536 = vand.u32 %v1535, 8388607
  %v1537 = vor.u32 %v1536, 8388608
  %v1538 = vsub.s32 0, %v1537
  %v1539 = vadd.s32 %v1534, 1
  %vm1540 = vcmp.gt.s32.totalorder %v1539, 0
  %v1541 = vsel %vm1540, %v1539, 0
  %v1542 = vshrl.u32 %v1541, 5
  %v1543 = vand.u32 %v1541, 31
  %v1544 = vsub.s32 32, %v1543
  %v1545 = vshrl.u32 683565275, %v1544
  %v1546 = vshll.u32 683565275, %v1543
  %v1547 = vshrl.u32 2475754826, %v1544
  %v1548 = vor.u32 %v1546, %v1547
  %v1549 = vshll.u32 2475754826, %v1543
  %v1550 = vshrl.u32 2131351028, %v1544
  %v1551 = vor.u32 %v1549, %v1550
  %v1552 = vshll.u32 2131351028, %v1543
  %v1553 = vshrl.u32 2102212464, %v1544
  %v1554 = vor.u32 %v1552, %v1553
  %v1555 = vshll.u32 2102212464, %v1543
  %v1556 = vshrl.u32 920167782, %v1544
  %v1557 = vor.u32 %v1555, %v1556
  %v1558 = vshll.u32 920167782, %v1543
  %v1559 = vshrl.u32 1326507024, %v1544
  %v1560 = vor.u32 %v1558, %v1559
  %vm1561 = vcmp.lt.s32.totalorder %v1542, 1
  %vm1562 = vcmp.lt.s32.totalorder %v1542, 2
  %vm1563 = vcmp.lt.s32.totalorder %v1542, 3
  %vm1564 = vcmp.lt.s32.totalorder %v1542, 4
  %v1565 = vsel %vm1561, %v1545, %v1548
  %v1566 = vsel %vm1564, %v1554, 2102212464
  %v1567 = vsel %vm1563, %v1551, %v1566
  %v1568 = vsel %vm1562, %v1565, %v1567
  %v1569 = vsel %vm1561, %v1548, %v1551
  %v1570 = vsel %vm1564, %v1557, 920167782
  %v1571 = vsel %vm1563, %v1554, %v1570
  %v1572 = vsel %vm1562, %v1569, %v1571
  %v1573 = vsel %vm1561, %v1551, %v1554
  %v1574 = vsel %vm1564, %v1560, 1326507024
  %v1575 = vsel %vm1563, %v1557, %v1574
  %v1576 = vsel %vm1562, %v1573, %v1575
  %v1577 = vshll.u32 %v1537, 8
  %v1578 = vmul.u32.u64.compose %v1577, %v1576
  %v1579 = vextract.low.u32 %v1578
  %v1580 = vextract.high.u32 %v1578
  %v1581 = vmul.u32.u64.compose %v1577, %v1572
  %v1582 = vextract.low.u32 %v1581
  %v1583 = vextract.high.u32 %v1581
  %v1584 = vmul.u32 %v1577, %v1568
  %v1585 = vadd.s32 %v1580, %v1582
  %vm1586 = vc.u32 %v1580, %v1582
  %v1587 = vadd.s32 %v1583, 1
  %v1588 = vsel %vm1586, %v1587, %v1583
  %v1589 = vadd.s32 %v1584, %v1588
  %v1590 = vadd.s32 %v1589, 536870912
  %v1591 = vshrl.u32 %v1590, 30
  %v1592 = vshll.u32 %v1591, 30
  %v1593 = vsub.s32 %v1589, %v1592
  %vm1594 = vcmp.lt.s32.totalorder %v1593, 0
  %v1595 = vsub.s32 0, %v1593
  %v1596 = vsel %vm1594, %v1595, %v1593
  %v1597 = vclz %v1596
  %v1598 = vsub.s32 %v1597, 2
  %vm1599 = vcmp.gt.s32.totalorder 0, %v1598
  %v1600 = vsel %vm1599, 0, %v1598
  %v1601 = vsub.s32 32, %v1600
  %v1602 = vshll.u32 %v1593, %v1600
  %v1603 = vshrl.u32 %v1585, %v1601
  %v1604 = vor.u32 %v1602, %v1603
  %v1605 = vsub.s32 4294967266, %v1600
  %v1606 = vadd.s32 %v1605, 127
  %v1607 = vshll.u32 %v1606, 23
  %v1608 = vor.u32 4788187, %v1607
  %v1609 = vand.u32 2147483647, %v1608
  %v1611 = vcvt.s32.f32 %v1604
  %v1612 = vmul.f32 %v1611, %v1609
  %v1613 = vxor.u32 %v1612, 2147483648
  %v1614 = vsel %vm1531, %v1613, %v1612
  %v1615 = vsub.s32 4, %v1591
  %v1616 = vsel %vm1531, %v1615, %v1591
  %v1617 = vsel %vm1530, %v188, %v1614
  %v1618 = vsel %vm1530, 0, %v1616
  %v1619 = vcosq.f32.pop %v1617
  %v1620 = vsinq.f32.pop %v1617
  %vm1621 = vweird.f32 %v188
  %v1622 = vadd.s32 %v1618, 3
  %v1623 = vand.u32 %v1622, 3
  %vm1624 = vcmp.lt.s32.totalorder %v1623, 2
  %vm1625 = vcmp.eq.s32.totalorder %v1623, 0
  %v1626 = vxor.u32 %v1620, 2147483648
  %v1627 = vsel %vm1625, %v1619, %v1626
  %vm1628 = vcmp.eq.s32.totalorder %v1623, 2
  %v1629 = vxor.u32 %v1619, 2147483648
  %v1630 = vsel %vm1628, %v1629, %v1620
  %v1631 = vsel %vm1624, %v1627, %v1630
  %v1632 = vsel %vm1621, nan, %v1631
  %v1633 = vand.u32 2147483647, %v190
  %vm1634 = vcmp.le.f32.partialorder %v1633, 0.7853982
  %vm1635 = vcmp.lt.s32.totalorder %v190, 0
  %v1636 = vand.u32 %v190, 2139095040
  %v1637 = vshrl.u32 %v1636, 23
  %v1638 = vsub.s32 %v1637, 127
  %v1639 = vand.u32 2147483647, %v190
  %v1640 = vand.u32 %v1639, 8388607
  %v1641 = vor.u32 %v1640, 8388608
  %v1642 = vsub.s32 0, %v1641
  %v1643 = vadd.s32 %v1638, 1
  %vm1644 = vcmp.gt.s32.totalorder %v1643, 0
  %v1645 = vsel %vm1644, %v1643, 0
  %v1646 = vshrl.u32 %v1645, 5
  %v1647 = vand.u32 %v1645, 31
  %v1648 = vsub.s32 32, %v1647
  %v1649 = vshrl.u32 683565275, %v1648
  %v1650 = vshll.u32 683565275, %v1647
  %v1651 = vshrl.u32 2475754826, %v1648
  %v1652 = vor.u32 %v1650, %v1651
  %v1653 = vshll.u32 2475754826, %v1647
  %v1654 = vshrl.u32 2131351028, %v1648
  %v1655 = vor.u32 %v1653, %v1654
  %v1656 = vshll.u32 2131351028, %v1647
  %v1657 = vshrl.u32 2102212464, %v1648
  %v1658 = vor.u32 %v1656, %v1657
  %v1659 = vshll.u32 2102212464, %v1647
  %v1660 = vshrl.u32 920167782, %v1648
  %v1661 = vor.u32 %v1659, %v1660
  %v1662 = vshll.u32 920167782, %v1647
  %v1663 = vshrl.u32 1326507024, %v1648
  %v1664 = vor.u32 %v1662, %v1663
  %vm1665 = vcmp.lt.s32.totalorder %v1646, 1
  %vm1666 = vcmp.lt.s32.totalorder %v1646, 2
  %vm1667 = vcmp.lt.s32.totalorder %v1646, 3
  %vm1668 = vcmp.lt.s32.totalorder %v1646, 4
  %v1669 = vsel %vm1665, %v1649, %v1652
  %v1670 = vsel %vm1668, %v1658, 2102212464
  %v1671 = vsel %vm1667, %v1655, %v1670
  %v1672 = vsel %vm1666, %v1669, %v1671
  %v1673 = vsel %vm1665, %v1652, %v1655
  %v1674 = vsel %vm1668, %v1661, 920167782
  %v1675 = vsel %vm1667, %v1658, %v1674
  %v1676 = vsel %vm1666, %v1673, %v1675
  %v1677 = vsel %vm1665, %v1655, %v1658
  %v1678 = vsel %vm1668, %v1664, 1326507024
  %v1679 = vsel %vm1667, %v1661, %v1678
  %v1680 = vsel %vm1666, %v1677, %v1679
  %v1681 = vshll.u32 %v1641, 8
  %v1682 = vmul.u32.u64.compose %v1681, %v1680
  %v1683 = vextract.low.u32 %v1682
  %v1684 = vextract.high.u32 %v1682
  %v1685 = vmul.u32.u64.compose %v1681, %v1676
  %v1686 = vextract.low.u32 %v1685
  %v1687 = vextract.high.u32 %v1685
  %v1688 = vmul.u32 %v1681, %v1672
  %v1689 = vadd.s32 %v1684, %v1686
  %vm1690 = vc.u32 %v1684, %v1686
  %v1691 = vadd.s32 %v1687, 1
  %v1692 = vsel %vm1690, %v1691, %v1687
  %v1693 = vadd.s32 %v1688, %v1692
  %v1694 = vadd.s32 %v1693, 536870912
  %v1695 = vshrl.u32 %v1694, 30
  %v1696 = vshll.u32 %v1695, 30
  %v1697 = vsub.s32 %v1693, %v1696
  %vm1698 = vcmp.lt.s32.totalorder %v1697, 0
  %v1699 = vsub.s32 0, %v1697
  %v1700 = vsel %vm1698, %v1699, %v1697
  %v1701 = vclz %v1700
  %v1702 = vsub.s32 %v1701, 2
  %vm1703 = vcmp.gt.s32.totalorder 0, %v1702
  %v1704 = vsel %vm1703, 0, %v1702
  %v1705 = vsub.s32 32, %v1704
  %v1706 = vshll.u32 %v1697, %v1704
  %v1707 = vshrl.u32 %v1689, %v1705
  %v1708 = vor.u32 %v1706, %v1707
  %v1709 = vsub.s32 4294967266, %v1704
  %v1710 = vadd.s32 %v1709, 127
  %v1711 = vshll.u32 %v1710, 23
  %v1712 = vor.u32 4788187, %v1711
  %v1713 = vand.u32 2147483647, %v1712
  %v1715 = vcvt.s32.f32 %v1708
  %v1716 = vmul.f32 %v1715, %v1713
  %v1717 = vxor.u32 %v1716, 2147483648
  %v1718 = vsel %vm1635, %v1717, %v1716
  %v1719 = vsub.s32 4, %v1695
  %v1720 = vsel %vm1635, %v1719, %v1695
  %v1721 = vsel %vm1634, %v190, %v1718
  %v1722 = vsel %vm1634, 0, %v1720
  %v1723 = vcosq.f32.pop %v1721
  %v1724 = vsinq.f32.pop %v1721
  %vm1725 = vweird.f32 %v190
  %v1726 = vadd.s32 %v1722, 3
  %v1727 = vand.u32 %v1726, 3
  %vm1728 = vcmp.lt.s32.totalorder %v1727, 2
  %vm1729 = vcmp.eq.s32.totalorder %v1727, 0
  %v1730 = vxor.u32 %v1724, 2147483648
  %v1731 = vsel %vm1729, %v1723, %v1730
  %vm1732 = vcmp.eq.s32.totalorder %v1727, 2
  %v1733 = vxor.u32 %v1723, 2147483648
  %v1734 = vsel %vm1732, %v1733, %v1724
  %v1735 = vsel %vm1728, %v1731, %v1734
  %v1736 = vsel %vm1725, nan, %v1735
  %v1737 = vand.u32 2147483647, %v277
  %vm1738 = vcmp.le.f32.partialorder %v1737, 0.7853982
  %vm1739 = vcmp.lt.s32.totalorder %v277, 0
  %v1740 = vand.u32 %v277, 2139095040
  %v1741 = vshrl.u32 %v1740, 23
  %v1742 = vsub.s32 %v1741, 127
  %v1743 = vand.u32 2147483647, %v277
  %v1744 = vand.u32 %v1743, 8388607
  %v1745 = vor.u32 %v1744, 8388608
  %v1746 = vsub.s32 0, %v1745
  %v1747 = vadd.s32 %v1742, 1
  %vm1748 = vcmp.gt.s32.totalorder %v1747, 0
  %v1749 = vsel %vm1748, %v1747, 0
  %v1750 = vshrl.u32 %v1749, 5
  %v1751 = vand.u32 %v1749, 31
  %v1752 = vsub.s32 32, %v1751
  %v1753 = vshrl.u32 683565275, %v1752
  %v1754 = vshll.u32 683565275, %v1751
  %v1755 = vshrl.u32 2475754826, %v1752
  %v1756 = vor.u32 %v1754, %v1755
  %v1757 = vshll.u32 2475754826, %v1751
  %v1758 = vshrl.u32 2131351028, %v1752
  %v1759 = vor.u32 %v1757, %v1758
  %v1760 = vshll.u32 2131351028, %v1751
  %v1761 = vshrl.u32 2102212464, %v1752
  %v1762 = vor.u32 %v1760, %v1761
  %v1763 = vshll.u32 2102212464, %v1751
  %v1764 = vshrl.u32 920167782, %v1752
  %v1765 = vor.u32 %v1763, %v1764
  %v1766 = vshll.u32 920167782, %v1751
  %v1767 = vshrl.u32 1326507024, %v1752
  %v1768 = vor.u32 %v1766, %v1767
  %vm1769 = vcmp.lt.s32.totalorder %v1750, 1
  %vm1770 = vcmp.lt.s32.totalorder %v1750, 2
  %vm1771 = vcmp.lt.s32.totalorder %v1750, 3
  %vm1772 = vcmp.lt.s32.totalorder %v1750, 4
  %v1773 = vsel %vm1769, %v1753, %v1756
  %v1774 = vsel %vm1772, %v1762, 2102212464
  %v1775 = vsel %vm1771, %v1759, %v1774
  %v1776 = vsel %vm1770, %v1773, %v1775
  %v1777 = vsel %vm1769, %v1756, %v1759
  %v1778 = vsel %vm1772, %v1765, 920167782
  %v1779 = vsel %vm1771, %v1762, %v1778
  %v1780 = vsel %vm1770, %v1777, %v1779
  %v1781 = vsel %vm1769, %v1759, %v1762
  %v1782 = vsel %vm1772, %v1768, 1326507024
  %v1783 = vsel %vm1771, %v1765, %v1782
  %v1784 = vsel %vm1770, %v1781, %v1783
  %v1785 = vshll.u32 %v1745, 8
  %v1786 = vmul.u32.u64.compose %v1785, %v1784
  %v1787 = vextract.low.u32 %v1786
  %v1788 = vextract.high.u32 %v1786
  %v1789 = vmul.u32.u64.compose %v1785, %v1780
  %v1790 = vextract.low.u32 %v1789
  %v1791 = vextract.high.u32 %v1789
  %v1792 = vmul.u32 %v1785, %v1776
  %v1793 = vadd.s32 %v1788, %v1790
  %vm1794 = vc.u32 %v1788, %v1790
  %v1795 = vadd.s32 %v1791, 1
  %v1796 = vsel %vm1794, %v1795, %v1791
  %v1797 = vadd.s32 %v1792, %v1796
  %v1798 = vadd.s32 %v1797, 536870912
  %v1799 = vshrl.u32 %v1798, 30
  %v1800 = vshll.u32 %v1799, 30
  %v1801 = vsub.s32 %v1797, %v1800
  %vm1802 = vcmp.lt.s32.totalorder %v1801, 0
  %v1803 = vsub.s32 0, %v1801
  %v1804 = vsel %vm1802, %v1803, %v1801
  %v1805 = vclz %v1804
  %v1806 = vsub.s32 %v1805, 2
  %vm1807 = vcmp.gt.s32.totalorder 0, %v1806
  %v1808 = vsel %vm1807, 0, %v1806
  %v1809 = vsub.s32 32, %v1808
  %v1810 = vshll.u32 %v1801, %v1808
  %v1811 = vshrl.u32 %v1793, %v1809
  %v1812 = vor.u32 %v1810, %v1811
  %v1813 = vsub.s32 4294967266, %v1808
  %v1814 = vadd.s32 %v1813, 127
  %v1815 = vshll.u32 %v1814, 23
  %v1816 = vor.u32 4788187, %v1815
  %v1817 = vand.u32 2147483647, %v1816
  %v1819 = vcvt.s32.f32 %v1812
  %v1820 = vmul.f32 %v1819, %v1817
  %v1821 = vxor.u32 %v1820, 2147483648
  %v1822 = vsel %vm1739, %v1821, %v1820
  %v1823 = vsub.s32 4, %v1799
  %v1824 = vsel %vm1739, %v1823, %v1799
  %v1825 = vsel %vm1738, %v277, %v1822
  %v1826 = vsel %vm1738, 0, %v1824
  %v1827 = vcosq.f32.pop %v1825
  %v1828 = vsinq.f32.pop %v1825
  %vm1829 = vweird.f32 %v277
  %v1830 = vadd.s32 %v1826, 3
  %v1831 = vand.u32 %v1830, 3
  %vm1832 = vcmp.lt.s32.totalorder %v1831, 2
  %vm1833 = vcmp.eq.s32.totalorder %v1831, 0
  %v1834 = vxor.u32 %v1828, 2147483648
  %v1835 = vsel %vm1833, %v1827, %v1834
  %vm1836 = vcmp.eq.s32.totalorder %v1831, 2
  %v1837 = vxor.u32 %v1827, 2147483648
  %v1838 = vsel %vm1836, %v1837, %v1828
  %v1839 = vsel %vm1832, %v1835, %v1838
  %v1840 = vsel %vm1829, nan, %v1839
  %v1841 = vand.u32 2147483647, %v279
  %vm1842 = vcmp.le.f32.partialorder %v1841, 0.7853982
  %vm1843 = vcmp.lt.s32.totalorder %v279, 0
  %v1844 = vand.u32 %v279, 2139095040
  %v1845 = vshrl.u32 %v1844, 23
  %v1846 = vsub.s32 %v1845, 127
  %v1847 = vand.u32 2147483647, %v279
  %v1848 = vand.u32 %v1847, 8388607
  %v1849 = vor.u32 %v1848, 8388608
  %v1850 = vsub.s32 0, %v1849
  %v1851 = vadd.s32 %v1846, 1
  %vm1852 = vcmp.gt.s32.totalorder %v1851, 0
  %v1853 = vsel %vm1852, %v1851, 0
  %v1854 = vshrl.u32 %v1853, 5
  %v1855 = vand.u32 %v1853, 31
  %v1856 = vsub.s32 32, %v1855
  %v1857 = vshrl.u32 683565275, %v1856
  %v1858 = vshll.u32 683565275, %v1855
  %v1859 = vshrl.u32 2475754826, %v1856
  %v1860 = vor.u32 %v1858, %v1859
  %v1861 = vshll.u32 2475754826, %v1855
  %v1862 = vshrl.u32 2131351028, %v1856
  %v1863 = vor.u32 %v1861, %v1862
  %v1864 = vshll.u32 2131351028, %v1855
  %v1865 = vshrl.u32 2102212464, %v1856
  %v1866 = vor.u32 %v1864, %v1865
  %v1867 = vshll.u32 2102212464, %v1855
  %v1868 = vshrl.u32 920167782, %v1856
  %v1869 = vor.u32 %v1867, %v1868
  %v1870 = vshll.u32 920167782, %v1855
  %v1871 = vshrl.u32 1326507024, %v1856
  %v1872 = vor.u32 %v1870, %v1871
  %vm1873 = vcmp.lt.s32.totalorder %v1854, 1
  %vm1874 = vcmp.lt.s32.totalorder %v1854, 2
  %vm1875 = vcmp.lt.s32.totalorder %v1854, 3
  %vm1876 = vcmp.lt.s32.totalorder %v1854, 4
  %v1877 = vsel %vm1873, %v1857, %v1860
  %v1878 = vsel %vm1876, %v1866, 2102212464
  %v1879 = vsel %vm1875, %v1863, %v1878
  %v1880 = vsel %vm1874, %v1877, %v1879
  %v1881 = vsel %vm1873, %v1860, %v1863
  %v1882 = vsel %vm1876, %v1869, 920167782
  %v1883 = vsel %vm1875, %v1866, %v1882
  %v1884 = vsel %vm1874, %v1881, %v1883
  %v1885 = vsel %vm1873, %v1863, %v1866
  %v1886 = vsel %vm1876, %v1872, 1326507024
  %v1887 = vsel %vm1875, %v1869, %v1886
  %v1888 = vsel %vm1874, %v1885, %v1887
  %v1889 = vshll.u32 %v1849, 8
  %v1890 = vmul.u32.u64.compose %v1889, %v1888
  %v1891 = vextract.low.u32 %v1890
  %v1892 = vextract.high.u32 %v1890
  %v1893 = vmul.u32.u64.compose %v1889, %v1884
  %v1894 = vextract.low.u32 %v1893
  %v1895 = vextract.high.u32 %v1893
  %v1896 = vmul.u32 %v1889, %v1880
  %v1897 = vadd.s32 %v1892, %v1894
  %vm1898 = vc.u32 %v1892, %v1894
  %v1899 = vadd.s32 %v1895, 1
  %v1900 = vsel %vm1898, %v1899, %v1895
  %v1901 = vadd.s32 %v1896, %v1900
  %v1902 = vadd.s32 %v1901, 536870912
  %v1903 = vshrl.u32 %v1902, 30
  %v1904 = vshll.u32 %v1903, 30
  %v1905 = vsub.s32 %v1901, %v1904
  %vm1906 = vcmp.lt.s32.totalorder %v1905, 0
  %v1907 = vsub.s32 0, %v1905
  %v1908 = vsel %vm1906, %v1907, %v1905
  %v1909 = vclz %v1908
  %v1910 = vsub.s32 %v1909, 2
  %vm1911 = vcmp.gt.s32.totalorder 0, %v1910
  %v1912 = vsel %vm1911, 0, %v1910
  %v1913 = vsub.s32 32, %v1912
  %v1914 = vshll.u32 %v1905, %v1912
  %v1915 = vshrl.u32 %v1897, %v1913
  %v1916 = vor.u32 %v1914, %v1915
  %v1917 = vsub.s32 4294967266, %v1912
  %v1918 = vadd.s32 %v1917, 127
  %v1919 = vshll.u32 %v1918, 23
  %v1920 = vor.u32 4788187, %v1919
  %v1921 = vand.u32 2147483647, %v1920
  %v1923 = vcvt.s32.f32 %v1916
  %v1924 = vmul.f32 %v1923, %v1921
  %v1925 = vxor.u32 %v1924, 2147483648
  %v1926 = vsel %vm1843, %v1925, %v1924
  %v1927 = vsub.s32 4, %v1903
  %v1928 = vsel %vm1843, %v1927, %v1903
  %v1929 = vsel %vm1842, %v279, %v1926
  %v1930 = vsel %vm1842, 0, %v1928
  %v1931 = vcosq.f32.pop %v1929
  %v1932 = vsinq.f32.pop %v1929
  %vm1933 = vweird.f32 %v279
  %v1934 = vadd.s32 %v1930, 3
  %v1935 = vand.u32 %v1934, 3
  %vm1936 = vcmp.lt.s32.totalorder %v1935, 2
  %vm1937 = vcmp.eq.s32.totalorder %v1935, 0
  %v1938 = vxor.u32 %v1932, 2147483648
  %v1939 = vsel %vm1937, %v1931, %v1938
  %vm1940 = vcmp.eq.s32.totalorder %v1935, 2
  %v1941 = vxor.u32 %v1931, 2147483648
  %v1942 = vsel %vm1940, %v1941, %v1932
  %v1943 = vsel %vm1936, %v1939, %v1942
  %v1944 = vsel %vm1933, nan, %v1943
  %v1945 = vld [vmem:[%s3] sm:$0xff]
  %v1946 = vld [vmem:[%s3 + $0x8] sm:$0xff]
  %v1947 = vld [vmem:[%s3 + $0x10] sm:$0xff]
  %v1948 = vld [vmem:[%s3 + $0x18] sm:$0xff]
  %v1949 = vld [vmem:[%s4] sm:$0xff]
  %v1950 = vld [vmem:[%s4 + $0x8] sm:$0xff]
  %v1951 = vld [vmem:[%s4 + $0x10] sm:$0xff]
  %v1952 = vld [vmem:[%s4 + $0x18] sm:$0xff]
  %1954 = vset.pattern.permute.xlu0 0
  %1955 = vperm.xlu0 %1954, %v1949
  %v1956 = vpop.permute.xlu0 %1955
  %1959 = vset.pattern.permute.xlu0 0
  %1960 = vperm.xlu0 %1959, %v1950
  %v1961 = vpop.permute.xlu0 %1960
  %1964 = vset.pattern.permute.xlu0 0
  %1965 = vperm.xlu0 %1964, %v1951
  %v1966 = vpop.permute.xlu0 %1965
  %1969 = vset.pattern.permute.xlu0 0
  %1970 = vperm.xlu0 %1969, %v1952
  %v1971 = vpop.permute.xlu0 %1970
  %vm1973 = vcmask 261120
  %v1975 = vsel %vm1973, %v1945, 0
  %v1978 = vsel %vm1973, %v1946, 0
  %v1981 = vsel %vm1973, %v1947, 0
  %v1984 = vsel %vm1973, %v1948, 0
  %1986 = vmatprep.subr.mxu0 %v488
  %1987 = vmatpush1.msra.mxu0 %v384
  %1988 = vmatprep.subr.mxu0 %v904
  %1989 = vmatpush1.msra.mxu0 %v800
  %1990 = vmatprep.subr.mxu0 %v1320
  %1991 = vmatpush1.msra.mxu0 %v1216
  %1992 = vmatprep.subr.mxu0 %v1736
  %1993 = vmatpush1.msra.mxu0 %v1632
  %1994 = vmatprep.subr.mxu0 0.0
  %1995 = vmatpush1.msra.mxu0 0.0
  %1996 = vmatprep.subr.mxu0 0.0
  %1997 = vmatpush1.msra.mxu0 0.0
  %1998 = vmatprep.subr.mxu0 0.0
  %1999 = vmatpush1.msra.mxu0 0.0
  %2000 = vmatprep.subr.mxu0 0.0
  %2001 = vmatpush1.msra.mxu0 0.0
  %2002 = vmatprep.subr.mxu0 0.0
  %2003 = vmatpush1.msra.mxu0 0.0
  %2004 = vmatprep.subr.mxu0 0.0
  %2005 = vmatpush1.msra.mxu0 0.0
  %2006 = vmatprep.subr.mxu0 0.0
  %2007 = vmatpush1.msra.mxu0 0.0
  %2008 = vmatprep.subr.mxu0 0.0
  %2009 = vmatpush1.msra.mxu0 0.0
  %2010 = vmatprep.subr.mxu0 0.0
  %2011 = vmatpush1.msra.mxu0 0.0
  %2012 = vmatprep.subr.mxu0 0.0
  %2013 = vmatpush1.msra.mxu0 0.0
  %2014 = vmatprep.subr.mxu0 0.0
  %2015 = vmatpush1.msra.mxu0 0.0
  %2016 = vmatprep.subr.mxu0 0.0
  %2017 = vmatpush1.msra.mxu0 0.0
  %2018 = vmatprep.subr.mxu0 0.0
  %2019 = vmatpush1.msra.mxu0 0.0
  %2020 = vmatprep.subr.mxu0 0.0
  %2021 = vmatpush1.msra.mxu0 0.0
  %2022 = vmatprep.subr.mxu0 0.0
  %2023 = vmatpush1.msra.mxu0 0.0
  %2024 = vmatprep.subr.mxu0 0.0
  %2025 = vmatpush1.msra.mxu0 0.0
  %2026 = vmatprep.subr.mxu0 0.0
  %2027 = vmatpush1.msra.mxu0 0.0
  %2028 = vmatprep.subr.mxu0 0.0
  %2029 = vmatpush1.msra.mxu0 0.0
  %2030 = vmatprep.subr.mxu0 0.0
  %2031 = vmatpush1.msra.mxu0 0.0
  %2032 = vmatprep.subr.mxu0 0.0
  %2033 = vmatpush1.msra.mxu0 0.0
  %2034 = vmatprep.subr.mxu0 0.0
  %2035 = vmatpush1.msra.mxu0 0.0
  %2036 = vmatprep.subr.mxu0 0.0
  %2037 = vmatpush1.msra.mxu0 0.0
  %2038 = vmatprep.subr.mxu0 0.0
  %2039 = vmatpush1.msra.mxu0 0.0
  %2040 = vmatprep.subr.mxu0 0.0
  %2041 = vmatpush1.msra.mxu0 0.0
  %2042 = vmatprep.subr.mxu0 0.0
  %2043 = vmatpush1.msra.mxu0 0.0
  %2044 = vmatprep.subr.mxu0 0.0
  %2045 = vmatpush1.msra.mxu0 0.0
  %2046 = vmatprep.subr.mxu0 0.0
  %2047 = vmatpush1.msra.mxu0 0.0
  %2048 = vmatprep.subr.mxu0 0.0
  %2049 = vmatpush1.msra.mxu0 0.0
  %2050 = vmatprep.mubr.f32.mxu0 0.0
  %2051 = vmatmul.mubr.f32.gmra.mrb[0].mxu0 %v1975
  %v2052 = vpop.f32.mrb[0].mxu0
  %v2053 = vadd.f32 %v1956, %v2052
  %v2054 = vpop.f32.mrb[0].mxu0
  %v2055 = vadd.f32 %v1956, %v2054
  %2056 = vmatprep.mubr.f32.mxu0 0.0
  %2057 = vmatmul.mubr.f32.gmra.mrb[0].mxu0 %v1978
  %v2058 = vpop.f32.mrb[0].mxu0
  %v2059 = vadd.f32 %v1961, %v2058
  %v2060 = vpop.f32.mrb[0].mxu0
  %v2061 = vadd.f32 %v1961, %v2060
  %2062 = vmatprep.mubr.f32.mxu0 0.0
  %2063 = vmatmul.mubr.f32.gmra.mrb[0].mxu0 %v1981
  %v2064 = vpop.f32.mrb[0].mxu0
  %v2065 = vadd.f32 %v1966, %v2064
  %v2066 = vpop.f32.mrb[0].mxu0
  %v2067 = vadd.f32 %v1966, %v2066
  %2068 = vmatprep.mubr.f32.mxu0 0.0
  %2069 = vmatmul.mubr.f32.gmra.mrb[0].mxu0 %v1984
  %v2070 = vpop.f32.mrb[0].mxu0
  %v2071 = vadd.f32 %v1971, %v2070
  %v2072 = vpop.f32.mrb[0].mxu0
  %v2073 = vadd.f32 %v1971, %v2072
  %2074 = vdwg.mxu0
  %2075 = vmatprep.subr.mxu0 %v696
  %2076 = vmatpush1.msra.mxu0 %v592
  %2077 = vmatprep.subr.mxu0 %v1112
  %2078 = vmatpush1.msra.mxu0 %v1008
  %2079 = vmatprep.subr.mxu0 %v1528
  %2080 = vmatpush1.msra.mxu0 %v1424
  %2081 = vmatprep.subr.mxu0 %v1944
  %2082 = vmatpush1.msra.mxu0 %v1840
  %2083 = vmatprep.subr.mxu0 0.0
  %2084 = vmatpush1.msra.mxu0 0.0
  %2085 = vmatprep.subr.mxu0 0.0
  %2086 = vmatpush1.msra.mxu0 0.0
  %2087 = vmatprep.subr.mxu0 0.0
  %2088 = vmatpush1.msra.mxu0 0.0
  %2089 = vmatprep.subr.mxu0 0.0
  %2090 = vmatpush1.msra.mxu0 0.0
  %2091 = vmatprep.subr.mxu0 0.0
  %2092 = vmatpush1.msra.mxu0 0.0
  %2093 = vmatprep.subr.mxu0 0.0
  %2094 = vmatpush1.msra.mxu0 0.0
  %2095 = vmatprep.subr.mxu0 0.0
  %2096 = vmatpush1.msra.mxu0 0.0
  %2097 = vmatprep.subr.mxu0 0.0
  %2098 = vmatpush1.msra.mxu0 0.0
  %2099 = vmatprep.subr.mxu0 0.0
  %2100 = vmatpush1.msra.mxu0 0.0
  %2101 = vmatprep.subr.mxu0 0.0
  %2102 = vmatpush1.msra.mxu0 0.0
  %2103 = vmatprep.subr.mxu0 0.0
  %2104 = vmatpush1.msra.mxu0 0.0
  %2105 = vmatprep.subr.mxu0 0.0
  %2106 = vmatpush1.msra.mxu0 0.0
  %2107 = vmatprep.subr.mxu0 0.0
  %2108 = vmatpush1.msra.mxu0 0.0
  %2109 = vmatprep.subr.mxu0 0.0
  %2110 = vmatpush1.msra.mxu0 0.0
  %2111 = vmatprep.subr.mxu0 0.0
  %2112 = vmatpush1.msra.mxu0 0.0
  %2113 = vmatprep.subr.mxu0 0.0
  %2114 = vmatpush1.msra.mxu0 0.0
  %2115 = vmatprep.subr.mxu0 0.0
  %2116 = vmatpush1.msra.mxu0 0.0
  %2117 = vmatprep.subr.mxu0 0.0
  %2118 = vmatpush1.msra.mxu0 0.0
  %2119 = vmatprep.subr.mxu0 0.0
  %2120 = vmatpush1.msra.mxu0 0.0
  %2121 = vmatprep.subr.mxu0 0.0
  %2122 = vmatpush1.msra.mxu0 0.0
  %2123 = vmatprep.subr.mxu0 0.0
  %2124 = vmatpush1.msra.mxu0 0.0
  %2125 = vmatprep.subr.mxu0 0.0
  %2126 = vmatpush1.msra.mxu0 0.0
  %2127 = vmatprep.subr.mxu0 0.0
  %2128 = vmatpush1.msra.mxu0 0.0
  %2129 = vmatprep.subr.mxu0 0.0
  %2130 = vmatpush1.msra.mxu0 0.0
  %2131 = vmatprep.subr.mxu0 0.0
  %2132 = vmatpush1.msra.mxu0 0.0
  %2133 = vmatprep.subr.mxu0 0.0
  %2134 = vmatpush1.msra.mxu0 0.0
  %2135 = vmatprep.subr.mxu0 0.0
  %2136 = vmatpush1.msra.mxu0 0.0
  %2137 = vmatprep.subr.mxu0 0.0
  %2138 = vmatpush1.msra.mxu0 0.0
  %2139 = vmatprep.mubr.f32.mxu0 0.0
  %2140 = vmatmul.mubr.f32.gmra.mrb[0].mxu0 %v1975
  %v2141 = vpop.f32.mrb[0].mxu0
  %v2142 = vadd.f32 %v1956, %v2141
  %v2143 = vpop.f32.mrb[0].mxu0
  %v2144 = vadd.f32 %v1956, %v2143
  %2145 = vmatprep.mubr.f32.mxu0 0.0
  %2146 = vmatmul.mubr.f32.gmra.mrb[0].mxu0 %v1978
  %v2147 = vpop.f32.mrb[0].mxu0
  %v2148 = vadd.f32 %v1961, %v2147
  %v2149 = vpop.f32.mrb[0].mxu0
  %v2150 = vadd.f32 %v1961, %v2149
  %2151 = vmatprep.mubr.f32.mxu0 0.0
  %2152 = vmatmul.mubr.f32.gmra.mrb[0].mxu0 %v1981
  %v2153 = vpop.f32.mrb[0].mxu0
  %v2154 = vadd.f32 %v1966, %v2153
  %v2155 = vpop.f32.mrb[0].mxu0
  %v2156 = vadd.f32 %v1966, %v2155
  %2157 = vmatprep.mubr.f32.mxu0 0.0
  %2158 = vmatmul.mubr.f32.gmra.mrb[0].mxu0 %v1984
  %v2159 = vpop.f32.mrb[0].mxu0
  %v2160 = vadd.f32 %v1971, %v2159
  %v2161 = vpop.f32.mrb[0].mxu0
  %v2162 = vadd.f32 %v1971, %v2161
  %2163 = vdwg.mxu0
  %v2164 = vand.u32 2147483647, %v2053
  %vm2165 = vcmp.le.f32.partialorder %v2164, 0.7853982
  %vm2166 = vcmp.lt.s32.totalorder %v2053, 0
  %v2167 = vand.u32 %v2053, 2139095040
  %v2168 = vshrl.u32 %v2167, 23
  %v2169 = vsub.s32 %v2168, 127
  %v2170 = vand.u32 2147483647, %v2053
  %v2171 = vand.u32 %v2170, 8388607
  %v2172 = vor.u32 %v2171, 8388608
  %v2173 = vsub.s32 0, %v2172
  %v2174 = vadd.s32 %v2169, 1
  %vm2175 = vcmp.gt.s32.totalorder %v2174, 0
  %v2176 = vsel %vm2175, %v2174, 0
  %v2177 = vshrl.u32 %v2176, 5
  %v2178 = vand.u32 %v2176, 31
  %v2179 = vsub.s32 32, %v2178
  %v2180 = vshrl.u32 683565275, %v2179
  %v2181 = vshll.u32 683565275, %v2178
  %v2182 = vshrl.u32 2475754826, %v2179
  %v2183 = vor.u32 %v2181, %v2182
  %v2184 = vshll.u32 2475754826, %v2178
  %v2185 = vshrl.u32 2131351028, %v2179
  %v2186 = vor.u32 %v2184, %v2185
  %v2187 = vshll.u32 2131351028, %v2178
  %v2188 = vshrl.u32 2102212464, %v2179
  %v2189 = vor.u32 %v2187, %v2188
  %v2190 = vshll.u32 2102212464, %v2178
  %v2191 = vshrl.u32 920167782, %v2179
  %v2192 = vor.u32 %v2190, %v2191
  %v2193 = vshll.u32 920167782, %v2178
  %v2194 = vshrl.u32 1326507024, %v2179
  %v2195 = vor.u32 %v2193, %v2194
  %vm2196 = vcmp.lt.s32.totalorder %v2177, 1
  %vm2197 = vcmp.lt.s32.totalorder %v2177, 2
  %vm2198 = vcmp.lt.s32.totalorder %v2177, 3
  %vm2199 = vcmp.lt.s32.totalorder %v2177, 4
  %v2200 = vsel %vm2196, %v2180, %v2183
  %v2201 = vsel %vm2199, %v2189, 2102212464
  %v2202 = vsel %vm2198, %v2186, %v2201
  %v2203 = vsel %vm2197, %v2200, %v2202
  %v2204 = vsel %vm2196, %v2183, %v2186
  %v2205 = vsel %vm2199, %v2192, 920167782
  %v2206 = vsel %vm2198, %v2189, %v2205
  %v2207 = vsel %vm2197, %v2204, %v2206
  %v2208 = vsel %vm2196, %v2186, %v2189
  %v2209 = vsel %vm2199, %v2195, 1326507024
  %v2210 = vsel %vm2198, %v2192, %v2209
  %v2211 = vsel %vm2197, %v2208, %v2210
  %v2212 = vshll.u32 %v2172, 8
  %v2213 = vmul.u32.u64.compose %v2212, %v2211
  %v2214 = vextract.low.u32 %v2213
  %v2215 = vextract.high.u32 %v2213
  %v2216 = vmul.u32.u64.compose %v2212, %v2207
  %v2217 = vextract.low.u32 %v2216
  %v2218 = vextract.high.u32 %v2216
  %v2219 = vmul.u32 %v2212, %v2203
  %v2220 = vadd.s32 %v2215, %v2217
  %vm2221 = vc.u32 %v2215, %v2217
  %v2222 = vadd.s32 %v2218, 1
  %v2223 = vsel %vm2221, %v2222, %v2218
  %v2224 = vadd.s32 %v2219, %v2223
  %v2225 = vadd.s32 %v2224, 536870912
  %v2226 = vshrl.u32 %v2225, 30
  %v2227 = vshll.u32 %v2226, 30
  %v2228 = vsub.s32 %v2224, %v2227
  %vm2229 = vcmp.lt.s32.totalorder %v2228, 0
  %v2230 = vsub.s32 0, %v2228
  %v2231 = vsel %vm2229, %v2230, %v2228
  %v2232 = vclz %v2231
  %v2233 = vsub.s32 %v2232, 2
  %vm2234 = vcmp.gt.s32.totalorder 0, %v2233
  %v2235 = vsel %vm2234, 0, %v2233
  %v2236 = vsub.s32 32, %v2235
  %v2237 = vshll.u32 %v2228, %v2235
  %v2238 = vshrl.u32 %v2220, %v2236
  %v2239 = vor.u32 %v2237, %v2238
  %v2240 = vsub.s32 4294967266, %v2235
  %v2241 = vadd.s32 %v2240, 127
  %v2242 = vshll.u32 %v2241, 23
  %v2243 = vor.u32 4788187, %v2242
  %v2244 = vand.u32 2147483647, %v2243
  %v2246 = vcvt.s32.f32 %v2239
  %v2247 = vmul.f32 %v2246, %v2244
  %v2248 = vxor.u32 %v2247, 2147483648
  %v2249 = vsel %vm2166, %v2248, %v2247
  %v2250 = vsub.s32 4, %v2226
  %v2251 = vsel %vm2166, %v2250, %v2226
  %v2252 = vsel %vm2165, %v2053, %v2249
  %v2253 = vsel %vm2165, 0, %v2251
  %v2254 = vcosq.f32.pop %v2252
  %v2255 = vsinq.f32.pop %v2252
  %vm2256 = vweird.f32 %v2053
  %v2257 = vadd.s32 %v2253, 3
  %v2258 = vand.u32 %v2257, 3
  %vm2259 = vcmp.lt.s32.totalorder %v2258, 2
  %vm2260 = vcmp.eq.s32.totalorder %v2258, 0
  %v2261 = vxor.u32 %v2255, 2147483648
  %v2262 = vsel %vm2260, %v2254, %v2261
  %vm2263 = vcmp.eq.s32.totalorder %v2258, 2
  %v2264 = vxor.u32 %v2254, 2147483648
  %v2265 = vsel %vm2263, %v2264, %v2255
  %v2266 = vsel %vm2259, %v2262, %v2265
  %v2267 = vsel %vm2256, nan, %v2266
  %v2268 = vand.u32 2147483647, %v2055
  %vm2269 = vcmp.le.f32.partialorder %v2268, 0.7853982
  %vm2270 = vcmp.lt.s32.totalorder %v2055, 0
  %v2271 = vand.u32 %v2055, 2139095040
  %v2272 = vshrl.u32 %v2271, 23
  %v2273 = vsub.s32 %v2272, 127
  %v2274 = vand.u32 2147483647, %v2055
  %v2275 = vand.u32 %v2274, 8388607
  %v2276 = vor.u32 %v2275, 8388608
  %v2277 = vsub.s32 0, %v2276
  %v2278 = vadd.s32 %v2273, 1
  %vm2279 = vcmp.gt.s32.totalorder %v2278, 0
  %v2280 = vsel %vm2279, %v2278, 0
  %v2281 = vshrl.u32 %v2280, 5
  %v2282 = vand.u32 %v2280, 31
  %v2283 = vsub.s32 32, %v2282
  %v2284 = vshrl.u32 683565275, %v2283
  %v2285 = vshll.u32 683565275, %v2282
  %v2286 = vshrl.u32 2475754826, %v2283
  %v2287 = vor.u32 %v2285, %v2286
  %v2288 = vshll.u32 2475754826, %v2282
  %v2289 = vshrl.u32 2131351028, %v2283
  %v2290 = vor.u32 %v2288, %v2289
  %v2291 = vshll.u32 2131351028, %v2282
  %v2292 = vshrl.u32 2102212464, %v2283
  %v2293 = vor.u32 %v2291, %v2292
  %v2294 = vshll.u32 2102212464, %v2282
  %v2295 = vshrl.u32 920167782, %v2283
  %v2296 = vor.u32 %v2294, %v2295
  %v2297 = vshll.u32 920167782, %v2282
  %v2298 = vshrl.u32 1326507024, %v2283
  %v2299 = vor.u32 %v2297, %v2298
  %vm2300 = vcmp.lt.s32.totalorder %v2281, 1
  %vm2301 = vcmp.lt.s32.totalorder %v2281, 2
  %vm2302 = vcmp.lt.s32.totalorder %v2281, 3
  %vm2303 = vcmp.lt.s32.totalorder %v2281, 4
  %v2304 = vsel %vm2300, %v2284, %v2287
  %v2305 = vsel %vm2303, %v2293, 2102212464
  %v2306 = vsel %vm2302, %v2290, %v2305
  %v2307 = vsel %vm2301, %v2304, %v2306
  %v2308 = vsel %vm2300, %v2287, %v2290
  %v2309 = vsel %vm2303, %v2296, 920167782
  %v2310 = vsel %vm2302, %v2293, %v2309
  %v2311 = vsel %vm2301, %v2308, %v2310
  %v2312 = vsel %vm2300, %v2290, %v2293
  %v2313 = vsel %vm2303, %v2299, 1326507024
  %v2314 = vsel %vm2302, %v2296, %v2313
  %v2315 = vsel %vm2301, %v2312, %v2314
  %v2316 = vshll.u32 %v2276, 8
  %v2317 = vmul.u32.u64.compose %v2316, %v2315
  %v2318 = vextract.low.u32 %v2317
  %v2319 = vextract.high.u32 %v2317
  %v2320 = vmul.u32.u64.compose %v2316, %v2311
  %v2321 = vextract.low.u32 %v2320
  %v2322 = vextract.high.u32 %v2320
  %v2323 = vmul.u32 %v2316, %v2307
  %v2324 = vadd.s32 %v2319, %v2321
  %vm2325 = vc.u32 %v2319, %v2321
  %v2326 = vadd.s32 %v2322, 1
  %v2327 = vsel %vm2325, %v2326, %v2322
  %v2328 = vadd.s32 %v2323, %v2327
  %v2329 = vadd.s32 %v2328, 536870912
  %v2330 = vshrl.u32 %v2329, 30
  %v2331 = vshll.u32 %v2330, 30
  %v2332 = vsub.s32 %v2328, %v2331
  %vm2333 = vcmp.lt.s32.totalorder %v2332, 0
  %v2334 = vsub.s32 0, %v2332
  %v2335 = vsel %vm2333, %v2334, %v2332
  %v2336 = vclz %v2335
  %v2337 = vsub.s32 %v2336, 2
  %vm2338 = vcmp.gt.s32.totalorder 0, %v2337
  %v2339 = vsel %vm2338, 0, %v2337
  %v2340 = vsub.s32 32, %v2339
  %v2341 = vshll.u32 %v2332, %v2339
  %v2342 = vshrl.u32 %v2324, %v2340
  %v2343 = vor.u32 %v2341, %v2342
  %v2344 = vsub.s32 4294967266, %v2339
  %v2345 = vadd.s32 %v2344, 127
  %v2346 = vshll.u32 %v2345, 23
  %v2347 = vor.u32 4788187, %v2346
  %v2348 = vand.u32 2147483647, %v2347
  %v2350 = vcvt.s32.f32 %v2343
  %v2351 = vmul.f32 %v2350, %v2348
  %v2352 = vxor.u32 %v2351, 2147483648
  %v2353 = vsel %vm2270, %v2352, %v2351
  %v2354 = vsub.s32 4, %v2330
  %v2355 = vsel %vm2270, %v2354, %v2330
  %v2356 = vsel %vm2269, %v2055, %v2353
  %v2357 = vsel %vm2269, 0, %v2355
  %v2358 = vcosq.f32.pop %v2356
  %v2359 = vsinq.f32.pop %v2356
  %vm2360 = vweird.f32 %v2055
  %v2361 = vadd.s32 %v2357, 3
  %v2362 = vand.u32 %v2361, 3
  %vm2363 = vcmp.lt.s32.totalorder %v2362, 2
  %vm2364 = vcmp.eq.s32.totalorder %v2362, 0
  %v2365 = vxor.u32 %v2359, 2147483648
  %v2366 = vsel %vm2364, %v2358, %v2365
  %vm2367 = vcmp.eq.s32.totalorder %v2362, 2
  %v2368 = vxor.u32 %v2358, 2147483648
  %v2369 = vsel %vm2367, %v2368, %v2359
  %v2370 = vsel %vm2363, %v2366, %v2369
  %v2371 = vsel %vm2360, nan, %v2370
  %v2372 = vand.u32 2147483647, %v2142
  %vm2373 = vcmp.le.f32.partialorder %v2372, 0.7853982
  %vm2374 = vcmp.lt.s32.totalorder %v2142, 0
  %v2375 = vand.u32 %v2142, 2139095040
  %v2376 = vshrl.u32 %v2375, 23
  %v2377 = vsub.s32 %v2376, 127
  %v2378 = vand.u32 2147483647, %v2142
  %v2379 = vand.u32 %v2378, 8388607
  %v2380 = vor.u32 %v2379, 8388608
  %v2381 = vsub.s32 0, %v2380
  %v2382 = vadd.s32 %v2377, 1
  %vm2383 = vcmp.gt.s32.totalorder %v2382, 0
  %v2384 = vsel %vm2383, %v2382, 0
  %v2385 = vshrl.u32 %v2384, 5
  %v2386 = vand.u32 %v2384, 31
  %v2387 = vsub.s32 32, %v2386
  %v2388 = vshrl.u32 683565275, %v2387
  %v2389 = vshll.u32 683565275, %v2386
  %v2390 = vshrl.u32 2475754826, %v2387
  %v2391 = vor.u32 %v2389, %v2390
  %v2392 = vshll.u32 2475754826, %v2386
  %v2393 = vshrl.u32 2131351028, %v2387
  %v2394 = vor.u32 %v2392, %v2393
  %v2395 = vshll.u32 2131351028, %v2386
  %v2396 = vshrl.u32 2102212464, %v2387
  %v2397 = vor.u32 %v2395, %v2396
  %v2398 = vshll.u32 2102212464, %v2386
  %v2399 = vshrl.u32 920167782, %v2387
  %v2400 = vor.u32 %v2398, %v2399
  %v2401 = vshll.u32 920167782, %v2386
  %v2402 = vshrl.u32 1326507024, %v2387
  %v2403 = vor.u32 %v2401, %v2402
  %vm2404 = vcmp.lt.s32.totalorder %v2385, 1
  %vm2405 = vcmp.lt.s32.totalorder %v2385, 2
  %vm2406 = vcmp.lt.s32.totalorder %v2385, 3
  %vm2407 = vcmp.lt.s32.totalorder %v2385, 4
  %v2408 = vsel %vm2404, %v2388, %v2391
  %v2409 = vsel %vm2407, %v2397, 2102212464
  %v2410 = vsel %vm2406, %v2394, %v2409
  %v2411 = vsel %vm2405, %v2408, %v2410
  %v2412 = vsel %vm2404, %v2391, %v2394
  %v2413 = vsel %vm2407, %v2400, 920167782
  %v2414 = vsel %vm2406, %v2397, %v2413
  %v2415 = vsel %vm2405, %v2412, %v2414
  %v2416 = vsel %vm2404, %v2394, %v2397
  %v2417 = vsel %vm2407, %v2403, 1326507024
  %v2418 = vsel %vm2406, %v2400, %v2417
  %v2419 = vsel %vm2405, %v2416, %v2418
  %v2420 = vshll.u32 %v2380, 8
  %v2421 = vmul.u32.u64.compose %v2420, %v2419
  %v2422 = vextract.low.u32 %v2421
  %v2423 = vextract.high.u32 %v2421
  %v2424 = vmul.u32.u64.compose %v2420, %v2415
  %v2425 = vextract.low.u32 %v2424
  %v2426 = vextract.high.u32 %v2424
  %v2427 = vmul.u32 %v2420, %v2411
  %v2428 = vadd.s32 %v2423, %v2425
  %vm2429 = vc.u32 %v2423, %v2425
  %v2430 = vadd.s32 %v2426, 1
  %v2431 = vsel %vm2429, %v2430, %v2426
  %v2432 = vadd.s32 %v2427, %v2431
  %v2433 = vadd.s32 %v2432, 536870912
  %v2434 = vshrl.u32 %v2433, 30
  %v2435 = vshll.u32 %v2434, 30
  %v2436 = vsub.s32 %v2432, %v2435
  %vm2437 = vcmp.lt.s32.totalorder %v2436, 0
  %v2438 = vsub.s32 0, %v2436
  %v2439 = vsel %vm2437, %v2438, %v2436
  %v2440 = vclz %v2439
  %v2441 = vsub.s32 %v2440, 2
  %vm2442 = vcmp.gt.s32.totalorder 0, %v2441
  %v2443 = vsel %vm2442, 0, %v2441
  %v2444 = vsub.s32 32, %v2443
  %v2445 = vshll.u32 %v2436, %v2443
  %v2446 = vshrl.u32 %v2428, %v2444
  %v2447 = vor.u32 %v2445, %v2446
  %v2448 = vsub.s32 4294967266, %v2443
  %v2449 = vadd.s32 %v2448, 127
  %v2450 = vshll.u32 %v2449, 23
  %v2451 = vor.u32 4788187, %v2450
  %v2452 = vand.u32 2147483647, %v2451
  %v2454 = vcvt.s32.f32 %v2447
  %v2455 = vmul.f32 %v2454, %v2452
  %v2456 = vxor.u32 %v2455, 2147483648
  %v2457 = vsel %vm2374, %v2456, %v2455
  %v2458 = vsub.s32 4, %v2434
  %v2459 = vsel %vm2374, %v2458, %v2434
  %v2460 = vsel %vm2373, %v2142, %v2457
  %v2461 = vsel %vm2373, 0, %v2459
  %v2462 = vcosq.f32.pop %v2460
  %v2463 = vsinq.f32.pop %v2460
  %vm2464 = vweird.f32 %v2142
  %v2465 = vadd.s32 %v2461, 3
  %v2466 = vand.u32 %v2465, 3
  %vm2467 = vcmp.lt.s32.totalorder %v2466, 2
  %vm2468 = vcmp.eq.s32.totalorder %v2466, 0
  %v2469 = vxor.u32 %v2463, 2147483648
  %v2470 = vsel %vm2468, %v2462, %v2469
  %vm2471 = vcmp.eq.s32.totalorder %v2466, 2
  %v2472 = vxor.u32 %v2462, 2147483648
  %v2473 = vsel %vm2471, %v2472, %v2463
  %v2474 = vsel %vm2467, %v2470, %v2473
  %v2475 = vsel %vm2464, nan, %v2474
  %v2476 = vand.u32 2147483647, %v2144
  %vm2477 = vcmp.le.f32.partialorder %v2476, 0.7853982
  %vm2478 = vcmp.lt.s32.totalorder %v2144, 0
  %v2479 = vand.u32 %v2144, 2139095040
  %v2480 = vshrl.u32 %v2479, 23
  %v2481 = vsub.s32 %v2480, 127
  %v2482 = vand.u32 2147483647, %v2144
  %v2483 = vand.u32 %v2482, 8388607
  %v2484 = vor.u32 %v2483, 8388608
  %v2485 = vsub.s32 0, %v2484
  %v2486 = vadd.s32 %v2481, 1
  %vm2487 = vcmp.gt.s32.totalorder %v2486, 0
  %v2488 = vsel %vm2487, %v2486, 0
  %v2489 = vshrl.u32 %v2488, 5
  %v2490 = vand.u32 %v2488, 31
  %v2491 = vsub.s32 32, %v2490
  %v2492 = vshrl.u32 683565275, %v2491
  %v2493 = vshll.u32 683565275, %v2490
  %v2494 = vshrl.u32 2475754826, %v2491
  %v2495 = vor.u32 %v2493, %v2494
  %v2496 = vshll.u32 2475754826, %v2490
  %v2497 = vshrl.u32 2131351028, %v2491
  %v2498 = vor.u32 %v2496, %v2497
  %v2499 = vshll.u32 2131351028, %v2490
  %v2500 = vshrl.u32 2102212464, %v2491
  %v2501 = vor.u32 %v2499, %v2500
  %v2502 = vshll.u32 2102212464, %v2490
  %v2503 = vshrl.u32 920167782, %v2491
  %v2504 = vor.u32 %v2502, %v2503
  %v2505 = vshll.u32 920167782, %v2490
  %v2506 = vshrl.u32 1326507024, %v2491
  %v2507 = vor.u32 %v2505, %v2506
  %vm2508 = vcmp.lt.s32.totalorder %v2489, 1
  %vm2509 = vcmp.lt.s32.totalorder %v2489, 2
  %vm2510 = vcmp.lt.s32.totalorder %v2489, 3
  %vm2511 = vcmp.lt.s32.totalorder %v2489, 4
  %v2512 = vsel %vm2508, %v2492, %v2495
  %v2513 = vsel %vm2511, %v2501, 2102212464
  %v2514 = vsel %vm2510, %v2498, %v2513
  %v2515 = vsel %vm2509, %v2512, %v2514
  %v2516 = vsel %vm2508, %v2495, %v2498
  %v2517 = vsel %vm2511, %v2504, 920167782
  %v2518 = vsel %vm2510, %v2501, %v2517
  %v2519 = vsel %vm2509, %v2516, %v2518
  %v2520 = vsel %vm2508, %v2498, %v2501
  %v2521 = vsel %vm2511, %v2507, 1326507024
  %v2522 = vsel %vm2510, %v2504, %v2521
  %v2523 = vsel %vm2509, %v2520, %v2522
  %v2524 = vshll.u32 %v2484, 8
  %v2525 = vmul.u32.u64.compose %v2524, %v2523
  %v2526 = vextract.low.u32 %v2525
  %v2527 = vextract.high.u32 %v2525
  %v2528 = vmul.u32.u64.compose %v2524, %v2519
  %v2529 = vextract.low.u32 %v2528
  %v2530 = vextract.high.u32 %v2528
  %v2531 = vmul.u32 %v2524, %v2515
  %v2532 = vadd.s32 %v2527, %v2529
  %vm2533 = vc.u32 %v2527, %v2529
  %v2534 = vadd.s32 %v2530, 1
  %v2535 = vsel %vm2533, %v2534, %v2530
  %v2536 = vadd.s32 %v2531, %v2535
  %v2537 = vadd.s32 %v2536, 536870912
  %v2538 = vshrl.u32 %v2537, 30
  %v2539 = vshll.u32 %v2538, 30
  %v2540 = vsub.s32 %v2536, %v2539
  %vm2541 = vcmp.lt.s32.totalorder %v2540, 0
  %v2542 = vsub.s32 0, %v2540
  %v2543 = vsel %vm2541, %v2542, %v2540
  %v2544 = vclz %v2543
  %v2545 = vsub.s32 %v2544, 2
  %vm2546 = vcmp.gt.s32.totalorder 0, %v2545
  %v2547 = vsel %vm2546, 0, %v2545
  %v2548 = vsub.s32 32, %v2547
  %v2549 = vshll.u32 %v2540, %v2547
  %v2550 = vshrl.u32 %v2532, %v2548
  %v2551 = vor.u32 %v2549, %v2550
  %v2552 = vsub.s32 4294967266, %v2547
  %v2553 = vadd.s32 %v2552, 127
  %v2554 = vshll.u32 %v2553, 23
  %v2555 = vor.u32 4788187, %v2554
  %v2556 = vand.u32 2147483647, %v2555
  %v2558 = vcvt.s32.f32 %v2551
  %v2559 = vmul.f32 %v2558, %v2556
  %v2560 = vxor.u32 %v2559, 2147483648
  %v2561 = vsel %vm2478, %v2560, %v2559
  %v2562 = vsub.s32 4, %v2538
  %v2563 = vsel %vm2478, %v2562, %v2538
  %v2564 = vsel %vm2477, %v2144, %v2561
  %v2565 = vsel %vm2477, 0, %v2563
  %v2566 = vcosq.f32.pop %v2564
  %v2567 = vsinq.f32.pop %v2564
  %vm2568 = vweird.f32 %v2144
  %v2569 = vadd.s32 %v2565, 3
  %v2570 = vand.u32 %v2569, 3
  %vm2571 = vcmp.lt.s32.totalorder %v2570, 2
  %vm2572 = vcmp.eq.s32.totalorder %v2570, 0
  %v2573 = vxor.u32 %v2567, 2147483648
  %v2574 = vsel %vm2572, %v2566, %v2573
  %vm2575 = vcmp.eq.s32.totalorder %v2570, 2
  %v2576 = vxor.u32 %v2566, 2147483648
  %v2577 = vsel %vm2575, %v2576, %v2567
  %v2578 = vsel %vm2571, %v2574, %v2577
  %v2579 = vsel %vm2568, nan, %v2578
  %v2580 = vand.u32 2147483647, %v2059
  %vm2581 = vcmp.le.f32.partialorder %v2580, 0.7853982
  %vm2582 = vcmp.lt.s32.totalorder %v2059, 0
  %v2583 = vand.u32 %v2059, 2139095040
  %v2584 = vshrl.u32 %v2583, 23
  %v2585 = vsub.s32 %v2584, 127
  %v2586 = vand.u32 2147483647, %v2059
  %v2587 = vand.u32 %v2586, 8388607
  %v2588 = vor.u32 %v2587, 8388608
  %v2589 = vsub.s32 0, %v2588
  %v2590 = vadd.s32 %v2585, 1
  %vm2591 = vcmp.gt.s32.totalorder %v2590, 0
  %v2592 = vsel %vm2591, %v2590, 0
  %v2593 = vshrl.u32 %v2592, 5
  %v2594 = vand.u32 %v2592, 31
  %v2595 = vsub.s32 32, %v2594
  %v2596 = vshrl.u32 683565275, %v2595
  %v2597 = vshll.u32 683565275, %v2594
  %v2598 = vshrl.u32 2475754826, %v2595
  %v2599 = vor.u32 %v2597, %v2598
  %v2600 = vshll.u32 2475754826, %v2594
  %v2601 = vshrl.u32 2131351028, %v2595
  %v2602 = vor.u32 %v2600, %v2601
  %v2603 = vshll.u32 2131351028, %v2594
  %v2604 = vshrl.u32 2102212464, %v2595
  %v2605 = vor.u32 %v2603, %v2604
  %v2606 = vshll.u32 2102212464, %v2594
  %v2607 = vshrl.u32 920167782, %v2595
  %v2608 = vor.u32 %v2606, %v2607
  %v2609 = vshll.u32 920167782, %v2594
  %v2610 = vshrl.u32 1326507024, %v2595
  %v2611 = vor.u32 %v2609, %v2610
  %vm2612 = vcmp.lt.s32.totalorder %v2593, 1
  %vm2613 = vcmp.lt.s32.totalorder %v2593, 2
  %vm2614 = vcmp.lt.s32.totalorder %v2593, 3
  %vm2615 = vcmp.lt.s32.totalorder %v2593, 4
  %v2616 = vsel %vm2612, %v2596, %v2599
  %v2617 = vsel %vm2615, %v2605, 2102212464
  %v2618 = vsel %vm2614, %v2602, %v2617
  %v2619 = vsel %vm2613, %v2616, %v2618
  %v2620 = vsel %vm2612, %v2599, %v2602
  %v2621 = vsel %vm2615, %v2608, 920167782
  %v2622 = vsel %vm2614, %v2605, %v2621
  %v2623 = vsel %vm2613, %v2620, %v2622
  %v2624 = vsel %vm2612, %v2602, %v2605
  %v2625 = vsel %vm2615, %v2611, 1326507024
  %v2626 = vsel %vm2614, %v2608, %v2625
  %v2627 = vsel %vm2613, %v2624, %v2626
  %v2628 = vshll.u32 %v2588, 8
  %v2629 = vmul.u32.u64.compose %v2628, %v2627
  %v2630 = vextract.low.u32 %v2629
  %v2631 = vextract.high.u32 %v2629
  %v2632 = vmul.u32.u64.compose %v2628, %v2623
  %v2633 = vextract.low.u32 %v2632
  %v2634 = vextract.high.u32 %v2632
  %v2635 = vmul.u32 %v2628, %v2619
  %v2636 = vadd.s32 %v2631, %v2633
  %vm2637 = vc.u32 %v2631, %v2633
  %v2638 = vadd.s32 %v2634, 1
  %v2639 = vsel %vm2637, %v2638, %v2634
  %v2640 = vadd.s32 %v2635, %v2639
  %v2641 = vadd.s32 %v2640, 536870912
  %v2642 = vshrl.u32 %v2641, 30
  %v2643 = vshll.u32 %v2642, 30
  %v2644 = vsub.s32 %v2640, %v2643
  %vm2645 = vcmp.lt.s32.totalorder %v2644, 0
  %v2646 = vsub.s32 0, %v2644
  %v2647 = vsel %vm2645, %v2646, %v2644
  %v2648 = vclz %v2647
  %v2649 = vsub.s32 %v2648, 2
  %vm2650 = vcmp.gt.s32.totalorder 0, %v2649
  %v2651 = vsel %vm2650, 0, %v2649
  %v2652 = vsub.s32 32, %v2651
  %v2653 = vshll.u32 %v2644, %v2651
  %v2654 = vshrl.u32 %v2636, %v2652
  %v2655 = vor.u32 %v2653, %v2654
  %v2656 = vsub.s32 4294967266, %v2651
  %v2657 = vadd.s32 %v2656, 127
  %v2658 = vshll.u32 %v2657, 23
  %v2659 = vor.u32 4788187, %v2658
  %v2660 = vand.u32 2147483647, %v2659
  %v2662 = vcvt.s32.f32 %v2655
  %v2663 = vmul.f32 %v2662, %v2660
  %v2664 = vxor.u32 %v2663, 2147483648
  %v2665 = vsel %vm2582, %v2664, %v2663
  %v2666 = vsub.s32 4, %v2642
  %v2667 = vsel %vm2582, %v2666, %v2642
  %v2668 = vsel %vm2581, %v2059, %v2665
  %v2669 = vsel %vm2581, 0, %v2667
  %v2670 = vcosq.f32.pop %v2668
  %v2671 = vsinq.f32.pop %v2668
  %vm2672 = vweird.f32 %v2059
  %v2673 = vadd.s32 %v2669, 3
  %v2674 = vand.u32 %v2673, 3
  %vm2675 = vcmp.lt.s32.totalorder %v2674, 2
  %vm2676 = vcmp.eq.s32.totalorder %v2674, 0
  %v2677 = vxor.u32 %v2671, 2147483648
  %v2678 = vsel %vm2676, %v2670, %v2677
  %vm2679 = vcmp.eq.s32.totalorder %v2674, 2
  %v2680 = vxor.u32 %v2670, 2147483648
  %v2681 = vsel %vm2679, %v2680, %v2671
  %v2682 = vsel %vm2675, %v2678, %v2681
  %v2683 = vsel %vm2672, nan, %v2682
  %v2684 = vand.u32 2147483647, %v2061
  %vm2685 = vcmp.le.f32.partialorder %v2684, 0.7853982
  %vm2686 = vcmp.lt.s32.totalorder %v2061, 0
  %v2687 = vand.u32 %v2061, 2139095040
  %v2688 = vshrl.u32 %v2687, 23
  %v2689 = vsub.s32 %v2688, 127
  %v2690 = vand.u32 2147483647, %v2061
  %v2691 = vand.u32 %v2690, 8388607
  %v2692 = vor.u32 %v2691, 8388608
  %v2693 = vsub.s32 0, %v2692
  %v2694 = vadd.s32 %v2689, 1
  %vm2695 = vcmp.gt.s32.totalorder %v2694, 0
  %v2696 = vsel %vm2695, %v2694, 0
  %v2697 = vshrl.u32 %v2696, 5
  %v2698 = vand.u32 %v2696, 31
  %v2699 = vsub.s32 32, %v2698
  %v2700 = vshrl.u32 683565275, %v2699
  %v2701 = vshll.u32 683565275, %v2698
  %v2702 = vshrl.u32 2475754826, %v2699
  %v2703 = vor.u32 %v2701, %v2702
  %v2704 = vshll.u32 2475754826, %v2698
  %v2705 = vshrl.u32 2131351028, %v2699
  %v2706 = vor.u32 %v2704, %v2705
  %v2707 = vshll.u32 2131351028, %v2698
  %v2708 = vshrl.u32 2102212464, %v2699
  %v2709 = vor.u32 %v2707, %v2708
  %v2710 = vshll.u32 2102212464, %v2698
  %v2711 = vshrl.u32 920167782, %v2699
  %v2712 = vor.u32 %v2710, %v2711
  %v2713 = vshll.u32 920167782, %v2698
  %v2714 = vshrl.u32 1326507024, %v2699
  %v2715 = vor.u32 %v2713, %v2714
  %vm2716 = vcmp.lt.s32.totalorder %v2697, 1
  %vm2717 = vcmp.lt.s32.totalorder %v2697, 2
  %vm2718 = vcmp.lt.s32.totalorder %v2697, 3
  %vm2719 = vcmp.lt.s32.totalorder %v2697, 4
  %v2720 = vsel %vm2716, %v2700, %v2703
  %v2721 = vsel %vm2719, %v2709, 2102212464
  %v2722 = vsel %vm2718, %v2706, %v2721
  %v2723 = vsel %vm2717, %v2720, %v2722
  %v2724 = vsel %vm2716, %v2703, %v2706
  %v2725 = vsel %vm2719, %v2712, 920167782
  %v2726 = vsel %vm2718, %v2709, %v2725
  %v2727 = vsel %vm2717, %v2724, %v2726
  %v2728 = vsel %vm2716, %v2706, %v2709
  %v2729 = vsel %vm2719, %v2715, 1326507024
  %v2730 = vsel %vm2718, %v2712, %v2729
  %v2731 = vsel %vm2717, %v2728, %v2730
  %v2732 = vshll.u32 %v2692, 8
  %v2733 = vmul.u32.u64.compose %v2732, %v2731
  %v2734 = vextract.low.u32 %v2733
  %v2735 = vextract.high.u32 %v2733
  %v2736 = vmul.u32.u64.compose %v2732, %v2727
  %v2737 = vextract.low.u32 %v2736
  %v2738 = vextract.high.u32 %v2736
  %v2739 = vmul.u32 %v2732, %v2723
  %v2740 = vadd.s32 %v2735, %v2737
  %vm2741 = vc.u32 %v2735, %v2737
  %v2742 = vadd.s32 %v2738, 1
  %v2743 = vsel %vm2741, %v2742, %v2738
  %v2744 = vadd.s32 %v2739, %v2743
  %v2745 = vadd.s32 %v2744, 536870912
  %v2746 = vshrl.u32 %v2745, 30
  %v2747 = vshll.u32 %v2746, 30
  %v2748 = vsub.s32 %v2744, %v2747
  %vm2749 = vcmp.lt.s32.totalorder %v2748, 0
  %v2750 = vsub.s32 0, %v2748
  %v2751 = vsel %vm2749, %v2750, %v2748
  %v2752 = vclz %v2751
  %v2753 = vsub.s32 %v2752, 2
  %vm2754 = vcmp.gt.s32.totalorder 0, %v2753
  %v2755 = vsel %vm2754, 0, %v2753
  %v2756 = vsub.s32 32, %v2755
  %v2757 = vshll.u32 %v2748, %v2755
  %v2758 = vshrl.u32 %v2740, %v2756
  %v2759 = vor.u32 %v2757, %v2758
  %v2760 = vsub.s32 4294967266, %v2755
  %v2761 = vadd.s32 %v2760, 127
  %v2762 = vshll.u32 %v2761, 23
  %v2763 = vor.u32 4788187, %v2762
  %v2764 = vand.u32 2147483647, %v2763
  %v2766 = vcvt.s32.f32 %v2759
  %v2767 = vmul.f32 %v2766, %v2764
  %v2768 = vxor.u32 %v2767, 2147483648
  %v2769 = vsel %vm2686, %v2768, %v2767
  %v2770 = vsub.s32 4, %v2746
  %v2771 = vsel %vm2686, %v2770, %v2746
  %v2772 = vsel %vm2685, %v2061, %v2769
  %v2773 = vsel %vm2685, 0, %v2771
  %v2774 = vcosq.f32.pop %v2772
  %v2775 = vsinq.f32.pop %v2772
  %vm2776 = vweird.f32 %v2061
  %v2777 = vadd.s32 %v2773, 3
  %v2778 = vand.u32 %v2777, 3
  %vm2779 = vcmp.lt.s32.totalorder %v2778, 2
  %vm2780 = vcmp.eq.s32.totalorder %v2778, 0
  %v2781 = vxor.u32 %v2775, 2147483648
  %v2782 = vsel %vm2780, %v2774, %v2781
  %vm2783 = vcmp.eq.s32.totalorder %v2778, 2
  %v2784 = vxor.u32 %v2774, 2147483648
  %v2785 = vsel %vm2783, %v2784, %v2775
  %v2786 = vsel %vm2779, %v2782, %v2785
  %v2787 = vsel %vm2776, nan, %v2786
  %v2788 = vand.u32 2147483647, %v2148
  %vm2789 = vcmp.le.f32.partialorder %v2788, 0.7853982
  %vm2790 = vcmp.lt.s32.totalorder %v2148, 0
  %v2791 = vand.u32 %v2148, 2139095040
  %v2792 = vshrl.u32 %v2791, 23
  %v2793 = vsub.s32 %v2792, 127
  %v2794 = vand.u32 2147483647, %v2148
  %v2795 = vand.u32 %v2794, 8388607
  %v2796 = vor.u32 %v2795, 8388608
  %v2797 = vsub.s32 0, %v2796
  %v2798 = vadd.s32 %v2793, 1
  %vm2799 = vcmp.gt.s32.totalorder %v2798, 0
  %v2800 = vsel %vm2799, %v2798, 0
  %v2801 = vshrl.u32 %v2800, 5
  %v2802 = vand.u32 %v2800, 31
  %v2803 = vsub.s32 32, %v2802
  %v2804 = vshrl.u32 683565275, %v2803
  %v2805 = vshll.u32 683565275, %v2802
  %v2806 = vshrl.u32 2475754826, %v2803
  %v2807 = vor.u32 %v2805, %v2806
  %v2808 = vshll.u32 2475754826, %v2802
  %v2809 = vshrl.u32 2131351028, %v2803
  %v2810 = vor.u32 %v2808, %v2809
  %v2811 = vshll.u32 2131351028, %v2802
  %v2812 = vshrl.u32 2102212464, %v2803
  %v2813 = vor.u32 %v2811, %v2812
  %v2814 = vshll.u32 2102212464, %v2802
  %v2815 = vshrl.u32 920167782, %v2803
  %v2816 = vor.u32 %v2814, %v2815
  %v2817 = vshll.u32 920167782, %v2802
  %v2818 = vshrl.u32 1326507024, %v2803
  %v2819 = vor.u32 %v2817, %v2818
  %vm2820 = vcmp.lt.s32.totalorder %v2801, 1
  %vm2821 = vcmp.lt.s32.totalorder %v2801, 2
  %vm2822 = vcmp.lt.s32.totalorder %v2801, 3
  %vm2823 = vcmp.lt.s32.totalorder %v2801, 4
  %v2824 = vsel %vm2820, %v2804, %v2807
  %v2825 = vsel %vm2823, %v2813, 2102212464
  %v2826 = vsel %vm2822, %v2810, %v2825
  %v2827 = vsel %vm2821, %v2824, %v2826
  %v2828 = vsel %vm2820, %v2807, %v2810
  %v2829 = vsel %vm2823, %v2816, 920167782
  %v2830 = vsel %vm2822, %v2813, %v2829
  %v2831 = vsel %vm2821, %v2828, %v2830
  %v2832 = vsel %vm2820, %v2810, %v2813
  %v2833 = vsel %vm2823, %v2819, 1326507024
  %v2834 = vsel %vm2822, %v2816, %v2833
  %v2835 = vsel %vm2821, %v2832, %v2834
  %v2836 = vshll.u32 %v2796, 8
  %v2837 = vmul.u32.u64.compose %v2836, %v2835
  %v2838 = vextract.low.u32 %v2837
  %v2839 = vextract.high.u32 %v2837
  %v2840 = vmul.u32.u64.compose %v2836, %v2831
  %v2841 = vextract.low.u32 %v2840
  %v2842 = vextract.high.u32 %v2840
  %v2843 = vmul.u32 %v2836, %v2827
  %v2844 = vadd.s32 %v2839, %v2841
  %vm2845 = vc.u32 %v2839, %v2841
  %v2846 = vadd.s32 %v2842, 1
  %v2847 = vsel %vm2845, %v2846, %v2842
  %v2848 = vadd.s32 %v2843, %v2847
  %v2849 = vadd.s32 %v2848, 536870912
  %v2850 = vshrl.u32 %v2849, 30
  %v2851 = vshll.u32 %v2850, 30
  %v2852 = vsub.s32 %v2848, %v2851
  %vm2853 = vcmp.lt.s32.totalorder %v2852, 0
  %v2854 = vsub.s32 0, %v2852
  %v2855 = vsel %vm2853, %v2854, %v2852
  %v2856 = vclz %v2855
  %v2857 = vsub.s32 %v2856, 2
  %vm2858 = vcmp.gt.s32.totalorder 0, %v2857
  %v2859 = vsel %vm2858, 0, %v2857
  %v2860 = vsub.s32 32, %v2859
  %v2861 = vshll.u32 %v2852, %v2859
  %v2862 = vshrl.u32 %v2844, %v2860
  %v2863 = vor.u32 %v2861, %v2862
  %v2864 = vsub.s32 4294967266, %v2859
  %v2865 = vadd.s32 %v2864, 127
  %v2866 = vshll.u32 %v2865, 23
  %v2867 = vor.u32 4788187, %v2866
  %v2868 = vand.u32 2147483647, %v2867
  %v2870 = vcvt.s32.f32 %v2863
  %v2871 = vmul.f32 %v2870, %v2868
  %v2872 = vxor.u32 %v2871, 2147483648
  %v2873 = vsel %vm2790, %v2872, %v2871
  %v2874 = vsub.s32 4, %v2850
  %v2875 = vsel %vm2790, %v2874, %v2850
  %v2876 = vsel %vm2789, %v2148, %v2873
  %v2877 = vsel %vm2789, 0, %v2875
  %v2878 = vcosq.f32.pop %v2876
  %v2879 = vsinq.f32.pop %v2876
  %vm2880 = vweird.f32 %v2148
  %v2881 = vadd.s32 %v2877, 3
  %v2882 = vand.u32 %v2881, 3
  %vm2883 = vcmp.lt.s32.totalorder %v2882, 2
  %vm2884 = vcmp.eq.s32.totalorder %v2882, 0
  %v2885 = vxor.u32 %v2879, 2147483648
  %v2886 = vsel %vm2884, %v2878, %v2885
  %vm2887 = vcmp.eq.s32.totalorder %v2882, 2
  %v2888 = vxor.u32 %v2878, 2147483648
  %v2889 = vsel %vm2887, %v2888, %v2879
  %v2890 = vsel %vm2883, %v2886, %v2889
  %v2891 = vsel %vm2880, nan, %v2890
  %v2892 = vand.u32 2147483647, %v2150
  %vm2893 = vcmp.le.f32.partialorder %v2892, 0.7853982
  %vm2894 = vcmp.lt.s32.totalorder %v2150, 0
  %v2895 = vand.u32 %v2150, 2139095040
  %v2896 = vshrl.u32 %v2895, 23
  %v2897 = vsub.s32 %v2896, 127
  %v2898 = vand.u32 2147483647, %v2150
  %v2899 = vand.u32 %v2898, 8388607
  %v2900 = vor.u32 %v2899, 8388608
  %v2901 = vsub.s32 0, %v2900
  %v2902 = vadd.s32 %v2897, 1
  %vm2903 = vcmp.gt.s32.totalorder %v2902, 0
  %v2904 = vsel %vm2903, %v2902, 0
  %v2905 = vshrl.u32 %v2904, 5
  %v2906 = vand.u32 %v2904, 31
  %v2907 = vsub.s32 32, %v2906
  %v2908 = vshrl.u32 683565275, %v2907
  %v2909 = vshll.u32 683565275, %v2906
  %v2910 = vshrl.u32 2475754826, %v2907
  %v2911 = vor.u32 %v2909, %v2910
  %v2912 = vshll.u32 2475754826, %v2906
  %v2913 = vshrl.u32 2131351028, %v2907
  %v2914 = vor.u32 %v2912, %v2913
  %v2915 = vshll.u32 2131351028, %v2906
  %v2916 = vshrl.u32 2102212464, %v2907
  %v2917 = vor.u32 %v2915, %v2916
  %v2918 = vshll.u32 2102212464, %v2906
  %v2919 = vshrl.u32 920167782, %v2907
  %v2920 = vor.u32 %v2918, %v2919
  %v2921 = vshll.u32 920167782, %v2906
  %v2922 = vshrl.u32 1326507024, %v2907
  %v2923 = vor.u32 %v2921, %v2922
  %vm2924 = vcmp.lt.s32.totalorder %v2905, 1
  %vm2925 = vcmp.lt.s32.totalorder %v2905, 2
  %vm2926 = vcmp.lt.s32.totalorder %v2905, 3
  %vm2927 = vcmp.lt.s32.totalorder %v2905, 4
  %v2928 = vsel %vm2924, %v2908, %v2911
  %v2929 = vsel %vm2927, %v2917, 2102212464
  %v2930 = vsel %vm2926, %v2914, %v2929
  %v2931 = vsel %vm2925, %v2928, %v2930
  %v2932 = vsel %vm2924, %v2911, %v2914
  %v2933 = vsel %vm2927, %v2920, 920167782
  %v2934 = vsel %vm2926, %v2917, %v2933
  %v2935 = vsel %vm2925, %v2932, %v2934
  %v2936 = vsel %vm2924, %v2914, %v2917
  %v2937 = vsel %vm2927, %v2923, 1326507024
  %v2938 = vsel %vm2926, %v2920, %v2937
  %v2939 = vsel %vm2925, %v2936, %v2938
  %v2940 = vshll.u32 %v2900, 8
  %v2941 = vmul.u32.u64.compose %v2940, %v2939
  %v2942 = vextract.low.u32 %v2941
  %v2943 = vextract.high.u32 %v2941
  %v2944 = vmul.u32.u64.compose %v2940, %v2935
  %v2945 = vextract.low.u32 %v2944
  %v2946 = vextract.high.u32 %v2944
  %v2947 = vmul.u32 %v2940, %v2931
  %v2948 = vadd.s32 %v2943, %v2945
  %vm2949 = vc.u32 %v2943, %v2945
  %v2950 = vadd.s32 %v2946, 1
  %v2951 = vsel %vm2949, %v2950, %v2946
  %v2952 = vadd.s32 %v2947, %v2951
  %v2953 = vadd.s32 %v2952, 536870912
  %v2954 = vshrl.u32 %v2953, 30
  %v2955 = vshll.u32 %v2954, 30
  %v2956 = vsub.s32 %v2952, %v2955
  %vm2957 = vcmp.lt.s32.totalorder %v2956, 0
  %v2958 = vsub.s32 0, %v2956
  %v2959 = vsel %vm2957, %v2958, %v2956
  %v2960 = vclz %v2959
  %v2961 = vsub.s32 %v2960, 2
  %vm2962 = vcmp.gt.s32.totalorder 0, %v2961
  %v2963 = vsel %vm2962, 0, %v2961
  %v2964 = vsub.s32 32, %v2963
  %v2965 = vshll.u32 %v2956, %v2963
  %v2966 = vshrl.u32 %v2948, %v2964
  %v2967 = vor.u32 %v2965, %v2966
  %v2968 = vsub.s32 4294967266, %v2963
  %v2969 = vadd.s32 %v2968, 127
  %v2970 = vshll.u32 %v2969, 23
  %v2971 = vor.u32 4788187, %v2970
  %v2972 = vand.u32 2147483647, %v2971
  %v2974 = vcvt.s32.f32 %v2967
  %v2975 = vmul.f32 %v2974, %v2972
  %v2976 = vxor.u32 %v2975, 2147483648
  %v2977 = vsel %vm2894, %v2976, %v2975
  %v2978 = vsub.s32 4, %v2954
  %v2979 = vsel %vm2894, %v2978, %v2954
  %v2980 = vsel %vm2893, %v2150, %v2977
  %v2981 = vsel %vm2893, 0, %v2979
  %v2982 = vcosq.f32.pop %v2980
  %v2983 = vsinq.f32.pop %v2980
  %vm2984 = vweird.f32 %v2150
  %v2985 = vadd.s32 %v2981, 3
  %v2986 = vand.u32 %v2985, 3
  %vm2987 = vcmp.lt.s32.totalorder %v2986, 2
  %vm2988 = vcmp.eq.s32.totalorder %v2986, 0
  %v2989 = vxor.u32 %v2983, 2147483648
  %v2990 = vsel %vm2988, %v2982, %v2989
  %vm2991 = vcmp.eq.s32.totalorder %v2986, 2
  %v2992 = vxor.u32 %v2982, 2147483648
  %v2993 = vsel %vm2991, %v2992, %v2983
  %v2994 = vsel %vm2987, %v2990, %v2993
  %v2995 = vsel %vm2984, nan, %v2994
  %v2996 = vand.u32 2147483647, %v2065
  %vm2997 = vcmp.le.f32.partialorder %v2996, 0.7853982
  %vm2998 = vcmp.lt.s32.totalorder %v2065, 0
  %v2999 = vand.u32 %v2065, 2139095040
  %v3000 = vshrl.u32 %v2999, 23
  %v3001 = vsub.s32 %v3000, 127
  %v3002 = vand.u32 2147483647, %v2065
  %v3003 = vand.u32 %v3002, 8388607
  %v3004 = vor.u32 %v3003, 8388608
  %v3005 = vsub.s32 0, %v3004
  %v3006 = vadd.s32 %v3001, 1
  %vm3007 = vcmp.gt.s32.totalorder %v3006, 0
  %v3008 = vsel %vm3007, %v3006, 0
  %v3009 = vshrl.u32 %v3008, 5
  %v3010 = vand.u32 %v3008, 31
  %v3011 = vsub.s32 32, %v3010
  %v3012 = vshrl.u32 683565275, %v3011
  %v3013 = vshll.u32 683565275, %v3010
  %v3014 = vshrl.u32 2475754826, %v3011
  %v3015 = vor.u32 %v3013, %v3014
  %v3016 = vshll.u32 2475754826, %v3010
  %v3017 = vshrl.u32 2131351028, %v3011
  %v3018 = vor.u32 %v3016, %v3017
  %v3019 = vshll.u32 2131351028, %v3010
  %v3020 = vshrl.u32 2102212464, %v3011
  %v3021 = vor.u32 %v3019, %v3020
  %v3022 = vshll.u32 2102212464, %v3010
  %v3023 = vshrl.u32 920167782, %v3011
  %v3024 = vor.u32 %v3022, %v3023
  %v3025 = vshll.u32 920167782, %v3010
  %v3026 = vshrl.u32 1326507024, %v3011
  %v3027 = vor.u32 %v3025, %v3026
  %vm3028 = vcmp.lt.s32.totalorder %v3009, 1
  %vm3029 = vcmp.lt.s32.totalorder %v3009, 2
  %vm3030 = vcmp.lt.s32.totalorder %v3009, 3
  %vm3031 = vcmp.lt.s32.totalorder %v3009, 4
  %v3032 = vsel %vm3028, %v3012, %v3015
  %v3033 = vsel %vm3031, %v3021, 2102212464
  %v3034 = vsel %vm3030, %v3018, %v3033
  %v3035 = vsel %vm3029, %v3032, %v3034
  %v3036 = vsel %vm3028, %v3015, %v3018
  %v3037 = vsel %vm3031, %v3024, 920167782
  %v3038 = vsel %vm3030, %v3021, %v3037
  %v3039 = vsel %vm3029, %v3036, %v3038
  %v3040 = vsel %vm3028, %v3018, %v3021
  %v3041 = vsel %vm3031, %v3027, 1326507024
  %v3042 = vsel %vm3030, %v3024, %v3041
  %v3043 = vsel %vm3029, %v3040, %v3042
  %v3044 = vshll.u32 %v3004, 8
  %v3045 = vmul.u32.u64.compose %v3044, %v3043
  %v3046 = vextract.low.u32 %v3045
  %v3047 = vextract.high.u32 %v3045
  %v3048 = vmul.u32.u64.compose %v3044, %v3039
  %v3049 = vextract.low.u32 %v3048
  %v3050 = vextract.high.u32 %v3048
  %v3051 = vmul.u32 %v3044, %v3035
  %v3052 = vadd.s32 %v3047, %v3049
  %vm3053 = vc.u32 %v3047, %v3049
  %v3054 = vadd.s32 %v3050, 1
  %v3055 = vsel %vm3053, %v3054, %v3050
  %v3056 = vadd.s32 %v3051, %v3055
  %v3057 = vadd.s32 %v3056, 536870912
  %v3058 = vshrl.u32 %v3057, 30
  %v3059 = vshll.u32 %v3058, 30
  %v3060 = vsub.s32 %v3056, %v3059
  %vm3061 = vcmp.lt.s32.totalorder %v3060, 0
  %v3062 = vsub.s32 0, %v3060
  %v3063 = vsel %vm3061, %v3062, %v3060
  %v3064 = vclz %v3063
  %v3065 = vsub.s32 %v3064, 2
  %vm3066 = vcmp.gt.s32.totalorder 0, %v3065
  %v3067 = vsel %vm3066, 0, %v3065
  %v3068 = vsub.s32 32, %v3067
  %v3069 = vshll.u32 %v3060, %v3067
  %v3070 = vshrl.u32 %v3052, %v3068
  %v3071 = vor.u32 %v3069, %v3070
  %v3072 = vsub.s32 4294967266, %v3067
  %v3073 = vadd.s32 %v3072, 127
  %v3074 = vshll.u32 %v3073, 23
  %v3075 = vor.u32 4788187, %v3074
  %v3076 = vand.u32 2147483647, %v3075
  %v3078 = vcvt.s32.f32 %v3071
  %v3079 = vmul.f32 %v3078, %v3076
  %v3080 = vxor.u32 %v3079, 2147483648
  %v3081 = vsel %vm2998, %v3080, %v3079
  %v3082 = vsub.s32 4, %v3058
  %v3083 = vsel %vm2998, %v3082, %v3058
  %v3084 = vsel %vm2997, %v2065, %v3081
  %v3085 = vsel %vm2997, 0, %v3083
  %v3086 = vcosq.f32.pop %v3084
  %v3087 = vsinq.f32.pop %v3084
  %vm3088 = vweird.f32 %v2065
  %v3089 = vadd.s32 %v3085, 3
  %v3090 = vand.u32 %v3089, 3
  %vm3091 = vcmp.lt.s32.totalorder %v3090, 2
  %vm3092 = vcmp.eq.s32.totalorder %v3090, 0
  %v3093 = vxor.u32 %v3087, 2147483648
  %v3094 = vsel %vm3092, %v3086, %v3093
  %vm3095 = vcmp.eq.s32.totalorder %v3090, 2
  %v3096 = vxor.u32 %v3086, 2147483648
  %v3097 = vsel %vm3095, %v3096, %v3087
  %v3098 = vsel %vm3091, %v3094, %v3097
  %v3099 = vsel %vm3088, nan, %v3098
  %v3100 = vand.u32 2147483647, %v2067
  %vm3101 = vcmp.le.f32.partialorder %v3100, 0.7853982
  %vm3102 = vcmp.lt.s32.totalorder %v2067, 0
  %v3103 = vand.u32 %v2067, 2139095040
  %v3104 = vshrl.u32 %v3103, 23
  %v3105 = vsub.s32 %v3104, 127
  %v3106 = vand.u32 2147483647, %v2067
  %v3107 = vand.u32 %v3106, 8388607
  %v3108 = vor.u32 %v3107, 8388608
  %v3109 = vsub.s32 0, %v3108
  %v3110 = vadd.s32 %v3105, 1
  %vm3111 = vcmp.gt.s32.totalorder %v3110, 0
  %v3112 = vsel %vm3111, %v3110, 0
  %v3113 = vshrl.u32 %v3112, 5
  %v3114 = vand.u32 %v3112, 31
  %v3115 = vsub.s32 32, %v3114
  %v3116 = vshrl.u32 683565275, %v3115
  %v3117 = vshll.u32 683565275, %v3114
  %v3118 = vshrl.u32 2475754826, %v3115
  %v3119 = vor.u32 %v3117, %v3118
  %v3120 = vshll.u32 2475754826, %v3114
  %v3121 = vshrl.u32 2131351028, %v3115
  %v3122 = vor.u32 %v3120, %v3121
  %v3123 = vshll.u32 2131351028, %v3114
  %v3124 = vshrl.u32 2102212464, %v3115
  %v3125 = vor.u32 %v3123, %v3124
  %v3126 = vshll.u32 2102212464, %v3114
  %v3127 = vshrl.u32 920167782, %v3115
  %v3128 = vor.u32 %v3126, %v3127
  %v3129 = vshll.u32 920167782, %v3114
  %v3130 = vshrl.u32 1326507024, %v3115
  %v3131 = vor.u32 %v3129, %v3130
  %vm3132 = vcmp.lt.s32.totalorder %v3113, 1
  %vm3133 = vcmp.lt.s32.totalorder %v3113, 2
  %vm3134 = vcmp.lt.s32.totalorder %v3113, 3
  %vm3135 = vcmp.lt.s32.totalorder %v3113, 4
  %v3136 = vsel %vm3132, %v3116, %v3119
  %v3137 = vsel %vm3135, %v3125, 2102212464
  %v3138 = vsel %vm3134, %v3122, %v3137
  %v3139 = vsel %vm3133, %v3136, %v3138
  %v3140 = vsel %vm3132, %v3119, %v3122
  %v3141 = vsel %vm3135, %v3128, 920167782
  %v3142 = vsel %vm3134, %v3125, %v3141
  %v3143 = vsel %vm3133, %v3140, %v3142
  %v3144 = vsel %vm3132, %v3122, %v3125
  %v3145 = vsel %vm3135, %v3131, 1326507024
  %v3146 = vsel %vm3134, %v3128, %v3145
  %v3147 = vsel %vm3133, %v3144, %v3146
  %v3148 = vshll.u32 %v3108, 8
  %v3149 = vmul.u32.u64.compose %v3148, %v3147
  %v3150 = vextract.low.u32 %v3149
  %v3151 = vextract.high.u32 %v3149
  %v3152 = vmul.u32.u64.compose %v3148, %v3143
  %v3153 = vextract.low.u32 %v3152
  %v3154 = vextract.high.u32 %v3152
  %v3155 = vmul.u32 %v3148, %v3139
  %v3156 = vadd.s32 %v3151, %v3153
  %vm3157 = vc.u32 %v3151, %v3153
  %v3158 = vadd.s32 %v3154, 1
  %v3159 = vsel %vm3157, %v3158, %v3154
  %v3160 = vadd.s32 %v3155, %v3159
  %v3161 = vadd.s32 %v3160, 536870912
  %v3162 = vshrl.u32 %v3161, 30
  %v3163 = vshll.u32 %v3162, 30
  %v3164 = vsub.s32 %v3160, %v3163
  %vm3165 = vcmp.lt.s32.totalorder %v3164, 0
  %v3166 = vsub.s32 0, %v3164
  %v3167 = vsel %vm3165, %v3166, %v3164
  %v3168 = vclz %v3167
  %v3169 = vsub.s32 %v3168, 2
  %vm3170 = vcmp.gt.s32.totalorder 0, %v3169
  %v3171 = vsel %vm3170, 0, %v3169
  %v3172 = vsub.s32 32, %v3171
  %v3173 = vshll.u32 %v3164, %v3171
  %v3174 = vshrl.u32 %v3156, %v3172
  %v3175 = vor.u32 %v3173, %v3174
  %v3176 = vsub.s32 4294967266, %v3171
  %v3177 = vadd.s32 %v3176, 127
  %v3178 = vshll.u32 %v3177, 23
  %v3179 = vor.u32 4788187, %v3178
  %v3180 = vand.u32 2147483647, %v3179
  %v3182 = vcvt.s32.f32 %v3175
  %v3183 = vmul.f32 %v3182, %v3180
  %v3184 = vxor.u32 %v3183, 2147483648
  %v3185 = vsel %vm3102, %v3184, %v3183
  %v3186 = vsub.s32 4, %v3162
  %v3187 = vsel %vm3102, %v3186, %v3162
  %v3188 = vsel %vm3101, %v2067, %v3185
  %v3189 = vsel %vm3101, 0, %v3187
  %v3190 = vcosq.f32.pop %v3188
  %v3191 = vsinq.f32.pop %v3188
  %vm3192 = vweird.f32 %v2067
  %v3193 = vadd.s32 %v3189, 3
  %v3194 = vand.u32 %v3193, 3
  %vm3195 = vcmp.lt.s32.totalorder %v3194, 2
  %vm3196 = vcmp.eq.s32.totalorder %v3194, 0
  %v3197 = vxor.u32 %v3191, 2147483648
  %v3198 = vsel %vm3196, %v3190, %v3197
  %vm3199 = vcmp.eq.s32.totalorder %v3194, 2
  %v3200 = vxor.u32 %v3190, 2147483648
  %v3201 = vsel %vm3199, %v3200, %v3191
  %v3202 = vsel %vm3195, %v3198, %v3201
  %v3203 = vsel %vm3192, nan, %v3202
  %v3204 = vand.u32 2147483647, %v2154
  %vm3205 = vcmp.le.f32.partialorder %v3204, 0.7853982
  %vm3206 = vcmp.lt.s32.totalorder %v2154, 0
  %v3207 = vand.u32 %v2154, 2139095040
  %v3208 = vshrl.u32 %v3207, 23
  %v3209 = vsub.s32 %v3208, 127
  %v3210 = vand.u32 2147483647, %v2154
  %v3211 = vand.u32 %v3210, 8388607
  %v3212 = vor.u32 %v3211, 8388608
  %v3213 = vsub.s32 0, %v3212
  %v3214 = vadd.s32 %v3209, 1
  %vm3215 = vcmp.gt.s32.totalorder %v3214, 0
  %v3216 = vsel %vm3215, %v3214, 0
  %v3217 = vshrl.u32 %v3216, 5
  %v3218 = vand.u32 %v3216, 31
  %v3219 = vsub.s32 32, %v3218
  %v3220 = vshrl.u32 683565275, %v3219
  %v3221 = vshll.u32 683565275, %v3218
  %v3222 = vshrl.u32 2475754826, %v3219
  %v3223 = vor.u32 %v3221, %v3222
  %v3224 = vshll.u32 2475754826, %v3218
  %v3225 = vshrl.u32 2131351028, %v3219
  %v3226 = vor.u32 %v3224, %v3225
  %v3227 = vshll.u32 2131351028, %v3218
  %v3228 = vshrl.u32 2102212464, %v3219
  %v3229 = vor.u32 %v3227, %v3228
  %v3230 = vshll.u32 2102212464, %v3218
  %v3231 = vshrl.u32 920167782, %v3219
  %v3232 = vor.u32 %v3230, %v3231
  %v3233 = vshll.u32 920167782, %v3218
  %v3234 = vshrl.u32 1326507024, %v3219
  %v3235 = vor.u32 %v3233, %v3234
  %vm3236 = vcmp.lt.s32.totalorder %v3217, 1
  %vm3237 = vcmp.lt.s32.totalorder %v3217, 2
  %vm3238 = vcmp.lt.s32.totalorder %v3217, 3
  %vm3239 = vcmp.lt.s32.totalorder %v3217, 4
  %v3240 = vsel %vm3236, %v3220, %v3223
  %v3241 = vsel %vm3239, %v3229, 2102212464
  %v3242 = vsel %vm3238, %v3226, %v3241
  %v3243 = vsel %vm3237, %v3240, %v3242
  %v3244 = vsel %vm3236, %v3223, %v3226
  %v3245 = vsel %vm3239, %v3232, 920167782
  %v3246 = vsel %vm3238, %v3229, %v3245
  %v3247 = vsel %vm3237, %v3244, %v3246
  %v3248 = vsel %vm3236, %v3226, %v3229
  %v3249 = vsel %vm3239, %v3235, 1326507024
  %v3250 = vsel %vm3238, %v3232, %v3249
  %v3251 = vsel %vm3237, %v3248, %v3250
  %v3252 = vshll.u32 %v3212, 8
  %v3253 = vmul.u32.u64.compose %v3252, %v3251
  %v3254 = vextract.low.u32 %v3253
  %v3255 = vextract.high.u32 %v3253
  %v3256 = vmul.u32.u64.compose %v3252, %v3247
  %v3257 = vextract.low.u32 %v3256
  %v3258 = vextract.high.u32 %v3256
  %v3259 = vmul.u32 %v3252, %v3243
  %v3260 = vadd.s32 %v3255, %v3257
  %vm3261 = vc.u32 %v3255, %v3257
  %v3262 = vadd.s32 %v3258, 1
  %v3263 = vsel %vm3261, %v3262, %v3258
  %v3264 = vadd.s32 %v3259, %v3263
  %v3265 = vadd.s32 %v3264, 536870912
  %v3266 = vshrl.u32 %v3265, 30
  %v3267 = vshll.u32 %v3266, 30
  %v3268 = vsub.s32 %v3264, %v3267
  %vm3269 = vcmp.lt.s32.totalorder %v3268, 0
  %v3270 = vsub.s32 0, %v3268
  %v3271 = vsel %vm3269, %v3270, %v3268
  %v3272 = vclz %v3271
  %v3273 = vsub.s32 %v3272, 2
  %vm3274 = vcmp.gt.s32.totalorder 0, %v3273
  %v3275 = vsel %vm3274, 0, %v3273
  %v3276 = vsub.s32 32, %v3275
  %v3277 = vshll.u32 %v3268, %v3275
  %v3278 = vshrl.u32 %v3260, %v3276
  %v3279 = vor.u32 %v3277, %v3278
  %v3280 = vsub.s32 4294967266, %v3275
  %v3281 = vadd.s32 %v3280, 127
  %v3282 = vshll.u32 %v3281, 23
  %v3283 = vor.u32 4788187, %v3282
  %v3284 = vand.u32 2147483647, %v3283
  %v3286 = vcvt.s32.f32 %v3279
  %v3287 = vmul.f32 %v3286, %v3284
  %v3288 = vxor.u32 %v3287, 2147483648
  %v3289 = vsel %vm3206, %v3288, %v3287
  %v3290 = vsub.s32 4, %v3266
  %v3291 = vsel %vm3206, %v3290, %v3266
  %v3292 = vsel %vm3205, %v2154, %v3289
  %v3293 = vsel %vm3205, 0, %v3291
  %v3294 = vcosq.f32.pop %v3292
  %v3295 = vsinq.f32.pop %v3292
  %vm3296 = vweird.f32 %v2154
  %v3297 = vadd.s32 %v3293, 3
  %v3298 = vand.u32 %v3297, 3
  %vm3299 = vcmp.lt.s32.totalorder %v3298, 2
  %vm3300 = vcmp.eq.s32.totalorder %v3298, 0
  %v3301 = vxor.u32 %v3295, 2147483648
  %v3302 = vsel %vm3300, %v3294, %v3301
  %vm3303 = vcmp.eq.s32.totalorder %v3298, 2
  %v3304 = vxor.u32 %v3294, 2147483648
  %v3305 = vsel %vm3303, %v3304, %v3295
  %v3306 = vsel %vm3299, %v3302, %v3305
  %v3307 = vsel %vm3296, nan, %v3306
  %v3308 = vand.u32 2147483647, %v2156
  %vm3309 = vcmp.le.f32.partialorder %v3308, 0.7853982
  %vm3310 = vcmp.lt.s32.totalorder %v2156, 0
  %v3311 = vand.u32 %v2156, 2139095040
  %v3312 = vshrl.u32 %v3311, 23
  %v3313 = vsub.s32 %v3312, 127
  %v3314 = vand.u32 2147483647, %v2156
  %v3315 = vand.u32 %v3314, 8388607
  %v3316 = vor.u32 %v3315, 8388608
  %v3317 = vsub.s32 0, %v3316
  %v3318 = vadd.s32 %v3313, 1
  %vm3319 = vcmp.gt.s32.totalorder %v3318, 0
  %v3320 = vsel %vm3319, %v3318, 0
  %v3321 = vshrl.u32 %v3320, 5
  %v3322 = vand.u32 %v3320, 31
  %v3323 = vsub.s32 32, %v3322
  %v3324 = vshrl.u32 683565275, %v3323
  %v3325 = vshll.u32 683565275, %v3322
  %v3326 = vshrl.u32 2475754826, %v3323
  %v3327 = vor.u32 %v3325, %v3326
  %v3328 = vshll.u32 2475754826, %v3322
  %v3329 = vshrl.u32 2131351028, %v3323
  %v3330 = vor.u32 %v3328, %v3329
  %v3331 = vshll.u32 2131351028, %v3322
  %v3332 = vshrl.u32 2102212464, %v3323
  %v3333 = vor.u32 %v3331, %v3332
  %v3334 = vshll.u32 2102212464, %v3322
  %v3335 = vshrl.u32 920167782, %v3323
  %v3336 = vor.u32 %v3334, %v3335
  %v3337 = vshll.u32 920167782, %v3322
  %v3338 = vshrl.u32 1326507024, %v3323
  %v3339 = vor.u32 %v3337, %v3338
  %vm3340 = vcmp.lt.s32.totalorder %v3321, 1
  %vm3341 = vcmp.lt.s32.totalorder %v3321, 2
  %vm3342 = vcmp.lt.s32.totalorder %v3321, 3
  %vm3343 = vcmp.lt.s32.totalorder %v3321, 4
  %v3344 = vsel %vm3340, %v3324, %v3327
  %v3345 = vsel %vm3343, %v3333, 2102212464
  %v3346 = vsel %vm3342, %v3330, %v3345
  %v3347 = vsel %vm3341, %v3344, %v3346
  %v3348 = vsel %vm3340, %v3327, %v3330
  %v3349 = vsel %vm3343, %v3336, 920167782
  %v3350 = vsel %vm3342, %v3333, %v3349
  %v3351 = vsel %vm3341, %v3348, %v3350
  %v3352 = vsel %vm3340, %v3330, %v3333
  %v3353 = vsel %vm3343, %v3339, 1326507024
  %v3354 = vsel %vm3342, %v3336, %v3353
  %v3355 = vsel %vm3341, %v3352, %v3354
  %v3356 = vshll.u32 %v3316, 8
  %v3357 = vmul.u32.u64.compose %v3356, %v3355
  %v3358 = vextract.low.u32 %v3357
  %v3359 = vextract.high.u32 %v3357
  %v3360 = vmul.u32.u64.compose %v3356, %v3351
  %v3361 = vextract.low.u32 %v3360
  %v3362 = vextract.high.u32 %v3360
  %v3363 = vmul.u32 %v3356, %v3347
  %v3364 = vadd.s32 %v3359, %v3361
  %vm3365 = vc.u32 %v3359, %v3361
  %v3366 = vadd.s32 %v3362, 1
  %v3367 = vsel %vm3365, %v3366, %v3362
  %v3368 = vadd.s32 %v3363, %v3367
  %v3369 = vadd.s32 %v3368, 536870912
  %v3370 = vshrl.u32 %v3369, 30
  %v3371 = vshll.u32 %v3370, 30
  %v3372 = vsub.s32 %v3368, %v3371
  %vm3373 = vcmp.lt.s32.totalorder %v3372, 0
  %v3374 = vsub.s32 0, %v3372
  %v3375 = vsel %vm3373, %v3374, %v3372
  %v3376 = vclz %v3375
  %v3377 = vsub.s32 %v3376, 2
  %vm3378 = vcmp.gt.s32.totalorder 0, %v3377
  %v3379 = vsel %vm3378, 0, %v3377
  %v3380 = vsub.s32 32, %v3379
  %v3381 = vshll.u32 %v3372, %v3379
  %v3382 = vshrl.u32 %v3364, %v3380
  %v3383 = vor.u32 %v3381, %v3382
  %v3384 = vsub.s32 4294967266, %v3379
  %v3385 = vadd.s32 %v3384, 127
  %v3386 = vshll.u32 %v3385, 23
  %v3387 = vor.u32 4788187, %v3386
  %v3388 = vand.u32 2147483647, %v3387
  %v3390 = vcvt.s32.f32 %v3383
  %v3391 = vmul.f32 %v3390, %v3388
  %v3392 = vxor.u32 %v3391, 2147483648
  %v3393 = vsel %vm3310, %v3392, %v3391
  %v3394 = vsub.s32 4, %v3370
  %v3395 = vsel %vm3310, %v3394, %v3370
  %v3396 = vsel %vm3309, %v2156, %v3393
  %v3397 = vsel %vm3309, 0, %v3395
  %v3398 = vcosq.f32.pop %v3396
  %v3399 = vsinq.f32.pop %v3396
  %vm3400 = vweird.f32 %v2156
  %v3401 = vadd.s32 %v3397, 3
  %v3402 = vand.u32 %v3401, 3
  %vm3403 = vcmp.lt.s32.totalorder %v3402, 2
  %vm3404 = vcmp.eq.s32.totalorder %v3402, 0
  %v3405 = vxor.u32 %v3399, 2147483648
  %v3406 = vsel %vm3404, %v3398, %v3405
  %vm3407 = vcmp.eq.s32.totalorder %v3402, 2
  %v3408 = vxor.u32 %v3398, 2147483648
  %v3409 = vsel %vm3407, %v3408, %v3399
  %v3410 = vsel %vm3403, %v3406, %v3409
  %v3411 = vsel %vm3400, nan, %v3410
  %v3412 = vand.u32 2147483647, %v2071
  %vm3413 = vcmp.le.f32.partialorder %v3412, 0.7853982
  %vm3414 = vcmp.lt.s32.totalorder %v2071, 0
  %v3415 = vand.u32 %v2071, 2139095040
  %v3416 = vshrl.u32 %v3415, 23
  %v3417 = vsub.s32 %v3416, 127
  %v3418 = vand.u32 2147483647, %v2071
  %v3419 = vand.u32 %v3418, 8388607
  %v3420 = vor.u32 %v3419, 8388608
  %v3421 = vsub.s32 0, %v3420
  %v3422 = vadd.s32 %v3417, 1
  %vm3423 = vcmp.gt.s32.totalorder %v3422, 0
  %v3424 = vsel %vm3423, %v3422, 0
  %v3425 = vshrl.u32 %v3424, 5
  %v3426 = vand.u32 %v3424, 31
  %v3427 = vsub.s32 32, %v3426
  %v3428 = vshrl.u32 683565275, %v3427
  %v3429 = vshll.u32 683565275, %v3426
  %v3430 = vshrl.u32 2475754826, %v3427
  %v3431 = vor.u32 %v3429, %v3430
  %v3432 = vshll.u32 2475754826, %v3426
  %v3433 = vshrl.u32 2131351028, %v3427
  %v3434 = vor.u32 %v3432, %v3433
  %v3435 = vshll.u32 2131351028, %v3426
  %v3436 = vshrl.u32 2102212464, %v3427
  %v3437 = vor.u32 %v3435, %v3436
  %v3438 = vshll.u32 2102212464, %v3426
  %v3439 = vshrl.u32 920167782, %v3427
  %v3440 = vor.u32 %v3438, %v3439
  %v3441 = vshll.u32 920167782, %v3426
  %v3442 = vshrl.u32 1326507024, %v3427
  %v3443 = vor.u32 %v3441, %v3442
  %vm3444 = vcmp.lt.s32.totalorder %v3425, 1
  %vm3445 = vcmp.lt.s32.totalorder %v3425, 2
  %vm3446 = vcmp.lt.s32.totalorder %v3425, 3
  %vm3447 = vcmp.lt.s32.totalorder %v3425, 4
  %v3448 = vsel %vm3444, %v3428, %v3431
  %v3449 = vsel %vm3447, %v3437, 2102212464
  %v3450 = vsel %vm3446, %v3434, %v3449
  %v3451 = vsel %vm3445, %v3448, %v3450
  %v3452 = vsel %vm3444, %v3431, %v3434
  %v3453 = vsel %vm3447, %v3440, 920167782
  %v3454 = vsel %vm3446, %v3437, %v3453
  %v3455 = vsel %vm3445, %v3452, %v3454
  %v3456 = vsel %vm3444, %v3434, %v3437
  %v3457 = vsel %vm3447, %v3443, 1326507024
  %v3458 = vsel %vm3446, %v3440, %v3457
  %v3459 = vsel %vm3445, %v3456, %v3458
  %v3460 = vshll.u32 %v3420, 8
  %v3461 = vmul.u32.u64.compose %v3460, %v3459
  %v3462 = vextract.low.u32 %v3461
  %v3463 = vextract.high.u32 %v3461
  %v3464 = vmul.u32.u64.compose %v3460, %v3455
  %v3465 = vextract.low.u32 %v3464
  %v3466 = vextract.high.u32 %v3464
  %v3467 = vmul.u32 %v3460, %v3451
  %v3468 = vadd.s32 %v3463, %v3465
  %vm3469 = vc.u32 %v3463, %v3465
  %v3470 = vadd.s32 %v3466, 1
  %v3471 = vsel %vm3469, %v3470, %v3466
  %v3472 = vadd.s32 %v3467, %v3471
  %v3473 = vadd.s32 %v3472, 536870912
  %v3474 = vshrl.u32 %v3473, 30
  %v3475 = vshll.u32 %v3474, 30
  %v3476 = vsub.s32 %v3472, %v3475
  %vm3477 = vcmp.lt.s32.totalorder %v3476, 0
  %v3478 = vsub.s32 0, %v3476
  %v3479 = vsel %vm3477, %v3478, %v3476
  %v3480 = vclz %v3479
  %v3481 = vsub.s32 %v3480, 2
  %vm3482 = vcmp.gt.s32.totalorder 0, %v3481
  %v3483 = vsel %vm3482, 0, %v3481
  %v3484 = vsub.s32 32, %v3483
  %v3485 = vshll.u32 %v3476, %v3483
  %v3486 = vshrl.u32 %v3468, %v3484
  %v3487 = vor.u32 %v3485, %v3486
  %v3488 = vsub.s32 4294967266, %v3483
  %v3489 = vadd.s32 %v3488, 127
  %v3490 = vshll.u32 %v3489, 23
  %v3491 = vor.u32 4788187, %v3490
  %v3492 = vand.u32 2147483647, %v3491
  %v3494 = vcvt.s32.f32 %v3487
  %v3495 = vmul.f32 %v3494, %v3492
  %v3496 = vxor.u32 %v3495, 2147483648
  %v3497 = vsel %vm3414, %v3496, %v3495
  %v3498 = vsub.s32 4, %v3474
  %v3499 = vsel %vm3414, %v3498, %v3474
  %v3500 = vsel %vm3413, %v2071, %v3497
  %v3501 = vsel %vm3413, 0, %v3499
  %v3502 = vcosq.f32.pop %v3500
  %v3503 = vsinq.f32.pop %v3500
  %vm3504 = vweird.f32 %v2071
  %v3505 = vadd.s32 %v3501, 3
  %v3506 = vand.u32 %v3505, 3
  %vm3507 = vcmp.lt.s32.totalorder %v3506, 2
  %vm3508 = vcmp.eq.s32.totalorder %v3506, 0
  %v3509 = vxor.u32 %v3503, 2147483648
  %v3510 = vsel %vm3508, %v3502, %v3509
  %vm3511 = vcmp.eq.s32.totalorder %v3506, 2
  %v3512 = vxor.u32 %v3502, 2147483648
  %v3513 = vsel %vm3511, %v3512, %v3503
  %v3514 = vsel %vm3507, %v3510, %v3513
  %v3515 = vsel %vm3504, nan, %v3514
  %v3516 = vand.u32 2147483647, %v2073
  %vm3517 = vcmp.le.f32.partialorder %v3516, 0.7853982
  %vm3518 = vcmp.lt.s32.totalorder %v2073, 0
  %v3519 = vand.u32 %v2073, 2139095040
  %v3520 = vshrl.u32 %v3519, 23
  %v3521 = vsub.s32 %v3520, 127
  %v3522 = vand.u32 2147483647, %v2073
  %v3523 = vand.u32 %v3522, 8388607
  %v3524 = vor.u32 %v3523, 8388608
  %v3525 = vsub.s32 0, %v3524
  %v3526 = vadd.s32 %v3521, 1
  %vm3527 = vcmp.gt.s32.totalorder %v3526, 0
  %v3528 = vsel %vm3527, %v3526, 0
  %v3529 = vshrl.u32 %v3528, 5
  %v3530 = vand.u32 %v3528, 31
  %v3531 = vsub.s32 32, %v3530
  %v3532 = vshrl.u32 683565275, %v3531
  %v3533 = vshll.u32 683565275, %v3530
  %v3534 = vshrl.u32 2475754826, %v3531
  %v3535 = vor.u32 %v3533, %v3534
  %v3536 = vshll.u32 2475754826, %v3530
  %v3537 = vshrl.u32 2131351028, %v3531
  %v3538 = vor.u32 %v3536, %v3537
  %v3539 = vshll.u32 2131351028, %v3530
  %v3540 = vshrl.u32 2102212464, %v3531
  %v3541 = vor.u32 %v3539, %v3540
  %v3542 = vshll.u32 2102212464, %v3530
  %v3543 = vshrl.u32 920167782, %v3531
  %v3544 = vor.u32 %v3542, %v3543
  %v3545 = vshll.u32 920167782, %v3530
  %v3546 = vshrl.u32 1326507024, %v3531
  %v3547 = vor.u32 %v3545, %v3546
  %vm3548 = vcmp.lt.s32.totalorder %v3529, 1
  %vm3549 = vcmp.lt.s32.totalorder %v3529, 2
  %vm3550 = vcmp.lt.s32.totalorder %v3529, 3
  %vm3551 = vcmp.lt.s32.totalorder %v3529, 4
  %v3552 = vsel %vm3548, %v3532, %v3535
  %v3553 = vsel %vm3551, %v3541, 2102212464
  %v3554 = vsel %vm3550, %v3538, %v3553
  %v3555 = vsel %vm3549, %v3552, %v3554
  %v3556 = vsel %vm3548, %v3535, %v3538
  %v3557 = vsel %vm3551, %v3544, 920167782
  %v3558 = vsel %vm3550, %v3541, %v3557
  %v3559 = vsel %vm3549, %v3556, %v3558
  %v3560 = vsel %vm3548, %v3538, %v3541
  %v3561 = vsel %vm3551, %v3547, 1326507024
  %v3562 = vsel %vm3550, %v3544, %v3561
  %v3563 = vsel %vm3549, %v3560, %v3562
  %v3564 = vshll.u32 %v3524, 8
  %v3565 = vmul.u32.u64.compose %v3564, %v3563
  %v3566 = vextract.low.u32 %v3565
  %v3567 = vextract.high.u32 %v3565
  %v3568 = vmul.u32.u64.compose %v3564, %v3559
  %v3569 = vextract.low.u32 %v3568
  %v3570 = vextract.high.u32 %v3568
  %v3571 = vmul.u32 %v3564, %v3555
  %v3572 = vadd.s32 %v3567, %v3569
  %vm3573 = vc.u32 %v3567, %v3569
  %v3574 = vadd.s32 %v3570, 1
  %v3575 = vsel %vm3573, %v3574, %v3570
  %v3576 = vadd.s32 %v3571, %v3575
  %v3577 = vadd.s32 %v3576, 536870912
  %v3578 = vshrl.u32 %v3577, 30
  %v3579 = vshll.u32 %v3578, 30
  %v3580 = vsub.s32 %v3576, %v3579
  %vm3581 = vcmp.lt.s32.totalorder %v3580, 0
  %v3582 = vsub.s32 0, %v3580
  %v3583 = vsel %vm3581, %v3582, %v3580
  %v3584 = vclz %v3583
  %v3585 = vsub.s32 %v3584, 2
  %vm3586 = vcmp.gt.s32.totalorder 0, %v3585
  %v3587 = vsel %vm3586, 0, %v3585
  %v3588 = vsub.s32 32, %v3587
  %v3589 = vshll.u32 %v3580, %v3587
  %v3590 = vshrl.u32 %v3572, %v3588
  %v3591 = vor.u32 %v3589, %v3590
  %v3592 = vsub.s32 4294967266, %v3587
  %v3593 = vadd.s32 %v3592, 127
  %v3594 = vshll.u32 %v3593, 23
  %v3595 = vor.u32 4788187, %v3594
  %v3596 = vand.u32 2147483647, %v3595
  %v3598 = vcvt.s32.f32 %v3591
  %v3599 = vmul.f32 %v3598, %v3596
  %v3600 = vxor.u32 %v3599, 2147483648
  %v3601 = vsel %vm3518, %v3600, %v3599
  %v3602 = vsub.s32 4, %v3578
  %v3603 = vsel %vm3518, %v3602, %v3578
  %v3604 = vsel %vm3517, %v2073, %v3601
  %v3605 = vsel %vm3517, 0, %v3603
  %v3606 = vcosq.f32.pop %v3604
  %v3607 = vsinq.f32.pop %v3604
  %vm3608 = vweird.f32 %v2073
  %v3609 = vadd.s32 %v3605, 3
  %v3610 = vand.u32 %v3609, 3
  %vm3611 = vcmp.lt.s32.totalorder %v3610, 2
  %vm3612 = vcmp.eq.s32.totalorder %v3610, 0
  %v3613 = vxor.u32 %v3607, 2147483648
  %v3614 = vsel %vm3612, %v3606, %v3613
  %vm3615 = vcmp.eq.s32.totalorder %v3610, 2
  %v3616 = vxor.u32 %v3606, 2147483648
  %v3617 = vsel %vm3615, %v3616, %v3607
  %v3618 = vsel %vm3611, %v3614, %v3617
  %v3619 = vsel %vm3608, nan, %v3618
  %v3620 = vand.u32 2147483647, %v2160
  %vm3621 = vcmp.le.f32.partialorder %v3620, 0.7853982
  %vm3622 = vcmp.lt.s32.totalorder %v2160, 0
  %v3623 = vand.u32 %v2160, 2139095040
  %v3624 = vshrl.u32 %v3623, 23
  %v3625 = vsub.s32 %v3624, 127
  %v3626 = vand.u32 2147483647, %v2160
  %v3627 = vand.u32 %v3626, 8388607
  %v3628 = vor.u32 %v3627, 8388608
  %v3629 = vsub.s32 0, %v3628
  %v3630 = vadd.s32 %v3625, 1
  %vm3631 = vcmp.gt.s32.totalorder %v3630, 0
  %v3632 = vsel %vm3631, %v3630, 0
  %v3633 = vshrl.u32 %v3632, 5
  %v3634 = vand.u32 %v3632, 31
  %v3635 = vsub.s32 32, %v3634
  %v3636 = vshrl.u32 683565275, %v3635
  %v3637 = vshll.u32 683565275, %v3634
  %v3638 = vshrl.u32 2475754826, %v3635
  %v3639 = vor.u32 %v3637, %v3638
  %v3640 = vshll.u32 2475754826, %v3634
  %v3641 = vshrl.u32 2131351028, %v3635
  %v3642 = vor.u32 %v3640, %v3641
  %v3643 = vshll.u32 2131351028, %v3634
  %v3644 = vshrl.u32 2102212464, %v3635
  %v3645 = vor.u32 %v3643, %v3644
  %v3646 = vshll.u32 2102212464, %v3634
  %v3647 = vshrl.u32 920167782, %v3635
  %v3648 = vor.u32 %v3646, %v3647
  %v3649 = vshll.u32 920167782, %v3634
  %v3650 = vshrl.u32 1326507024, %v3635
  %v3651 = vor.u32 %v3649, %v3650
  %vm3652 = vcmp.lt.s32.totalorder %v3633, 1
  %vm3653 = vcmp.lt.s32.totalorder %v3633, 2
  %vm3654 = vcmp.lt.s32.totalorder %v3633, 3
  %vm3655 = vcmp.lt.s32.totalorder %v3633, 4
  %v3656 = vsel %vm3652, %v3636, %v3639
  %v3657 = vsel %vm3655, %v3645, 2102212464
  %v3658 = vsel %vm3654, %v3642, %v3657
  %v3659 = vsel %vm3653, %v3656, %v3658
  %v3660 = vsel %vm3652, %v3639, %v3642
  %v3661 = vsel %vm3655, %v3648, 920167782
  %v3662 = vsel %vm3654, %v3645, %v3661
  %v3663 = vsel %vm3653, %v3660, %v3662
  %v3664 = vsel %vm3652, %v3642, %v3645
  %v3665 = vsel %vm3655, %v3651, 1326507024
  %v3666 = vsel %vm3654, %v3648, %v3665
  %v3667 = vsel %vm3653, %v3664, %v3666
  %v3668 = vshll.u32 %v3628, 8
  %v3669 = vmul.u32.u64.compose %v3668, %v3667
  %v3670 = vextract.low.u32 %v3669
  %v3671 = vextract.high.u32 %v3669
  %v3672 = vmul.u32.u64.compose %v3668, %v3663
  %v3673 = vextract.low.u32 %v3672
  %v3674 = vextract.high.u32 %v3672
  %v3675 = vmul.u32 %v3668, %v3659
  %v3676 = vadd.s32 %v3671, %v3673
  %vm3677 = vc.u32 %v3671, %v3673
  %v3678 = vadd.s32 %v3674, 1
  %v3679 = vsel %vm3677, %v3678, %v3674
  %v3680 = vadd.s32 %v3675, %v3679
  %v3681 = vadd.s32 %v3680, 536870912
  %v3682 = vshrl.u32 %v3681, 30
  %v3683 = vshll.u32 %v3682, 30
  %v3684 = vsub.s32 %v3680, %v3683
  %vm3685 = vcmp.lt.s32.totalorder %v3684, 0
  %v3686 = vsub.s32 0, %v3684
  %v3687 = vsel %vm3685, %v3686, %v3684
  %v3688 = vclz %v3687
  %v3689 = vsub.s32 %v3688, 2
  %vm3690 = vcmp.gt.s32.totalorder 0, %v3689
  %v3691 = vsel %vm3690, 0, %v3689
  %v3692 = vsub.s32 32, %v3691
  %v3693 = vshll.u32 %v3684, %v3691
  %v3694 = vshrl.u32 %v3676, %v3692
  %v3695 = vor.u32 %v3693, %v3694
  %v3696 = vsub.s32 4294967266, %v3691
  %v3697 = vadd.s32 %v3696, 127
  %v3698 = vshll.u32 %v3697, 23
  %v3699 = vor.u32 4788187, %v3698
  %v3700 = vand.u32 2147483647, %v3699
  %v3702 = vcvt.s32.f32 %v3695
  %v3703 = vmul.f32 %v3702, %v3700
  %v3704 = vxor.u32 %v3703, 2147483648
  %v3705 = vsel %vm3622, %v3704, %v3703
  %v3706 = vsub.s32 4, %v3682
  %v3707 = vsel %vm3622, %v3706, %v3682
  %v3708 = vsel %vm3621, %v2160, %v3705
  %v3709 = vsel %vm3621, 0, %v3707
  %v3710 = vcosq.f32.pop %v3708
  %v3711 = vsinq.f32.pop %v3708
  %vm3712 = vweird.f32 %v2160
  %v3713 = vadd.s32 %v3709, 3
  %v3714 = vand.u32 %v3713, 3
  %vm3715 = vcmp.lt.s32.totalorder %v3714, 2
  %vm3716 = vcmp.eq.s32.totalorder %v3714, 0
  %v3717 = vxor.u32 %v3711, 2147483648
  %v3718 = vsel %vm3716, %v3710, %v3717
  %vm3719 = vcmp.eq.s32.totalorder %v3714, 2
  %v3720 = vxor.u32 %v3710, 2147483648
  %v3721 = vsel %vm3719, %v3720, %v3711
  %v3722 = vsel %vm3715, %v3718, %v3721
  %v3723 = vsel %vm3712, nan, %v3722
  %v3724 = vand.u32 2147483647, %v2162
  %vm3725 = vcmp.le.f32.partialorder %v3724, 0.7853982
  %vm3726 = vcmp.lt.s32.totalorder %v2162, 0
  %v3727 = vand.u32 %v2162, 2139095040
  %v3728 = vshrl.u32 %v3727, 23
  %v3729 = vsub.s32 %v3728, 127
  %v3730 = vand.u32 2147483647, %v2162
  %v3731 = vand.u32 %v3730, 8388607
  %v3732 = vor.u32 %v3731, 8388608
  %v3733 = vsub.s32 0, %v3732
  %v3734 = vadd.s32 %v3729, 1
  %vm3735 = vcmp.gt.s32.totalorder %v3734, 0
  %v3736 = vsel %vm3735, %v3734, 0
  %v3737 = vshrl.u32 %v3736, 5
  %v3738 = vand.u32 %v3736, 31
  %v3739 = vsub.s32 32, %v3738
  %v3740 = vshrl.u32 683565275, %v3739
  %v3741 = vshll.u32 683565275, %v3738
  %v3742 = vshrl.u32 2475754826, %v3739
  %v3743 = vor.u32 %v3741, %v3742
  %v3744 = vshll.u32 2475754826, %v3738
  %v3745 = vshrl.u32 2131351028, %v3739
  %v3746 = vor.u32 %v3744, %v3745
  %v3747 = vshll.u32 2131351028, %v3738
  %v3748 = vshrl.u32 2102212464, %v3739
  %v3749 = vor.u32 %v3747, %v3748
  %v3750 = vshll.u32 2102212464, %v3738
  %v3751 = vshrl.u32 920167782, %v3739
  %v3752 = vor.u32 %v3750, %v3751
  %v3753 = vshll.u32 920167782, %v3738
  %v3754 = vshrl.u32 1326507024, %v3739
  %v3755 = vor.u32 %v3753, %v3754
  %vm3756 = vcmp.lt.s32.totalorder %v3737, 1
  %vm3757 = vcmp.lt.s32.totalorder %v3737, 2
  %vm3758 = vcmp.lt.s32.totalorder %v3737, 3
  %vm3759 = vcmp.lt.s32.totalorder %v3737, 4
  %v3760 = vsel %vm3756, %v3740, %v3743
  %v3761 = vsel %vm3759, %v3749, 2102212464
  %v3762 = vsel %vm3758, %v3746, %v3761
  %v3763 = vsel %vm3757, %v3760, %v3762
  %v3764 = vsel %vm3756, %v3743, %v3746
  %v3765 = vsel %vm3759, %v3752, 920167782
  %v3766 = vsel %vm3758, %v3749, %v3765
  %v3767 = vsel %vm3757, %v3764, %v3766
  %v3768 = vsel %vm3756, %v3746, %v3749
  %v3769 = vsel %vm3759, %v3755, 1326507024
  %v3770 = vsel %vm3758, %v3752, %v3769
  %v3771 = vsel %vm3757, %v3768, %v3770
  %v3772 = vshll.u32 %v3732, 8
  %v3773 = vmul.u32.u64.compose %v3772, %v3771
  %v3774 = vextract.low.u32 %v3773
  %v3775 = vextract.high.u32 %v3773
  %v3776 = vmul.u32.u64.compose %v3772, %v3767
  %v3777 = vextract.low.u32 %v3776
  %v3778 = vextract.high.u32 %v3776
  %v3779 = vmul.u32 %v3772, %v3763
  %v3780 = vadd.s32 %v3775, %v3777
  %vm3781 = vc.u32 %v3775, %v3777
  %v3782 = vadd.s32 %v3778, 1
  %v3783 = vsel %vm3781, %v3782, %v3778
  %v3784 = vadd.s32 %v3779, %v3783
  %v3785 = vadd.s32 %v3784, 536870912
  %v3786 = vshrl.u32 %v3785, 30
  %v3787 = vshll.u32 %v3786, 30
  %v3788 = vsub.s32 %v3784, %v3787
  %vm3789 = vcmp.lt.s32.totalorder %v3788, 0
  %v3790 = vsub.s32 0, %v3788
  %v3791 = vsel %vm3789, %v3790, %v3788
  %v3792 = vclz %v3791
  %v3793 = vsub.s32 %v3792, 2
  %vm3794 = vcmp.gt.s32.totalorder 0, %v3793
  %v3795 = vsel %vm3794, 0, %v3793
  %v3796 = vsub.s32 32, %v3795
  %v3797 = vshll.u32 %v3788, %v3795
  %v3798 = vshrl.u32 %v3780, %v3796
  %v3799 = vor.u32 %v3797, %v3798
  %v3800 = vsub.s32 4294967266, %v3795
  %v3801 = vadd.s32 %v3800, 127
  %v3802 = vshll.u32 %v3801, 23
  %v3803 = vor.u32 4788187, %v3802
  %v3804 = vand.u32 2147483647, %v3803
  %v3806 = vcvt.s32.f32 %v3799
  %v3807 = vmul.f32 %v3806, %v3804
  %v3808 = vxor.u32 %v3807, 2147483648
  %v3809 = vsel %vm3726, %v3808, %v3807
  %v3810 = vsub.s32 4, %v3786
  %v3811 = vsel %vm3726, %v3810, %v3786
  %v3812 = vsel %vm3725, %v2162, %v3809
  %v3813 = vsel %vm3725, 0, %v3811
  %v3814 = vcosq.f32.pop %v3812
  %v3815 = vsinq.f32.pop %v3812
  %vm3816 = vweird.f32 %v2162
  %v3817 = vadd.s32 %v3813, 3
  %v3818 = vand.u32 %v3817, 3
  %vm3819 = vcmp.lt.s32.totalorder %v3818, 2
  %vm3820 = vcmp.eq.s32.totalorder %v3818, 0
  %v3821 = vxor.u32 %v3815, 2147483648
  %v3822 = vsel %vm3820, %v3814, %v3821
  %vm3823 = vcmp.eq.s32.totalorder %v3818, 2
  %v3824 = vxor.u32 %v3814, 2147483648
  %v3825 = vsel %vm3823, %v3824, %v3815
  %v3826 = vsel %vm3819, %v3822, %v3825
  %v3827 = vsel %vm3816, nan, %v3826
  %v3828 = vld [vmem:[%s5] sm:$0xff]
  %v3829 = vld [vmem:[%s5 + $0x8] sm:$0xff]
  %v3830 = vld [vmem:[%s5 + $0x10] sm:$0xff]
  %v3831 = vld [vmem:[%s5 + $0x18] sm:$0xff]
  %v3832 = vld [vmem:[%s6] sm:$0xff]
  %v3833 = vld [vmem:[%s6 + $0x8] sm:$0xff]
  %v3834 = vld [vmem:[%s6 + $0x10] sm:$0xff]
  %v3835 = vld [vmem:[%s6 + $0x18] sm:$0xff]
  %3837 = vset.pattern.permute.xlu0 0
  %3838 = vperm.xlu0 %3837, %v3832
  %v3839 = vpop.permute.xlu0 %3838
  %3842 = vset.pattern.permute.xlu0 0
  %3843 = vperm.xlu0 %3842, %v3833
  %v3844 = vpop.permute.xlu0 %3843
  %3847 = vset.pattern.permute.xlu0 0
  %3848 = vperm.xlu0 %3847, %v3834
  %v3849 = vpop.permute.xlu0 %3848
  %3852 = vset.pattern.permute.xlu0 0
  %3853 = vperm.xlu0 %3852, %v3835
  %v3854 = vpop.permute.xlu0 %3853
  %v3857 = vsel %vm1973, %v3828, 0
  %v3860 = vsel %vm1973, %v3829, 0
  %v3863 = vsel %vm1973, %v3830, 0
  %v3866 = vsel %vm1973, %v3831, 0
  %3868 = vmatprep.subr.mxu0 %v2371
  %3869 = vmatpush1.msra.mxu0 %v2267
  %3870 = vmatprep.subr.mxu0 %v2787
  %3871 = vmatpush1.msra.mxu0 %v2683
  %3872 = vmatprep.subr.mxu0 %v3203
  %3873 = vmatpush1.msra.mxu0 %v3099
  %3874 = vmatprep.subr.mxu0 %v3619
  %3875 = vmatpush1.msra.mxu0 %v3515
  %3876 = vmatprep.subr.mxu0 0.0
  %3877 = vmatpush1.msra.mxu0 0.0
  %3878 = vmatprep.subr.mxu0 0.0
  %3879 = vmatpush1.msra.mxu0 0.0
  %3880 = vmatprep.subr.mxu0 0.0
  %3881 = vmatpush1.msra.mxu0 0.0
  %3882 = vmatprep.subr.mxu0 0.0
  %3883 = vmatpush1.msra.mxu0 0.0
  %3884 = vmatprep.subr.mxu0 0.0
  %3885 = vmatpush1.msra.mxu0 0.0
  %3886 = vmatprep.subr.mxu0 0.0
  %3887 = vmatpush1.msra.mxu0 0.0
  %3888 = vmatprep.subr.mxu0 0.0
  %3889 = vmatpush1.msra.mxu0 0.0
  %3890 = vmatprep.subr.mxu0 0.0
  %3891 = vmatpush1.msra.mxu0 0.0
  %3892 = vmatprep.subr.mxu0 0.0
  %3893 = vmatpush1.msra.mxu0 0.0
  %3894 = vmatprep.subr.mxu0 0.0
  %3895 = vmatpush1.msra.mxu0 0.0
  %3896 = vmatprep.subr.mxu0 0.0
  %3897 = vmatpush1.msra.mxu0 0.0
  %3898 = vmatprep.subr.mxu0 0.0
  %3899 = vmatpush1.msra.mxu0 0.0
  %3900 = vmatprep.subr.mxu0 0.0
  %3901 = vmatpush1.msra.mxu0 0.0
  %3902 = vmatprep.subr.mxu0 0.0
  %3903 = vmatpush1.msra.mxu0 0.0
  %3904 = vmatprep.subr.mxu0 0.0
  %3905 = vmatpush1.msra.mxu0 0.0
  %3906 = vmatprep.subr.mxu0 0.0
  %3907 = vmatpush1.msra.mxu0 0.0
  %3908 = vmatprep.subr.mxu0 0.0
  %3909 = vmatpush1.msra.mxu0 0.0
  %3910 = vmatprep.subr.mxu0 0.0
  %3911 = vmatpush1.msra.mxu0 0.0
  %3912 = vmatprep.subr.mxu0 0.0
  %3913 = vmatpush1.msra.mxu0 0.0
  %3914 = vmatprep.subr.mxu0 0.0
  %3915 = vmatpush1.msra.mxu0 0.0
  %3916 = vmatprep.subr.mxu0 0.0
  %3917 = vmatpush1.msra.mxu0 0.0
  %3918 = vmatprep.subr.mxu0 0.0
  %3919 = vmatpush1.msra.mxu0 0.0
  %3920 = vmatprep.subr.mxu0 0.0
  %3921 = vmatpush1.msra.mxu0 0.0
  %3922 = vmatprep.subr.mxu0 0.0
  %3923 = vmatpush1.msra.mxu0 0.0
  %3924 = vmatprep.subr.mxu0 0.0
  %3925 = vmatpush1.msra.mxu0 0.0
  %3926 = vmatprep.subr.mxu0 0.0
  %3927 = vmatpush1.msra.mxu0 0.0
  %3928 = vmatprep.subr.mxu0 0.0
  %3929 = vmatpush1.msra.mxu0 0.0
  %3930 = vmatprep.subr.mxu0 0.0
  %3931 = vmatpush1.msra.mxu0 0.0
  %3932 = vmatprep.mubr.f32.mxu0 0.0
  %3933 = vmatmul.mubr.f32.gmra.mrb[0].mxu0 %v3857
  %v3934 = vpop.f32.mrb[0].mxu0
  %v3935 = vadd.f32 %v3839, %v3934
  %v3936 = vpop.f32.mrb[0].mxu0
  %v3937 = vadd.f32 %v3839, %v3936
  %3938 = vmatprep.mubr.f32.mxu0 0.0
  %3939 = vmatmul.mubr.f32.gmra.mrb[0].mxu0 %v3860
  %v3940 = vpop.f32.mrb[0].mxu0
  %v3941 = vadd.f32 %v3844, %v3940
  %v3942 = vpop.f32.mrb[0].mxu0
  %v3943 = vadd.f32 %v3844, %v3942
  %3944 = vmatprep.mubr.f32.mxu0 0.0
  %3945 = vmatmul.mubr.f32.gmra.mrb[0].mxu0 %v3863
  %v3946 = vpop.f32.mrb[0].mxu0
  %v3947 = vadd.f32 %v3849, %v3946
  %v3948 = vpop.f32.mrb[0].mxu0
  %v3949 = vadd.f32 %v3849, %v3948
  %3950 = vmatprep.mubr.f32.mxu0 0.0
  %3951 = vmatmul.mubr.f32.gmra.mrb[0].mxu0 %v3866
  %v3952 = vpop.f32.mrb[0].mxu0
  %v3953 = vadd.f32 %v3854, %v3952
  %v3954 = vpop.f32.mrb[0].mxu0
  %v3955 = vadd.f32 %v3854, %v3954
  %3956 = vdwg.mxu0
  %3957 = vmatprep.subr.mxu0 %v2579
  %3958 = vmatpush1.msra.mxu0 %v2475
  %3959 = vmatprep.subr.mxu0 %v2995
  %3960 = vmatpush1.msra.mxu0 %v2891
  %3961 = vmatprep.subr.mxu0 %v3411
  %3962 = vmatpush1.msra.mxu0 %v3307
  %3963 = vmatprep.subr.mxu0 %v3827
  %3964 = vmatpush1.msra.mxu0 %v3723
  %3965 = vmatprep.subr.mxu0 0.0
  %3966 = vmatpush1.msra.mxu0 0.0
  %3967 = vmatprep.subr.mxu0 0.0
  %3968 = vmatpush1.msra.mxu0 0.0
  %3969 = vmatprep.subr.mxu0 0.0
  %3970 = vmatpush1.msra.mxu0 0.0
  %3971 = vmatprep.subr.mxu0 0.0
  %3972 = vmatpush1.msra.mxu0 0.0
  %3973 = vmatprep.subr.mxu0 0.0
  %3974 = vmatpush1.msra.mxu0 0.0
  %3975 = vmatprep.subr.mxu0 0.0
  %3976 = vmatpush1.msra.mxu0 0.0
  %3977 = vmatprep.subr.mxu0 0.0
  %3978 = vmatpush1.msra.mxu0 0.0
  %3979 = vmatprep.subr.mxu0 0.0
  %3980 = vmatpush1.msra.mxu0 0.0
  %3981 = vmatprep.subr.mxu0 0.0
  %3982 = vmatpush1.msra.mxu0 0.0
  %3983 = vmatprep.subr.mxu0 0.0
  %3984 = vmatpush1.msra.mxu0 0.0
  %3985 = vmatprep.subr.mxu0 0.0
  %3986 = vmatpush1.msra.mxu0 0.0
  %3987 = vmatprep.subr.mxu0 0.0
  %3988 = vmatpush1.msra.mxu0 0.0
  %3989 = vmatprep.subr.mxu0 0.0
  %3990 = vmatpush1.msra.mxu0 0.0
  %3991 = vmatprep.subr.mxu0 0.0
  %3992 = vmatpush1.msra.mxu0 0.0
  %3993 = vmatprep.subr.mxu0 0.0
  %3994 = vmatpush1.msra.mxu0 0.0
  %3995 = vmatprep.subr.mxu0 0.0
  %3996 = vmatpush1.msra.mxu0 0.0
  %3997 = vmatprep.subr.mxu0 0.0
  %3998 = vmatpush1.msra.mxu0 0.0
  %3999 = vmatprep.subr.mxu0 0.0
  %4000 = vmatpush1.msra.mxu0 0.0
  %4001 = vmatprep.subr.mxu0 0.0
  %4002 = vmatpush1.msra.mxu0 0.0
  %4003 = vmatprep.subr.mxu0 0.0
  %4004 = vmatpush1.msra.mxu0 0.0
  %4005 = vmatprep.subr.mxu0 0.0
  %4006 = vmatpush1.msra.mxu0 0.0
  %4007 = vmatprep.subr.mxu0 0.0
  %4008 = vmatpush1.msra.mxu0 0.0
  %4009 = vmatprep.subr.mxu0 0.0
  %4010 = vmatpush1.msra.mxu0 0.0
  %4011 = vmatprep.subr.mxu0 0.0
  %4012 = vmatpush1.msra.mxu0 0.0
  %4013 = vmatprep.subr.mxu0 0.0
  %4014 = vmatpush1.msra.mxu0 0.0
  %4015 = vmatprep.subr.mxu0 0.0
  %4016 = vmatpush1.msra.mxu0 0.0
  %4017 = vmatprep.subr.mxu0 0.0
  %4018 = vmatpush1.msra.mxu0 0.0
  %4019 = vmatprep.subr.mxu0 0.0
  %4020 = vmatpush1.msra.mxu0 0.0
  %4021 = vmatprep.mubr.f32.mxu0 0.0
  %4022 = vmatmul.mubr.f32.gmra.mrb[0].mxu0 %v3857
  %v4023 = vpop.f32.mrb[0].mxu0
  %v4024 = vadd.f32 %v3839, %v4023
  %v4025 = vpop.f32.mrb[0].mxu0
  %v4026 = vadd.f32 %v3839, %v4025
  %4027 = vmatprep.mubr.f32.mxu0 0.0
  %4028 = vmatmul.mubr.f32.gmra.mrb[0].mxu0 %v3860
  %v4029 = vpop.f32.mrb[0].mxu0
  %v4030 = vadd.f32 %v3844, %v4029
  %v4031 = vpop.f32.mrb[0].mxu0
  %v4032 = vadd.f32 %v3844, %v4031
  %4033 = vmatprep.mubr.f32.mxu0 0.0
  %4034 = vmatmul.mubr.f32.gmra.mrb[0].mxu0 %v3863
  %v4035 = vpop.f32.mrb[0].mxu0
  %v4036 = vadd.f32 %v3849, %v4035
  %v4037 = vpop.f32.mrb[0].mxu0
  %v4038 = vadd.f32 %v3849, %v4037
  %4039 = vmatprep.mubr.f32.mxu0 0.0
  %4040 = vmatmul.mubr.f32.gmra.mrb[0].mxu0 %v3866
  %v4041 = vpop.f32.mrb[0].mxu0
  %v4042 = vadd.f32 %v3854, %v4041
  %v4043 = vpop.f32.mrb[0].mxu0
  %v4044 = vadd.f32 %v3854, %v4043
  %4045 = vdwg.mxu0
  %v4046 = vand.u32 2147483647, %v3935
  %vm4047 = vcmp.le.f32.partialorder %v4046, 0.7853982
  %vm4048 = vcmp.lt.s32.totalorder %v3935, 0
  %v4049 = vand.u32 %v3935, 2139095040
  %v4050 = vshrl.u32 %v4049, 23
  %v4051 = vsub.s32 %v4050, 127
  %v4052 = vand.u32 2147483647, %v3935
  %v4053 = vand.u32 %v4052, 8388607
  %v4054 = vor.u32 %v4053, 8388608
  %v4055 = vsub.s32 0, %v4054
  %v4056 = vadd.s32 %v4051, 1
  %vm4057 = vcmp.gt.s32.totalorder %v4056, 0
  %v4058 = vsel %vm4057, %v4056, 0
  %v4059 = vshrl.u32 %v4058, 5
  %v4060 = vand.u32 %v4058, 31
  %v4061 = vsub.s32 32, %v4060
  %v4062 = vshrl.u32 683565275, %v4061
  %v4063 = vshll.u32 683565275, %v4060
  %v4064 = vshrl.u32 2475754826, %v4061
  %v4065 = vor.u32 %v4063, %v4064
  %v4066 = vshll.u32 2475754826, %v4060
  %v4067 = vshrl.u32 2131351028, %v4061
  %v4068 = vor.u32 %v4066, %v4067
  %v4069 = vshll.u32 2131351028, %v4060
  %v4070 = vshrl.u32 2102212464, %v4061
  %v4071 = vor.u32 %v4069, %v4070
  %v4072 = vshll.u32 2102212464, %v4060
  %v4073 = vshrl.u32 920167782, %v4061
  %v4074 = vor.u32 %v4072, %v4073
  %v4075 = vshll.u32 920167782, %v4060
  %v4076 = vshrl.u32 1326507024, %v4061
  %v4077 = vor.u32 %v4075, %v4076
  %vm4078 = vcmp.lt.s32.totalorder %v4059, 1
  %vm4079 = vcmp.lt.s32.totalorder %v4059, 2
  %vm4080 = vcmp.lt.s32.totalorder %v4059, 3
  %vm4081 = vcmp.lt.s32.totalorder %v4059, 4
  %v4082 = vsel %vm4078, %v4062, %v4065
  %v4083 = vsel %vm4081, %v4071, 2102212464
  %v4084 = vsel %vm4080, %v4068, %v4083
  %v4085 = vsel %vm4079, %v4082, %v4084
  %v4086 = vsel %vm4078, %v4065, %v4068
  %v4087 = vsel %vm4081, %v4074, 920167782
  %v4088 = vsel %vm4080, %v4071, %v4087
  %v4089 = vsel %vm4079, %v4086, %v4088
  %v4090 = vsel %vm4078, %v4068, %v4071
  %v4091 = vsel %vm4081, %v4077, 1326507024
  %v4092 = vsel %vm4080, %v4074, %v4091
  %v4093 = vsel %vm4079, %v4090, %v4092
  %v4094 = vshll.u32 %v4054, 8
  %v4095 = vmul.u32.u64.compose %v4094, %v4093
  %v4096 = vextract.low.u32 %v4095
  %v4097 = vextract.high.u32 %v4095
  %v4098 = vmul.u32.u64.compose %v4094, %v4089
  %v4099 = vextract.low.u32 %v4098
  %v4100 = vextract.high.u32 %v4098
  %v4101 = vmul.u32 %v4094, %v4085
  %v4102 = vadd.s32 %v4097, %v4099
  %vm4103 = vc.u32 %v4097, %v4099
  %v4104 = vadd.s32 %v4100, 1
  %v4105 = vsel %vm4103, %v4104, %v4100
  %v4106 = vadd.s32 %v4101, %v4105
  %v4107 = vadd.s32 %v4106, 536870912
  %v4108 = vshrl.u32 %v4107, 30
  %v4109 = vshll.u32 %v4108, 30
  %v4110 = vsub.s32 %v4106, %v4109
  %vm4111 = vcmp.lt.s32.totalorder %v4110, 0
  %v4112 = vsub.s32 0, %v4110
  %v4113 = vsel %vm4111, %v4112, %v4110
  %v4114 = vclz %v4113
  %v4115 = vsub.s32 %v4114, 2
  %vm4116 = vcmp.gt.s32.totalorder 0, %v4115
  %v4117 = vsel %vm4116, 0, %v4115
  %v4118 = vsub.s32 32, %v4117
  %v4119 = vshll.u32 %v4110, %v4117
  %v4120 = vshrl.u32 %v4102, %v4118
  %v4121 = vor.u32 %v4119, %v4120
  %v4122 = vsub.s32 4294967266, %v4117
  %v4123 = vadd.s32 %v4122, 127
  %v4124 = vshll.u32 %v4123, 23
  %v4125 = vor.u32 4788187, %v4124
  %v4126 = vand.u32 2147483647, %v4125
  %v4128 = vcvt.s32.f32 %v4121
  %v4129 = vmul.f32 %v4128, %v4126
  %v4130 = vxor.u32 %v4129, 2147483648
  %v4131 = vsel %vm4048, %v4130, %v4129
  %v4132 = vsub.s32 4, %v4108
  %v4133 = vsel %vm4048, %v4132, %v4108
  %v4134 = vsel %vm4047, %v3935, %v4131
  %v4135 = vsel %vm4047, 0, %v4133
  %v4136 = vcosq.f32.pop %v4134
  %v4137 = vsinq.f32.pop %v4134
  %vm4138 = vweird.f32 %v3935
  %v4139 = vadd.s32 %v4135, 3
  %v4140 = vand.u32 %v4139, 3
  %vm4141 = vcmp.lt.s32.totalorder %v4140, 2
  %vm4142 = vcmp.eq.s32.totalorder %v4140, 0
  %v4143 = vxor.u32 %v4137, 2147483648
  %v4144 = vsel %vm4142, %v4136, %v4143
  %vm4145 = vcmp.eq.s32.totalorder %v4140, 2
  %v4146 = vxor.u32 %v4136, 2147483648
  %v4147 = vsel %vm4145, %v4146, %v4137
  %v4148 = vsel %vm4141, %v4144, %v4147
  %v4149 = vsel %vm4138, nan, %v4148
  %v4150 = vand.u32 2147483647, %v3937
  %vm4151 = vcmp.le.f32.partialorder %v4150, 0.7853982
  %vm4152 = vcmp.lt.s32.totalorder %v3937, 0
  %v4153 = vand.u32 %v3937, 2139095040
  %v4154 = vshrl.u32 %v4153, 23
  %v4155 = vsub.s32 %v4154, 127
  %v4156 = vand.u32 2147483647, %v3937
  %v4157 = vand.u32 %v4156, 8388607
  %v4158 = vor.u32 %v4157, 8388608
  %v4159 = vsub.s32 0, %v4158
  %v4160 = vadd.s32 %v4155, 1
  %vm4161 = vcmp.gt.s32.totalorder %v4160, 0
  %v4162 = vsel %vm4161, %v4160, 0
  %v4163 = vshrl.u32 %v4162, 5
  %v4164 = vand.u32 %v4162, 31
  %v4165 = vsub.s32 32, %v4164
  %v4166 = vshrl.u32 683565275, %v4165
  %v4167 = vshll.u32 683565275, %v4164
  %v4168 = vshrl.u32 2475754826, %v4165
  %v4169 = vor.u32 %v4167, %v4168
  %v4170 = vshll.u32 2475754826, %v4164
  %v4171 = vshrl.u32 2131351028, %v4165
  %v4172 = vor.u32 %v4170, %v4171
  %v4173 = vshll.u32 2131351028, %v4164
  %v4174 = vshrl.u32 2102212464, %v4165
  %v4175 = vor.u32 %v4173, %v4174
  %v4176 = vshll.u32 2102212464, %v4164
  %v4177 = vshrl.u32 920167782, %v4165
  %v4178 = vor.u32 %v4176, %v4177
  %v4179 = vshll.u32 920167782, %v4164
  %v4180 = vshrl.u32 1326507024, %v4165
  %v4181 = vor.u32 %v4179, %v4180
  %vm4182 = vcmp.lt.s32.totalorder %v4163, 1
  %vm4183 = vcmp.lt.s32.totalorder %v4163, 2
  %vm4184 = vcmp.lt.s32.totalorder %v4163, 3
  %vm4185 = vcmp.lt.s32.totalorder %v4163, 4
  %v4186 = vsel %vm4182, %v4166, %v4169
  %v4187 = vsel %vm4185, %v4175, 2102212464
  %v4188 = vsel %vm4184, %v4172, %v4187
  %v4189 = vsel %vm4183, %v4186, %v4188
  %v4190 = vsel %vm4182, %v4169, %v4172
  %v4191 = vsel %vm4185, %v4178, 920167782
  %v4192 = vsel %vm4184, %v4175, %v4191
  %v4193 = vsel %vm4183, %v4190, %v4192
  %v4194 = vsel %vm4182, %v4172, %v4175
  %v4195 = vsel %vm4185, %v4181, 1326507024
  %v4196 = vsel %vm4184, %v4178, %v4195
  %v4197 = vsel %vm4183, %v4194, %v4196
  %v4198 = vshll.u32 %v4158, 8
  %v4199 = vmul.u32.u64.compose %v4198, %v4197
  %v4200 = vextract.low.u32 %v4199
  %v4201 = vextract.high.u32 %v4199
  %v4202 = vmul.u32.u64.compose %v4198, %v4193
  %v4203 = vextract.low.u32 %v4202
  %v4204 = vextract.high.u32 %v4202
  %v4205 = vmul.u32 %v4198, %v4189
  %v4206 = vadd.s32 %v4201, %v4203
  %vm4207 = vc.u32 %v4201, %v4203
  %v4208 = vadd.s32 %v4204, 1
  %v4209 = vsel %vm4207, %v4208, %v4204
  %v4210 = vadd.s32 %v4205, %v4209
  %v4211 = vadd.s32 %v4210, 536870912
  %v4212 = vshrl.u32 %v4211, 30
  %v4213 = vshll.u32 %v4212, 30
  %v4214 = vsub.s32 %v4210, %v4213
  %vm4215 = vcmp.lt.s32.totalorder %v4214, 0
  %v4216 = vsub.s32 0, %v4214
  %v4217 = vsel %vm4215, %v4216, %v4214
  %v4218 = vclz %v4217
  %v4219 = vsub.s32 %v4218, 2
  %vm4220 = vcmp.gt.s32.totalorder 0, %v4219
  %v4221 = vsel %vm4220, 0, %v4219
  %v4222 = vsub.s32 32, %v4221
  %v4223 = vshll.u32 %v4214, %v4221
  %v4224 = vshrl.u32 %v4206, %v4222
  %v4225 = vor.u32 %v4223, %v4224
  %v4226 = vsub.s32 4294967266, %v4221
  %v4227 = vadd.s32 %v4226, 127
  %v4228 = vshll.u32 %v4227, 23
  %v4229 = vor.u32 4788187, %v4228
  %v4230 = vand.u32 2147483647, %v4229
  %v4232 = vcvt.s32.f32 %v4225
  %v4233 = vmul.f32 %v4232, %v4230
  %v4234 = vxor.u32 %v4233, 2147483648
  %v4235 = vsel %vm4152, %v4234, %v4233
  %v4236 = vsub.s32 4, %v4212
  %v4237 = vsel %vm4152, %v4236, %v4212
  %v4238 = vsel %vm4151, %v3937, %v4235
  %v4239 = vsel %vm4151, 0, %v4237
  %v4240 = vcosq.f32.pop %v4238
  %v4241 = vsinq.f32.pop %v4238
  %vm4242 = vweird.f32 %v3937
  %v4243 = vadd.s32 %v4239, 3
  %v4244 = vand.u32 %v4243, 3
  %vm4245 = vcmp.lt.s32.totalorder %v4244, 2
  %vm4246 = vcmp.eq.s32.totalorder %v4244, 0
  %v4247 = vxor.u32 %v4241, 2147483648
  %v4248 = vsel %vm4246, %v4240, %v4247
  %vm4249 = vcmp.eq.s32.totalorder %v4244, 2
  %v4250 = vxor.u32 %v4240, 2147483648
  %v4251 = vsel %vm4249, %v4250, %v4241
  %v4252 = vsel %vm4245, %v4248, %v4251
  %v4253 = vsel %vm4242, nan, %v4252
  %v4254 = vand.u32 2147483647, %v4024
  %vm4255 = vcmp.le.f32.partialorder %v4254, 0.7853982
  %vm4256 = vcmp.lt.s32.totalorder %v4024, 0
  %v4257 = vand.u32 %v4024, 2139095040
  %v4258 = vshrl.u32 %v4257, 23
  %v4259 = vsub.s32 %v4258, 127
  %v4260 = vand.u32 2147483647, %v4024
  %v4261 = vand.u32 %v4260, 8388607
  %v4262 = vor.u32 %v4261, 8388608
  %v4263 = vsub.s32 0, %v4262
  %v4264 = vadd.s32 %v4259, 1
  %vm4265 = vcmp.gt.s32.totalorder %v4264, 0
  %v4266 = vsel %vm4265, %v4264, 0
  %v4267 = vshrl.u32 %v4266, 5
  %v4268 = vand.u32 %v4266, 31
  %v4269 = vsub.s32 32, %v4268
  %v4270 = vshrl.u32 683565275, %v4269
  %v4271 = vshll.u32 683565275, %v4268
  %v4272 = vshrl.u32 2475754826, %v4269
  %v4273 = vor.u32 %v4271, %v4272
  %v4274 = vshll.u32 2475754826, %v4268
  %v4275 = vshrl.u32 2131351028, %v4269
  %v4276 = vor.u32 %v4274, %v4275
  %v4277 = vshll.u32 2131351028, %v4268
  %v4278 = vshrl.u32 2102212464, %v4269
  %v4279 = vor.u32 %v4277, %v4278
  %v4280 = vshll.u32 2102212464, %v4268
  %v4281 = vshrl.u32 920167782, %v4269
  %v4282 = vor.u32 %v4280, %v4281
  %v4283 = vshll.u32 920167782, %v4268
  %v4284 = vshrl.u32 1326507024, %v4269
  %v4285 = vor.u32 %v4283, %v4284
  %vm4286 = vcmp.lt.s32.totalorder %v4267, 1
  %vm4287 = vcmp.lt.s32.totalorder %v4267, 2
  %vm4288 = vcmp.lt.s32.totalorder %v4267, 3
  %vm4289 = vcmp.lt.s32.totalorder %v4267, 4
  %v4290 = vsel %vm4286, %v4270, %v4273
  %v4291 = vsel %vm4289, %v4279, 2102212464
  %v4292 = vsel %vm4288, %v4276, %v4291
  %v4293 = vsel %vm4287, %v4290, %v4292
  %v4294 = vsel %vm4286, %v4273, %v4276
  %v4295 = vsel %vm4289, %v4282, 920167782
  %v4296 = vsel %vm4288, %v4279, %v4295
  %v4297 = vsel %vm4287, %v4294, %v4296
  %v4298 = vsel %vm4286, %v4276, %v4279
  %v4299 = vsel %vm4289, %v4285, 1326507024
  %v4300 = vsel %vm4288, %v4282, %v4299
  %v4301 = vsel %vm4287, %v4298, %v4300
  %v4302 = vshll.u32 %v4262, 8
  %v4303 = vmul.u32.u64.compose %v4302, %v4301
  %v4304 = vextract.low.u32 %v4303
  %v4305 = vextract.high.u32 %v4303
  %v4306 = vmul.u32.u64.compose %v4302, %v4297
  %v4307 = vextract.low.u32 %v4306
  %v4308 = vextract.high.u32 %v4306
  %v4309 = vmul.u32 %v4302, %v4293
  %v4310 = vadd.s32 %v4305, %v4307
  %vm4311 = vc.u32 %v4305, %v4307
  %v4312 = vadd.s32 %v4308, 1
  %v4313 = vsel %vm4311, %v4312, %v4308
  %v4314 = vadd.s32 %v4309, %v4313
  %v4315 = vadd.s32 %v4314, 536870912
  %v4316 = vshrl.u32 %v4315, 30
  %v4317 = vshll.u32 %v4316, 30
  %v4318 = vsub.s32 %v4314, %v4317
  %vm4319 = vcmp.lt.s32.totalorder %v4318, 0
  %v4320 = vsub.s32 0, %v4318
  %v4321 = vsel %vm4319, %v4320, %v4318
  %v4322 = vclz %v4321
  %v4323 = vsub.s32 %v4322, 2
  %vm4324 = vcmp.gt.s32.totalorder 0, %v4323
  %v4325 = vsel %vm4324, 0, %v4323
  %v4326 = vsub.s32 32, %v4325
  %v4327 = vshll.u32 %v4318, %v4325
  %v4328 = vshrl.u32 %v4310, %v4326
  %v4329 = vor.u32 %v4327, %v4328
  %v4330 = vsub.s32 4294967266, %v4325
  %v4331 = vadd.s32 %v4330, 127
  %v4332 = vshll.u32 %v4331, 23
  %v4333 = vor.u32 4788187, %v4332
  %v4334 = vand.u32 2147483647, %v4333
  %v4336 = vcvt.s32.f32 %v4329
  %v4337 = vmul.f32 %v4336, %v4334
  %v4338 = vxor.u32 %v4337, 2147483648
  %v4339 = vsel %vm4256, %v4338, %v4337
  %v4340 = vsub.s32 4, %v4316
  %v4341 = vsel %vm4256, %v4340, %v4316
  %v4342 = vsel %vm4255, %v4024, %v4339
  %v4343 = vsel %vm4255, 0, %v4341
  %v4344 = vcosq.f32.pop %v4342
  %v4345 = vsinq.f32.pop %v4342
  %vm4346 = vweird.f32 %v4024
  %v4347 = vadd.s32 %v4343, 3
  %v4348 = vand.u32 %v4347, 3
  %vm4349 = vcmp.lt.s32.totalorder %v4348, 2
  %vm4350 = vcmp.eq.s32.totalorder %v4348, 0
  %v4351 = vxor.u32 %v4345, 2147483648
  %v4352 = vsel %vm4350, %v4344, %v4351
  %vm4353 = vcmp.eq.s32.totalorder %v4348, 2
  %v4354 = vxor.u32 %v4344, 2147483648
  %v4355 = vsel %vm4353, %v4354, %v4345
  %v4356 = vsel %vm4349, %v4352, %v4355
  %v4357 = vsel %vm4346, nan, %v4356
  %v4358 = vand.u32 2147483647, %v4026
  %vm4359 = vcmp.le.f32.partialorder %v4358, 0.7853982
  %vm4360 = vcmp.lt.s32.totalorder %v4026, 0
  %v4361 = vand.u32 %v4026, 2139095040
  %v4362 = vshrl.u32 %v4361, 23
  %v4363 = vsub.s32 %v4362, 127
  %v4364 = vand.u32 2147483647, %v4026
  %v4365 = vand.u32 %v4364, 8388607
  %v4366 = vor.u32 %v4365, 8388608
  %v4367 = vsub.s32 0, %v4366
  %v4368 = vadd.s32 %v4363, 1
  %vm4369 = vcmp.gt.s32.totalorder %v4368, 0
  %v4370 = vsel %vm4369, %v4368, 0
  %v4371 = vshrl.u32 %v4370, 5
  %v4372 = vand.u32 %v4370, 31
  %v4373 = vsub.s32 32, %v4372
  %v4374 = vshrl.u32 683565275, %v4373
  %v4375 = vshll.u32 683565275, %v4372
  %v4376 = vshrl.u32 2475754826, %v4373
  %v4377 = vor.u32 %v4375, %v4376
  %v4378 = vshll.u32 2475754826, %v4372
  %v4379 = vshrl.u32 2131351028, %v4373
  %v4380 = vor.u32 %v4378, %v4379
  %v4381 = vshll.u32 2131351028, %v4372
  %v4382 = vshrl.u32 2102212464, %v4373
  %v4383 = vor.u32 %v4381, %v4382
  %v4384 = vshll.u32 2102212464, %v4372
  %v4385 = vshrl.u32 920167782, %v4373
  %v4386 = vor.u32 %v4384, %v4385
  %v4387 = vshll.u32 920167782, %v4372
  %v4388 = vshrl.u32 1326507024, %v4373
  %v4389 = vor.u32 %v4387, %v4388
  %vm4390 = vcmp.lt.s32.totalorder %v4371, 1
  %vm4391 = vcmp.lt.s32.totalorder %v4371, 2
  %vm4392 = vcmp.lt.s32.totalorder %v4371, 3
  %vm4393 = vcmp.lt.s32.totalorder %v4371, 4
  %v4394 = vsel %vm4390, %v4374, %v4377
  %v4395 = vsel %vm4393, %v4383, 2102212464
  %v4396 = vsel %vm4392, %v4380, %v4395
  %v4397 = vsel %vm4391, %v4394, %v4396
  %v4398 = vsel %vm4390, %v4377, %v4380
  %v4399 = vsel %vm4393, %v4386, 920167782
  %v4400 = vsel %vm4392, %v4383, %v4399
  %v4401 = vsel %vm4391, %v4398, %v4400
  %v4402 = vsel %vm4390, %v4380, %v4383
  %v4403 = vsel %vm4393, %v4389, 1326507024
  %v4404 = vsel %vm4392, %v4386, %v4403
  %v4405 = vsel %vm4391, %v4402, %v4404
  %v4406 = vshll.u32 %v4366, 8
  %v4407 = vmul.u32.u64.compose %v4406, %v4405
  %v4408 = vextract.low.u32 %v4407
  %v4409 = vextract.high.u32 %v4407
  %v4410 = vmul.u32.u64.compose %v4406, %v4401
  %v4411 = vextract.low.u32 %v4410
  %v4412 = vextract.high.u32 %v4410
  %v4413 = vmul.u32 %v4406, %v4397
  %v4414 = vadd.s32 %v4409, %v4411
  %vm4415 = vc.u32 %v4409, %v4411
  %v4416 = vadd.s32 %v4412, 1
  %v4417 = vsel %vm4415, %v4416, %v4412
  %v4418 = vadd.s32 %v4413, %v4417
  %v4419 = vadd.s32 %v4418, 536870912
  %v4420 = vshrl.u32 %v4419, 30
  %v4421 = vshll.u32 %v4420, 30
  %v4422 = vsub.s32 %v4418, %v4421
  %vm4423 = vcmp.lt.s32.totalorder %v4422, 0
  %v4424 = vsub.s32 0, %v4422
  %v4425 = vsel %vm4423, %v4424, %v4422
  %v4426 = vclz %v4425
  %v4427 = vsub.s32 %v4426, 2
  %vm4428 = vcmp.gt.s32.totalorder 0, %v4427
  %v4429 = vsel %vm4428, 0, %v4427
  %v4430 = vsub.s32 32, %v4429
  %v4431 = vshll.u32 %v4422, %v4429
  %v4432 = vshrl.u32 %v4414, %v4430
  %v4433 = vor.u32 %v4431, %v4432
  %v4434 = vsub.s32 4294967266, %v4429
  %v4435 = vadd.s32 %v4434, 127
  %v4436 = vshll.u32 %v4435, 23
  %v4437 = vor.u32 4788187, %v4436
  %v4438 = vand.u32 2147483647, %v4437
  %v4440 = vcvt.s32.f32 %v4433
  %v4441 = vmul.f32 %v4440, %v4438
  %v4442 = vxor.u32 %v4441, 2147483648
  %v4443 = vsel %vm4360, %v4442, %v4441
  %v4444 = vsub.s32 4, %v4420
  %v4445 = vsel %vm4360, %v4444, %v4420
  %v4446 = vsel %vm4359, %v4026, %v4443
  %v4447 = vsel %vm4359, 0, %v4445
  %v4448 = vcosq.f32.pop %v4446
  %v4449 = vsinq.f32.pop %v4446
  %vm4450 = vweird.f32 %v4026
  %v4451 = vadd.s32 %v4447, 3
  %v4452 = vand.u32 %v4451, 3
  %vm4453 = vcmp.lt.s32.totalorder %v4452, 2
  %vm4454 = vcmp.eq.s32.totalorder %v4452, 0
  %v4455 = vxor.u32 %v4449, 2147483648
  %v4456 = vsel %vm4454, %v4448, %v4455
  %vm4457 = vcmp.eq.s32.totalorder %v4452, 2
  %v4458 = vxor.u32 %v4448, 2147483648
  %v4459 = vsel %vm4457, %v4458, %v4449
  %v4460 = vsel %vm4453, %v4456, %v4459
  %v4461 = vsel %vm4450, nan, %v4460
  %v4462 = vand.u32 2147483647, %v3941
  %vm4463 = vcmp.le.f32.partialorder %v4462, 0.7853982
  %vm4464 = vcmp.lt.s32.totalorder %v3941, 0
  %v4465 = vand.u32 %v3941, 2139095040
  %v4466 = vshrl.u32 %v4465, 23
  %v4467 = vsub.s32 %v4466, 127
  %v4468 = vand.u32 2147483647, %v3941
  %v4469 = vand.u32 %v4468, 8388607
  %v4470 = vor.u32 %v4469, 8388608
  %v4471 = vsub.s32 0, %v4470
  %v4472 = vadd.s32 %v4467, 1
  %vm4473 = vcmp.gt.s32.totalorder %v4472, 0
  %v4474 = vsel %vm4473, %v4472, 0
  %v4475 = vshrl.u32 %v4474, 5
  %v4476 = vand.u32 %v4474, 31
  %v4477 = vsub.s32 32, %v4476
  %v4478 = vshrl.u32 683565275, %v4477
  %v4479 = vshll.u32 683565275, %v4476
  %v4480 = vshrl.u32 2475754826, %v4477
  %v4481 = vor.u32 %v4479, %v4480
  %v4482 = vshll.u32 2475754826, %v4476
  %v4483 = vshrl.u32 2131351028, %v4477
  %v4484 = vor.u32 %v4482, %v4483
  %v4485 = vshll.u32 2131351028, %v4476
  %v4486 = vshrl.u32 2102212464, %v4477
  %v4487 = vor.u32 %v4485, %v4486
  %v4488 = vshll.u32 2102212464, %v4476
  %v4489 = vshrl.u32 920167782, %v4477
  %v4490 = vor.u32 %v4488, %v4489
  %v4491 = vshll.u32 920167782, %v4476
  %v4492 = vshrl.u32 1326507024, %v4477
  %v4493 = vor.u32 %v4491, %v4492
  %vm4494 = vcmp.lt.s32.totalorder %v4475, 1
  %vm4495 = vcmp.lt.s32.totalorder %v4475, 2
  %vm4496 = vcmp.lt.s32.totalorder %v4475, 3
  %vm4497 = vcmp.lt.s32.totalorder %v4475, 4
  %v4498 = vsel %vm4494, %v4478, %v4481
  %v4499 = vsel %vm4497, %v4487, 2102212464
  %v4500 = vsel %vm4496, %v4484, %v4499
  %v4501 = vsel %vm4495, %v4498, %v4500
  %v4502 = vsel %vm4494, %v4481, %v4484
  %v4503 = vsel %vm4497, %v4490, 920167782
  %v4504 = vsel %vm4496, %v4487, %v4503
  %v4505 = vsel %vm4495, %v4502, %v4504
  %v4506 = vsel %vm4494, %v4484, %v4487
  %v4507 = vsel %vm4497, %v4493, 1326507024
  %v4508 = vsel %vm4496, %v4490, %v4507
  %v4509 = vsel %vm4495, %v4506, %v4508
  %v4510 = vshll.u32 %v4470, 8
  %v4511 = vmul.u32.u64.compose %v4510, %v4509
  %v4512 = vextract.low.u32 %v4511
  %v4513 = vextract.high.u32 %v4511
  %v4514 = vmul.u32.u64.compose %v4510, %v4505
  %v4515 = vextract.low.u32 %v4514
  %v4516 = vextract.high.u32 %v4514
  %v4517 = vmul.u32 %v4510, %v4501
  %v4518 = vadd.s32 %v4513, %v4515
  %vm4519 = vc.u32 %v4513, %v4515
  %v4520 = vadd.s32 %v4516, 1
  %v4521 = vsel %vm4519, %v4520, %v4516
  %v4522 = vadd.s32 %v4517, %v4521
  %v4523 = vadd.s32 %v4522, 536870912
  %v4524 = vshrl.u32 %v4523, 30
  %v4525 = vshll.u32 %v4524, 30
  %v4526 = vsub.s32 %v4522, %v4525
  %vm4527 = vcmp.lt.s32.totalorder %v4526, 0
  %v4528 = vsub.s32 0, %v4526
  %v4529 = vsel %vm4527, %v4528, %v4526
  %v4530 = vclz %v4529
  %v4531 = vsub.s32 %v4530, 2
  %vm4532 = vcmp.gt.s32.totalorder 0, %v4531
  %v4533 = vsel %vm4532, 0, %v4531
  %v4534 = vsub.s32 32, %v4533
  %v4535 = vshll.u32 %v4526, %v4533
  %v4536 = vshrl.u32 %v4518, %v4534
  %v4537 = vor.u32 %v4535, %v4536
  %v4538 = vsub.s32 4294967266, %v4533
  %v4539 = vadd.s32 %v4538, 127
  %v4540 = vshll.u32 %v4539, 23
  %v4541 = vor.u32 4788187, %v4540
  %v4542 = vand.u32 2147483647, %v4541
  %v4544 = vcvt.s32.f32 %v4537
  %v4545 = vmul.f32 %v4544, %v4542
  %v4546 = vxor.u32 %v4545, 2147483648
  %v4547 = vsel %vm4464, %v4546, %v4545
  %v4548 = vsub.s32 4, %v4524
  %v4549 = vsel %vm4464, %v4548, %v4524
  %v4550 = vsel %vm4463, %v3941, %v4547
  %v4551 = vsel %vm4463, 0, %v4549
  %v4552 = vcosq.f32.pop %v4550
  %v4553 = vsinq.f32.pop %v4550
  %vm4554 = vweird.f32 %v3941
  %v4555 = vadd.s32 %v4551, 3
  %v4556 = vand.u32 %v4555, 3
  %vm4557 = vcmp.lt.s32.totalorder %v4556, 2
  %vm4558 = vcmp.eq.s32.totalorder %v4556, 0
  %v4559 = vxor.u32 %v4553, 2147483648
  %v4560 = vsel %vm4558, %v4552, %v4559
  %vm4561 = vcmp.eq.s32.totalorder %v4556, 2
  %v4562 = vxor.u32 %v4552, 2147483648
  %v4563 = vsel %vm4561, %v4562, %v4553
  %v4564 = vsel %vm4557, %v4560, %v4563
  %v4565 = vsel %vm4554, nan, %v4564
  %v4566 = vand.u32 2147483647, %v3943
  %vm4567 = vcmp.le.f32.partialorder %v4566, 0.7853982
  %vm4568 = vcmp.lt.s32.totalorder %v3943, 0
  %v4569 = vand.u32 %v3943, 2139095040
  %v4570 = vshrl.u32 %v4569, 23
  %v4571 = vsub.s32 %v4570, 127
  %v4572 = vand.u32 2147483647, %v3943
  %v4573 = vand.u32 %v4572, 8388607
  %v4574 = vor.u32 %v4573, 8388608
  %v4575 = vsub.s32 0, %v4574
  %v4576 = vadd.s32 %v4571, 1
  %vm4577 = vcmp.gt.s32.totalorder %v4576, 0
  %v4578 = vsel %vm4577, %v4576, 0
  %v4579 = vshrl.u32 %v4578, 5
  %v4580 = vand.u32 %v4578, 31
  %v4581 = vsub.s32 32, %v4580
  %v4582 = vshrl.u32 683565275, %v4581
  %v4583 = vshll.u32 683565275, %v4580
  %v4584 = vshrl.u32 2475754826, %v4581
  %v4585 = vor.u32 %v4583, %v4584
  %v4586 = vshll.u32 2475754826, %v4580
  %v4587 = vshrl.u32 2131351028, %v4581
  %v4588 = vor.u32 %v4586, %v4587
  %v4589 = vshll.u32 2131351028, %v4580
  %v4590 = vshrl.u32 2102212464, %v4581
  %v4591 = vor.u32 %v4589, %v4590
  %v4592 = vshll.u32 2102212464, %v4580
  %v4593 = vshrl.u32 920167782, %v4581
  %v4594 = vor.u32 %v4592, %v4593
  %v4595 = vshll.u32 920167782, %v4580
  %v4596 = vshrl.u32 1326507024, %v4581
  %v4597 = vor.u32 %v4595, %v4596
  %vm4598 = vcmp.lt.s32.totalorder %v4579, 1
  %vm4599 = vcmp.lt.s32.totalorder %v4579, 2
  %vm4600 = vcmp.lt.s32.totalorder %v4579, 3
  %vm4601 = vcmp.lt.s32.totalorder %v4579, 4
  %v4602 = vsel %vm4598, %v4582, %v4585
  %v4603 = vsel %vm4601, %v4591, 2102212464
  %v4604 = vsel %vm4600, %v4588, %v4603
  %v4605 = vsel %vm4599, %v4602, %v4604
  %v4606 = vsel %vm4598, %v4585, %v4588
  %v4607 = vsel %vm4601, %v4594, 920167782
  %v4608 = vsel %vm4600, %v4591, %v4607
  %v4609 = vsel %vm4599, %v4606, %v4608
  %v4610 = vsel %vm4598, %v4588, %v4591
  %v4611 = vsel %vm4601, %v4597, 1326507024
  %v4612 = vsel %vm4600, %v4594, %v4611
  %v4613 = vsel %vm4599, %v4610, %v4612
  %v4614 = vshll.u32 %v4574, 8
  %v4615 = vmul.u32.u64.compose %v4614, %v4613
  %v4616 = vextract.low.u32 %v4615
  %v4617 = vextract.high.u32 %v4615
  %v4618 = vmul.u32.u64.compose %v4614, %v4609
  %v4619 = vextract.low.u32 %v4618
  %v4620 = vextract.high.u32 %v4618
  %v4621 = vmul.u32 %v4614, %v4605
  %v4622 = vadd.s32 %v4617, %v4619
  %vm4623 = vc.u32 %v4617, %v4619
  %v4624 = vadd.s32 %v4620, 1
  %v4625 = vsel %vm4623, %v4624, %v4620
  %v4626 = vadd.s32 %v4621, %v4625
  %v4627 = vadd.s32 %v4626, 536870912
  %v4628 = vshrl.u32 %v4627, 30
  %v4629 = vshll.u32 %v4628, 30
  %v4630 = vsub.s32 %v4626, %v4629
  %vm4631 = vcmp.lt.s32.totalorder %v4630, 0
  %v4632 = vsub.s32 0, %v4630
  %v4633 = vsel %vm4631, %v4632, %v4630
  %v4634 = vclz %v4633
  %v4635 = vsub.s32 %v4634, 2
  %vm4636 = vcmp.gt.s32.totalorder 0, %v4635
  %v4637 = vsel %vm4636, 0, %v4635
  %v4638 = vsub.s32 32, %v4637
  %v4639 = vshll.u32 %v4630, %v4637
  %v4640 = vshrl.u32 %v4622, %v4638
  %v4641 = vor.u32 %v4639, %v4640
  %v4642 = vsub.s32 4294967266, %v4637
  %v4643 = vadd.s32 %v4642, 127
  %v4644 = vshll.u32 %v4643, 23
  %v4645 = vor.u32 4788187, %v4644
  %v4646 = vand.u32 2147483647, %v4645
  %v4648 = vcvt.s32.f32 %v4641
  %v4649 = vmul.f32 %v4648, %v4646
  %v4650 = vxor.u32 %v4649, 2147483648
  %v4651 = vsel %vm4568, %v4650, %v4649
  %v4652 = vsub.s32 4, %v4628
  %v4653 = vsel %vm4568, %v4652, %v4628
  %v4654 = vsel %vm4567, %v3943, %v4651
  %v4655 = vsel %vm4567, 0, %v4653
  %v4656 = vcosq.f32.pop %v4654
  %v4657 = vsinq.f32.pop %v4654
  %vm4658 = vweird.f32 %v3943
  %v4659 = vadd.s32 %v4655, 3
  %v4660 = vand.u32 %v4659, 3
  %vm4661 = vcmp.lt.s32.totalorder %v4660, 2
  %vm4662 = vcmp.eq.s32.totalorder %v4660, 0
  %v4663 = vxor.u32 %v4657, 2147483648
  %v4664 = vsel %vm4662, %v4656, %v4663
  %vm4665 = vcmp.eq.s32.totalorder %v4660, 2
  %v4666 = vxor.u32 %v4656, 2147483648
  %v4667 = vsel %vm4665, %v4666, %v4657
  %v4668 = vsel %vm4661, %v4664, %v4667
  %v4669 = vsel %vm4658, nan, %v4668
  %v4670 = vand.u32 2147483647, %v4030
  %vm4671 = vcmp.le.f32.partialorder %v4670, 0.7853982
  %vm4672 = vcmp.lt.s32.totalorder %v4030, 0
  %v4673 = vand.u32 %v4030, 2139095040
  %v4674 = vshrl.u32 %v4673, 23
  %v4675 = vsub.s32 %v4674, 127
  %v4676 = vand.u32 2147483647, %v4030
  %v4677 = vand.u32 %v4676, 8388607
  %v4678 = vor.u32 %v4677, 8388608
  %v4679 = vsub.s32 0, %v4678
  %v4680 = vadd.s32 %v4675, 1
  %vm4681 = vcmp.gt.s32.totalorder %v4680, 0
  %v4682 = vsel %vm4681, %v4680, 0
  %v4683 = vshrl.u32 %v4682, 5
  %v4684 = vand.u32 %v4682, 31
  %v4685 = vsub.s32 32, %v4684
  %v4686 = vshrl.u32 683565275, %v4685
  %v4687 = vshll.u32 683565275, %v4684
  %v4688 = vshrl.u32 2475754826, %v4685
  %v4689 = vor.u32 %v4687, %v4688
  %v4690 = vshll.u32 2475754826, %v4684
  %v4691 = vshrl.u32 2131351028, %v4685
  %v4692 = vor.u32 %v4690, %v4691
  %v4693 = vshll.u32 2131351028, %v4684
  %v4694 = vshrl.u32 2102212464, %v4685
  %v4695 = vor.u32 %v4693, %v4694
  %v4696 = vshll.u32 2102212464, %v4684
  %v4697 = vshrl.u32 920167782, %v4685
  %v4698 = vor.u32 %v4696, %v4697
  %v4699 = vshll.u32 920167782, %v4684
  %v4700 = vshrl.u32 1326507024, %v4685
  %v4701 = vor.u32 %v4699, %v4700
  %vm4702 = vcmp.lt.s32.totalorder %v4683, 1
  %vm4703 = vcmp.lt.s32.totalorder %v4683, 2
  %vm4704 = vcmp.lt.s32.totalorder %v4683, 3
  %vm4705 = vcmp.lt.s32.totalorder %v4683, 4
  %v4706 = vsel %vm4702, %v4686, %v4689
  %v4707 = vsel %vm4705, %v4695, 2102212464
  %v4708 = vsel %vm4704, %v4692, %v4707
  %v4709 = vsel %vm4703, %v4706, %v4708
  %v4710 = vsel %vm4702, %v4689, %v4692
  %v4711 = vsel %vm4705, %v4698, 920167782
  %v4712 = vsel %vm4704, %v4695, %v4711
  %v4713 = vsel %vm4703, %v4710, %v4712
  %v4714 = vsel %vm4702, %v4692, %v4695
  %v4715 = vsel %vm4705, %v4701, 1326507024
  %v4716 = vsel %vm4704, %v4698, %v4715
  %v4717 = vsel %vm4703, %v4714, %v4716
  %v4718 = vshll.u32 %v4678, 8
  %v4719 = vmul.u32.u64.compose %v4718, %v4717
  %v4720 = vextract.low.u32 %v4719
  %v4721 = vextract.high.u32 %v4719
  %v4722 = vmul.u32.u64.compose %v4718, %v4713
  %v4723 = vextract.low.u32 %v4722
  %v4724 = vextract.high.u32 %v4722
  %v4725 = vmul.u32 %v4718, %v4709
  %v4726 = vadd.s32 %v4721, %v4723
  %vm4727 = vc.u32 %v4721, %v4723
  %v4728 = vadd.s32 %v4724, 1
  %v4729 = vsel %vm4727, %v4728, %v4724
  %v4730 = vadd.s32 %v4725, %v4729
  %v4731 = vadd.s32 %v4730, 536870912
  %v4732 = vshrl.u32 %v4731, 30
  %v4733 = vshll.u32 %v4732, 30
  %v4734 = vsub.s32 %v4730, %v4733
  %vm4735 = vcmp.lt.s32.totalorder %v4734, 0
  %v4736 = vsub.s32 0, %v4734
  %v4737 = vsel %vm4735, %v4736, %v4734
  %v4738 = vclz %v4737
  %v4739 = vsub.s32 %v4738, 2
  %vm4740 = vcmp.gt.s32.totalorder 0, %v4739
  %v4741 = vsel %vm4740, 0, %v4739
  %v4742 = vsub.s32 32, %v4741
  %v4743 = vshll.u32 %v4734, %v4741
  %v4744 = vshrl.u32 %v4726, %v4742
  %v4745 = vor.u32 %v4743, %v4744
  %v4746 = vsub.s32 4294967266, %v4741
  %v4747 = vadd.s32 %v4746, 127
  %v4748 = vshll.u32 %v4747, 23
  %v4749 = vor.u32 4788187, %v4748
  %v4750 = vand.u32 2147483647, %v4749
  %v4752 = vcvt.s32.f32 %v4745
  %v4753 = vmul.f32 %v4752, %v4750
  %v4754 = vxor.u32 %v4753, 2147483648
  %v4755 = vsel %vm4672, %v4754, %v4753
  %v4756 = vsub.s32 4, %v4732
  %v4757 = vsel %vm4672, %v4756, %v4732
  %v4758 = vsel %vm4671, %v4030, %v4755
  %v4759 = vsel %vm4671, 0, %v4757
  %v4760 = vcosq.f32.pop %v4758
  %v4761 = vsinq.f32.pop %v4758
  %vm4762 = vweird.f32 %v4030
  %v4763 = vadd.s32 %v4759, 3
  %v4764 = vand.u32 %v4763, 3
  %vm4765 = vcmp.lt.s32.totalorder %v4764, 2
  %vm4766 = vcmp.eq.s32.totalorder %v4764, 0
  %v4767 = vxor.u32 %v4761, 2147483648
  %v4768 = vsel %vm4766, %v4760, %v4767
  %vm4769 = vcmp.eq.s32.totalorder %v4764, 2
  %v4770 = vxor.u32 %v4760, 2147483648
  %v4771 = vsel %vm4769, %v4770, %v4761
  %v4772 = vsel %vm4765, %v4768, %v4771
  %v4773 = vsel %vm4762, nan, %v4772
  %v4774 = vand.u32 2147483647, %v4032
  %vm4775 = vcmp.le.f32.partialorder %v4774, 0.7853982
  %vm4776 = vcmp.lt.s32.totalorder %v4032, 0
  %v4777 = vand.u32 %v4032, 2139095040
  %v4778 = vshrl.u32 %v4777, 23
  %v4779 = vsub.s32 %v4778, 127
  %v4780 = vand.u32 2147483647, %v4032
  %v4781 = vand.u32 %v4780, 8388607
  %v4782 = vor.u32 %v4781, 8388608
  %v4783 = vsub.s32 0, %v4782
  %v4784 = vadd.s32 %v4779, 1
  %vm4785 = vcmp.gt.s32.totalorder %v4784, 0
  %v4786 = vsel %vm4785, %v4784, 0
  %v4787 = vshrl.u32 %v4786, 5
  %v4788 = vand.u32 %v4786, 31
  %v4789 = vsub.s32 32, %v4788
  %v4790 = vshrl.u32 683565275, %v4789
  %v4791 = vshll.u32 683565275, %v4788
  %v4792 = vshrl.u32 2475754826, %v4789
  %v4793 = vor.u32 %v4791, %v4792
  %v4794 = vshll.u32 2475754826, %v4788
  %v4795 = vshrl.u32 2131351028, %v4789
  %v4796 = vor.u32 %v4794, %v4795
  %v4797 = vshll.u32 2131351028, %v4788
  %v4798 = vshrl.u32 2102212464, %v4789
  %v4799 = vor.u32 %v4797, %v4798
  %v4800 = vshll.u32 2102212464, %v4788
  %v4801 = vshrl.u32 920167782, %v4789
  %v4802 = vor.u32 %v4800, %v4801
  %v4803 = vshll.u32 920167782, %v4788
  %v4804 = vshrl.u32 1326507024, %v4789
  %v4805 = vor.u32 %v4803, %v4804
  %vm4806 = vcmp.lt.s32.totalorder %v4787, 1
  %vm4807 = vcmp.lt.s32.totalorder %v4787, 2
  %vm4808 = vcmp.lt.s32.totalorder %v4787, 3
  %vm4809 = vcmp.lt.s32.totalorder %v4787, 4
  %v4810 = vsel %vm4806, %v4790, %v4793
  %v4811 = vsel %vm4809, %v4799, 2102212464
  %v4812 = vsel %vm4808, %v4796, %v4811
  %v4813 = vsel %vm4807, %v4810, %v4812
  %v4814 = vsel %vm4806, %v4793, %v4796
  %v4815 = vsel %vm4809, %v4802, 920167782
  %v4816 = vsel %vm4808, %v4799, %v4815
  %v4817 = vsel %vm4807, %v4814, %v4816
  %v4818 = vsel %vm4806, %v4796, %v4799
  %v4819 = vsel %vm4809, %v4805, 1326507024
  %v4820 = vsel %vm4808, %v4802, %v4819
  %v4821 = vsel %vm4807, %v4818, %v4820
  %v4822 = vshll.u32 %v4782, 8
  %v4823 = vmul.u32.u64.compose %v4822, %v4821
  %v4824 = vextract.low.u32 %v4823
  %v4825 = vextract.high.u32 %v4823
  %v4826 = vmul.u32.u64.compose %v4822, %v4817
  %v4827 = vextract.low.u32 %v4826
  %v4828 = vextract.high.u32 %v4826
  %v4829 = vmul.u32 %v4822, %v4813
  %v4830 = vadd.s32 %v4825, %v4827
  %vm4831 = vc.u32 %v4825, %v4827
  %v4832 = vadd.s32 %v4828, 1
  %v4833 = vsel %vm4831, %v4832, %v4828
  %v4834 = vadd.s32 %v4829, %v4833
  %v4835 = vadd.s32 %v4834, 536870912
  %v4836 = vshrl.u32 %v4835, 30
  %v4837 = vshll.u32 %v4836, 30
  %v4838 = vsub.s32 %v4834, %v4837
  %vm4839 = vcmp.lt.s32.totalorder %v4838, 0
  %v4840 = vsub.s32 0, %v4838
  %v4841 = vsel %vm4839, %v4840, %v4838
  %v4842 = vclz %v4841
  %v4843 = vsub.s32 %v4842, 2
  %vm4844 = vcmp.gt.s32.totalorder 0, %v4843
  %v4845 = vsel %vm4844, 0, %v4843
  %v4846 = vsub.s32 32, %v4845
  %v4847 = vshll.u32 %v4838, %v4845
  %v4848 = vshrl.u32 %v4830, %v4846
  %v4849 = vor.u32 %v4847, %v4848
  %v4850 = vsub.s32 4294967266, %v4845
  %v4851 = vadd.s32 %v4850, 127
  %v4852 = vshll.u32 %v4851, 23
  %v4853 = vor.u32 4788187, %v4852
  %v4854 = vand.u32 2147483647, %v4853
  %v4856 = vcvt.s32.f32 %v4849
  %v4857 = vmul.f32 %v4856, %v4854
  %v4858 = vxor.u32 %v4857, 2147483648
  %v4859 = vsel %vm4776, %v4858, %v4857
  %v4860 = vsub.s32 4, %v4836
  %v4861 = vsel %vm4776, %v4860, %v4836
  %v4862 = vsel %vm4775, %v4032, %v4859
  %v4863 = vsel %vm4775, 0, %v4861
  %v4864 = vcosq.f32.pop %v4862
  %v4865 = vsinq.f32.pop %v4862
  %vm4866 = vweird.f32 %v4032
  %v4867 = vadd.s32 %v4863, 3
  %v4868 = vand.u32 %v4867, 3
  %vm4869 = vcmp.lt.s32.totalorder %v4868, 2
  %vm4870 = vcmp.eq.s32.totalorder %v4868, 0
  %v4871 = vxor.u32 %v4865, 2147483648
  %v4872 = vsel %vm4870, %v4864, %v4871
  %vm4873 = vcmp.eq.s32.totalorder %v4868, 2
  %v4874 = vxor.u32 %v4864, 2147483648
  %v4875 = vsel %vm4873, %v4874, %v4865
  %v4876 = vsel %vm4869, %v4872, %v4875
  %v4877 = vsel %vm4866, nan, %v4876
  %v4878 = vand.u32 2147483647, %v3947
  %vm4879 = vcmp.le.f32.partialorder %v4878, 0.7853982
  %vm4880 = vcmp.lt.s32.totalorder %v3947, 0
  %v4881 = vand.u32 %v3947, 2139095040
  %v4882 = vshrl.u32 %v4881, 23
  %v4883 = vsub.s32 %v4882, 127
  %v4884 = vand.u32 2147483647, %v3947
  %v4885 = vand.u32 %v4884, 8388607
  %v4886 = vor.u32 %v4885, 8388608
  %v4887 = vsub.s32 0, %v4886
  %v4888 = vadd.s32 %v4883, 1
  %vm4889 = vcmp.gt.s32.totalorder %v4888, 0
  %v4890 = vsel %vm4889, %v4888, 0
  %v4891 = vshrl.u32 %v4890, 5
  %v4892 = vand.u32 %v4890, 31
  %v4893 = vsub.s32 32, %v4892
  %v4894 = vshrl.u32 683565275, %v4893
  %v4895 = vshll.u32 683565275, %v4892
  %v4896 = vshrl.u32 2475754826, %v4893
  %v4897 = vor.u32 %v4895, %v4896
  %v4898 = vshll.u32 2475754826, %v4892
  %v4899 = vshrl.u32 2131351028, %v4893
  %v4900 = vor.u32 %v4898, %v4899
  %v4901 = vshll.u32 2131351028, %v4892
  %v4902 = vshrl.u32 2102212464, %v4893
  %v4903 = vor.u32 %v4901, %v4902
  %v4904 = vshll.u32 2102212464, %v4892
  %v4905 = vshrl.u32 920167782, %v4893
  %v4906 = vor.u32 %v4904, %v4905
  %v4907 = vshll.u32 920167782, %v4892
  %v4908 = vshrl.u32 1326507024, %v4893
  %v4909 = vor.u32 %v4907, %v4908
  %vm4910 = vcmp.lt.s32.totalorder %v4891, 1
  %vm4911 = vcmp.lt.s32.totalorder %v4891, 2
  %vm4912 = vcmp.lt.s32.totalorder %v4891, 3
  %vm4913 = vcmp.lt.s32.totalorder %v4891, 4
  %v4914 = vsel %vm4910, %v4894, %v4897
  %v4915 = vsel %vm4913, %v4903, 2102212464
  %v4916 = vsel %vm4912, %v4900, %v4915
  %v4917 = vsel %vm4911, %v4914, %v4916
  %v4918 = vsel %vm4910, %v4897, %v4900
  %v4919 = vsel %vm4913, %v4906, 920167782
  %v4920 = vsel %vm4912, %v4903, %v4919
  %v4921 = vsel %vm4911, %v4918, %v4920
  %v4922 = vsel %vm4910, %v4900, %v4903
  %v4923 = vsel %vm4913, %v4909, 1326507024
  %v4924 = vsel %vm4912, %v4906, %v4923
  %v4925 = vsel %vm4911, %v4922, %v4924
  %v4926 = vshll.u32 %v4886, 8
  %v4927 = vmul.u32.u64.compose %v4926, %v4925
  %v4928 = vextract.low.u32 %v4927
  %v4929 = vextract.high.u32 %v4927
  %v4930 = vmul.u32.u64.compose %v4926, %v4921
  %v4931 = vextract.low.u32 %v4930
  %v4932 = vextract.high.u32 %v4930
  %v4933 = vmul.u32 %v4926, %v4917
  %v4934 = vadd.s32 %v4929, %v4931
  %vm4935 = vc.u32 %v4929, %v4931
  %v4936 = vadd.s32 %v4932, 1
  %v4937 = vsel %vm4935, %v4936, %v4932
  %v4938 = vadd.s32 %v4933, %v4937
  %v4939 = vadd.s32 %v4938, 536870912
  %v4940 = vshrl.u32 %v4939, 30
  %v4941 = vshll.u32 %v4940, 30
  %v4942 = vsub.s32 %v4938, %v4941
  %vm4943 = vcmp.lt.s32.totalorder %v4942, 0
  %v4944 = vsub.s32 0, %v4942
  %v4945 = vsel %vm4943, %v4944, %v4942
  %v4946 = vclz %v4945
  %v4947 = vsub.s32 %v4946, 2
  %vm4948 = vcmp.gt.s32.totalorder 0, %v4947
  %v4949 = vsel %vm4948, 0, %v4947
  %v4950 = vsub.s32 32, %v4949
  %v4951 = vshll.u32 %v4942, %v4949
  %v4952 = vshrl.u32 %v4934, %v4950
  %v4953 = vor.u32 %v4951, %v4952
  %v4954 = vsub.s32 4294967266, %v4949
  %v4955 = vadd.s32 %v4954, 127
  %v4956 = vshll.u32 %v4955, 23
  %v4957 = vor.u32 4788187, %v4956
  %v4958 = vand.u32 2147483647, %v4957
  %v4960 = vcvt.s32.f32 %v4953
  %v4961 = vmul.f32 %v4960, %v4958
  %v4962 = vxor.u32 %v4961, 2147483648
  %v4963 = vsel %vm4880, %v4962, %v4961
  %v4964 = vsub.s32 4, %v4940
  %v4965 = vsel %vm4880, %v4964, %v4940
  %v4966 = vsel %vm4879, %v3947, %v4963
  %v4967 = vsel %vm4879, 0, %v4965
  %v4968 = vcosq.f32.pop %v4966
  %v4969 = vsinq.f32.pop %v4966
  %vm4970 = vweird.f32 %v3947
  %v4971 = vadd.s32 %v4967, 3
  %v4972 = vand.u32 %v4971, 3
  %vm4973 = vcmp.lt.s32.totalorder %v4972, 2
  %vm4974 = vcmp.eq.s32.totalorder %v4972, 0
  %v4975 = vxor.u32 %v4969, 2147483648
  %v4976 = vsel %vm4974, %v4968, %v4975
  %vm4977 = vcmp.eq.s32.totalorder %v4972, 2
  %v4978 = vxor.u32 %v4968, 2147483648
  %v4979 = vsel %vm4977, %v4978, %v4969
  %v4980 = vsel %vm4973, %v4976, %v4979
  %v4981 = vsel %vm4970, nan, %v4980
  %v4982 = vand.u32 2147483647, %v3949
  %vm4983 = vcmp.le.f32.partialorder %v4982, 0.7853982
  %vm4984 = vcmp.lt.s32.totalorder %v3949, 0
  %v4985 = vand.u32 %v3949, 2139095040
  %v4986 = vshrl.u32 %v4985, 23
  %v4987 = vsub.s32 %v4986, 127
  %v4988 = vand.u32 2147483647, %v3949
  %v4989 = vand.u32 %v4988, 8388607
  %v4990 = vor.u32 %v4989, 8388608
  %v4991 = vsub.s32 0, %v4990
  %v4992 = vadd.s32 %v4987, 1
  %vm4993 = vcmp.gt.s32.totalorder %v4992, 0
  %v4994 = vsel %vm4993, %v4992, 0
  %v4995 = vshrl.u32 %v4994, 5
  %v4996 = vand.u32 %v4994, 31
  %v4997 = vsub.s32 32, %v4996
  %v4998 = vshrl.u32 683565275, %v4997
  %v4999 = vshll.u32 683565275, %v4996
  %v5000 = vshrl.u32 2475754826, %v4997
  %v5001 = vor.u32 %v4999, %v5000
  %v5002 = vshll.u32 2475754826, %v4996
  %v5003 = vshrl.u32 2131351028, %v4997
  %v5004 = vor.u32 %v5002, %v5003
  %v5005 = vshll.u32 2131351028, %v4996
  %v5006 = vshrl.u32 2102212464, %v4997
  %v5007 = vor.u32 %v5005, %v5006
  %v5008 = vshll.u32 2102212464, %v4996
  %v5009 = vshrl.u32 920167782, %v4997
  %v5010 = vor.u32 %v5008, %v5009
  %v5011 = vshll.u32 920167782, %v4996
  %v5012 = vshrl.u32 1326507024, %v4997
  %v5013 = vor.u32 %v5011, %v5012
  %vm5014 = vcmp.lt.s32.totalorder %v4995, 1
  %vm5015 = vcmp.lt.s32.totalorder %v4995, 2
  %vm5016 = vcmp.lt.s32.totalorder %v4995, 3
  %vm5017 = vcmp.lt.s32.totalorder %v4995, 4
  %v5018 = vsel %vm5014, %v4998, %v5001
  %v5019 = vsel %vm5017, %v5007, 2102212464
  %v5020 = vsel %vm5016, %v5004, %v5019
  %v5021 = vsel %vm5015, %v5018, %v5020
  %v5022 = vsel %vm5014, %v5001, %v5004
  %v5023 = vsel %vm5017, %v5010, 920167782
  %v5024 = vsel %vm5016, %v5007, %v5023
  %v5025 = vsel %vm5015, %v5022, %v5024
  %v5026 = vsel %vm5014, %v5004, %v5007
  %v5027 = vsel %vm5017, %v5013, 1326507024
  %v5028 = vsel %vm5016, %v5010, %v5027
  %v5029 = vsel %vm5015, %v5026, %v5028
  %v5030 = vshll.u32 %v4990, 8
  %v5031 = vmul.u32.u64.compose %v5030, %v5029
  %v5032 = vextract.low.u32 %v5031
  %v5033 = vextract.high.u32 %v5031
  %v5034 = vmul.u32.u64.compose %v5030, %v5025
  %v5035 = vextract.low.u32 %v5034
  %v5036 = vextract.high.u32 %v5034
  %v5037 = vmul.u32 %v5030, %v5021
  %v5038 = vadd.s32 %v5033, %v5035
  %vm5039 = vc.u32 %v5033, %v5035
  %v5040 = vadd.s32 %v5036, 1
  %v5041 = vsel %vm5039, %v5040, %v5036
  %v5042 = vadd.s32 %v5037, %v5041
  %v5043 = vadd.s32 %v5042, 536870912
  %v5044 = vshrl.u32 %v5043, 30
  %v5045 = vshll.u32 %v5044, 30
  %v5046 = vsub.s32 %v5042, %v5045
  %vm5047 = vcmp.lt.s32.totalorder %v5046, 0
  %v5048 = vsub.s32 0, %v5046
  %v5049 = vsel %vm5047, %v5048, %v5046
  %v5050 = vclz %v5049
  %v5051 = vsub.s32 %v5050, 2
  %vm5052 = vcmp.gt.s32.totalorder 0, %v5051
  %v5053 = vsel %vm5052, 0, %v5051
  %v5054 = vsub.s32 32, %v5053
  %v5055 = vshll.u32 %v5046, %v5053
  %v5056 = vshrl.u32 %v5038, %v5054
  %v5057 = vor.u32 %v5055, %v5056
  %v5058 = vsub.s32 4294967266, %v5053
  %v5059 = vadd.s32 %v5058, 127
  %v5060 = vshll.u32 %v5059, 23
  %v5061 = vor.u32 4788187, %v5060
  %v5062 = vand.u32 2147483647, %v5061
  %v5064 = vcvt.s32.f32 %v5057
  %v5065 = vmul.f32 %v5064, %v5062
  %v5066 = vxor.u32 %v5065, 2147483648
  %v5067 = vsel %vm4984, %v5066, %v5065
  %v5068 = vsub.s32 4, %v5044
  %v5069 = vsel %vm4984, %v5068, %v5044
  %v5070 = vsel %vm4983, %v3949, %v5067
  %v5071 = vsel %vm4983, 0, %v5069
  %v5072 = vcosq.f32.pop %v5070
  %v5073 = vsinq.f32.pop %v5070
  %vm5074 = vweird.f32 %v3949
  %v5075 = vadd.s32 %v5071, 3
  %v5076 = vand.u32 %v5075, 3
  %vm5077 = vcmp.lt.s32.totalorder %v5076, 2
  %vm5078 = vcmp.eq.s32.totalorder %v5076, 0
  %v5079 = vxor.u32 %v5073, 2147483648
  %v5080 = vsel %vm5078, %v5072, %v5079
  %vm5081 = vcmp.eq.s32.totalorder %v5076, 2
  %v5082 = vxor.u32 %v5072, 2147483648
  %v5083 = vsel %vm5081, %v5082, %v5073
  %v5084 = vsel %vm5077, %v5080, %v5083
  %v5085 = vsel %vm5074, nan, %v5084
  %v5086 = vand.u32 2147483647, %v4036
  %vm5087 = vcmp.le.f32.partialorder %v5086, 0.7853982
  %vm5088 = vcmp.lt.s32.totalorder %v4036, 0
  %v5089 = vand.u32 %v4036, 2139095040
  %v5090 = vshrl.u32 %v5089, 23
  %v5091 = vsub.s32 %v5090, 127
  %v5092 = vand.u32 2147483647, %v4036
  %v5093 = vand.u32 %v5092, 8388607
  %v5094 = vor.u32 %v5093, 8388608
  %v5095 = vsub.s32 0, %v5094
  %v5096 = vadd.s32 %v5091, 1
  %vm5097 = vcmp.gt.s32.totalorder %v5096, 0
  %v5098 = vsel %vm5097, %v5096, 0
  %v5099 = vshrl.u32 %v5098, 5
  %v5100 = vand.u32 %v5098, 31
  %v5101 = vsub.s32 32, %v5100
  %v5102 = vshrl.u32 683565275, %v5101
  %v5103 = vshll.u32 683565275, %v5100
  %v5104 = vshrl.u32 2475754826, %v5101
  %v5105 = vor.u32 %v5103, %v5104
  %v5106 = vshll.u32 2475754826, %v5100
  %v5107 = vshrl.u32 2131351028, %v5101
  %v5108 = vor.u32 %v5106, %v5107
  %v5109 = vshll.u32 2131351028, %v5100
  %v5110 = vshrl.u32 2102212464, %v5101
  %v5111 = vor.u32 %v5109, %v5110
  %v5112 = vshll.u32 2102212464, %v5100
  %v5113 = vshrl.u32 920167782, %v5101
  %v5114 = vor.u32 %v5112, %v5113
  %v5115 = vshll.u32 920167782, %v5100
  %v5116 = vshrl.u32 1326507024, %v5101
  %v5117 = vor.u32 %v5115, %v5116
  %vm5118 = vcmp.lt.s32.totalorder %v5099, 1
  %vm5119 = vcmp.lt.s32.totalorder %v5099, 2
  %vm5120 = vcmp.lt.s32.totalorder %v5099, 3
  %vm5121 = vcmp.lt.s32.totalorder %v5099, 4
  %v5122 = vsel %vm5118, %v5102, %v5105
  %v5123 = vsel %vm5121, %v5111, 2102212464
  %v5124 = vsel %vm5120, %v5108, %v5123
  %v5125 = vsel %vm5119, %v5122, %v5124
  %v5126 = vsel %vm5118, %v5105, %v5108
  %v5127 = vsel %vm5121, %v5114, 920167782
  %v5128 = vsel %vm5120, %v5111, %v5127
  %v5129 = vsel %vm5119, %v5126, %v5128
  %v5130 = vsel %vm5118, %v5108, %v5111
  %v5131 = vsel %vm5121, %v5117, 1326507024
  %v5132 = vsel %vm5120, %v5114, %v5131
  %v5133 = vsel %vm5119, %v5130, %v5132
  %v5134 = vshll.u32 %v5094, 8
  %v5135 = vmul.u32.u64.compose %v5134, %v5133
  %v5136 = vextract.low.u32 %v5135
  %v5137 = vextract.high.u32 %v5135
  %v5138 = vmul.u32.u64.compose %v5134, %v5129
  %v5139 = vextract.low.u32 %v5138
  %v5140 = vextract.high.u32 %v5138
  %v5141 = vmul.u32 %v5134, %v5125
  %v5142 = vadd.s32 %v5137, %v5139
  %vm5143 = vc.u32 %v5137, %v5139
  %v5144 = vadd.s32 %v5140, 1
  %v5145 = vsel %vm5143, %v5144, %v5140
  %v5146 = vadd.s32 %v5141, %v5145
  %v5147 = vadd.s32 %v5146, 536870912
  %v5148 = vshrl.u32 %v5147, 30
  %v5149 = vshll.u32 %v5148, 30
  %v5150 = vsub.s32 %v5146, %v5149
  %vm5151 = vcmp.lt.s32.totalorder %v5150, 0
  %v5152 = vsub.s32 0, %v5150
  %v5153 = vsel %vm5151, %v5152, %v5150
  %v5154 = vclz %v5153
  %v5155 = vsub.s32 %v5154, 2
  %vm5156 = vcmp.gt.s32.totalorder 0, %v5155
  %v5157 = vsel %vm5156, 0, %v5155
  %v5158 = vsub.s32 32, %v5157
  %v5159 = vshll.u32 %v5150, %v5157
  %v5160 = vshrl.u32 %v5142, %v5158
  %v5161 = vor.u32 %v5159, %v5160
  %v5162 = vsub.s32 4294967266, %v5157
  %v5163 = vadd.s32 %v5162, 127
  %v5164 = vshll.u32 %v5163, 23
  %v5165 = vor.u32 4788187, %v5164
  %v5166 = vand.u32 2147483647, %v5165
  %v5168 = vcvt.s32.f32 %v5161
  %v5169 = vmul.f32 %v5168, %v5166
  %v5170 = vxor.u32 %v5169, 2147483648
  %v5171 = vsel %vm5088, %v5170, %v5169
  %v5172 = vsub.s32 4, %v5148
  %v5173 = vsel %vm5088, %v5172, %v5148
  %v5174 = vsel %vm5087, %v4036, %v5171
  %v5175 = vsel %vm5087, 0, %v5173
  %v5176 = vcosq.f32.pop %v5174
  %v5177 = vsinq.f32.pop %v5174
  %vm5178 = vweird.f32 %v4036
  %v5179 = vadd.s32 %v5175, 3
  %v5180 = vand.u32 %v5179, 3
  %vm5181 = vcmp.lt.s32.totalorder %v5180, 2
  %vm5182 = vcmp.eq.s32.totalorder %v5180, 0
  %v5183 = vxor.u32 %v5177, 2147483648
  %v5184 = vsel %vm5182, %v5176, %v5183
  %vm5185 = vcmp.eq.s32.totalorder %v5180, 2
  %v5186 = vxor.u32 %v5176, 2147483648
  %v5187 = vsel %vm5185, %v5186, %v5177
  %v5188 = vsel %vm5181, %v5184, %v5187
  %v5189 = vsel %vm5178, nan, %v5188
  %v5190 = vand.u32 2147483647, %v4038
  %vm5191 = vcmp.le.f32.partialorder %v5190, 0.7853982
  %vm5192 = vcmp.lt.s32.totalorder %v4038, 0
  %v5193 = vand.u32 %v4038, 2139095040
  %v5194 = vshrl.u32 %v5193, 23
  %v5195 = vsub.s32 %v5194, 127
  %v5196 = vand.u32 2147483647, %v4038
  %v5197 = vand.u32 %v5196, 8388607
  %v5198 = vor.u32 %v5197, 8388608
  %v5199 = vsub.s32 0, %v5198
  %v5200 = vadd.s32 %v5195, 1
  %vm5201 = vcmp.gt.s32.totalorder %v5200, 0
  %v5202 = vsel %vm5201, %v5200, 0
  %v5203 = vshrl.u32 %v5202, 5
  %v5204 = vand.u32 %v5202, 31
  %v5205 = vsub.s32 32, %v5204
  %v5206 = vshrl.u32 683565275, %v5205
  %v5207 = vshll.u32 683565275, %v5204
  %v5208 = vshrl.u32 2475754826, %v5205
  %v5209 = vor.u32 %v5207, %v5208
  %v5210 = vshll.u32 2475754826, %v5204
  %v5211 = vshrl.u32 2131351028, %v5205
  %v5212 = vor.u32 %v5210, %v5211
  %v5213 = vshll.u32 2131351028, %v5204
  %v5214 = vshrl.u32 2102212464, %v5205
  %v5215 = vor.u32 %v5213, %v5214
  %v5216 = vshll.u32 2102212464, %v5204
  %v5217 = vshrl.u32 920167782, %v5205
  %v5218 = vor.u32 %v5216, %v5217
  %v5219 = vshll.u32 920167782, %v5204
  %v5220 = vshrl.u32 1326507024, %v5205
  %v5221 = vor.u32 %v5219, %v5220
  %vm5222 = vcmp.lt.s32.totalorder %v5203, 1
  %vm5223 = vcmp.lt.s32.totalorder %v5203, 2
  %vm5224 = vcmp.lt.s32.totalorder %v5203, 3
  %vm5225 = vcmp.lt.s32.totalorder %v5203, 4
  %v5226 = vsel %vm5222, %v5206, %v5209
  %v5227 = vsel %vm5225, %v5215, 2102212464
  %v5228 = vsel %vm5224, %v5212, %v5227
  %v5229 = vsel %vm5223, %v5226, %v5228
  %v5230 = vsel %vm5222, %v5209, %v5212
  %v5231 = vsel %vm5225, %v5218, 920167782
  %v5232 = vsel %vm5224, %v5215, %v5231
  %v5233 = vsel %vm5223, %v5230, %v5232
  %v5234 = vsel %vm5222, %v5212, %v5215
  %v5235 = vsel %vm5225, %v5221, 1326507024
  %v5236 = vsel %vm5224, %v5218, %v5235
  %v5237 = vsel %vm5223, %v5234, %v5236
  %v5238 = vshll.u32 %v5198, 8
  %v5239 = vmul.u32.u64.compose %v5238, %v5237
  %v5240 = vextract.low.u32 %v5239
  %v5241 = vextract.high.u32 %v5239
  %v5242 = vmul.u32.u64.compose %v5238, %v5233
  %v5243 = vextract.low.u32 %v5242
  %v5244 = vextract.high.u32 %v5242
  %v5245 = vmul.u32 %v5238, %v5229
  %v5246 = vadd.s32 %v5241, %v5243
  %vm5247 = vc.u32 %v5241, %v5243
  %v5248 = vadd.s32 %v5244, 1
  %v5249 = vsel %vm5247, %v5248, %v5244
  %v5250 = vadd.s32 %v5245, %v5249
  %v5251 = vadd.s32 %v5250, 536870912
  %v5252 = vshrl.u32 %v5251, 30
  %v5253 = vshll.u32 %v5252, 30
  %v5254 = vsub.s32 %v5250, %v5253
  %vm5255 = vcmp.lt.s32.totalorder %v5254, 0
  %v5256 = vsub.s32 0, %v5254
  %v5257 = vsel %vm5255, %v5256, %v5254
  %v5258 = vclz %v5257
  %v5259 = vsub.s32 %v5258, 2
  %vm5260 = vcmp.gt.s32.totalorder 0, %v5259
  %v5261 = vsel %vm5260, 0, %v5259
  %v5262 = vsub.s32 32, %v5261
  %v5263 = vshll.u32 %v5254, %v5261
  %v5264 = vshrl.u32 %v5246, %v5262
  %v5265 = vor.u32 %v5263, %v5264
  %v5266 = vsub.s32 4294967266, %v5261
  %v5267 = vadd.s32 %v5266, 127
  %v5268 = vshll.u32 %v5267, 23
  %v5269 = vor.u32 4788187, %v5268
  %v5270 = vand.u32 2147483647, %v5269
  %v5272 = vcvt.s32.f32 %v5265
  %v5273 = vmul.f32 %v5272, %v5270
  %v5274 = vxor.u32 %v5273, 2147483648
  %v5275 = vsel %vm5192, %v5274, %v5273
  %v5276 = vsub.s32 4, %v5252
  %v5277 = vsel %vm5192, %v5276, %v5252
  %v5278 = vsel %vm5191, %v4038, %v5275
  %v5279 = vsel %vm5191, 0, %v5277
  %v5280 = vcosq.f32.pop %v5278
  %v5281 = vsinq.f32.pop %v5278
  %vm5282 = vweird.f32 %v4038
  %v5283 = vadd.s32 %v5279, 3
  %v5284 = vand.u32 %v5283, 3
  %vm5285 = vcmp.lt.s32.totalorder %v5284, 2
  %vm5286 = vcmp.eq.s32.totalorder %v5284, 0
  %v5287 = vxor.u32 %v5281, 2147483648
  %v5288 = vsel %vm5286, %v5280, %v5287
  %vm5289 = vcmp.eq.s32.totalorder %v5284, 2
  %v5290 = vxor.u32 %v5280, 2147483648
  %v5291 = vsel %vm5289, %v5290, %v5281
  %v5292 = vsel %vm5285, %v5288, %v5291
  %v5293 = vsel %vm5282, nan, %v5292
  %v5294 = vand.u32 2147483647, %v3953
  %vm5295 = vcmp.le.f32.partialorder %v5294, 0.7853982
  %vm5296 = vcmp.lt.s32.totalorder %v3953, 0
  %v5297 = vand.u32 %v3953, 2139095040
  %v5298 = vshrl.u32 %v5297, 23
  %v5299 = vsub.s32 %v5298, 127
  %v5300 = vand.u32 2147483647, %v3953
  %v5301 = vand.u32 %v5300, 8388607
  %v5302 = vor.u32 %v5301, 8388608
  %v5303 = vsub.s32 0, %v5302
  %v5304 = vadd.s32 %v5299, 1
  %vm5305 = vcmp.gt.s32.totalorder %v5304, 0
  %v5306 = vsel %vm5305, %v5304, 0
  %v5307 = vshrl.u32 %v5306, 5
  %v5308 = vand.u32 %v5306, 31
  %v5309 = vsub.s32 32, %v5308
  %v5310 = vshrl.u32 683565275, %v5309
  %v5311 = vshll.u32 683565275, %v5308
  %v5312 = vshrl.u32 2475754826, %v5309
  %v5313 = vor.u32 %v5311, %v5312
  %v5314 = vshll.u32 2475754826, %v5308
  %v5315 = vshrl.u32 2131351028, %v5309
  %v5316 = vor.u32 %v5314, %v5315
  %v5317 = vshll.u32 2131351028, %v5308
  %v5318 = vshrl.u32 2102212464, %v5309
  %v5319 = vor.u32 %v5317, %v5318
  %v5320 = vshll.u32 2102212464, %v5308
  %v5321 = vshrl.u32 920167782, %v5309
  %v5322 = vor.u32 %v5320, %v5321
  %v5323 = vshll.u32 920167782, %v5308
  %v5324 = vshrl.u32 1326507024, %v5309
  %v5325 = vor.u32 %v5323, %v5324
  %vm5326 = vcmp.lt.s32.totalorder %v5307, 1
  %vm5327 = vcmp.lt.s32.totalorder %v5307, 2
  %vm5328 = vcmp.lt.s32.totalorder %v5307, 3
  %vm5329 = vcmp.lt.s32.totalorder %v5307, 4
  %v5330 = vsel %vm5326, %v5310, %v5313
  %v5331 = vsel %vm5329, %v5319, 2102212464
  %v5332 = vsel %vm5328, %v5316, %v5331
  %v5333 = vsel %vm5327, %v5330, %v5332
  %v5334 = vsel %vm5326, %v5313, %v5316
  %v5335 = vsel %vm5329, %v5322, 920167782
  %v5336 = vsel %vm5328, %v5319, %v5335
  %v5337 = vsel %vm5327, %v5334, %v5336
  %v5338 = vsel %vm5326, %v5316, %v5319
  %v5339 = vsel %vm5329, %v5325, 1326507024
  %v5340 = vsel %vm5328, %v5322, %v5339
  %v5341 = vsel %vm5327, %v5338, %v5340
  %v5342 = vshll.u32 %v5302, 8
  %v5343 = vmul.u32.u64.compose %v5342, %v5341
  %v5344 = vextract.low.u32 %v5343
  %v5345 = vextract.high.u32 %v5343
  %v5346 = vmul.u32.u64.compose %v5342, %v5337
  %v5347 = vextract.low.u32 %v5346
  %v5348 = vextract.high.u32 %v5346
  %v5349 = vmul.u32 %v5342, %v5333
  %v5350 = vadd.s32 %v5345, %v5347
  %vm5351 = vc.u32 %v5345, %v5347
  %v5352 = vadd.s32 %v5348, 1
  %v5353 = vsel %vm5351, %v5352, %v5348
  %v5354 = vadd.s32 %v5349, %v5353
  %v5355 = vadd.s32 %v5354, 536870912
  %v5356 = vshrl.u32 %v5355, 30
  %v5357 = vshll.u32 %v5356, 30
  %v5358 = vsub.s32 %v5354, %v5357
  %vm5359 = vcmp.lt.s32.totalorder %v5358, 0
  %v5360 = vsub.s32 0, %v5358
  %v5361 = vsel %vm5359, %v5360, %v5358
  %v5362 = vclz %v5361
  %v5363 = vsub.s32 %v5362, 2
  %vm5364 = vcmp.gt.s32.totalorder 0, %v5363
  %v5365 = vsel %vm5364, 0, %v5363
  %v5366 = vsub.s32 32, %v5365
  %v5367 = vshll.u32 %v5358, %v5365
  %v5368 = vshrl.u32 %v5350, %v5366
  %v5369 = vor.u32 %v5367, %v5368
  %v5370 = vsub.s32 4294967266, %v5365
  %v5371 = vadd.s32 %v5370, 127
  %v5372 = vshll.u32 %v5371, 23
  %v5373 = vor.u32 4788187, %v5372
  %v5374 = vand.u32 2147483647, %v5373
  %v5376 = vcvt.s32.f32 %v5369
  %v5377 = vmul.f32 %v5376, %v5374
  %v5378 = vxor.u32 %v5377, 2147483648
  %v5379 = vsel %vm5296, %v5378, %v5377
  %v5380 = vsub.s32 4, %v5356
  %v5381 = vsel %vm5296, %v5380, %v5356
  %v5382 = vsel %vm5295, %v3953, %v5379
  %v5383 = vsel %vm5295, 0, %v5381
  %v5384 = vcosq.f32.pop %v5382
  %v5385 = vsinq.f32.pop %v5382
  %vm5386 = vweird.f32 %v3953
  %v5387 = vadd.s32 %v5383, 3
  %v5388 = vand.u32 %v5387, 3
  %vm5389 = vcmp.lt.s32.totalorder %v5388, 2
  %vm5390 = vcmp.eq.s32.totalorder %v5388, 0
  %v5391 = vxor.u32 %v5385, 2147483648
  %v5392 = vsel %vm5390, %v5384, %v5391
  %vm5393 = vcmp.eq.s32.totalorder %v5388, 2
  %v5394 = vxor.u32 %v5384, 2147483648
  %v5395 = vsel %vm5393, %v5394, %v5385
  %v5396 = vsel %vm5389, %v5392, %v5395
  %v5397 = vsel %vm5386, nan, %v5396
  %v5398 = vand.u32 2147483647, %v3955
  %vm5399 = vcmp.le.f32.partialorder %v5398, 0.7853982
  %vm5400 = vcmp.lt.s32.totalorder %v3955, 0
  %v5401 = vand.u32 %v3955, 2139095040
  %v5402 = vshrl.u32 %v5401, 23
  %v5403 = vsub.s32 %v5402, 127
  %v5404 = vand.u32 2147483647, %v3955
  %v5405 = vand.u32 %v5404, 8388607
  %v5406 = vor.u32 %v5405, 8388608
  %v5407 = vsub.s32 0, %v5406
  %v5408 = vadd.s32 %v5403, 1
  %vm5409 = vcmp.gt.s32.totalorder %v5408, 0
  %v5410 = vsel %vm5409, %v5408, 0
  %v5411 = vshrl.u32 %v5410, 5
  %v5412 = vand.u32 %v5410, 31
  %v5413 = vsub.s32 32, %v5412
  %v5414 = vshrl.u32 683565275, %v5413
  %v5415 = vshll.u32 683565275, %v5412
  %v5416 = vshrl.u32 2475754826, %v5413
  %v5417 = vor.u32 %v5415, %v5416
  %v5418 = vshll.u32 2475754826, %v5412
  %v5419 = vshrl.u32 2131351028, %v5413
  %v5420 = vor.u32 %v5418, %v5419
  %v5421 = vshll.u32 2131351028, %v5412
  %v5422 = vshrl.u32 2102212464, %v5413
  %v5423 = vor.u32 %v5421, %v5422
  %v5424 = vshll.u32 2102212464, %v5412
  %v5425 = vshrl.u32 920167782, %v5413
  %v5426 = vor.u32 %v5424, %v5425
  %v5427 = vshll.u32 920167782, %v5412
  %v5428 = vshrl.u32 1326507024, %v5413
  %v5429 = vor.u32 %v5427, %v5428
  %vm5430 = vcmp.lt.s32.totalorder %v5411, 1
  %vm5431 = vcmp.lt.s32.totalorder %v5411, 2
  %vm5432 = vcmp.lt.s32.totalorder %v5411, 3
  %vm5433 = vcmp.lt.s32.totalorder %v5411, 4
  %v5434 = vsel %vm5430, %v5414, %v5417
  %v5435 = vsel %vm5433, %v5423, 2102212464
  %v5436 = vsel %vm5432, %v5420, %v5435
  %v5437 = vsel %vm5431, %v5434, %v5436
  %v5438 = vsel %vm5430, %v5417, %v5420
  %v5439 = vsel %vm5433, %v5426, 920167782
  %v5440 = vsel %vm5432, %v5423, %v5439
  %v5441 = vsel %vm5431, %v5438, %v5440
  %v5442 = vsel %vm5430, %v5420, %v5423
  %v5443 = vsel %vm5433, %v5429, 1326507024
  %v5444 = vsel %vm5432, %v5426, %v5443
  %v5445 = vsel %vm5431, %v5442, %v5444
  %v5446 = vshll.u32 %v5406, 8
  %v5447 = vmul.u32.u64.compose %v5446, %v5445
  %v5448 = vextract.low.u32 %v5447
  %v5449 = vextract.high.u32 %v5447
  %v5450 = vmul.u32.u64.compose %v5446, %v5441
  %v5451 = vextract.low.u32 %v5450
  %v5452 = vextract.high.u32 %v5450
  %v5453 = vmul.u32 %v5446, %v5437
  %v5454 = vadd.s32 %v5449, %v5451
  %vm5455 = vc.u32 %v5449, %v5451
  %v5456 = vadd.s32 %v5452, 1
  %v5457 = vsel %vm5455, %v5456, %v5452
  %v5458 = vadd.s32 %v5453, %v5457
  %v5459 = vadd.s32 %v5458, 536870912
  %v5460 = vshrl.u32 %v5459, 30
  %v5461 = vshll.u32 %v5460, 30
  %v5462 = vsub.s32 %v5458, %v5461
  %vm5463 = vcmp.lt.s32.totalorder %v5462, 0
  %v5464 = vsub.s32 0, %v5462
  %v5465 = vsel %vm5463, %v5464, %v5462
  %v5466 = vclz %v5465
  %v5467 = vsub.s32 %v5466, 2
  %vm5468 = vcmp.gt.s32.totalorder 0, %v5467
  %v5469 = vsel %vm5468, 0, %v5467
  %v5470 = vsub.s32 32, %v5469
  %v5471 = vshll.u32 %v5462, %v5469
  %v5472 = vshrl.u32 %v5454, %v5470
  %v5473 = vor.u32 %v5471, %v5472
  %v5474 = vsub.s32 4294967266, %v5469
  %v5475 = vadd.s32 %v5474, 127
  %v5476 = vshll.u32 %v5475, 23
  %v5477 = vor.u32 4788187, %v5476
  %v5478 = vand.u32 2147483647, %v5477
  %v5480 = vcvt.s32.f32 %v5473
  %v5481 = vmul.f32 %v5480, %v5478
  %v5482 = vxor.u32 %v5481, 2147483648
  %v5483 = vsel %vm5400, %v5482, %v5481
  %v5484 = vsub.s32 4, %v5460
  %v5485 = vsel %vm5400, %v5484, %v5460
  %v5486 = vsel %vm5399, %v3955, %v5483
  %v5487 = vsel %vm5399, 0, %v5485
  %v5488 = vcosq.f32.pop %v5486
  %v5489 = vsinq.f32.pop %v5486
  %vm5490 = vweird.f32 %v3955
  %v5491 = vadd.s32 %v5487, 3
  %v5492 = vand.u32 %v5491, 3
  %vm5493 = vcmp.lt.s32.totalorder %v5492, 2
  %vm5494 = vcmp.eq.s32.totalorder %v5492, 0
  %v5495 = vxor.u32 %v5489, 2147483648
  %v5496 = vsel %vm5494, %v5488, %v5495
  %vm5497 = vcmp.eq.s32.totalorder %v5492, 2
  %v5498 = vxor.u32 %v5488, 2147483648
  %v5499 = vsel %vm5497, %v5498, %v5489
  %v5500 = vsel %vm5493, %v5496, %v5499
  %v5501 = vsel %vm5490, nan, %v5500
  %v5502 = vand.u32 2147483647, %v4042
  %vm5503 = vcmp.le.f32.partialorder %v5502, 0.7853982
  %vm5504 = vcmp.lt.s32.totalorder %v4042, 0
  %v5505 = vand.u32 %v4042, 2139095040
  %v5506 = vshrl.u32 %v5505, 23
  %v5507 = vsub.s32 %v5506, 127
  %v5508 = vand.u32 2147483647, %v4042
  %v5509 = vand.u32 %v5508, 8388607
  %v5510 = vor.u32 %v5509, 8388608
  %v5511 = vsub.s32 0, %v5510
  %v5512 = vadd.s32 %v5507, 1
  %vm5513 = vcmp.gt.s32.totalorder %v5512, 0
  %v5514 = vsel %vm5513, %v5512, 0
  %v5515 = vshrl.u32 %v5514, 5
  %v5516 = vand.u32 %v5514, 31
  %v5517 = vsub.s32 32, %v5516
  %v5518 = vshrl.u32 683565275, %v5517
  %v5519 = vshll.u32 683565275, %v5516
  %v5520 = vshrl.u32 2475754826, %v5517
  %v5521 = vor.u32 %v5519, %v5520
  %v5522 = vshll.u32 2475754826, %v5516
  %v5523 = vshrl.u32 2131351028, %v5517
  %v5524 = vor.u32 %v5522, %v5523
  %v5525 = vshll.u32 2131351028, %v5516
  %v5526 = vshrl.u32 2102212464, %v5517
  %v5527 = vor.u32 %v5525, %v5526
  %v5528 = vshll.u32 2102212464, %v5516
  %v5529 = vshrl.u32 920167782, %v5517
  %v5530 = vor.u32 %v5528, %v5529
  %v5531 = vshll.u32 920167782, %v5516
  %v5532 = vshrl.u32 1326507024, %v5517
  %v5533 = vor.u32 %v5531, %v5532
  %vm5534 = vcmp.lt.s32.totalorder %v5515, 1
  %vm5535 = vcmp.lt.s32.totalorder %v5515, 2
  %vm5536 = vcmp.lt.s32.totalorder %v5515, 3
  %vm5537 = vcmp.lt.s32.totalorder %v5515, 4
  %v5538 = vsel %vm5534, %v5518, %v5521
  %v5539 = vsel %vm5537, %v5527, 2102212464
  %v5540 = vsel %vm5536, %v5524, %v5539
  %v5541 = vsel %vm5535, %v5538, %v5540
  %v5542 = vsel %vm5534, %v5521, %v5524
  %v5543 = vsel %vm5537, %v5530, 920167782
  %v5544 = vsel %vm5536, %v5527, %v5543
  %v5545 = vsel %vm5535, %v5542, %v5544
  %v5546 = vsel %vm5534, %v5524, %v5527
  %v5547 = vsel %vm5537, %v5533, 1326507024
  %v5548 = vsel %vm5536, %v5530, %v5547
  %v5549 = vsel %vm5535, %v5546, %v5548
  %v5550 = vshll.u32 %v5510, 8
  %v5551 = vmul.u32.u64.compose %v5550, %v5549
  %v5552 = vextract.low.u32 %v5551
  %v5553 = vextract.high.u32 %v5551
  %v5554 = vmul.u32.u64.compose %v5550, %v5545
  %v5555 = vextract.low.u32 %v5554
  %v5556 = vextract.high.u32 %v5554
  %v5557 = vmul.u32 %v5550, %v5541
  %v5558 = vadd.s32 %v5553, %v5555
  %vm5559 = vc.u32 %v5553, %v5555
  %v5560 = vadd.s32 %v5556, 1
  %v5561 = vsel %vm5559, %v5560, %v5556
  %v5562 = vadd.s32 %v5557, %v5561
  %v5563 = vadd.s32 %v5562, 536870912
  %v5564 = vshrl.u32 %v5563, 30
  %v5565 = vshll.u32 %v5564, 30
  %v5566 = vsub.s32 %v5562, %v5565
  %vm5567 = vcmp.lt.s32.totalorder %v5566, 0
  %v5568 = vsub.s32 0, %v5566
  %v5569 = vsel %vm5567, %v5568, %v5566
  %v5570 = vclz %v5569
  %v5571 = vsub.s32 %v5570, 2
  %vm5572 = vcmp.gt.s32.totalorder 0, %v5571
  %v5573 = vsel %vm5572, 0, %v5571
  %v5574 = vsub.s32 32, %v5573
  %v5575 = vshll.u32 %v5566, %v5573
  %v5576 = vshrl.u32 %v5558, %v5574
  %v5577 = vor.u32 %v5575, %v5576
  %v5578 = vsub.s32 4294967266, %v5573
  %v5579 = vadd.s32 %v5578, 127
  %v5580 = vshll.u32 %v5579, 23
  %v5581 = vor.u32 4788187, %v5580
  %v5582 = vand.u32 2147483647, %v5581
  %v5584 = vcvt.s32.f32 %v5577
  %v5585 = vmul.f32 %v5584, %v5582
  %v5586 = vxor.u32 %v5585, 2147483648
  %v5587 = vsel %vm5504, %v5586, %v5585
  %v5588 = vsub.s32 4, %v5564
  %v5589 = vsel %vm5504, %v5588, %v5564
  %v5590 = vsel %vm5503, %v4042, %v5587
  %v5591 = vsel %vm5503, 0, %v5589
  %v5592 = vcosq.f32.pop %v5590
  %v5593 = vsinq.f32.pop %v5590
  %vm5594 = vweird.f32 %v4042
  %v5595 = vadd.s32 %v5591, 3
  %v5596 = vand.u32 %v5595, 3
  %vm5597 = vcmp.lt.s32.totalorder %v5596, 2
  %vm5598 = vcmp.eq.s32.totalorder %v5596, 0
  %v5599 = vxor.u32 %v5593, 2147483648
  %v5600 = vsel %vm5598, %v5592, %v5599
  %vm5601 = vcmp.eq.s32.totalorder %v5596, 2
  %v5602 = vxor.u32 %v5592, 2147483648
  %v5603 = vsel %vm5601, %v5602, %v5593
  %v5604 = vsel %vm5597, %v5600, %v5603
  %v5605 = vsel %vm5594, nan, %v5604
  %v5606 = vand.u32 2147483647, %v4044
  %vm5607 = vcmp.le.f32.partialorder %v5606, 0.7853982
  %vm5608 = vcmp.lt.s32.totalorder %v4044, 0
  %v5609 = vand.u32 %v4044, 2139095040
  %v5610 = vshrl.u32 %v5609, 23
  %v5611 = vsub.s32 %v5610, 127
  %v5612 = vand.u32 2147483647, %v4044
  %v5613 = vand.u32 %v5612, 8388607
  %v5614 = vor.u32 %v5613, 8388608
  %v5615 = vsub.s32 0, %v5614
  %v5616 = vadd.s32 %v5611, 1
  %vm5617 = vcmp.gt.s32.totalorder %v5616, 0
  %v5618 = vsel %vm5617, %v5616, 0
  %v5619 = vshrl.u32 %v5618, 5
  %v5620 = vand.u32 %v5618, 31
  %v5621 = vsub.s32 32, %v5620
  %v5622 = vshrl.u32 683565275, %v5621
  %v5623 = vshll.u32 683565275, %v5620
  %v5624 = vshrl.u32 2475754826, %v5621
  %v5625 = vor.u32 %v5623, %v5624
  %v5626 = vshll.u32 2475754826, %v5620
  %v5627 = vshrl.u32 2131351028, %v5621
  %v5628 = vor.u32 %v5626, %v5627
  %v5629 = vshll.u32 2131351028, %v5620
  %v5630 = vshrl.u32 2102212464, %v5621
  %v5631 = vor.u32 %v5629, %v5630
  %v5632 = vshll.u32 2102212464, %v5620
  %v5633 = vshrl.u32 920167782, %v5621
  %v5634 = vor.u32 %v5632, %v5633
  %v5635 = vshll.u32 920167782, %v5620
  %v5636 = vshrl.u32 1326507024, %v5621
  %v5637 = vor.u32 %v5635, %v5636
  %vm5638 = vcmp.lt.s32.totalorder %v5619, 1
  %vm5639 = vcmp.lt.s32.totalorder %v5619, 2
  %vm5640 = vcmp.lt.s32.totalorder %v5619, 3
  %vm5641 = vcmp.lt.s32.totalorder %v5619, 4
  %v5642 = vsel %vm5638, %v5622, %v5625
  %v5643 = vsel %vm5641, %v5631, 2102212464
  %v5644 = vsel %vm5640, %v5628, %v5643
  %v5645 = vsel %vm5639, %v5642, %v5644
  %v5646 = vsel %vm5638, %v5625, %v5628
  %v5647 = vsel %vm5641, %v5634, 920167782
  %v5648 = vsel %vm5640, %v5631, %v5647
  %v5649 = vsel %vm5639, %v5646, %v5648
  %v5650 = vsel %vm5638, %v5628, %v5631
  %v5651 = vsel %vm5641, %v5637, 1326507024
  %v5652 = vsel %vm5640, %v5634, %v5651
  %v5653 = vsel %vm5639, %v5650, %v5652
  %v5654 = vshll.u32 %v5614, 8
  %v5655 = vmul.u32.u64.compose %v5654, %v5653
  %v5656 = vextract.low.u32 %v5655
  %v5657 = vextract.high.u32 %v5655
  %v5658 = vmul.u32.u64.compose %v5654, %v5649
  %v5659 = vextract.low.u32 %v5658
  %v5660 = vextract.high.u32 %v5658
  %v5661 = vmul.u32 %v5654, %v5645
  %v5662 = vadd.s32 %v5657, %v5659
  %vm5663 = vc.u32 %v5657, %v5659
  %v5664 = vadd.s32 %v5660, 1
  %v5665 = vsel %vm5663, %v5664, %v5660
  %v5666 = vadd.s32 %v5661, %v5665
  %v5667 = vadd.s32 %v5666, 536870912
  %v5668 = vshrl.u32 %v5667, 30
  %v5669 = vshll.u32 %v5668, 30
  %v5670 = vsub.s32 %v5666, %v5669
  %vm5671 = vcmp.lt.s32.totalorder %v5670, 0
  %v5672 = vsub.s32 0, %v5670
  %v5673 = vsel %vm5671, %v5672, %v5670
  %v5674 = vclz %v5673
  %v5675 = vsub.s32 %v5674, 2
  %vm5676 = vcmp.gt.s32.totalorder 0, %v5675
  %v5677 = vsel %vm5676, 0, %v5675
  %v5678 = vsub.s32 32, %v5677
  %v5679 = vshll.u32 %v5670, %v5677
  %v5680 = vshrl.u32 %v5662, %v5678
  %v5681 = vor.u32 %v5679, %v5680
  %v5682 = vsub.s32 4294967266, %v5677
  %v5683 = vadd.s32 %v5682, 127
  %v5684 = vshll.u32 %v5683, 23
  %v5685 = vor.u32 4788187, %v5684
  %v5686 = vand.u32 2147483647, %v5685
  %v5688 = vcvt.s32.f32 %v5681
  %v5689 = vmul.f32 %v5688, %v5686
  %v5690 = vxor.u32 %v5689, 2147483648
  %v5691 = vsel %vm5608, %v5690, %v5689
  %v5692 = vsub.s32 4, %v5668
  %v5693 = vsel %vm5608, %v5692, %v5668
  %v5694 = vsel %vm5607, %v4044, %v5691
  %v5695 = vsel %vm5607, 0, %v5693
  %v5696 = vcosq.f32.pop %v5694
  %v5697 = vsinq.f32.pop %v5694
  %vm5698 = vweird.f32 %v4044
  %v5699 = vadd.s32 %v5695, 3
  %v5700 = vand.u32 %v5699, 3
  %vm5701 = vcmp.lt.s32.totalorder %v5700, 2
  %vm5702 = vcmp.eq.s32.totalorder %v5700, 0
  %v5703 = vxor.u32 %v5697, 2147483648
  %v5704 = vsel %vm5702, %v5696, %v5703
  %vm5705 = vcmp.eq.s32.totalorder %v5700, 2
  %v5706 = vxor.u32 %v5696, 2147483648
  %v5707 = vsel %vm5705, %v5706, %v5697
  %v5708 = vsel %vm5701, %v5704, %v5707
  %v5709 = vsel %vm5698, nan, %v5708
  %v5710 = vld [vmem:[%s7] sm:$0x1]
  %v5711 = vld [vmem:[#allocation2] sm:$0x1]
  %5713 = vset.pattern.permute.xlu0 0
  %5714 = vperm.xlu0 %5713, %v5711
  %v5715 = vpop.permute.xlu0 %5714
  %v5717 = vlaneseq
  %v5718 = vshrl.u32 %v5717, 7
  %v5719 = vsub.s32 0, %v5718
  %v5720 = vrot.slane %v5715, %v5719
  %v5722 = vsel %vm1973, %v5710, 0
  %5724 = vmatprep.subr.mxu0 %v4253
  %5725 = vmatpush1.msra.mxu0 %v4149
  %5726 = vmatprep.subr.mxu0 %v4669
  %5727 = vmatpush1.msra.mxu0 %v4565
  %5728 = vmatprep.subr.mxu0 %v5085
  %5729 = vmatpush1.msra.mxu0 %v4981
  %5730 = vmatprep.subr.mxu0 %v5501
  %5731 = vmatpush1.msra.mxu0 %v5397
  %5732 = vmatprep.subr.mxu0 0.0
  %5733 = vmatpush1.msra.mxu0 0.0
  %5734 = vmatprep.subr.mxu0 0.0
  %5735 = vmatpush1.msra.mxu0 0.0
  %5736 = vmatprep.subr.mxu0 0.0
  %5737 = vmatpush1.msra.mxu0 0.0
  %5738 = vmatprep.subr.mxu0 0.0
  %5739 = vmatpush1.msra.mxu0 0.0
  %5740 = vmatprep.subr.mxu0 0.0
  %5741 = vmatpush1.msra.mxu0 0.0
  %5742 = vmatprep.subr.mxu0 0.0
  %5743 = vmatpush1.msra.mxu0 0.0
  %5744 = vmatprep.subr.mxu0 0.0
  %5745 = vmatpush1.msra.mxu0 0.0
  %5746 = vmatprep.subr.mxu0 0.0
  %5747 = vmatpush1.msra.mxu0 0.0
  %5748 = vmatprep.subr.mxu0 0.0
  %5749 = vmatpush1.msra.mxu0 0.0
  %5750 = vmatprep.subr.mxu0 0.0
  %5751 = vmatpush1.msra.mxu0 0.0
  %5752 = vmatprep.subr.mxu0 0.0
  %5753 = vmatpush1.msra.mxu0 0.0
  %5754 = vmatprep.subr.mxu0 0.0
  %5755 = vmatpush1.msra.mxu0 0.0
  %5756 = vmatprep.subr.mxu0 0.0
  %5757 = vmatpush1.msra.mxu0 0.0
  %5758 = vmatprep.subr.mxu0 0.0
  %5759 = vmatpush1.msra.mxu0 0.0
  %5760 = vmatprep.subr.mxu0 0.0
  %5761 = vmatpush1.msra.mxu0 0.0
  %5762 = vmatprep.subr.mxu0 0.0
  %5763 = vmatpush1.msra.mxu0 0.0
  %5764 = vmatprep.subr.mxu0 0.0
  %5765 = vmatpush1.msra.mxu0 0.0
  %5766 = vmatprep.subr.mxu0 0.0
  %5767 = vmatpush1.msra.mxu0 0.0
  %5768 = vmatprep.subr.mxu0 0.0
  %5769 = vmatpush1.msra.mxu0 0.0
  %5770 = vmatprep.subr.mxu0 0.0
  %5771 = vmatpush1.msra.mxu0 0.0
  %5772 = vmatprep.subr.mxu0 0.0
  %5773 = vmatpush1.msra.mxu0 0.0
  %5774 = vmatprep.subr.mxu0 0.0
  %5775 = vmatpush1.msra.mxu0 0.0
  %5776 = vmatprep.subr.mxu0 0.0
  %5777 = vmatpush1.msra.mxu0 0.0
  %5778 = vmatprep.subr.mxu0 0.0
  %5779 = vmatpush1.msra.mxu0 0.0
  %5780 = vmatprep.subr.mxu0 0.0
  %5781 = vmatpush1.msra.mxu0 0.0
  %5782 = vmatprep.subr.mxu0 0.0
  %5783 = vmatpush1.msra.mxu0 0.0
  %5784 = vmatprep.subr.mxu0 0.0
  %5785 = vmatpush1.msra.mxu0 0.0
  %5786 = vmatprep.subr.mxu0 0.0
  %5787 = vmatpush1.msra.mxu0 0.0
  %5788 = vmatprep.mubr.f32.mxu0 0.0
  %5789 = vmatmul.mubr.f32.gmra.mrb[0].mxu0 %v5722
  %v5790 = vpop.f32.mrb[0].mxu0
  %v5791 = vadd.f32 %v5720, %v5790
  %v5792 = vpop.f32.mrb[0].mxu0
  %v5793 = vadd.f32 %v5720, %v5792
  %5794 = vdwg.mxu0
  %5795 = vmatprep.subr.mxu0 %v4461
  %5796 = vmatpush1.msra.mxu0 %v4357
  %5797 = vmatprep.subr.mxu0 %v4877
  %5798 = vmatpush1.msra.mxu0 %v4773
  %5799 = vmatprep.subr.mxu0 %v5293
  %5800 = vmatpush1.msra.mxu0 %v5189
  %5801 = vmatprep.subr.mxu0 %v5709
  %5802 = vmatpush1.msra.mxu0 %v5605
  %5803 = vmatprep.subr.mxu0 0.0
  %5804 = vmatpush1.msra.mxu0 0.0
  %5805 = vmatprep.subr.mxu0 0.0
  %5806 = vmatpush1.msra.mxu0 0.0
  %5807 = vmatprep.subr.mxu0 0.0
  %5808 = vmatpush1.msra.mxu0 0.0
  %5809 = vmatprep.subr.mxu0 0.0
  %5810 = vmatpush1.msra.mxu0 0.0
  %5811 = vmatprep.subr.mxu0 0.0
  %5812 = vmatpush1.msra.mxu0 0.0
  %5813 = vmatprep.subr.mxu0 0.0
  %5814 = vmatpush1.msra.mxu0 0.0
  %5815 = vmatprep.subr.mxu0 0.0
  %5816 = vmatpush1.msra.mxu0 0.0
  %5817 = vmatprep.subr.mxu0 0.0
  %5818 = vmatpush1.msra.mxu0 0.0
  %5819 = vmatprep.subr.mxu0 0.0
  %5820 = vmatpush1.msra.mxu0 0.0
  %5821 = vmatprep.subr.mxu0 0.0
  %5822 = vmatpush1.msra.mxu0 0.0
  %5823 = vmatprep.subr.mxu0 0.0
  %5824 = vmatpush1.msra.mxu0 0.0
  %5825 = vmatprep.subr.mxu0 0.0
  %5826 = vmatpush1.msra.mxu0 0.0
  %5827 = vmatprep.subr.mxu0 0.0
  %5828 = vmatpush1.msra.mxu0 0.0
  %5829 = vmatprep.subr.mxu0 0.0
  %5830 = vmatpush1.msra.mxu0 0.0
  %5831 = vmatprep.subr.mxu0 0.0
  %5832 = vmatpush1.msra.mxu0 0.0
  %5833 = vmatprep.subr.mxu0 0.0
  %5834 = vmatpush1.msra.mxu0 0.0
  %5835 = vmatprep.subr.mxu0 0.0
  %5836 = vmatpush1.msra.mxu0 0.0
  %5837 = vmatprep.subr.mxu0 0.0
  %5838 = vmatpush1.msra.mxu0 0.0
  %5839 = vmatprep.subr.mxu0 0.0
  %5840 = vmatpush1.msra.mxu0 0.0
  %5841 = vmatprep.subr.mxu0 0.0
  %5842 = vmatpush1.msra.mxu0 0.0
  %5843 = vmatprep.subr.mxu0 0.0
  %5844 = vmatpush1.msra.mxu0 0.0
  %5845 = vmatprep.subr.mxu0 0.0
  %5846 = vmatpush1.msra.mxu0 0.0
  %5847 = vmatprep.subr.mxu0 0.0
  %5848 = vmatpush1.msra.mxu0 0.0
  %5849 = vmatprep.subr.mxu0 0.0
  %5850 = vmatpush1.msra.mxu0 0.0
  %5851 = vmatprep.subr.mxu0 0.0
  %5852 = vmatpush1.msra.mxu0 0.0
  %5853 = vmatprep.subr.mxu0 0.0
  %5854 = vmatpush1.msra.mxu0 0.0
  %5855 = vmatprep.subr.mxu0 0.0
  %5856 = vmatpush1.msra.mxu0 0.0
  %5857 = vmatprep.subr.mxu0 0.0
  %5858 = vmatpush1.msra.mxu0 0.0
  %5859 = vmatprep.mubr.f32.mxu0 0.0
  %5860 = vmatmul.mubr.f32.gmra.mrb[0].mxu0 %v5722
  %v5861 = vpop.f32.mrb[0].mxu0
  %v5862 = vadd.f32 %v5720, %v5861
  %v5863 = vpop.f32.mrb[0].mxu0
  %v5864 = vadd.f32 %v5720, %v5863
  %5865 = vdwg.mxu0
  %v5866 = vand.u32 2147483647, %v5791
  %vm5867 = vcmp.le.f32.partialorder %v5866, 0.7853982
  %vm5868 = vcmp.lt.s32.totalorder %v5791, 0
  %v5869 = vand.u32 %v5791, 2139095040
  %v5870 = vshrl.u32 %v5869, 23
  %v5871 = vsub.s32 %v5870, 127
  %v5872 = vand.u32 2147483647, %v5791
  %v5873 = vand.u32 %v5872, 8388607
  %v5874 = vor.u32 %v5873, 8388608
  %v5875 = vsub.s32 0, %v5874
  %v5876 = vadd.s32 %v5871, 1
  %vm5877 = vcmp.gt.s32.totalorder %v5876, 0
  %v5878 = vsel %vm5877, %v5876, 0
  %v5879 = vshrl.u32 %v5878, 5
  %v5880 = vand.u32 %v5878, 31
  %v5881 = vsub.s32 32, %v5880
  %v5882 = vshrl.u32 683565275, %v5881
  %v5883 = vshll.u32 683565275, %v5880
  %v5884 = vshrl.u32 2475754826, %v5881
  %v5885 = vor.u32 %v5883, %v5884
  %v5886 = vshll.u32 2475754826, %v5880
  %v5887 = vshrl.u32 2131351028, %v5881
  %v5888 = vor.u32 %v5886, %v5887
  %v5889 = vshll.u32 2131351028, %v5880
  %v5890 = vshrl.u32 2102212464, %v5881
  %v5891 = vor.u32 %v5889, %v5890
  %v5892 = vshll.u32 2102212464, %v5880
  %v5893 = vshrl.u32 920167782, %v5881
  %v5894 = vor.u32 %v5892, %v5893
  %v5895 = vshll.u32 920167782, %v5880
  %v5896 = vshrl.u32 1326507024, %v5881
  %v5897 = vor.u32 %v5895, %v5896
  %vm5898 = vcmp.lt.s32.totalorder %v5879, 1
  %vm5899 = vcmp.lt.s32.totalorder %v5879, 2
  %vm5900 = vcmp.lt.s32.totalorder %v5879, 3
  %vm5901 = vcmp.lt.s32.totalorder %v5879, 4
  %v5902 = vsel %vm5898, %v5882, %v5885
  %v5903 = vsel %vm5901, %v5891, 2102212464
  %v5904 = vsel %vm5900, %v5888, %v5903
  %v5905 = vsel %vm5899, %v5902, %v5904
  %v5906 = vsel %vm5898, %v5885, %v5888
  %v5907 = vsel %vm5901, %v5894, 920167782
  %v5908 = vsel %vm5900, %v5891, %v5907
  %v5909 = vsel %vm5899, %v5906, %v5908
  %v5910 = vsel %vm5898, %v5888, %v5891
  %v5911 = vsel %vm5901, %v5897, 1326507024
  %v5912 = vsel %vm5900, %v5894, %v5911
  %v5913 = vsel %vm5899, %v5910, %v5912
  %v5914 = vshll.u32 %v5874, 8
  %v5915 = vmul.u32.u64.compose %v5914, %v5913
  %v5916 = vextract.low.u32 %v5915
  %v5917 = vextract.high.u32 %v5915
  %v5918 = vmul.u32.u64.compose %v5914, %v5909
  %v5919 = vextract.low.u32 %v5918
  %v5920 = vextract.high.u32 %v5918
  %v5921 = vmul.u32 %v5914, %v5905
  %v5922 = vadd.s32 %v5917, %v5919
  %vm5923 = vc.u32 %v5917, %v5919
  %v5924 = vadd.s32 %v5920, 1
  %v5925 = vsel %vm5923, %v5924, %v5920
  %v5926 = vadd.s32 %v5921, %v5925
  %v5927 = vadd.s32 %v5926, 536870912
  %v5928 = vshrl.u32 %v5927, 30
  %v5929 = vshll.u32 %v5928, 30
  %v5930 = vsub.s32 %v5926, %v5929
  %vm5931 = vcmp.lt.s32.totalorder %v5930, 0
  %v5932 = vsub.s32 0, %v5930
  %v5933 = vsel %vm5931, %v5932, %v5930
  %v5934 = vclz %v5933
  %v5935 = vsub.s32 %v5934, 2
  %vm5936 = vcmp.gt.s32.totalorder 0, %v5935
  %v5937 = vsel %vm5936, 0, %v5935
  %v5938 = vsub.s32 32, %v5937
  %v5939 = vshll.u32 %v5930, %v5937
  %v5940 = vshrl.u32 %v5922, %v5938
  %v5941 = vor.u32 %v5939, %v5940
  %v5942 = vsub.s32 4294967266, %v5937
  %v5943 = vadd.s32 %v5942, 127
  %v5944 = vshll.u32 %v5943, 23
  %v5945 = vor.u32 4788187, %v5944
  %v5946 = vand.u32 2147483647, %v5945
  %v5948 = vcvt.s32.f32 %v5941
  %v5949 = vmul.f32 %v5948, %v5946
  %v5950 = vxor.u32 %v5949, 2147483648
  %v5951 = vsel %vm5868, %v5950, %v5949
  %v5952 = vsub.s32 4, %v5928
  %v5953 = vsel %vm5868, %v5952, %v5928
  %v5954 = vsel %vm5867, %v5791, %v5951
  %v5955 = vsel %vm5867, 0, %v5953
  %v5956 = vcosq.f32.pop %v5954
  %v5957 = vsinq.f32.pop %v5954
  %vm5958 = vweird.f32 %v5791
  %v5959 = vadd.s32 %v5955, 3
  %v5960 = vand.u32 %v5959, 3
  %vm5961 = vcmp.lt.s32.totalorder %v5960, 2
  %vm5962 = vcmp.eq.s32.totalorder %v5960, 0
  %v5963 = vxor.u32 %v5957, 2147483648
  %v5964 = vsel %vm5962, %v5956, %v5963
  %vm5965 = vcmp.eq.s32.totalorder %v5960, 2
  %v5966 = vxor.u32 %v5956, 2147483648
  %v5967 = vsel %vm5965, %v5966, %v5957
  %v5968 = vsel %vm5961, %v5964, %v5967
  %v5969 = vsel %vm5958, nan, %v5968
  %v5970 = vand.u32 2147483647, %v5793
  %vm5971 = vcmp.le.f32.partialorder %v5970, 0.7853982
  %vm5972 = vcmp.lt.s32.totalorder %v5793, 0
  %v5973 = vand.u32 %v5793, 2139095040
  %v5974 = vshrl.u32 %v5973, 23
  %v5975 = vsub.s32 %v5974, 127
  %v5976 = vand.u32 2147483647, %v5793
  %v5977 = vand.u32 %v5976, 8388607
  %v5978 = vor.u32 %v5977, 8388608
  %v5979 = vsub.s32 0, %v5978
  %v5980 = vadd.s32 %v5975, 1
  %vm5981 = vcmp.gt.s32.totalorder %v5980, 0
  %v5982 = vsel %vm5981, %v5980, 0
  %v5983 = vshrl.u32 %v5982, 5
  %v5984 = vand.u32 %v5982, 31
  %v5985 = vsub.s32 32, %v5984
  %v5986 = vshrl.u32 683565275, %v5985
  %v5987 = vshll.u32 683565275, %v5984
  %v5988 = vshrl.u32 2475754826, %v5985
  %v5989 = vor.u32 %v5987, %v5988
  %v5990 = vshll.u32 2475754826, %v5984
  %v5991 = vshrl.u32 2131351028, %v5985
  %v5992 = vor.u32 %v5990, %v5991
  %v5993 = vshll.u32 2131351028, %v5984
  %v5994 = vshrl.u32 2102212464, %v5985
  %v5995 = vor.u32 %v5993, %v5994
  %v5996 = vshll.u32 2102212464, %v5984
  %v5997 = vshrl.u32 920167782, %v5985
  %v5998 = vor.u32 %v5996, %v5997
  %v5999 = vshll.u32 920167782, %v5984
  %v6000 = vshrl.u32 1326507024, %v5985
  %v6001 = vor.u32 %v5999, %v6000
  %vm6002 = vcmp.lt.s32.totalorder %v5983, 1
  %vm6003 = vcmp.lt.s32.totalorder %v5983, 2
  %vm6004 = vcmp.lt.s32.totalorder %v5983, 3
  %vm6005 = vcmp.lt.s32.totalorder %v5983, 4
  %v6006 = vsel %vm6002, %v5986, %v5989
  %v6007 = vsel %vm6005, %v5995, 2102212464
  %v6008 = vsel %vm6004, %v5992, %v6007
  %v6009 = vsel %vm6003, %v6006, %v6008
  %v6010 = vsel %vm6002, %v5989, %v5992
  %v6011 = vsel %vm6005, %v5998, 920167782
  %v6012 = vsel %vm6004, %v5995, %v6011
  %v6013 = vsel %vm6003, %v6010, %v6012
  %v6014 = vsel %vm6002, %v5992, %v5995
  %v6015 = vsel %vm6005, %v6001, 1326507024
  %v6016 = vsel %vm6004, %v5998, %v6015
  %v6017 = vsel %vm6003, %v6014, %v6016
  %v6018 = vshll.u32 %v5978, 8
  %v6019 = vmul.u32.u64.compose %v6018, %v6017
  %v6020 = vextract.low.u32 %v6019
  %v6021 = vextract.high.u32 %v6019
  %v6022 = vmul.u32.u64.compose %v6018, %v6013
  %v6023 = vextract.low.u32 %v6022
  %v6024 = vextract.high.u32 %v6022
  %v6025 = vmul.u32 %v6018, %v6009
  %v6026 = vadd.s32 %v6021, %v6023
  %vm6027 = vc.u32 %v6021, %v6023
  %v6028 = vadd.s32 %v6024, 1
  %v6029 = vsel %vm6027, %v6028, %v6024
  %v6030 = vadd.s32 %v6025, %v6029
  %v6031 = vadd.s32 %v6030, 536870912
  %v6032 = vshrl.u32 %v6031, 30
  %v6033 = vshll.u32 %v6032, 30
  %v6034 = vsub.s32 %v6030, %v6033
  %vm6035 = vcmp.lt.s32.totalorder %v6034, 0
  %v6036 = vsub.s32 0, %v6034
  %v6037 = vsel %vm6035, %v6036, %v6034
  %v6038 = vclz %v6037
  %v6039 = vsub.s32 %v6038, 2
  %vm6040 = vcmp.gt.s32.totalorder 0, %v6039
  %v6041 = vsel %vm6040, 0, %v6039
  %v6042 = vsub.s32 32, %v6041
  %v6043 = vshll.u32 %v6034, %v6041
  %v6044 = vshrl.u32 %v6026, %v6042
  %v6045 = vor.u32 %v6043, %v6044
  %v6046 = vsub.s32 4294967266, %v6041
  %v6047 = vadd.s32 %v6046, 127
  %v6048 = vshll.u32 %v6047, 23
  %v6049 = vor.u32 4788187, %v6048
  %v6050 = vand.u32 2147483647, %v6049
  %v6052 = vcvt.s32.f32 %v6045
  %v6053 = vmul.f32 %v6052, %v6050
  %v6054 = vxor.u32 %v6053, 2147483648
  %v6055 = vsel %vm5972, %v6054, %v6053
  %v6056 = vsub.s32 4, %v6032
  %v6057 = vsel %vm5972, %v6056, %v6032
  %v6058 = vsel %vm5971, %v5793, %v6055
  %v6059 = vsel %vm5971, 0, %v6057
  %v6060 = vcosq.f32.pop %v6058
  %v6061 = vsinq.f32.pop %v6058
  %vm6062 = vweird.f32 %v5793
  %v6063 = vadd.s32 %v6059, 3
  %v6064 = vand.u32 %v6063, 3
  %vm6065 = vcmp.lt.s32.totalorder %v6064, 2
  %vm6066 = vcmp.eq.s32.totalorder %v6064, 0
  %v6067 = vxor.u32 %v6061, 2147483648
  %v6068 = vsel %vm6066, %v6060, %v6067
  %vm6069 = vcmp.eq.s32.totalorder %v6064, 2
  %v6070 = vxor.u32 %v6060, 2147483648
  %v6071 = vsel %vm6069, %v6070, %v6061
  %v6072 = vsel %vm6065, %v6068, %v6071
  %v6073 = vsel %vm6062, nan, %v6072
  %v6074 = vand.u32 2147483647, %v5862
  %vm6075 = vcmp.le.f32.partialorder %v6074, 0.7853982
  %vm6076 = vcmp.lt.s32.totalorder %v5862, 0
  %v6077 = vand.u32 %v5862, 2139095040
  %v6078 = vshrl.u32 %v6077, 23
  %v6079 = vsub.s32 %v6078, 127
  %v6080 = vand.u32 2147483647, %v5862
  %v6081 = vand.u32 %v6080, 8388607
  %v6082 = vor.u32 %v6081, 8388608
  %v6083 = vsub.s32 0, %v6082
  %v6084 = vadd.s32 %v6079, 1
  %vm6085 = vcmp.gt.s32.totalorder %v6084, 0
  %v6086 = vsel %vm6085, %v6084, 0
  %v6087 = vshrl.u32 %v6086, 5
  %v6088 = vand.u32 %v6086, 31
  %v6089 = vsub.s32 32, %v6088
  %v6090 = vshrl.u32 683565275, %v6089
  %v6091 = vshll.u32 683565275, %v6088
  %v6092 = vshrl.u32 2475754826, %v6089
  %v6093 = vor.u32 %v6091, %v6092
  %v6094 = vshll.u32 2475754826, %v6088
  %v6095 = vshrl.u32 2131351028, %v6089
  %v6096 = vor.u32 %v6094, %v6095
  %v6097 = vshll.u32 2131351028, %v6088
  %v6098 = vshrl.u32 2102212464, %v6089
  %v6099 = vor.u32 %v6097, %v6098
  %v6100 = vshll.u32 2102212464, %v6088
  %v6101 = vshrl.u32 920167782, %v6089
  %v6102 = vor.u32 %v6100, %v6101
  %v6103 = vshll.u32 920167782, %v6088
  %v6104 = vshrl.u32 1326507024, %v6089
  %v6105 = vor.u32 %v6103, %v6104
  %vm6106 = vcmp.lt.s32.totalorder %v6087, 1
  %vm6107 = vcmp.lt.s32.totalorder %v6087, 2
  %vm6108 = vcmp.lt.s32.totalorder %v6087, 3
  %vm6109 = vcmp.lt.s32.totalorder %v6087, 4
  %v6110 = vsel %vm6106, %v6090, %v6093
  %v6111 = vsel %vm6109, %v6099, 2102212464
  %v6112 = vsel %vm6108, %v6096, %v6111
  %v6113 = vsel %vm6107, %v6110, %v6112
  %v6114 = vsel %vm6106, %v6093, %v6096
  %v6115 = vsel %vm6109, %v6102, 920167782
  %v6116 = vsel %vm6108, %v6099, %v6115
  %v6117 = vsel %vm6107, %v6114, %v6116
  %v6118 = vsel %vm6106, %v6096, %v6099
  %v6119 = vsel %vm6109, %v6105, 1326507024
  %v6120 = vsel %vm6108, %v6102, %v6119
  %v6121 = vsel %vm6107, %v6118, %v6120
  %v6122 = vshll.u32 %v6082, 8
  %v6123 = vmul.u32.u64.compose %v6122, %v6121
  %v6124 = vextract.low.u32 %v6123
  %v6125 = vextract.high.u32 %v6123
  %v6126 = vmul.u32.u64.compose %v6122, %v6117
  %v6127 = vextract.low.u32 %v6126
  %v6128 = vextract.high.u32 %v6126
  %v6129 = vmul.u32 %v6122, %v6113
  %v6130 = vadd.s32 %v6125, %v6127
  %vm6131 = vc.u32 %v6125, %v6127
  %v6132 = vadd.s32 %v6128, 1
  %v6133 = vsel %vm6131, %v6132, %v6128
  %v6134 = vadd.s32 %v6129, %v6133
  %v6135 = vadd.s32 %v6134, 536870912
  %v6136 = vshrl.u32 %v6135, 30
  %v6137 = vshll.u32 %v6136, 30
  %v6138 = vsub.s32 %v6134, %v6137
  %vm6139 = vcmp.lt.s32.totalorder %v6138, 0
  %v6140 = vsub.s32 0, %v6138
  %v6141 = vsel %vm6139, %v6140, %v6138
  %v6142 = vclz %v6141
  %v6143 = vsub.s32 %v6142, 2
  %vm6144 = vcmp.gt.s32.totalorder 0, %v6143
  %v6145 = vsel %vm6144, 0, %v6143
  %v6146 = vsub.s32 32, %v6145
  %v6147 = vshll.u32 %v6138, %v6145
  %v6148 = vshrl.u32 %v6130, %v6146
  %v6149 = vor.u32 %v6147, %v6148
  %v6150 = vsub.s32 4294967266, %v6145
  %v6151 = vadd.s32 %v6150, 127
  %v6152 = vshll.u32 %v6151, 23
  %v6153 = vor.u32 4788187, %v6152
  %v6154 = vand.u32 2147483647, %v6153
  %v6156 = vcvt.s32.f32 %v6149
  %v6157 = vmul.f32 %v6156, %v6154
  %v6158 = vxor.u32 %v6157, 2147483648
  %v6159 = vsel %vm6076, %v6158, %v6157
  %v6160 = vsub.s32 4, %v6136
  %v6161 = vsel %vm6076, %v6160, %v6136
  %v6162 = vsel %vm6075, %v5862, %v6159
  %v6163 = vsel %vm6075, 0, %v6161
  %v6164 = vcosq.f32.pop %v6162
  %v6165 = vsinq.f32.pop %v6162
  %vm6166 = vweird.f32 %v5862
  %v6167 = vadd.s32 %v6163, 3
  %v6168 = vand.u32 %v6167, 3
  %vm6169 = vcmp.lt.s32.totalorder %v6168, 2
  %vm6170 = vcmp.eq.s32.totalorder %v6168, 0
  %v6171 = vxor.u32 %v6165, 2147483648
  %v6172 = vsel %vm6170, %v6164, %v6171
  %vm6173 = vcmp.eq.s32.totalorder %v6168, 2
  %v6174 = vxor.u32 %v6164, 2147483648
  %v6175 = vsel %vm6173, %v6174, %v6165
  %v6176 = vsel %vm6169, %v6172, %v6175
  %v6177 = vsel %vm6166, nan, %v6176
  %v6178 = vand.u32 2147483647, %v5864
  %vm6179 = vcmp.le.f32.partialorder %v6178, 0.7853982
  %vm6180 = vcmp.lt.s32.totalorder %v5864, 0
  %v6181 = vand.u32 %v5864, 2139095040
  %v6182 = vshrl.u32 %v6181, 23
  %v6183 = vsub.s32 %v6182, 127
  %v6184 = vand.u32 2147483647, %v5864
  %v6185 = vand.u32 %v6184, 8388607
  %v6186 = vor.u32 %v6185, 8388608
  %v6187 = vsub.s32 0, %v6186
  %v6188 = vadd.s32 %v6183, 1
  %vm6189 = vcmp.gt.s32.totalorder %v6188, 0
  %v6190 = vsel %vm6189, %v6188, 0
  %v6191 = vshrl.u32 %v6190, 5
  %v6192 = vand.u32 %v6190, 31
  %v6193 = vsub.s32 32, %v6192
  %v6194 = vshrl.u32 683565275, %v6193
  %v6195 = vshll.u32 683565275, %v6192
  %v6196 = vshrl.u32 2475754826, %v6193
  %v6197 = vor.u32 %v6195, %v6196
  %v6198 = vshll.u32 2475754826, %v6192
  %v6199 = vshrl.u32 2131351028, %v6193
  %v6200 = vor.u32 %v6198, %v6199
  %v6201 = vshll.u32 2131351028, %v6192
  %v6202 = vshrl.u32 2102212464, %v6193
  %v6203 = vor.u32 %v6201, %v6202
  %v6204 = vshll.u32 2102212464, %v6192
  %v6205 = vshrl.u32 920167782, %v6193
  %v6206 = vor.u32 %v6204, %v6205
  %v6207 = vshll.u32 920167782, %v6192
  %v6208 = vshrl.u32 1326507024, %v6193
  %v6209 = vor.u32 %v6207, %v6208
  %vm6210 = vcmp.lt.s32.totalorder %v6191, 1
  %vm6211 = vcmp.lt.s32.totalorder %v6191, 2
  %vm6212 = vcmp.lt.s32.totalorder %v6191, 3
  %vm6213 = vcmp.lt.s32.totalorder %v6191, 4
  %v6214 = vsel %vm6210, %v6194, %v6197
  %v6215 = vsel %vm6213, %v6203, 2102212464
  %v6216 = vsel %vm6212, %v6200, %v6215
  %v6217 = vsel %vm6211, %v6214, %v6216
  %v6218 = vsel %vm6210, %v6197, %v6200
  %v6219 = vsel %vm6213, %v6206, 920167782
  %v6220 = vsel %vm6212, %v6203, %v6219
  %v6221 = vsel %vm6211, %v6218, %v6220
  %v6222 = vsel %vm6210, %v6200, %v6203
  %v6223 = vsel %vm6213, %v6209, 1326507024
  %v6224 = vsel %vm6212, %v6206, %v6223
  %v6225 = vsel %vm6211, %v6222, %v6224
  %v6226 = vshll.u32 %v6186, 8
  %v6227 = vmul.u32.u64.compose %v6226, %v6225
  %v6228 = vextract.low.u32 %v6227
  %v6229 = vextract.high.u32 %v6227
  %v6230 = vmul.u32.u64.compose %v6226, %v6221
  %v6231 = vextract.low.u32 %v6230
  %v6232 = vextract.high.u32 %v6230
  %v6233 = vmul.u32 %v6226, %v6217
  %v6234 = vadd.s32 %v6229, %v6231
  %vm6235 = vc.u32 %v6229, %v6231
  %v6236 = vadd.s32 %v6232, 1
  %v6237 = vsel %vm6235, %v6236, %v6232
  %v6238 = vadd.s32 %v6233, %v6237
  %v6239 = vadd.s32 %v6238, 536870912
  %v6240 = vshrl.u32 %v6239, 30
  %v6241 = vshll.u32 %v6240, 30
  %v6242 = vsub.s32 %v6238, %v6241
  %vm6243 = vcmp.lt.s32.totalorder %v6242, 0
  %v6244 = vsub.s32 0, %v6242
  %v6245 = vsel %vm6243, %v6244, %v6242
  %v6246 = vclz %v6245
  %v6247 = vsub.s32 %v6246, 2
  %vm6248 = vcmp.gt.s32.totalorder 0, %v6247
  %v6249 = vsel %vm6248, 0, %v6247
  %v6250 = vsub.s32 32, %v6249
  %v6251 = vshll.u32 %v6242, %v6249
  %v6252 = vshrl.u32 %v6234, %v6250
  %v6253 = vor.u32 %v6251, %v6252
  %v6254 = vsub.s32 4294967266, %v6249
  %v6255 = vadd.s32 %v6254, 127
  %v6256 = vshll.u32 %v6255, 23
  %v6257 = vor.u32 4788187, %v6256
  %v6258 = vand.u32 2147483647, %v6257
  %v6260 = vcvt.s32.f32 %v6253
  %v6261 = vmul.f32 %v6260, %v6258
  %v6262 = vxor.u32 %v6261, 2147483648
  %v6263 = vsel %vm6180, %v6262, %v6261
  %v6264 = vsub.s32 4, %v6240
  %v6265 = vsel %vm6180, %v6264, %v6240
  %v6266 = vsel %vm6179, %v5864, %v6263
  %v6267 = vsel %vm6179, 0, %v6265
  %v6268 = vcosq.f32.pop %v6266
  %v6269 = vsinq.f32.pop %v6266
  %vm6270 = vweird.f32 %v5864
  %v6271 = vadd.s32 %v6267, 3
  %v6272 = vand.u32 %v6271, 3
  %vm6273 = vcmp.lt.s32.totalorder %v6272, 2
  %vm6274 = vcmp.eq.s32.totalorder %v6272, 0
  %v6275 = vxor.u32 %v6269, 2147483648
  %v6276 = vsel %vm6274, %v6268, %v6275
  %vm6277 = vcmp.eq.s32.totalorder %v6272, 2
  %v6278 = vxor.u32 %v6268, 2147483648
  %v6279 = vsel %vm6277, %v6278, %v6269
  %v6280 = vsel %vm6273, %v6276, %v6279
  %v6281 = vsel %vm6270, nan, %v6280
  %v6286 = vcombine.low %v5969, %v6073
  %v6287 = vcombine.low %v6177, %v6281
  %v6289 = vunpack.c.l.s4 1966171168
  %v6290 = vunpack.c.0.s8 %v6289
  %v6291 = vlaneseq
  %v6292 = vshrl.u32 %v6291, 7
  %v6293 = vsub.s32 %v6290, %v6292
  %v6294 = vrot.slane %v6286, %v6293
  %v6296 = vunpack.c.l.s4 1966171168
  %v6297 = vunpack.c.0.s8 %v6296
  %v6298 = vlaneseq
  %v6299 = vshrl.u32 %v6298, 7
  %v6300 = vsub.s32 %v6297, %v6299
  %v6301 = vrot.slane %v6287, %v6300
  %v6302 = vcombine.low %v6294, %v6301
  %v6304 = vunpack.c.l.s4 1966171168
  %v6305 = vunpack.c.0.s8 %v6304
  %v6306 = vlaneseq
  %v6307 = vshrl.u32 %v6306, 7
  %v6308 = vsub.s32 %v6305, %v6307
  %v6309 = vrot.slane %v6302, %v6308
  %v6311 = vlaneseq
  %vm6312 = vcmp.ge.s32.totalorder %v6311, 0
  %vm6313 = vcmp.lt.s32.totalorder %v6311, 512
  %vm6314 = vmand %vm6312, %vm6313
  %6315 = vst.msk [vmem:[%s9] sm:$0xf] %vm6314, %v6309
  %s6316 = scalar_lea.vmem %s0, 8
  %v6317 = vld [vmem:[%s6316] sm:$0xff]
  %v6318 = vld [vmem:[%s1] sm:$0xff]
  %v6319 = vld [vmem:[%s1 + $0x8] sm:$0xff]
  %v6320 = vld [vmem:[%s1 + $0x10] sm:$0xff]
  %v6321 = vld [vmem:[%s1 + $0x18] sm:$0xff]
  %v6322 = vld [vmem:[%s2] sm:$0xff]
  %v6323 = vld [vmem:[%s2 + $0x8] sm:$0xff]
  %v6324 = vld [vmem:[%s2 + $0x10] sm:$0xff]
  %v6325 = vld [vmem:[%s2 + $0x18] sm:$0xff]
  %6327 = vset.pattern.permute.xlu0 0
  %6328 = vperm.xlu0 %6327, %v6322
  %v6329 = vpop.permute.xlu0 %6328
  %6332 = vset.pattern.permute.xlu0 0
  %6333 = vperm.xlu0 %6332, %v6323
  %v6334 = vpop.permute.xlu0 %6333
  %6337 = vset.pattern.permute.xlu0 0
  %6338 = vperm.xlu0 %6337, %v6324
  %v6339 = vpop.permute.xlu0 %6338
  %6342 = vset.pattern.permute.xlu0 0
  %6343 = vperm.xlu0 %6342, %v6325
  %v6344 = vpop.permute.xlu0 %6343
  %v6347 = vcombine.high %v6317, %v6317
  %v6349 = vunpack.c.l.s4 1983009808
  %v6350 = vunpack.c.0.s8 %v6349
  %v6351 = vlaneseq
  %v6352 = vshrl.u32 %v6351, 7
  %v6353 = vsub.s32 %v6350, %v6352
  %v6354 = vrot.slane %v6317, %v6353
  %v6356 = vunpack.c.l.s4 1983009808
  %v6357 = vunpack.c.0.s8 %v6356
  %v6358 = vlaneseq
  %v6359 = vshrl.u32 %v6358, 7
  %v6360 = vsub.s32 %v6357, %v6359
  %v6361 = vrot.slane %v6347, %v6360
  %v6362 = vcombine.high %v6354, %v6354
  %v6363 = vcombine.high %v6361, %v6361
  %v6365 = vsel %vm81, %v6318, 0
  %v6368 = vsel %vm81, %v6319, 0
  %v6371 = vsel %vm81, %v6320, 0
  %v6374 = vsel %vm81, %v6321, 0
  %v6376 = vsel %vm94, %v6354, 0
  %v6378 = vsel %vm94, %v6362, 0
  %v6380 = vsel %vm94, %v6361, 0
  %v6382 = vsel %vm94, %v6363, 0
  %6384 = vmatprep.subr.mxu0 %v6378
  %6385 = vmatpush1.msra.mxu0 %v6376
  %6386 = vmatprep.subr.mxu0 0.0
  %6387 = vmatpush1.msra.mxu0 0.0
  %6388 = vmatprep.subr.mxu0 0.0
  %6389 = vmatpush1.msra.mxu0 0.0
  %6390 = vmatprep.subr.mxu0 0.0
  %6391 = vmatpush1.msra.mxu0 0.0
  %6392 = vmatprep.subr.mxu0 0.0
  %6393 = vmatpush1.msra.mxu0 0.0
  %6394 = vmatprep.subr.mxu0 0.0
  %6395 = vmatpush1.msra.mxu0 0.0
  %6396 = vmatprep.subr.mxu0 0.0
  %6397 = vmatpush1.msra.mxu0 0.0
  %6398 = vmatprep.subr.mxu0 0.0
  %6399 = vmatpush1.msra.mxu0 0.0
  %6400 = vmatprep.subr.mxu0 0.0
  %6401 = vmatpush1.msra.mxu0 0.0
  %6402 = vmatprep.subr.mxu0 0.0
  %6403 = vmatpush1.msra.mxu0 0.0
  %6404 = vmatprep.subr.mxu0 0.0
  %6405 = vmatpush1.msra.mxu0 0.0
  %6406 = vmatprep.subr.mxu0 0.0
  %6407 = vmatpush1.msra.mxu0 0.0
  %6408 = vmatprep.subr.mxu0 0.0
  %6409 = vmatpush1.msra.mxu0 0.0
  %6410 = vmatprep.subr.mxu0 0.0
  %6411 = vmatpush1.msra.mxu0 0.0
  %6412 = vmatprep.subr.mxu0 0.0
  %6413 = vmatpush1.msra.mxu0 0.0
  %6414 = vmatprep.subr.mxu0 0.0
  %6415 = vmatpush1.msra.mxu0 0.0
  %6416 = vmatprep.subr.mxu0 0.0
  %6417 = vmatpush1.msra.mxu0 0.0
  %6418 = vmatprep.subr.mxu0 0.0
  %6419 = vmatpush1.msra.mxu0 0.0
  %6420 = vmatprep.subr.mxu0 0.0
  %6421 = vmatpush1.msra.mxu0 0.0
  %6422 = vmatprep.subr.mxu0 0.0
  %6423 = vmatpush1.msra.mxu0 0.0
  %6424 = vmatprep.subr.mxu0 0.0
  %6425 = vmatpush1.msra.mxu0 0.0
  %6426 = vmatprep.subr.mxu0 0.0
  %6427 = vmatpush1.msra.mxu0 0.0
  %6428 = vmatprep.subr.mxu0 0.0
  %6429 = vmatpush1.msra.mxu0 0.0
  %6430 = vmatprep.subr.mxu0 0.0
  %6431 = vmatpush1.msra.mxu0 0.0
  %6432 = vmatprep.subr.mxu0 0.0
  %6433 = vmatpush1.msra.mxu0 0.0
  %6434 = vmatprep.subr.mxu0 0.0
  %6435 = vmatpush1.msra.mxu0 0.0
  %6436 = vmatprep.subr.mxu0 0.0
  %6437 = vmatpush1.msra.mxu0 0.0
  %6438 = vmatprep.subr.mxu0 0.0
  %6439 = vmatpush1.msra.mxu0 0.0
  %6440 = vmatprep.subr.mxu0 0.0
  %6441 = vmatpush1.msra.mxu0 0.0
  %6442 = vmatprep.subr.mxu0 0.0
  %6443 = vmatpush1.msra.mxu0 0.0
  %6444 = vmatprep.subr.mxu0 0.0
  %6445 = vmatpush1.msra.mxu0 0.0
  %6446 = vmatprep.subr.mxu0 0.0
  %6447 = vmatpush1.msra.mxu0 0.0
  %6448 = vmatprep.mubr.f32.mxu0 0.0
  %6449 = vmatmul.mubr.f32.gmra.mrb[0].mxu0 %v6365
  %v6450 = vpop.f32.mrb[0].mxu0
  %v6451 = vadd.f32 %v6329, %v6450
  %v6452 = vpop.f32.mrb[0].mxu0
  %v6453 = vadd.f32 %v6329, %v6452
  %6454 = vmatprep.mubr.f32.mxu0 0.0
  %6455 = vmatmul.mubr.f32.gmra.mrb[0].mxu0 %v6368
  %v6456 = vpop.f32.mrb[0].mxu0
  %v6457 = vadd.f32 %v6334, %v6456
  %v6458 = vpop.f32.mrb[0].mxu0
  %v6459 = vadd.f32 %v6334, %v6458
  %6460 = vmatprep.mubr.f32.mxu0 0.0
  %6461 = vmatmul.mubr.f32.gmra.mrb[0].mxu0 %v6371
  %v6462 = vpop.f32.mrb[0].mxu0
  %v6463 = vadd.f32 %v6339, %v6462
  %v6464 = vpop.f32.mrb[0].mxu0
  %v6465 = vadd.f32 %v6339, %v6464
  %6466 = vmatprep.mubr.f32.mxu0 0.0
  %6467 = vmatmul.mubr.f32.gmra.mrb[0].mxu0 %v6374
  %v6468 = vpop.f32.mrb[0].mxu0
  %v6469 = vadd.f32 %v6344, %v6468
  %v6470 = vpop.f32.mrb[0].mxu0
  %v6471 = vadd.f32 %v6344, %v6470
  %6472 = vdwg.mxu0
  %6473 = vmatprep.subr.mxu0 %v6382
  %6474 = vmatpush1.msra.mxu0 %v6380
  %6475 = vmatprep.subr.mxu0 0.0
  %6476 = vmatpush1.msra.mxu0 0.0
  %6477 = vmatprep.subr.mxu0 0.0
  %6478 = vmatpush1.msra.mxu0 0.0
  %6479 = vmatprep.subr.mxu0 0.0
  %6480 = vmatpush1.msra.mxu0 0.0
  %6481 = vmatprep.subr.mxu0 0.0
  %6482 = vmatpush1.msra.mxu0 0.0
  %6483 = vmatprep.subr.mxu0 0.0
  %6484 = vmatpush1.msra.mxu0 0.0
  %6485 = vmatprep.subr.mxu0 0.0
  %6486 = vmatpush1.msra.mxu0 0.0
  %6487 = vmatprep.subr.mxu0 0.0
  %6488 = vmatpush1.msra.mxu0 0.0
  %6489 = vmatprep.subr.mxu0 0.0
  %6490 = vmatpush1.msra.mxu0 0.0
  %6491 = vmatprep.subr.mxu0 0.0
  %6492 = vmatpush1.msra.mxu0 0.0
  %6493 = vmatprep.subr.mxu0 0.0
  %6494 = vmatpush1.msra.mxu0 0.0
  %6495 = vmatprep.subr.mxu0 0.0
  %6496 = vmatpush1.msra.mxu0 0.0
  %6497 = vmatprep.subr.mxu0 0.0
  %6498 = vmatpush1.msra.mxu0 0.0
  %6499 = vmatprep.subr.mxu0 0.0
  %6500 = vmatpush1.msra.mxu0 0.0
  %6501 = vmatprep.subr.mxu0 0.0
  %6502 = vmatpush1.msra.mxu0 0.0
  %6503 = vmatprep.subr.mxu0 0.0
  %6504 = vmatpush1.msra.mxu0 0.0
  %6505 = vmatprep.subr.mxu0 0.0
  %6506 = vmatpush1.msra.mxu0 0.0
  %6507 = vmatprep.subr.mxu0 0.0
  %6508 = vmatpush1.msra.mxu0 0.0
  %6509 = vmatprep.subr.mxu0 0.0
  %6510 = vmatpush1.msra.mxu0 0.0
  %6511 = vmatprep.subr.mxu0 0.0
  %6512 = vmatpush1.msra.mxu0 0.0
  %6513 = vmatprep.subr.mxu0 0.0
  %6514 = vmatpush1.msra.mxu0 0.0
  %6515 = vmatprep.subr.mxu0 0.0
  %6516 = vmatpush1.msra.mxu0 0.0
  %6517 = vmatprep.subr.mxu0 0.0
  %6518 = vmatpush1.msra.mxu0 0.0
  %6519 = vmatprep.subr.mxu0 0.0
  %6520 = vmatpush1.msra.mxu0 0.0
  %6521 = vmatprep.subr.mxu0 0.0
  %6522 = vmatpush1.msra.mxu0 0.0
  %6523 = vmatprep.subr.mxu0 0.0
  %6524 = vmatpush1.msra.mxu0 0.0
  %6525 = vmatprep.subr.mxu0 0.0
  %6526 = vmatpush1.msra.mxu0 0.0
  %6527 = vmatprep.subr.mxu0 0.0
  %6528 = vmatpush1.msra.mxu0 0.0
  %6529 = vmatprep.subr.mxu0 0.0
  %6530 = vmatpush1.msra.mxu0 0.0
  %6531 = vmatprep.subr.mxu0 0.0
  %6532 = vmatpush1.msra.mxu0 0.0
  %6533 = vmatprep.subr.mxu0 0.0
  %6534 = vmatpush1.msra.mxu0 0.0
  %6535 = vmatprep.subr.mxu0 0.0
  %6536 = vmatpush1.msra.mxu0 0.0
  %6537 = vmatprep.mubr.f32.mxu0 0.0
  %6538 = vmatmul.mubr.f32.gmra.mrb[0].mxu0 %v6365
  %v6539 = vpop.f32.mrb[0].mxu0
  %v6540 = vadd.f32 %v6329, %v6539
  %v6541 = vpop.f32.mrb[0].mxu0
  %v6542 = vadd.f32 %v6329, %v6541
  %6543 = vmatprep.mubr.f32.mxu0 0.0
  %6544 = vmatmul.mubr.f32.gmra.mrb[0].mxu0 %v6368
  %v6545 = vpop.f32.mrb[0].mxu0
  %v6546 = vadd.f32 %v6334, %v6545
  %v6547 = vpop.f32.mrb[0].mxu0
  %v6548 = vadd.f32 %v6334, %v6547
  %6549 = vmatprep.mubr.f32.mxu0 0.0
  %6550 = vmatmul.mubr.f32.gmra.mrb[0].mxu0 %v6371
  %v6551 = vpop.f32.mrb[0].mxu0
  %v6552 = vadd.f32 %v6339, %v6551
  %v6553 = vpop.f32.mrb[0].mxu0
  %v6554 = vadd.f32 %v6339, %v6553
  %6555 = vmatprep.mubr.f32.mxu0 0.0
  %6556 = vmatmul.mubr.f32.gmra.mrb[0].mxu0 %v6374
  %v6557 = vpop.f32.mrb[0].mxu0
  %v6558 = vadd.f32 %v6344, %v6557
  %v6559 = vpop.f32.mrb[0].mxu0
  %v6560 = vadd.f32 %v6344, %v6559
  %6561 = vdwg.mxu0
  %v6562 = vand.u32 2147483647, %v6451
  %vm6563 = vcmp.le.f32.partialorder %v6562, 0.7853982
  %vm6564 = vcmp.lt.s32.totalorder %v6451, 0
  %v6565 = vand.u32 %v6451, 2139095040
  %v6566 = vshrl.u32 %v6565, 23
  %v6567 = vsub.s32 %v6566, 127
  %v6568 = vand.u32 2147483647, %v6451
  %v6569 = vand.u32 %v6568, 8388607
  %v6570 = vor.u32 %v6569, 8388608
  %v6571 = vsub.s32 0, %v6570
  %v6572 = vadd.s32 %v6567, 1
  %vm6573 = vcmp.gt.s32.totalorder %v6572, 0
  %v6574 = vsel %vm6573, %v6572, 0
  %v6575 = vshrl.u32 %v6574, 5
  %v6576 = vand.u32 %v6574, 31
  %v6577 = vsub.s32 32, %v6576
  %v6578 = vshrl.u32 683565275, %v6577
  %v6579 = vshll.u32 683565275, %v6576
  %v6580 = vshrl.u32 2475754826, %v6577
  %v6581 = vor.u32 %v6579, %v6580
  %v6582 = vshll.u32 2475754826, %v6576
  %v6583 = vshrl.u32 2131351028, %v6577
  %v6584 = vor.u32 %v6582, %v6583
  %v6585 = vshll.u32 2131351028, %v6576
  %v6586 = vshrl.u32 2102212464, %v6577
  %v6587 = vor.u32 %v6585, %v6586
  %v6588 = vshll.u32 2102212464, %v6576
  %v6589 = vshrl.u32 920167782, %v6577
  %v6590 = vor.u32 %v6588, %v6589
  %v6591 = vshll.u32 920167782, %v6576
  %v6592 = vshrl.u32 1326507024, %v6577
  %v6593 = vor.u32 %v6591, %v6592
  %vm6594 = vcmp.lt.s32.totalorder %v6575, 1
  %vm6595 = vcmp.lt.s32.totalorder %v6575, 2
  %vm6596 = vcmp.lt.s32.totalorder %v6575, 3
  %vm6597 = vcmp.lt.s32.totalorder %v6575, 4
  %v6598 = vsel %vm6594, %v6578, %v6581
  %v6599 = vsel %vm6597, %v6587, 2102212464
  %v6600 = vsel %vm6596, %v6584, %v6599
  %v6601 = vsel %vm6595, %v6598, %v6600
  %v6602 = vsel %vm6594, %v6581, %v6584
  %v6603 = vsel %vm6597, %v6590, 920167782
  %v6604 = vsel %vm6596, %v6587, %v6603
  %v6605 = vsel %vm6595, %v6602, %v6604
  %v6606 = vsel %vm6594, %v6584, %v6587
  %v6607 = vsel %vm6597, %v6593, 1326507024
  %v6608 = vsel %vm6596, %v6590, %v6607
  %v6609 = vsel %vm6595, %v6606, %v6608
  %v6610 = vshll.u32 %v6570, 8
  %v6611 = vmul.u32.u64.compose %v6610, %v6609
  %v6612 = vextract.low.u32 %v6611
  %v6613 = vextract.high.u32 %v6611
  %v6614 = vmul.u32.u64.compose %v6610, %v6605
  %v6615 = vextract.low.u32 %v6614
  %v6616 = vextract.high.u32 %v6614
  %v6617 = vmul.u32 %v6610, %v6601
  %v6618 = vadd.s32 %v6613, %v6615
  %vm6619 = vc.u32 %v6613, %v6615
  %v6620 = vadd.s32 %v6616, 1
  %v6621 = vsel %vm6619, %v6620, %v6616
  %v6622 = vadd.s32 %v6617, %v6621
  %v6623 = vadd.s32 %v6622, 536870912
  %v6624 = vshrl.u32 %v6623, 30
  %v6625 = vshll.u32 %v6624, 30
  %v6626 = vsub.s32 %v6622, %v6625
  %vm6627 = vcmp.lt.s32.totalorder %v6626, 0
  %v6628 = vsub.s32 0, %v6626
  %v6629 = vsel %vm6627, %v6628, %v6626
  %v6630 = vclz %v6629
  %v6631 = vsub.s32 %v6630, 2
  %vm6632 = vcmp.gt.s32.totalorder 0, %v6631
  %v6633 = vsel %vm6632, 0, %v6631
  %v6634 = vsub.s32 32, %v6633
  %v6635 = vshll.u32 %v6626, %v6633
  %v6636 = vshrl.u32 %v6618, %v6634
  %v6637 = vor.u32 %v6635, %v6636
  %v6638 = vsub.s32 4294967266, %v6633
  %v6639 = vadd.s32 %v6638, 127
  %v6640 = vshll.u32 %v6639, 23
  %v6641 = vor.u32 4788187, %v6640
  %v6642 = vand.u32 2147483647, %v6641
  %v6644 = vcvt.s32.f32 %v6637
  %v6645 = vmul.f32 %v6644, %v6642
  %v6646 = vxor.u32 %v6645, 2147483648
  %v6647 = vsel %vm6564, %v6646, %v6645
  %v6648 = vsub.s32 4, %v6624
  %v6649 = vsel %vm6564, %v6648, %v6624
  %v6650 = vsel %vm6563, %v6451, %v6647
  %v6651 = vsel %vm6563, 0, %v6649
  %v6652 = vcosq.f32.pop %v6650
  %v6653 = vsinq.f32.pop %v6650
  %vm6654 = vweird.f32 %v6451
  %v6655 = vadd.s32 %v6651, 3
  %v6656 = vand.u32 %v6655, 3
  %vm6657 = vcmp.lt.s32.totalorder %v6656, 2
  %vm6658 = vcmp.eq.s32.totalorder %v6656, 0
  %v6659 = vxor.u32 %v6653, 2147483648
  %v6660 = vsel %vm6658, %v6652, %v6659
  %vm6661 = vcmp.eq.s32.totalorder %v6656, 2
  %v6662 = vxor.u32 %v6652, 2147483648
  %v6663 = vsel %vm6661, %v6662, %v6653
  %v6664 = vsel %vm6657, %v6660, %v6663
  %v6665 = vsel %vm6654, nan, %v6664
  %v6666 = vand.u32 2147483647, %v6453
  %vm6667 = vcmp.le.f32.partialorder %v6666, 0.7853982
  %vm6668 = vcmp.lt.s32.totalorder %v6453, 0
  %v6669 = vand.u32 %v6453, 2139095040
  %v6670 = vshrl.u32 %v6669, 23
  %v6671 = vsub.s32 %v6670, 127
  %v6672 = vand.u32 2147483647, %v6453
  %v6673 = vand.u32 %v6672, 8388607
  %v6674 = vor.u32 %v6673, 8388608
  %v6675 = vsub.s32 0, %v6674
  %v6676 = vadd.s32 %v6671, 1
  %vm6677 = vcmp.gt.s32.totalorder %v6676, 0
  %v6678 = vsel %vm6677, %v6676, 0
  %v6679 = vshrl.u32 %v6678, 5
  %v6680 = vand.u32 %v6678, 31
  %v6681 = vsub.s32 32, %v6680
  %v6682 = vshrl.u32 683565275, %v6681
  %v6683 = vshll.u32 683565275, %v6680
  %v6684 = vshrl.u32 2475754826, %v6681
  %v6685 = vor.u32 %v6683, %v6684
  %v6686 = vshll.u32 2475754826, %v6680
  %v6687 = vshrl.u32 2131351028, %v6681
  %v6688 = vor.u32 %v6686, %v6687
  %v6689 = vshll.u32 2131351028, %v6680
  %v6690 = vshrl.u32 2102212464, %v6681
  %v6691 = vor.u32 %v6689, %v6690
  %v6692 = vshll.u32 2102212464, %v6680
  %v6693 = vshrl.u32 920167782, %v6681
  %v6694 = vor.u32 %v6692, %v6693
  %v6695 = vshll.u32 920167782, %v6680
  %v6696 = vshrl.u32 1326507024, %v6681
  %v6697 = vor.u32 %v6695, %v6696
  %vm6698 = vcmp.lt.s32.totalorder %v6679, 1
  %vm6699 = vcmp.lt.s32.totalorder %v6679, 2
  %vm6700 = vcmp.lt.s32.totalorder %v6679, 3
  %vm6701 = vcmp.lt.s32.totalorder %v6679, 4
  %v6702 = vsel %vm6698, %v6682, %v6685
  %v6703 = vsel %vm6701, %v6691, 2102212464
  %v6704 = vsel %vm6700, %v6688, %v6703
  %v6705 = vsel %vm6699, %v6702, %v6704
  %v6706 = vsel %vm6698, %v6685, %v6688
  %v6707 = vsel %vm6701, %v6694, 920167782
  %v6708 = vsel %vm6700, %v6691, %v6707
  %v6709 = vsel %vm6699, %v6706, %v6708
  %v6710 = vsel %vm6698, %v6688, %v6691
  %v6711 = vsel %vm6701, %v6697, 1326507024
  %v6712 = vsel %vm6700, %v6694, %v6711
  %v6713 = vsel %vm6699, %v6710, %v6712
  %v6714 = vshll.u32 %v6674, 8
  %v6715 = vmul.u32.u64.compose %v6714, %v6713
  %v6716 = vextract.low.u32 %v6715
  %v6717 = vextract.high.u32 %v6715
  %v6718 = vmul.u32.u64.compose %v6714, %v6709
  %v6719 = vextract.low.u32 %v6718
  %v6720 = vextract.high.u32 %v6718
  %v6721 = vmul.u32 %v6714, %v6705
  %v6722 = vadd.s32 %v6717, %v6719
  %vm6723 = vc.u32 %v6717, %v6719
  %v6724 = vadd.s32 %v6720, 1
  %v6725 = vsel %vm6723, %v6724, %v6720
  %v6726 = vadd.s32 %v6721, %v6725
  %v6727 = vadd.s32 %v6726, 536870912
  %v6728 = vshrl.u32 %v6727, 30
  %v6729 = vshll.u32 %v6728, 30
  %v6730 = vsub.s32 %v6726, %v6729
  %vm6731 = vcmp.lt.s32.totalorder %v6730, 0
  %v6732 = vsub.s32 0, %v6730
  %v6733 = vsel %vm6731, %v6732, %v6730
  %v6734 = vclz %v6733
  %v6735 = vsub.s32 %v6734, 2
  %vm6736 = vcmp.gt.s32.totalorder 0, %v6735
  %v6737 = vsel %vm6736, 0, %v6735
  %v6738 = vsub.s32 32, %v6737
  %v6739 = vshll.u32 %v6730, %v6737
  %v6740 = vshrl.u32 %v6722, %v6738
  %v6741 = vor.u32 %v6739, %v6740
  %v6742 = vsub.s32 4294967266, %v6737
  %v6743 = vadd.s32 %v6742, 127
  %v6744 = vshll.u32 %v6743, 23
  %v6745 = vor.u32 4788187, %v6744
  %v6746 = vand.u32 2147483647, %v6745
  %v6748 = vcvt.s32.f32 %v6741
  %v6749 = vmul.f32 %v6748, %v6746
  %v6750 = vxor.u32 %v6749, 2147483648
  %v6751 = vsel %vm6668, %v6750, %v6749
  %v6752 = vsub.s32 4, %v6728
  %v6753 = vsel %vm6668, %v6752, %v6728
  %v6754 = vsel %vm6667, %v6453, %v6751
  %v6755 = vsel %vm6667, 0, %v6753
  %v6756 = vcosq.f32.pop %v6754
  %v6757 = vsinq.f32.pop %v6754
  %vm6758 = vweird.f32 %v6453
  %v6759 = vadd.s32 %v6755, 3
  %v6760 = vand.u32 %v6759, 3
  %vm6761 = vcmp.lt.s32.totalorder %v6760, 2
  %vm6762 = vcmp.eq.s32.totalorder %v6760, 0
  %v6763 = vxor.u32 %v6757, 2147483648
  %v6764 = vsel %vm6762, %v6756, %v6763
  %vm6765 = vcmp.eq.s32.totalorder %v6760, 2
  %v6766 = vxor.u32 %v6756, 2147483648
  %v6767 = vsel %vm6765, %v6766, %v6757
  %v6768 = vsel %vm6761, %v6764, %v6767
  %v6769 = vsel %vm6758, nan, %v6768
  %v6770 = vand.u32 2147483647, %v6540
  %vm6771 = vcmp.le.f32.partialorder %v6770, 0.7853982
  %vm6772 = vcmp.lt.s32.totalorder %v6540, 0
  %v6773 = vand.u32 %v6540, 2139095040
  %v6774 = vshrl.u32 %v6773, 23
  %v6775 = vsub.s32 %v6774, 127
  %v6776 = vand.u32 2147483647, %v6540
  %v6777 = vand.u32 %v6776, 8388607
  %v6778 = vor.u32 %v6777, 8388608
  %v6779 = vsub.s32 0, %v6778
  %v6780 = vadd.s32 %v6775, 1
  %vm6781 = vcmp.gt.s32.totalorder %v6780, 0
  %v6782 = vsel %vm6781, %v6780, 0
  %v6783 = vshrl.u32 %v6782, 5
  %v6784 = vand.u32 %v6782, 31
  %v6785 = vsub.s32 32, %v6784
  %v6786 = vshrl.u32 683565275, %v6785
  %v6787 = vshll.u32 683565275, %v6784
  %v6788 = vshrl.u32 2475754826, %v6785
  %v6789 = vor.u32 %v6787, %v6788
  %v6790 = vshll.u32 2475754826, %v6784
  %v6791 = vshrl.u32 2131351028, %v6785
  %v6792 = vor.u32 %v6790, %v6791
  %v6793 = vshll.u32 2131351028, %v6784
  %v6794 = vshrl.u32 2102212464, %v6785
  %v6795 = vor.u32 %v6793, %v6794
  %v6796 = vshll.u32 2102212464, %v6784
  %v6797 = vshrl.u32 920167782, %v6785
  %v6798 = vor.u32 %v6796, %v6797
  %v6799 = vshll.u32 920167782, %v6784
  %v6800 = vshrl.u32 1326507024, %v6785
  %v6801 = vor.u32 %v6799, %v6800
  %vm6802 = vcmp.lt.s32.totalorder %v6783, 1
  %vm6803 = vcmp.lt.s32.totalorder %v6783, 2
  %vm6804 = vcmp.lt.s32.totalorder %v6783, 3
  %vm6805 = vcmp.lt.s32.totalorder %v6783, 4
  %v6806 = vsel %vm6802, %v6786, %v6789
  %v6807 = vsel %vm6805, %v6795, 2102212464
  %v6808 = vsel %vm6804, %v6792, %v6807
  %v6809 = vsel %vm6803, %v6806, %v6808
  %v6810 = vsel %vm6802, %v6789, %v6792
  %v6811 = vsel %vm6805, %v6798, 920167782
  %v6812 = vsel %vm6804, %v6795, %v6811
  %v6813 = vsel %vm6803, %v6810, %v6812
  %v6814 = vsel %vm6802, %v6792, %v6795
  %v6815 = vsel %vm6805, %v6801, 1326507024
  %v6816 = vsel %vm6804, %v6798, %v6815
  %v6817 = vsel %vm6803, %v6814, %v6816
  %v6818 = vshll.u32 %v6778, 8
  %v6819 = vmul.u32.u64.compose %v6818, %v6817
  %v6820 = vextract.low.u32 %v6819
  %v6821 = vextract.high.u32 %v6819
  %v6822 = vmul.u32.u64.compose %v6818, %v6813
  %v6823 = vextract.low.u32 %v6822
  %v6824 = vextract.high.u32 %v6822
  %v6825 = vmul.u32 %v6818, %v6809
  %v6826 = vadd.s32 %v6821, %v6823
  %vm6827 = vc.u32 %v6821, %v6823
  %v6828 = vadd.s32 %v6824, 1
  %v6829 = vsel %vm6827, %v6828, %v6824
  %v6830 = vadd.s32 %v6825, %v6829
  %v6831 = vadd.s32 %v6830, 536870912
  %v6832 = vshrl.u32 %v6831, 30
  %v6833 = vshll.u32 %v6832, 30
  %v6834 = vsub.s32 %v6830, %v6833
  %vm6835 = vcmp.lt.s32.totalorder %v6834, 0
  %v6836 = vsub.s32 0, %v6834
  %v6837 = vsel %vm6835, %v6836, %v6834
  %v6838 = vclz %v6837
  %v6839 = vsub.s32 %v6838, 2
  %vm6840 = vcmp.gt.s32.totalorder 0, %v6839
  %v6841 = vsel %vm6840, 0, %v6839
  %v6842 = vsub.s32 32, %v6841
  %v6843 = vshll.u32 %v6834, %v6841
  %v6844 = vshrl.u32 %v6826, %v6842
  %v6845 = vor.u32 %v6843, %v6844
  %v6846 = vsub.s32 4294967266, %v6841
  %v6847 = vadd.s32 %v6846, 127
  %v6848 = vshll.u32 %v6847, 23
  %v6849 = vor.u32 4788187, %v6848
  %v6850 = vand.u32 2147483647, %v6849
  %v6852 = vcvt.s32.f32 %v6845
  %v6853 = vmul.f32 %v6852, %v6850
  %v6854 = vxor.u32 %v6853, 2147483648
  %v6855 = vsel %vm6772, %v6854, %v6853
  %v6856 = vsub.s32 4, %v6832
  %v6857 = vsel %vm6772, %v6856, %v6832
  %v6858 = vsel %vm6771, %v6540, %v6855
  %v6859 = vsel %vm6771, 0, %v6857
  %v6860 = vcosq.f32.pop %v6858
  %v6861 = vsinq.f32.pop %v6858
  %vm6862 = vweird.f32 %v6540
  %v6863 = vadd.s32 %v6859, 3
  %v6864 = vand.u32 %v6863, 3
  %vm6865 = vcmp.lt.s32.totalorder %v6864, 2
  %vm6866 = vcmp.eq.s32.totalorder %v6864, 0
  %v6867 = vxor.u32 %v6861, 2147483648
  %v6868 = vsel %vm6866, %v6860, %v6867
  %vm6869 = vcmp.eq.s32.totalorder %v6864, 2
  %v6870 = vxor.u32 %v6860, 2147483648
  %v6871 = vsel %vm6869, %v6870, %v6861
  %v6872 = vsel %vm6865, %v6868, %v6871
  %v6873 = vsel %vm6862, nan, %v6872
  %v6874 = vand.u32 2147483647, %v6542
  %vm6875 = vcmp.le.f32.partialorder %v6874, 0.7853982
  %vm6876 = vcmp.lt.s32.totalorder %v6542, 0
  %v6877 = vand.u32 %v6542, 2139095040
  %v6878 = vshrl.u32 %v6877, 23
  %v6879 = vsub.s32 %v6878, 127
  %v6880 = vand.u32 2147483647, %v6542
  %v6881 = vand.u32 %v6880, 8388607
  %v6882 = vor.u32 %v6881, 8388608
  %v6883 = vsub.s32 0, %v6882
  %v6884 = vadd.s32 %v6879, 1
  %vm6885 = vcmp.gt.s32.totalorder %v6884, 0
  %v6886 = vsel %vm6885, %v6884, 0
  %v6887 = vshrl.u32 %v6886, 5
  %v6888 = vand.u32 %v6886, 31
  %v6889 = vsub.s32 32, %v6888
  %v6890 = vshrl.u32 683565275, %v6889
  %v6891 = vshll.u32 683565275, %v6888
  %v6892 = vshrl.u32 2475754826, %v6889
  %v6893 = vor.u32 %v6891, %v6892
  %v6894 = vshll.u32 2475754826, %v6888
  %v6895 = vshrl.u32 2131351028, %v6889
  %v6896 = vor.u32 %v6894, %v6895
  %v6897 = vshll.u32 2131351028, %v6888
  %v6898 = vshrl.u32 2102212464, %v6889
  %v6899 = vor.u32 %v6897, %v6898
  %v6900 = vshll.u32 2102212464, %v6888
  %v6901 = vshrl.u32 920167782, %v6889
  %v6902 = vor.u32 %v6900, %v6901
  %v6903 = vshll.u32 920167782, %v6888
  %v6904 = vshrl.u32 1326507024, %v6889
  %v6905 = vor.u32 %v6903, %v6904
  %vm6906 = vcmp.lt.s32.totalorder %v6887, 1
  %vm6907 = vcmp.lt.s32.totalorder %v6887, 2
  %vm6908 = vcmp.lt.s32.totalorder %v6887, 3
  %vm6909 = vcmp.lt.s32.totalorder %v6887, 4
  %v6910 = vsel %vm6906, %v6890, %v6893
  %v6911 = vsel %vm6909, %v6899, 2102212464
  %v6912 = vsel %vm6908, %v6896, %v6911
  %v6913 = vsel %vm6907, %v6910, %v6912
  %v6914 = vsel %vm6906, %v6893, %v6896
  %v6915 = vsel %vm6909, %v6902, 920167782
  %v6916 = vsel %vm6908, %v6899, %v6915
  %v6917 = vsel %vm6907, %v6914, %v6916
  %v6918 = vsel %vm6906, %v6896, %v6899
  %v6919 = vsel %vm6909, %v6905, 1326507024
  %v6920 = vsel %vm6908, %v6902, %v6919
  %v6921 = vsel %vm6907, %v6918, %v6920
  %v6922 = vshll.u32 %v6882, 8
  %v6923 = vmul.u32.u64.compose %v6922, %v6921
  %v6924 = vextract.low.u32 %v6923
  %v6925 = vextract.high.u32 %v6923
  %v6926 = vmul.u32.u64.compose %v6922, %v6917
  %v6927 = vextract.low.u32 %v6926
  %v6928 = vextract.high.u32 %v6926
  %v6929 = vmul.u32 %v6922, %v6913
  %v6930 = vadd.s32 %v6925, %v6927
  %vm6931 = vc.u32 %v6925, %v6927
  %v6932 = vadd.s32 %v6928, 1
  %v6933 = vsel %vm6931, %v6932, %v6928
  %v6934 = vadd.s32 %v6929, %v6933
  %v6935 = vadd.s32 %v6934, 536870912
  %v6936 = vshrl.u32 %v6935, 30
  %v6937 = vshll.u32 %v6936, 30
  %v6938 = vsub.s32 %v6934, %v6937
  %vm6939 = vcmp.lt.s32.totalorder %v6938, 0
  %v6940 = vsub.s32 0, %v6938
  %v6941 = vsel %vm6939, %v6940, %v6938
  %v6942 = vclz %v6941
  %v6943 = vsub.s32 %v6942, 2
  %vm6944 = vcmp.gt.s32.totalorder 0, %v6943
  %v6945 = vsel %vm6944, 0, %v6943
  %v6946 = vsub.s32 32, %v6945
  %v6947 = vshll.u32 %v6938, %v6945
  %v6948 = vshrl.u32 %v6930, %v6946
  %v6949 = vor.u32 %v6947, %v6948
  %v6950 = vsub.s32 4294967266, %v6945
  %v6951 = vadd.s32 %v6950, 127
  %v6952 = vshll.u32 %v6951, 23
  %v6953 = vor.u32 4788187, %v6952
  %v6954 = vand.u32 2147483647, %v6953
  %v6956 = vcvt.s32.f32 %v6949
  %v6957 = vmul.f32 %v6956, %v6954
  %v6958 = vxor.u32 %v6957, 2147483648
  %v6959 = vsel %vm6876, %v6958, %v6957
  %v6960 = vsub.s32 4, %v6936
  %v6961 = vsel %vm6876, %v6960, %v6936
  %v6962 = vsel %vm6875, %v6542, %v6959
  %v6963 = vsel %vm6875, 0, %v6961
  %v6964 = vcosq.f32.pop %v6962
  %v6965 = vsinq.f32.pop %v6962
  %vm6966 = vweird.f32 %v6542
  %v6967 = vadd.s32 %v6963, 3
  %v6968 = vand.u32 %v6967, 3
  %vm6969 = vcmp.lt.s32.totalorder %v6968, 2
  %vm6970 = vcmp.eq.s32.totalorder %v6968, 0
  %v6971 = vxor.u32 %v6965, 2147483648
  %v6972 = vsel %vm6970, %v6964, %v6971
  %vm6973 = vcmp.eq.s32.totalorder %v6968, 2
  %v6974 = vxor.u32 %v6964, 2147483648
  %v6975 = vsel %vm6973, %v6974, %v6965
  %v6976 = vsel %vm6969, %v6972, %v6975
  %v6977 = vsel %vm6966, nan, %v6976
  %v6978 = vand.u32 2147483647, %v6457
  %vm6979 = vcmp.le.f32.partialorder %v6978, 0.7853982
  %vm6980 = vcmp.lt.s32.totalorder %v6457, 0
  %v6981 = vand.u32 %v6457, 2139095040
  %v6982 = vshrl.u32 %v6981, 23
  %v6983 = vsub.s32 %v6982, 127
  %v6984 = vand.u32 2147483647, %v6457
  %v6985 = vand.u32 %v6984, 8388607
  %v6986 = vor.u32 %v6985, 8388608
  %v6987 = vsub.s32 0, %v6986
  %v6988 = vadd.s32 %v6983, 1
  %vm6989 = vcmp.gt.s32.totalorder %v6988, 0
  %v6990 = vsel %vm6989, %v6988, 0
  %v6991 = vshrl.u32 %v6990, 5
  %v6992 = vand.u32 %v6990, 31
  %v6993 = vsub.s32 32, %v6992
  %v6994 = vshrl.u32 683565275, %v6993
  %v6995 = vshll.u32 683565275, %v6992
  %v6996 = vshrl.u32 2475754826, %v6993
  %v6997 = vor.u32 %v6995, %v6996
  %v6998 = vshll.u32 2475754826, %v6992
  %v6999 = vshrl.u32 2131351028, %v6993
  %v7000 = vor.u32 %v6998, %v6999
  %v7001 = vshll.u32 2131351028, %v6992
  %v7002 = vshrl.u32 2102212464, %v6993
  %v7003 = vor.u32 %v7001, %v7002
  %v7004 = vshll.u32 2102212464, %v6992
  %v7005 = vshrl.u32 920167782, %v6993
  %v7006 = vor.u32 %v7004, %v7005
  %v7007 = vshll.u32 920167782, %v6992
  %v7008 = vshrl.u32 1326507024, %v6993
  %v7009 = vor.u32 %v7007, %v7008
  %vm7010 = vcmp.lt.s32.totalorder %v6991, 1
  %vm7011 = vcmp.lt.s32.totalorder %v6991, 2
  %vm7012 = vcmp.lt.s32.totalorder %v6991, 3
  %vm7013 = vcmp.lt.s32.totalorder %v6991, 4
  %v7014 = vsel %vm7010, %v6994, %v6997
  %v7015 = vsel %vm7013, %v7003, 2102212464
  %v7016 = vsel %vm7012, %v7000, %v7015
  %v7017 = vsel %vm7011, %v7014, %v7016
  %v7018 = vsel %vm7010, %v6997, %v7000
  %v7019 = vsel %vm7013, %v7006, 920167782
  %v7020 = vsel %vm7012, %v7003, %v7019
  %v7021 = vsel %vm7011, %v7018, %v7020
  %v7022 = vsel %vm7010, %v7000, %v7003
  %v7023 = vsel %vm7013, %v7009, 1326507024
  %v7024 = vsel %vm7012, %v7006, %v7023
  %v7025 = vsel %vm7011, %v7022, %v7024
  %v7026 = vshll.u32 %v6986, 8
  %v7027 = vmul.u32.u64.compose %v7026, %v7025
  %v7028 = vextract.low.u32 %v7027
  %v7029 = vextract.high.u32 %v7027
  %v7030 = vmul.u32.u64.compose %v7026, %v7021
  %v7031 = vextract.low.u32 %v7030
  %v7032 = vextract.high.u32 %v7030
  %v7033 = vmul.u32 %v7026, %v7017
  %v7034 = vadd.s32 %v7029, %v7031
  %vm7035 = vc.u32 %v7029, %v7031
  %v7036 = vadd.s32 %v7032, 1
  %v7037 = vsel %vm7035, %v7036, %v7032
  %v7038 = vadd.s32 %v7033, %v7037
  %v7039 = vadd.s32 %v7038, 536870912
  %v7040 = vshrl.u32 %v7039, 30
  %v7041 = vshll.u32 %v7040, 30
  %v7042 = vsub.s32 %v7038, %v7041
  %vm7043 = vcmp.lt.s32.totalorder %v7042, 0
  %v7044 = vsub.s32 0, %v7042
  %v7045 = vsel %vm7043, %v7044, %v7042
  %v7046 = vclz %v7045
  %v7047 = vsub.s32 %v7046, 2
  %vm7048 = vcmp.gt.s32.totalorder 0, %v7047
  %v7049 = vsel %vm7048, 0, %v7047
  %v7050 = vsub.s32 32, %v7049
  %v7051 = vshll.u32 %v7042, %v7049
  %v7052 = vshrl.u32 %v7034, %v7050
  %v7053 = vor.u32 %v7051, %v7052
  %v7054 = vsub.s32 4294967266, %v7049
  %v7055 = vadd.s32 %v7054, 127
  %v7056 = vshll.u32 %v7055, 23
  %v7057 = vor.u32 4788187, %v7056
  %v7058 = vand.u32 2147483647, %v7057
  %v7060 = vcvt.s32.f32 %v7053
  %v7061 = vmul.f32 %v7060, %v7058
  %v7062 = vxor.u32 %v7061, 2147483648
  %v7063 = vsel %vm6980, %v7062, %v7061
  %v7064 = vsub.s32 4, %v7040
  %v7065 = vsel %vm6980, %v7064, %v7040
  %v7066 = vsel %vm6979, %v6457, %v7063
  %v7067 = vsel %vm6979, 0, %v7065
  %v7068 = vcosq.f32.pop %v7066
  %v7069 = vsinq.f32.pop %v7066
  %vm7070 = vweird.f32 %v6457
  %v7071 = vadd.s32 %v7067, 3
  %v7072 = vand.u32 %v7071, 3
  %vm7073 = vcmp.lt.s32.totalorder %v7072, 2
  %vm7074 = vcmp.eq.s32.totalorder %v7072, 0
  %v7075 = vxor.u32 %v7069, 2147483648
  %v7076 = vsel %vm7074, %v7068, %v7075
  %vm7077 = vcmp.eq.s32.totalorder %v7072, 2
  %v7078 = vxor.u32 %v7068, 2147483648
  %v7079 = vsel %vm7077, %v7078, %v7069
  %v7080 = vsel %vm7073, %v7076, %v7079
  %v7081 = vsel %vm7070, nan, %v7080
  %v7082 = vand.u32 2147483647, %v6459
  %vm7083 = vcmp.le.f32.partialorder %v7082, 0.7853982
  %vm7084 = vcmp.lt.s32.totalorder %v6459, 0
  %v7085 = vand.u32 %v6459, 2139095040
  %v7086 = vshrl.u32 %v7085, 23
  %v7087 = vsub.s32 %v7086, 127
  %v7088 = vand.u32 2147483647, %v6459
  %v7089 = vand.u32 %v7088, 8388607
  %v7090 = vor.u32 %v7089, 8388608
  %v7091 = vsub.s32 0, %v7090
  %v7092 = vadd.s32 %v7087, 1
  %vm7093 = vcmp.gt.s32.totalorder %v7092, 0
  %v7094 = vsel %vm7093, %v7092, 0
  %v7095 = vshrl.u32 %v7094, 5
  %v7096 = vand.u32 %v7094, 31
  %v7097 = vsub.s32 32, %v7096
  %v7098 = vshrl.u32 683565275, %v7097
  %v7099 = vshll.u32 683565275, %v7096
  %v7100 = vshrl.u32 2475754826, %v7097
  %v7101 = vor.u32 %v7099, %v7100
  %v7102 = vshll.u32 2475754826, %v7096
  %v7103 = vshrl.u32 2131351028, %v7097
  %v7104 = vor.u32 %v7102, %v7103
  %v7105 = vshll.u32 2131351028, %v7096
  %v7106 = vshrl.u32 2102212464, %v7097
  %v7107 = vor.u32 %v7105, %v7106
  %v7108 = vshll.u32 2102212464, %v7096
  %v7109 = vshrl.u32 920167782, %v7097
  %v7110 = vor.u32 %v7108, %v7109
  %v7111 = vshll.u32 920167782, %v7096
  %v7112 = vshrl.u32 1326507024, %v7097
  %v7113 = vor.u32 %v7111, %v7112
  %vm7114 = vcmp.lt.s32.totalorder %v7095, 1
  %vm7115 = vcmp.lt.s32.totalorder %v7095, 2
  %vm7116 = vcmp.lt.s32.totalorder %v7095, 3
  %vm7117 = vcmp.lt.s32.totalorder %v7095, 4
  %v7118 = vsel %vm7114, %v7098, %v7101
  %v7119 = vsel %vm7117, %v7107, 2102212464
  %v7120 = vsel %vm7116, %v7104, %v7119
  %v7121 = vsel %vm7115, %v7118, %v7120
  %v7122 = vsel %vm7114, %v7101, %v7104
  %v7123 = vsel %vm7117, %v7110, 920167782
  %v7124 = vsel %vm7116, %v7107, %v7123
  %v7125 = vsel %vm7115, %v7122, %v7124
  %v7126 = vsel %vm7114, %v7104, %v7107
  %v7127 = vsel %vm7117, %v7113, 1326507024
  %v7128 = vsel %vm7116, %v7110, %v7127
  %v7129 = vsel %vm7115, %v7126, %v7128
  %v7130 = vshll.u32 %v7090, 8
  %v7131 = vmul.u32.u64.compose %v7130, %v7129
  %v7132 = vextract.low.u32 %v7131
  %v7133 = vextract.high.u32 %v7131
  %v7134 = vmul.u32.u64.compose %v7130, %v7125
  %v7135 = vextract.low.u32 %v7134
  %v7136 = vextract.high.u32 %v7134
  %v7137 = vmul.u32 %v7130, %v7121
  %v7138 = vadd.s32 %v7133, %v7135
  %vm7139 = vc.u32 %v7133, %v7135
  %v7140 = vadd.s32 %v7136, 1
  %v7141 = vsel %vm7139, %v7140, %v7136
  %v7142 = vadd.s32 %v7137, %v7141
  %v7143 = vadd.s32 %v7142, 536870912
  %v7144 = vshrl.u32 %v7143, 30
  %v7145 = vshll.u32 %v7144, 30
  %v7146 = vsub.s32 %v7142, %v7145
  %vm7147 = vcmp.lt.s32.totalorder %v7146, 0
  %v7148 = vsub.s32 0, %v7146
  %v7149 = vsel %vm7147, %v7148, %v7146
  %v7150 = vclz %v7149
  %v7151 = vsub.s32 %v7150, 2
  %vm7152 = vcmp.gt.s32.totalorder 0, %v7151
  %v7153 = vsel %vm7152, 0, %v7151
  %v7154 = vsub.s32 32, %v7153
  %v7155 = vshll.u32 %v7146, %v7153
  %v7156 = vshrl.u32 %v7138, %v7154
  %v7157 = vor.u32 %v7155, %v7156
  %v7158 = vsub.s32 4294967266, %v7153
  %v7159 = vadd.s32 %v7158, 127
  %v7160 = vshll.u32 %v7159, 23
  %v7161 = vor.u32 4788187, %v7160
  %v7162 = vand.u32 2147483647, %v7161
  %v7164 = vcvt.s32.f32 %v7157
  %v7165 = vmul.f32 %v7164, %v7162
  %v7166 = vxor.u32 %v7165, 2147483648
  %v7167 = vsel %vm7084, %v7166, %v7165
  %v7168 = vsub.s32 4, %v7144
  %v7169 = vsel %vm7084, %v7168, %v7144
  %v7170 = vsel %vm7083, %v6459, %v7167
  %v7171 = vsel %vm7083, 0, %v7169
  %v7172 = vcosq.f32.pop %v7170
  %v7173 = vsinq.f32.pop %v7170
  %vm7174 = vweird.f32 %v6459
  %v7175 = vadd.s32 %v7171, 3
  %v7176 = vand.u32 %v7175, 3
  %vm7177 = vcmp.lt.s32.totalorder %v7176, 2
  %vm7178 = vcmp.eq.s32.totalorder %v7176, 0
  %v7179 = vxor.u32 %v7173, 2147483648
  %v7180 = vsel %vm7178, %v7172, %v7179
  %vm7181 = vcmp.eq.s32.totalorder %v7176, 2
  %v7182 = vxor.u32 %v7172, 2147483648
  %v7183 = vsel %vm7181, %v7182, %v7173
  %v7184 = vsel %vm7177, %v7180, %v7183
  %v7185 = vsel %vm7174, nan, %v7184
  %v7186 = vand.u32 2147483647, %v6546
  %vm7187 = vcmp.le.f32.partialorder %v7186, 0.7853982
  %vm7188 = vcmp.lt.s32.totalorder %v6546, 0
  %v7189 = vand.u32 %v6546, 2139095040
  %v7190 = vshrl.u32 %v7189, 23
  %v7191 = vsub.s32 %v7190, 127
  %v7192 = vand.u32 2147483647, %v6546
  %v7193 = vand.u32 %v7192, 8388607
  %v7194 = vor.u32 %v7193, 8388608
  %v7195 = vsub.s32 0, %v7194
  %v7196 = vadd.s32 %v7191, 1
  %vm7197 = vcmp.gt.s32.totalorder %v7196, 0
  %v7198 = vsel %vm7197, %v7196, 0
  %v7199 = vshrl.u32 %v7198, 5
  %v7200 = vand.u32 %v7198, 31
  %v7201 = vsub.s32 32, %v7200
  %v7202 = vshrl.u32 683565275, %v7201
  %v7203 = vshll.u32 683565275, %v7200
  %v7204 = vshrl.u32 2475754826, %v7201
  %v7205 = vor.u32 %v7203, %v7204
  %v7206 = vshll.u32 2475754826, %v7200
  %v7207 = vshrl.u32 2131351028, %v7201
  %v7208 = vor.u32 %v7206, %v7207
  %v7209 = vshll.u32 2131351028, %v7200
  %v7210 = vshrl.u32 2102212464, %v7201
  %v7211 = vor.u32 %v7209, %v7210
  %v7212 = vshll.u32 2102212464, %v7200
  %v7213 = vshrl.u32 920167782, %v7201
  %v7214 = vor.u32 %v7212, %v7213
  %v7215 = vshll.u32 920167782, %v7200
  %v7216 = vshrl.u32 1326507024, %v7201
  %v7217 = vor.u32 %v7215, %v7216
  %vm7218 = vcmp.lt.s32.totalorder %v7199, 1
  %vm7219 = vcmp.lt.s32.totalorder %v7199, 2
  %vm7220 = vcmp.lt.s32.totalorder %v7199, 3
  %vm7221 = vcmp.lt.s32.totalorder %v7199, 4
  %v7222 = vsel %vm7218, %v7202, %v7205
  %v7223 = vsel %vm7221, %v7211, 2102212464
  %v7224 = vsel %vm7220, %v7208, %v7223
  %v7225 = vsel %vm7219, %v7222, %v7224
  %v7226 = vsel %vm7218, %v7205, %v7208
  %v7227 = vsel %vm7221, %v7214, 920167782
  %v7228 = vsel %vm7220, %v7211, %v7227
  %v7229 = vsel %vm7219, %v7226, %v7228
  %v7230 = vsel %vm7218, %v7208, %v7211
  %v7231 = vsel %vm7221, %v7217, 1326507024
  %v7232 = vsel %vm7220, %v7214, %v7231
  %v7233 = vsel %vm7219, %v7230, %v7232
  %v7234 = vshll.u32 %v7194, 8
  %v7235 = vmul.u32.u64.compose %v7234, %v7233
  %v7236 = vextract.low.u32 %v7235
  %v7237 = vextract.high.u32 %v7235
  %v7238 = vmul.u32.u64.compose %v7234, %v7229
  %v7239 = vextract.low.u32 %v7238
  %v7240 = vextract.high.u32 %v7238
  %v7241 = vmul.u32 %v7234, %v7225
  %v7242 = vadd.s32 %v7237, %v7239
  %vm7243 = vc.u32 %v7237, %v7239
  %v7244 = vadd.s32 %v7240, 1
  %v7245 = vsel %vm7243, %v7244, %v7240
  %v7246 = vadd.s32 %v7241, %v7245
  %v7247 = vadd.s32 %v7246, 536870912
  %v7248 = vshrl.u32 %v7247, 30
  %v7249 = vshll.u32 %v7248, 30
  %v7250 = vsub.s32 %v7246, %v7249
  %vm7251 = vcmp.lt.s32.totalorder %v7250, 0
  %v7252 = vsub.s32 0, %v7250
  %v7253 = vsel %vm7251, %v7252, %v7250
  %v7254 = vclz %v7253
  %v7255 = vsub.s32 %v7254, 2
  %vm7256 = vcmp.gt.s32.totalorder 0, %v7255
  %v7257 = vsel %vm7256, 0, %v7255
  %v7258 = vsub.s32 32, %v7257
  %v7259 = vshll.u32 %v7250, %v7257
  %v7260 = vshrl.u32 %v7242, %v7258
  %v7261 = vor.u32 %v7259, %v7260
  %v7262 = vsub.s32 4294967266, %v7257
  %v7263 = vadd.s32 %v7262, 127
  %v7264 = vshll.u32 %v7263, 23
  %v7265 = vor.u32 4788187, %v7264
  %v7266 = vand.u32 2147483647, %v7265
  %v7268 = vcvt.s32.f32 %v7261
  %v7269 = vmul.f32 %v7268, %v7266
  %v7270 = vxor.u32 %v7269, 2147483648
  %v7271 = vsel %vm7188, %v7270, %v7269
  %v7272 = vsub.s32 4, %v7248
  %v7273 = vsel %vm7188, %v7272, %v7248
  %v7274 = vsel %vm7187, %v6546, %v7271
  %v7275 = vsel %vm7187, 0, %v7273
  %v7276 = vcosq.f32.pop %v7274
  %v7277 = vsinq.f32.pop %v7274
  %vm7278 = vweird.f32 %v6546
  %v7279 = vadd.s32 %v7275, 3
  %v7280 = vand.u32 %v7279, 3
  %vm7281 = vcmp.lt.s32.totalorder %v7280, 2
  %vm7282 = vcmp.eq.s32.totalorder %v7280, 0
  %v7283 = vxor.u32 %v7277, 2147483648
  %v7284 = vsel %vm7282, %v7276, %v7283
  %vm7285 = vcmp.eq.s32.totalorder %v7280, 2
  %v7286 = vxor.u32 %v7276, 2147483648
  %v7287 = vsel %vm7285, %v7286, %v7277
  %v7288 = vsel %vm7281, %v7284, %v7287
  %v7289 = vsel %vm7278, nan, %v7288
  %v7290 = vand.u32 2147483647, %v6548
  %vm7291 = vcmp.le.f32.partialorder %v7290, 0.7853982
  %vm7292 = vcmp.lt.s32.totalorder %v6548, 0
  %v7293 = vand.u32 %v6548, 2139095040
  %v7294 = vshrl.u32 %v7293, 23
  %v7295 = vsub.s32 %v7294, 127
  %v7296 = vand.u32 2147483647, %v6548
  %v7297 = vand.u32 %v7296, 8388607
  %v7298 = vor.u32 %v7297, 8388608
  %v7299 = vsub.s32 0, %v7298
  %v7300 = vadd.s32 %v7295, 1
  %vm7301 = vcmp.gt.s32.totalorder %v7300, 0
  %v7302 = vsel %vm7301, %v7300, 0
  %v7303 = vshrl.u32 %v7302, 5
  %v7304 = vand.u32 %v7302, 31
  %v7305 = vsub.s32 32, %v7304
  %v7306 = vshrl.u32 683565275, %v7305
  %v7307 = vshll.u32 683565275, %v7304
  %v7308 = vshrl.u32 2475754826, %v7305
  %v7309 = vor.u32 %v7307, %v7308
  %v7310 = vshll.u32 2475754826, %v7304
  %v7311 = vshrl.u32 2131351028, %v7305
  %v7312 = vor.u32 %v7310, %v7311
  %v7313 = vshll.u32 2131351028, %v7304
  %v7314 = vshrl.u32 2102212464, %v7305
  %v7315 = vor.u32 %v7313, %v7314
  %v7316 = vshll.u32 2102212464, %v7304
  %v7317 = vshrl.u32 920167782, %v7305
  %v7318 = vor.u32 %v7316, %v7317
  %v7319 = vshll.u32 920167782, %v7304
  %v7320 = vshrl.u32 1326507024, %v7305
  %v7321 = vor.u32 %v7319, %v7320
  %vm7322 = vcmp.lt.s32.totalorder %v7303, 1
  %vm7323 = vcmp.lt.s32.totalorder %v7303, 2
  %vm7324 = vcmp.lt.s32.totalorder %v7303, 3
  %vm7325 = vcmp.lt.s32.totalorder %v7303, 4
  %v7326 = vsel %vm7322, %v7306, %v7309
  %v7327 = vsel %vm7325, %v7315, 2102212464
  %v7328 = vsel %vm7324, %v7312, %v7327
  %v7329 = vsel %vm7323, %v7326, %v7328
  %v7330 = vsel %vm7322, %v7309, %v7312
  %v7331 = vsel %vm7325, %v7318, 920167782
  %v7332 = vsel %vm7324, %v7315, %v7331
  %v7333 = vsel %vm7323, %v7330, %v7332
  %v7334 = vsel %vm7322, %v7312, %v7315
  %v7335 = vsel %vm7325, %v7321, 1326507024
  %v7336 = vsel %vm7324, %v7318, %v7335
  %v7337 = vsel %vm7323, %v7334, %v7336
  %v7338 = vshll.u32 %v7298, 8
  %v7339 = vmul.u32.u64.compose %v7338, %v7337
  %v7340 = vextract.low.u32 %v7339
  %v7341 = vextract.high.u32 %v7339
  %v7342 = vmul.u32.u64.compose %v7338, %v7333
  %v7343 = vextract.low.u32 %v7342
  %v7344 = vextract.high.u32 %v7342
  %v7345 = vmul.u32 %v7338, %v7329
  %v7346 = vadd.s32 %v7341, %v7343
  %vm7347 = vc.u32 %v7341, %v7343
  %v7348 = vadd.s32 %v7344, 1
  %v7349 = vsel %vm7347, %v7348, %v7344
  %v7350 = vadd.s32 %v7345, %v7349
  %v7351 = vadd.s32 %v7350, 536870912
  %v7352 = vshrl.u32 %v7351, 30
  %v7353 = vshll.u32 %v7352, 30
  %v7354 = vsub.s32 %v7350, %v7353
  %vm7355 = vcmp.lt.s32.totalorder %v7354, 0
  %v7356 = vsub.s32 0, %v7354
  %v7357 = vsel %vm7355, %v7356, %v7354
  %v7358 = vclz %v7357
  %v7359 = vsub.s32 %v7358, 2
  %vm7360 = vcmp.gt.s32.totalorder 0, %v7359
  %v7361 = vsel %vm7360, 0, %v7359
  %v7362 = vsub.s32 32, %v7361
  %v7363 = vshll.u32 %v7354, %v7361
  %v7364 = vshrl.u32 %v7346, %v7362
  %v7365 = vor.u32 %v7363, %v7364
  %v7366 = vsub.s32 4294967266, %v7361
  %v7367 = vadd.s32 %v7366, 127
  %v7368 = vshll.u32 %v7367, 23
  %v7369 = vor.u32 4788187, %v7368
  %v7370 = vand.u32 2147483647, %v7369
  %v7372 = vcvt.s32.f32 %v7365
  %v7373 = vmul.f32 %v7372, %v7370
  %v7374 = vxor.u32 %v7373, 2147483648
  %v7375 = vsel %vm7292, %v7374, %v7373
  %v7376 = vsub.s32 4, %v7352
  %v7377 = vsel %vm7292, %v7376, %v7352
  %v7378 = vsel %vm7291, %v6548, %v7375
  %v7379 = vsel %vm7291, 0, %v7377
  %v7380 = vcosq.f32.pop %v7378
  %v7381 = vsinq.f32.pop %v7378
  %vm7382 = vweird.f32 %v6548
  %v7383 = vadd.s32 %v7379, 3
  %v7384 = vand.u32 %v7383, 3
  %vm7385 = vcmp.lt.s32.totalorder %v7384, 2
  %vm7386 = vcmp.eq.s32.totalorder %v7384, 0
  %v7387 = vxor.u32 %v7381, 2147483648
  %v7388 = vsel %vm7386, %v7380, %v7387
  %vm7389 = vcmp.eq.s32.totalorder %v7384, 2
  %v7390 = vxor.u32 %v7380, 2147483648
  %v7391 = vsel %vm7389, %v7390, %v7381
  %v7392 = vsel %vm7385, %v7388, %v7391
  %v7393 = vsel %vm7382, nan, %v7392
  %v7394 = vand.u32 2147483647, %v6463
  %vm7395 = vcmp.le.f32.partialorder %v7394, 0.7853982
  %vm7396 = vcmp.lt.s32.totalorder %v6463, 0
  %v7397 = vand.u32 %v6463, 2139095040
  %v7398 = vshrl.u32 %v7397, 23
  %v7399 = vsub.s32 %v7398, 127
  %v7400 = vand.u32 2147483647, %v6463
  %v7401 = vand.u32 %v7400, 8388607
  %v7402 = vor.u32 %v7401, 8388608
  %v7403 = vsub.s32 0, %v7402
  %v7404 = vadd.s32 %v7399, 1
  %vm7405 = vcmp.gt.s32.totalorder %v7404, 0
  %v7406 = vsel %vm7405, %v7404, 0
  %v7407 = vshrl.u32 %v7406, 5
  %v7408 = vand.u32 %v7406, 31
  %v7409 = vsub.s32 32, %v7408
  %v7410 = vshrl.u32 683565275, %v7409
  %v7411 = vshll.u32 683565275, %v7408
  %v7412 = vshrl.u32 2475754826, %v7409
  %v7413 = vor.u32 %v7411, %v7412
  %v7414 = vshll.u32 2475754826, %v7408
  %v7415 = vshrl.u32 2131351028, %v7409
  %v7416 = vor.u32 %v7414, %v7415
  %v7417 = vshll.u32 2131351028, %v7408
  %v7418 = vshrl.u32 2102212464, %v7409
  %v7419 = vor.u32 %v7417, %v7418
  %v7420 = vshll.u32 2102212464, %v7408
  %v7421 = vshrl.u32 920167782, %v7409
  %v7422 = vor.u32 %v7420, %v7421
  %v7423 = vshll.u32 920167782, %v7408
  %v7424 = vshrl.u32 1326507024, %v7409
  %v7425 = vor.u32 %v7423, %v7424
  %vm7426 = vcmp.lt.s32.totalorder %v7407, 1
  %vm7427 = vcmp.lt.s32.totalorder %v7407, 2
  %vm7428 = vcmp.lt.s32.totalorder %v7407, 3
  %vm7429 = vcmp.lt.s32.totalorder %v7407, 4
  %v7430 = vsel %vm7426, %v7410, %v7413
  %v7431 = vsel %vm7429, %v7419, 2102212464
  %v7432 = vsel %vm7428, %v7416, %v7431
  %v7433 = vsel %vm7427, %v7430, %v7432
  %v7434 = vsel %vm7426, %v7413, %v7416
  %v7435 = vsel %vm7429, %v7422, 920167782
  %v7436 = vsel %vm7428, %v7419, %v7435
  %v7437 = vsel %vm7427, %v7434, %v7436
  %v7438 = vsel %vm7426, %v7416, %v7419
  %v7439 = vsel %vm7429, %v7425, 1326507024
  %v7440 = vsel %vm7428, %v7422, %v7439
  %v7441 = vsel %vm7427, %v7438, %v7440
  %v7442 = vshll.u32 %v7402, 8
  %v7443 = vmul.u32.u64.compose %v7442, %v7441
  %v7444 = vextract.low.u32 %v7443
  %v7445 = vextract.high.u32 %v7443
  %v7446 = vmul.u32.u64.compose %v7442, %v7437
  %v7447 = vextract.low.u32 %v7446
  %v7448 = vextract.high.u32 %v7446
  %v7449 = vmul.u32 %v7442, %v7433
  %v7450 = vadd.s32 %v7445, %v7447
  %vm7451 = vc.u32 %v7445, %v7447
  %v7452 = vadd.s32 %v7448, 1
  %v7453 = vsel %vm7451, %v7452, %v7448
  %v7454 = vadd.s32 %v7449, %v7453
  %v7455 = vadd.s32 %v7454, 536870912
  %v7456 = vshrl.u32 %v7455, 30
  %v7457 = vshll.u32 %v7456, 30
  %v7458 = vsub.s32 %v7454, %v7457
  %vm7459 = vcmp.lt.s32.totalorder %v7458, 0
  %v7460 = vsub.s32 0, %v7458
  %v7461 = vsel %vm7459, %v7460, %v7458
  %v7462 = vclz %v7461
  %v7463 = vsub.s32 %v7462, 2
  %vm7464 = vcmp.gt.s32.totalorder 0, %v7463
  %v7465 = vsel %vm7464, 0, %v7463
  %v7466 = vsub.s32 32, %v7465
  %v7467 = vshll.u32 %v7458, %v7465
  %v7468 = vshrl.u32 %v7450, %v7466
  %v7469 = vor.u32 %v7467, %v7468
  %v7470 = vsub.s32 4294967266, %v7465
  %v7471 = vadd.s32 %v7470, 127
  %v7472 = vshll.u32 %v7471, 23
  %v7473 = vor.u32 4788187, %v7472
  %v7474 = vand.u32 2147483647, %v7473
  %v7476 = vcvt.s32.f32 %v7469
  %v7477 = vmul.f32 %v7476, %v7474
  %v7478 = vxor.u32 %v7477, 2147483648
  %v7479 = vsel %vm7396, %v7478, %v7477
  %v7480 = vsub.s32 4, %v7456
  %v7481 = vsel %vm7396, %v7480, %v7456
  %v7482 = vsel %vm7395, %v6463, %v7479
  %v7483 = vsel %vm7395, 0, %v7481
  %v7484 = vcosq.f32.pop %v7482
  %v7485 = vsinq.f32.pop %v7482
  %vm7486 = vweird.f32 %v6463
  %v7487 = vadd.s32 %v7483, 3
  %v7488 = vand.u32 %v7487, 3
  %vm7489 = vcmp.lt.s32.totalorder %v7488, 2
  %vm7490 = vcmp.eq.s32.totalorder %v7488, 0
  %v7491 = vxor.u32 %v7485, 2147483648
  %v7492 = vsel %vm7490, %v7484, %v7491
  %vm7493 = vcmp.eq.s32.totalorder %v7488, 2
  %v7494 = vxor.u32 %v7484, 2147483648
  %v7495 = vsel %vm7493, %v7494, %v7485
  %v7496 = vsel %vm7489, %v7492, %v7495
  %v7497 = vsel %vm7486, nan, %v7496
  %v7498 = vand.u32 2147483647, %v6465
  %vm7499 = vcmp.le.f32.partialorder %v7498, 0.7853982
  %vm7500 = vcmp.lt.s32.totalorder %v6465, 0
  %v7501 = vand.u32 %v6465, 2139095040
  %v7502 = vshrl.u32 %v7501, 23
  %v7503 = vsub.s32 %v7502, 127
  %v7504 = vand.u32 2147483647, %v6465
  %v7505 = vand.u32 %v7504, 8388607
  %v7506 = vor.u32 %v7505, 8388608
  %v7507 = vsub.s32 0, %v7506
  %v7508 = vadd.s32 %v7503, 1
  %vm7509 = vcmp.gt.s32.totalorder %v7508, 0
  %v7510 = vsel %vm7509, %v7508, 0
  %v7511 = vshrl.u32 %v7510, 5
  %v7512 = vand.u32 %v7510, 31
  %v7513 = vsub.s32 32, %v7512
  %v7514 = vshrl.u32 683565275, %v7513
  %v7515 = vshll.u32 683565275, %v7512
  %v7516 = vshrl.u32 2475754826, %v7513
  %v7517 = vor.u32 %v7515, %v7516
  %v7518 = vshll.u32 2475754826, %v7512
  %v7519 = vshrl.u32 2131351028, %v7513
  %v7520 = vor.u32 %v7518, %v7519
  %v7521 = vshll.u32 2131351028, %v7512
  %v7522 = vshrl.u32 2102212464, %v7513
  %v7523 = vor.u32 %v7521, %v7522
  %v7524 = vshll.u32 2102212464, %v7512
  %v7525 = vshrl.u32 920167782, %v7513
  %v7526 = vor.u32 %v7524, %v7525
  %v7527 = vshll.u32 920167782, %v7512
  %v7528 = vshrl.u32 1326507024, %v7513
  %v7529 = vor.u32 %v7527, %v7528
  %vm7530 = vcmp.lt.s32.totalorder %v7511, 1
  %vm7531 = vcmp.lt.s32.totalorder %v7511, 2
  %vm7532 = vcmp.lt.s32.totalorder %v7511, 3
  %vm7533 = vcmp.lt.s32.totalorder %v7511, 4
  %v7534 = vsel %vm7530, %v7514, %v7517
  %v7535 = vsel %vm7533, %v7523, 2102212464
  %v7536 = vsel %vm7532, %v7520, %v7535
  %v7537 = vsel %vm7531, %v7534, %v7536
  %v7538 = vsel %vm7530, %v7517, %v7520
  %v7539 = vsel %vm7533, %v7526, 920167782
  %v7540 = vsel %vm7532, %v7523, %v7539
  %v7541 = vsel %vm7531, %v7538, %v7540
  %v7542 = vsel %vm7530, %v7520, %v7523
  %v7543 = vsel %vm7533, %v7529, 1326507024
  %v7544 = vsel %vm7532, %v7526, %v7543
  %v7545 = vsel %vm7531, %v7542, %v7544
  %v7546 = vshll.u32 %v7506, 8
  %v7547 = vmul.u32.u64.compose %v7546, %v7545
  %v7548 = vextract.low.u32 %v7547
  %v7549 = vextract.high.u32 %v7547
  %v7550 = vmul.u32.u64.compose %v7546, %v7541
  %v7551 = vextract.low.u32 %v7550
  %v7552 = vextract.high.u32 %v7550
  %v7553 = vmul.u32 %v7546, %v7537
  %v7554 = vadd.s32 %v7549, %v7551
  %vm7555 = vc.u32 %v7549, %v7551
  %v7556 = vadd.s32 %v7552, 1
  %v7557 = vsel %vm7555, %v7556, %v7552
  %v7558 = vadd.s32 %v7553, %v7557
  %v7559 = vadd.s32 %v7558, 536870912
  %v7560 = vshrl.u32 %v7559, 30
  %v7561 = vshll.u32 %v7560, 30
  %v7562 = vsub.s32 %v7558, %v7561
  %vm7563 = vcmp.lt.s32.totalorder %v7562, 0
  %v7564 = vsub.s32 0, %v7562
  %v7565 = vsel %vm7563, %v7564, %v7562
  %v7566 = vclz %v7565
  %v7567 = vsub.s32 %v7566, 2
  %vm7568 = vcmp.gt.s32.totalorder 0, %v7567
  %v7569 = vsel %vm7568, 0, %v7567
  %v7570 = vsub.s32 32, %v7569
  %v7571 = vshll.u32 %v7562, %v7569
  %v7572 = vshrl.u32 %v7554, %v7570
  %v7573 = vor.u32 %v7571, %v7572
  %v7574 = vsub.s32 4294967266, %v7569
  %v7575 = vadd.s32 %v7574, 127
  %v7576 = vshll.u32 %v7575, 23
  %v7577 = vor.u32 4788187, %v7576
  %v7578 = vand.u32 2147483647, %v7577
  %v7580 = vcvt.s32.f32 %v7573
  %v7581 = vmul.f32 %v7580, %v7578
  %v7582 = vxor.u32 %v7581, 2147483648
  %v7583 = vsel %vm7500, %v7582, %v7581
  %v7584 = vsub.s32 4, %v7560
  %v7585 = vsel %vm7500, %v7584, %v7560
  %v7586 = vsel %vm7499, %v6465, %v7583
  %v7587 = vsel %vm7499, 0, %v7585
  %v7588 = vcosq.f32.pop %v7586
  %v7589 = vsinq.f32.pop %v7586
  %vm7590 = vweird.f32 %v6465
  %v7591 = vadd.s32 %v7587, 3
  %v7592 = vand.u32 %v7591, 3
  %vm7593 = vcmp.lt.s32.totalorder %v7592, 2
  %vm7594 = vcmp.eq.s32.totalorder %v7592, 0
  %v7595 = vxor.u32 %v7589, 2147483648
  %v7596 = vsel %vm7594, %v7588, %v7595
  %vm7597 = vcmp.eq.s32.totalorder %v7592, 2
  %v7598 = vxor.u32 %v7588, 2147483648
  %v7599 = vsel %vm7597, %v7598, %v7589
  %v7600 = vsel %vm7593, %v7596, %v7599
  %v7601 = vsel %vm7590, nan, %v7600
  %v7602 = vand.u32 2147483647, %v6552
  %vm7603 = vcmp.le.f32.partialorder %v7602, 0.7853982
  %vm7604 = vcmp.lt.s32.totalorder %v6552, 0
  %v7605 = vand.u32 %v6552, 2139095040
  %v7606 = vshrl.u32 %v7605, 23
  %v7607 = vsub.s32 %v7606, 127
  %v7608 = vand.u32 2147483647, %v6552
  %v7609 = vand.u32 %v7608, 8388607
  %v7610 = vor.u32 %v7609, 8388608
  %v7611 = vsub.s32 0, %v7610
  %v7612 = vadd.s32 %v7607, 1
  %vm7613 = vcmp.gt.s32.totalorder %v7612, 0
  %v7614 = vsel %vm7613, %v7612, 0
  %v7615 = vshrl.u32 %v7614, 5
  %v7616 = vand.u32 %v7614, 31
  %v7617 = vsub.s32 32, %v7616
  %v7618 = vshrl.u32 683565275, %v7617
  %v7619 = vshll.u32 683565275, %v7616
  %v7620 = vshrl.u32 2475754826, %v7617
  %v7621 = vor.u32 %v7619, %v7620
  %v7622 = vshll.u32 2475754826, %v7616
  %v7623 = vshrl.u32 2131351028, %v7617
  %v7624 = vor.u32 %v7622, %v7623
  %v7625 = vshll.u32 2131351028, %v7616
  %v7626 = vshrl.u32 2102212464, %v7617
  %v7627 = vor.u32 %v7625, %v7626
  %v7628 = vshll.u32 2102212464, %v7616
  %v7629 = vshrl.u32 920167782, %v7617
  %v7630 = vor.u32 %v7628, %v7629
  %v7631 = vshll.u32 920167782, %v7616
  %v7632 = vshrl.u32 1326507024, %v7617
  %v7633 = vor.u32 %v7631, %v7632
  %vm7634 = vcmp.lt.s32.totalorder %v7615, 1
  %vm7635 = vcmp.lt.s32.totalorder %v7615, 2
  %vm7636 = vcmp.lt.s32.totalorder %v7615, 3
  %vm7637 = vcmp.lt.s32.totalorder %v7615, 4
  %v7638 = vsel %vm7634, %v7618, %v7621
  %v7639 = vsel %vm7637, %v7627, 2102212464
  %v7640 = vsel %vm7636, %v7624, %v7639
  %v7641 = vsel %vm7635, %v7638, %v7640
  %v7642 = vsel %vm7634, %v7621, %v7624
  %v7643 = vsel %vm7637, %v7630, 920167782
  %v7644 = vsel %vm7636, %v7627, %v7643
  %v7645 = vsel %vm7635, %v7642, %v7644
  %v7646 = vsel %vm7634, %v7624, %v7627
  %v7647 = vsel %vm7637, %v7633, 1326507024
  %v7648 = vsel %vm7636, %v7630, %v7647
  %v7649 = vsel %vm7635, %v7646, %v7648
  %v7650 = vshll.u32 %v7610, 8
  %v7651 = vmul.u32.u64.compose %v7650, %v7649
  %v7652 = vextract.low.u32 %v7651
  %v7653 = vextract.high.u32 %v7651
  %v7654 = vmul.u32.u64.compose %v7650, %v7645
  %v7655 = vextract.low.u32 %v7654
  %v7656 = vextract.high.u32 %v7654
  %v7657 = vmul.u32 %v7650, %v7641
  %v7658 = vadd.s32 %v7653, %v7655
  %vm7659 = vc.u32 %v7653, %v7655
  %v7660 = vadd.s32 %v7656, 1
  %v7661 = vsel %vm7659, %v7660, %v7656
  %v7662 = vadd.s32 %v7657, %v7661
  %v7663 = vadd.s32 %v7662, 536870912
  %v7664 = vshrl.u32 %v7663, 30
  %v7665 = vshll.u32 %v7664, 30
  %v7666 = vsub.s32 %v7662, %v7665
  %vm7667 = vcmp.lt.s32.totalorder %v7666, 0
  %v7668 = vsub.s32 0, %v7666
  %v7669 = vsel %vm7667, %v7668, %v7666
  %v7670 = vclz %v7669
  %v7671 = vsub.s32 %v7670, 2
  %vm7672 = vcmp.gt.s32.totalorder 0, %v7671
  %v7673 = vsel %vm7672, 0, %v7671
  %v7674 = vsub.s32 32, %v7673
  %v7675 = vshll.u32 %v7666, %v7673
  %v7676 = vshrl.u32 %v7658, %v7674
  %v7677 = vor.u32 %v7675, %v7676
  %v7678 = vsub.s32 4294967266, %v7673
  %v7679 = vadd.s32 %v7678, 127
  %v7680 = vshll.u32 %v7679, 23
  %v7681 = vor.u32 4788187, %v7680
  %v7682 = vand.u32 2147483647, %v7681
  %v7684 = vcvt.s32.f32 %v7677
  %v7685 = vmul.f32 %v7684, %v7682
  %v7686 = vxor.u32 %v7685, 2147483648
  %v7687 = vsel %vm7604, %v7686, %v7685
  %v7688 = vsub.s32 4, %v7664
  %v7689 = vsel %vm7604, %v7688, %v7664
  %v7690 = vsel %vm7603, %v6552, %v7687
  %v7691 = vsel %vm7603, 0, %v7689
  %v7692 = vcosq.f32.pop %v7690
  %v7693 = vsinq.f32.pop %v7690
  %vm7694 = vweird.f32 %v6552
  %v7695 = vadd.s32 %v7691, 3
  %v7696 = vand.u32 %v7695, 3
  %vm7697 = vcmp.lt.s32.totalorder %v7696, 2
  %vm7698 = vcmp.eq.s32.totalorder %v7696, 0
  %v7699 = vxor.u32 %v7693, 2147483648
  %v7700 = vsel %vm7698, %v7692, %v7699
  %vm7701 = vcmp.eq.s32.totalorder %v7696, 2
  %v7702 = vxor.u32 %v7692, 2147483648
  %v7703 = vsel %vm7701, %v7702, %v7693
  %v7704 = vsel %vm7697, %v7700, %v7703
  %v7705 = vsel %vm7694, nan, %v7704
  %v7706 = vand.u32 2147483647, %v6554
  %vm7707 = vcmp.le.f32.partialorder %v7706, 0.7853982
  %vm7708 = vcmp.lt.s32.totalorder %v6554, 0
  %v7709 = vand.u32 %v6554, 2139095040
  %v7710 = vshrl.u32 %v7709, 23
  %v7711 = vsub.s32 %v7710, 127
  %v7712 = vand.u32 2147483647, %v6554
  %v7713 = vand.u32 %v7712, 8388607
  %v7714 = vor.u32 %v7713, 8388608
  %v7715 = vsub.s32 0, %v7714
  %v7716 = vadd.s32 %v7711, 1
  %vm7717 = vcmp.gt.s32.totalorder %v7716, 0
  %v7718 = vsel %vm7717, %v7716, 0
  %v7719 = vshrl.u32 %v7718, 5
  %v7720 = vand.u32 %v7718, 31
  %v7721 = vsub.s32 32, %v7720
  %v7722 = vshrl.u32 683565275, %v7721
  %v7723 = vshll.u32 683565275, %v7720
  %v7724 = vshrl.u32 2475754826, %v7721
  %v7725 = vor.u32 %v7723, %v7724
  %v7726 = vshll.u32 2475754826, %v7720
  %v7727 = vshrl.u32 2131351028, %v7721
  %v7728 = vor.u32 %v7726, %v7727
  %v7729 = vshll.u32 2131351028, %v7720
  %v7730 = vshrl.u32 2102212464, %v7721
  %v7731 = vor.u32 %v7729, %v7730
  %v7732 = vshll.u32 2102212464, %v7720
  %v7733 = vshrl.u32 920167782, %v7721
  %v7734 = vor.u32 %v7732, %v7733
  %v7735 = vshll.u32 920167782, %v7720
  %v7736 = vshrl.u32 1326507024, %v7721
  %v7737 = vor.u32 %v7735, %v7736
  %vm7738 = vcmp.lt.s32.totalorder %v7719, 1
  %vm7739 = vcmp.lt.s32.totalorder %v7719, 2
  %vm7740 = vcmp.lt.s32.totalorder %v7719, 3
  %vm7741 = vcmp.lt.s32.totalorder %v7719, 4
  %v7742 = vsel %vm7738, %v7722, %v7725
  %v7743 = vsel %vm7741, %v7731, 2102212464
  %v7744 = vsel %vm7740, %v7728, %v7743
  %v7745 = vsel %vm7739, %v7742, %v7744
  %v7746 = vsel %vm7738, %v7725, %v7728
  %v7747 = vsel %vm7741, %v7734, 920167782
  %v7748 = vsel %vm7740, %v7731, %v7747
  %v7749 = vsel %vm7739, %v7746, %v7748
  %v7750 = vsel %vm7738, %v7728, %v7731
  %v7751 = vsel %vm7741, %v7737, 1326507024
  %v7752 = vsel %vm7740, %v7734, %v7751
  %v7753 = vsel %vm7739, %v7750, %v7752
  %v7754 = vshll.u32 %v7714, 8
  %v7755 = vmul.u32.u64.compose %v7754, %v7753
  %v7756 = vextract.low.u32 %v7755
  %v7757 = vextract.high.u32 %v7755
  %v7758 = vmul.u32.u64.compose %v7754, %v7749
  %v7759 = vextract.low.u32 %v7758
  %v7760 = vextract.high.u32 %v7758
  %v7761 = vmul.u32 %v7754, %v7745
  %v7762 = vadd.s32 %v7757, %v7759
  %vm7763 = vc.u32 %v7757, %v7759
  %v7764 = vadd.s32 %v7760, 1
  %v7765 = vsel %vm7763, %v7764, %v7760
  %v7766 = vadd.s32 %v7761, %v7765
  %v7767 = vadd.s32 %v7766, 536870912
  %v7768 = vshrl.u32 %v7767, 30
  %v7769 = vshll.u32 %v7768, 30
  %v7770 = vsub.s32 %v7766, %v7769
  %vm7771 = vcmp.lt.s32.totalorder %v7770, 0
  %v7772 = vsub.s32 0, %v7770
  %v7773 = vsel %vm7771, %v7772, %v7770
  %v7774 = vclz %v7773
  %v7775 = vsub.s32 %v7774, 2
  %vm7776 = vcmp.gt.s32.totalorder 0, %v7775
  %v7777 = vsel %vm7776, 0, %v7775
  %v7778 = vsub.s32 32, %v7777
  %v7779 = vshll.u32 %v7770, %v7777
  %v7780 = vshrl.u32 %v7762, %v7778
  %v7781 = vor.u32 %v7779, %v7780
  %v7782 = vsub.s32 4294967266, %v7777
  %v7783 = vadd.s32 %v7782, 127
  %v7784 = vshll.u32 %v7783, 23
  %v7785 = vor.u32 4788187, %v7784
  %v7786 = vand.u32 2147483647, %v7785
  %v7788 = vcvt.s32.f32 %v7781
  %v7789 = vmul.f32 %v7788, %v7786
  %v7790 = vxor.u32 %v7789, 2147483648
  %v7791 = vsel %vm7708, %v7790, %v7789
  %v7792 = vsub.s32 4, %v7768
  %v7793 = vsel %vm7708, %v7792, %v7768
  %v7794 = vsel %vm7707, %v6554, %v7791
  %v7795 = vsel %vm7707, 0, %v7793
  %v7796 = vcosq.f32.pop %v7794
  %v7797 = vsinq.f32.pop %v7794
  %vm7798 = vweird.f32 %v6554
  %v7799 = vadd.s32 %v7795, 3
  %v7800 = vand.u32 %v7799, 3
  %vm7801 = vcmp.lt.s32.totalorder %v7800, 2
  %vm7802 = vcmp.eq.s32.totalorder %v7800, 0
  %v7803 = vxor.u32 %v7797, 2147483648
  %v7804 = vsel %vm7802, %v7796, %v7803
  %vm7805 = vcmp.eq.s32.totalorder %v7800, 2
  %v7806 = vxor.u32 %v7796, 2147483648
  %v7807 = vsel %vm7805, %v7806, %v7797
  %v7808 = vsel %vm7801, %v7804, %v7807
  %v7809 = vsel %vm7798, nan, %v7808
  %v7810 = vand.u32 2147483647, %v6469
  %vm7811 = vcmp.le.f32.partialorder %v7810, 0.7853982
  %vm7812 = vcmp.lt.s32.totalorder %v6469, 0
  %v7813 = vand.u32 %v6469, 2139095040
  %v7814 = vshrl.u32 %v7813, 23
  %v7815 = vsub.s32 %v7814, 127
  %v7816 = vand.u32 2147483647, %v6469
  %v7817 = vand.u32 %v7816, 8388607
  %v7818 = vor.u32 %v7817, 8388608
  %v7819 = vsub.s32 0, %v7818
  %v7820 = vadd.s32 %v7815, 1
  %vm7821 = vcmp.gt.s32.totalorder %v7820, 0
  %v7822 = vsel %vm7821, %v7820, 0
  %v7823 = vshrl.u32 %v7822, 5
  %v7824 = vand.u32 %v7822, 31
  %v7825 = vsub.s32 32, %v7824
  %v7826 = vshrl.u32 683565275, %v7825
  %v7827 = vshll.u32 683565275, %v7824
  %v7828 = vshrl.u32 2475754826, %v7825
  %v7829 = vor.u32 %v7827, %v7828
  %v7830 = vshll.u32 2475754826, %v7824
  %v7831 = vshrl.u32 2131351028, %v7825
  %v7832 = vor.u32 %v7830, %v7831
  %v7833 = vshll.u32 2131351028, %v7824
  %v7834 = vshrl.u32 2102212464, %v7825
  %v7835 = vor.u32 %v7833, %v7834
  %v7836 = vshll.u32 2102212464, %v7824
  %v7837 = vshrl.u32 920167782, %v7825
  %v7838 = vor.u32 %v7836, %v7837
  %v7839 = vshll.u32 920167782, %v7824
  %v7840 = vshrl.u32 1326507024, %v7825
  %v7841 = vor.u32 %v7839, %v7840
  %vm7842 = vcmp.lt.s32.totalorder %v7823, 1
  %vm7843 = vcmp.lt.s32.totalorder %v7823, 2
  %vm7844 = vcmp.lt.s32.totalorder %v7823, 3
  %vm7845 = vcmp.lt.s32.totalorder %v7823, 4
  %v7846 = vsel %vm7842, %v7826, %v7829
  %v7847 = vsel %vm7845, %v7835, 2102212464
  %v7848 = vsel %vm7844, %v7832, %v7847
  %v7849 = vsel %vm7843, %v7846, %v7848
  %v7850 = vsel %vm7842, %v7829, %v7832
  %v7851 = vsel %vm7845, %v7838, 920167782
  %v7852 = vsel %vm7844, %v7835, %v7851
  %v7853 = vsel %vm7843, %v7850, %v7852
  %v7854 = vsel %vm7842, %v7832, %v7835
  %v7855 = vsel %vm7845, %v7841, 1326507024
  %v7856 = vsel %vm7844, %v7838, %v7855
  %v7857 = vsel %vm7843, %v7854, %v7856
  %v7858 = vshll.u32 %v7818, 8
  %v7859 = vmul.u32.u64.compose %v7858, %v7857
  %v7860 = vextract.low.u32 %v7859
  %v7861 = vextract.high.u32 %v7859
  %v7862 = vmul.u32.u64.compose %v7858, %v7853
  %v7863 = vextract.low.u32 %v7862
  %v7864 = vextract.high.u32 %v7862
  %v7865 = vmul.u32 %v7858, %v7849
  %v7866 = vadd.s32 %v7861, %v7863
  %vm7867 = vc.u32 %v7861, %v7863
  %v7868 = vadd.s32 %v7864, 1
  %v7869 = vsel %vm7867, %v7868, %v7864
  %v7870 = vadd.s32 %v7865, %v7869
  %v7871 = vadd.s32 %v7870, 536870912
  %v7872 = vshrl.u32 %v7871, 30
  %v7873 = vshll.u32 %v7872, 30
  %v7874 = vsub.s32 %v7870, %v7873
  %vm7875 = vcmp.lt.s32.totalorder %v7874, 0
  %v7876 = vsub.s32 0, %v7874
  %v7877 = vsel %vm7875, %v7876, %v7874
  %v7878 = vclz %v7877
  %v7879 = vsub.s32 %v7878, 2
  %vm7880 = vcmp.gt.s32.totalorder 0, %v7879
  %v7881 = vsel %vm7880, 0, %v7879
  %v7882 = vsub.s32 32, %v7881
  %v7883 = vshll.u32 %v7874, %v7881
  %v7884 = vshrl.u32 %v7866, %v7882
  %v7885 = vor.u32 %v7883, %v7884
  %v7886 = vsub.s32 4294967266, %v7881
  %v7887 = vadd.s32 %v7886, 127
  %v7888 = vshll.u32 %v7887, 23
  %v7889 = vor.u32 4788187, %v7888
  %v7890 = vand.u32 2147483647, %v7889
  %v7892 = vcvt.s32.f32 %v7885
  %v7893 = vmul.f32 %v7892, %v7890
  %v7894 = vxor.u32 %v7893, 2147483648
  %v7895 = vsel %vm7812, %v7894, %v7893
  %v7896 = vsub.s32 4, %v7872
  %v7897 = vsel %vm7812, %v7896, %v7872
  %v7898 = vsel %vm7811, %v6469, %v7895
  %v7899 = vsel %vm7811, 0, %v7897
  %v7900 = vcosq.f32.pop %v7898
  %v7901 = vsinq.f32.pop %v7898
  %vm7902 = vweird.f32 %v6469
  %v7903 = vadd.s32 %v7899, 3
  %v7904 = vand.u32 %v7903, 3
  %vm7905 = vcmp.lt.s32.totalorder %v7904, 2
  %vm7906 = vcmp.eq.s32.totalorder %v7904, 0
  %v7907 = vxor.u32 %v7901, 2147483648
  %v7908 = vsel %vm7906, %v7900, %v7907
  %vm7909 = vcmp.eq.s32.totalorder %v7904, 2
  %v7910 = vxor.u32 %v7900, 2147483648
  %v7911 = vsel %vm7909, %v7910, %v7901
  %v7912 = vsel %vm7905, %v7908, %v7911
  %v7913 = vsel %vm7902, nan, %v7912
  %v7914 = vand.u32 2147483647, %v6471
  %vm7915 = vcmp.le.f32.partialorder %v7914, 0.7853982
  %vm7916 = vcmp.lt.s32.totalorder %v6471, 0
  %v7917 = vand.u32 %v6471, 2139095040
  %v7918 = vshrl.u32 %v7917, 23
  %v7919 = vsub.s32 %v7918, 127
  %v7920 = vand.u32 2147483647, %v6471
  %v7921 = vand.u32 %v7920, 8388607
  %v7922 = vor.u32 %v7921, 8388608
  %v7923 = vsub.s32 0, %v7922
  %v7924 = vadd.s32 %v7919, 1
  %vm7925 = vcmp.gt.s32.totalorder %v7924, 0
  %v7926 = vsel %vm7925, %v7924, 0
  %v7927 = vshrl.u32 %v7926, 5
  %v7928 = vand.u32 %v7926, 31
  %v7929 = vsub.s32 32, %v7928
  %v7930 = vshrl.u32 683565275, %v7929
  %v7931 = vshll.u32 683565275, %v7928
  %v7932 = vshrl.u32 2475754826, %v7929
  %v7933 = vor.u32 %v7931, %v7932
  %v7934 = vshll.u32 2475754826, %v7928
  %v7935 = vshrl.u32 2131351028, %v7929
  %v7936 = vor.u32 %v7934, %v7935
  %v7937 = vshll.u32 2131351028, %v7928
  %v7938 = vshrl.u32 2102212464, %v7929
  %v7939 = vor.u32 %v7937, %v7938
  %v7940 = vshll.u32 2102212464, %v7928
  %v7941 = vshrl.u32 920167782, %v7929
  %v7942 = vor.u32 %v7940, %v7941
  %v7943 = vshll.u32 920167782, %v7928
  %v7944 = vshrl.u32 1326507024, %v7929
  %v7945 = vor.u32 %v7943, %v7944
  %vm7946 = vcmp.lt.s32.totalorder %v7927, 1
  %vm7947 = vcmp.lt.s32.totalorder %v7927, 2
  %vm7948 = vcmp.lt.s32.totalorder %v7927, 3
  %vm7949 = vcmp.lt.s32.totalorder %v7927, 4
  %v7950 = vsel %vm7946, %v7930, %v7933
  %v7951 = vsel %vm7949, %v7939, 2102212464
  %v7952 = vsel %vm7948, %v7936, %v7951
  %v7953 = vsel %vm7947, %v7950, %v7952
  %v7954 = vsel %vm7946, %v7933, %v7936
  %v7955 = vsel %vm7949, %v7942, 920167782
  %v7956 = vsel %vm7948, %v7939, %v7955
  %v7957 = vsel %vm7947, %v7954, %v7956
  %v7958 = vsel %vm7946, %v7936, %v7939
  %v7959 = vsel %vm7949, %v7945, 1326507024
  %v7960 = vsel %vm7948, %v7942, %v7959
  %v7961 = vsel %vm7947, %v7958, %v7960
  %v7962 = vshll.u32 %v7922, 8
  %v7963 = vmul.u32.u64.compose %v7962, %v7961
  %v7964 = vextract.low.u32 %v7963
  %v7965 = vextract.high.u32 %v7963
  %v7966 = vmul.u32.u64.compose %v7962, %v7957
  %v7967 = vextract.low.u32 %v7966
  %v7968 = vextract.high.u32 %v7966
  %v7969 = vmul.u32 %v7962, %v7953
  %v7970 = vadd.s32 %v7965, %v7967
  %vm7971 = vc.u32 %v7965, %v7967
  %v7972 = vadd.s32 %v7968, 1
  %v7973 = vsel %vm7971, %v7972, %v7968
  %v7974 = vadd.s32 %v7969, %v7973
  %v7975 = vadd.s32 %v7974, 536870912
  %v7976 = vshrl.u32 %v7975, 30
  %v7977 = vshll.u32 %v7976, 30
  %v7978 = vsub.s32 %v7974, %v7977
  %vm7979 = vcmp.lt.s32.totalorder %v7978, 0
  %v7980 = vsub.s32 0, %v7978
  %v7981 = vsel %vm7979, %v7980, %v7978
  %v7982 = vclz %v7981
  %v7983 = vsub.s32 %v7982, 2
  %vm7984 = vcmp.gt.s32.totalorder 0, %v7983
  %v7985 = vsel %vm7984, 0, %v7983
  %v7986 = vsub.s32 32, %v7985
  %v7987 = vshll.u32 %v7978, %v7985
  %v7988 = vshrl.u32 %v7970, %v7986
  %v7989 = vor.u32 %v7987, %v7988
  %v7990 = vsub.s32 4294967266, %v7985
  %v7991 = vadd.s32 %v7990, 127
  %v7992 = vshll.u32 %v7991, 23
  %v7993 = vor.u32 4788187, %v7992
  %v7994 = vand.u32 2147483647, %v7993
  %v7996 = vcvt.s32.f32 %v7989
  %v7997 = vmul.f32 %v7996, %v7994
  %v7998 = vxor.u32 %v7997, 2147483648
  %v7999 = vsel %vm7916, %v7998, %v7997
  %v8000 = vsub.s32 4, %v7976
  %v8001 = vsel %vm7916, %v8000, %v7976
  %v8002 = vsel %vm7915, %v6471, %v7999
  %v8003 = vsel %vm7915, 0, %v8001
  %v8004 = vcosq.f32.pop %v8002
  %v8005 = vsinq.f32.pop %v8002
  %vm8006 = vweird.f32 %v6471
  %v8007 = vadd.s32 %v8003, 3
  %v8008 = vand.u32 %v8007, 3
  %vm8009 = vcmp.lt.s32.totalorder %v8008, 2
  %vm8010 = vcmp.eq.s32.totalorder %v8008, 0
  %v8011 = vxor.u32 %v8005, 2147483648
  %v8012 = vsel %vm8010, %v8004, %v8011
  %vm8013 = vcmp.eq.s32.totalorder %v8008, 2
  %v8014 = vxor.u32 %v8004, 2147483648
  %v8015 = vsel %vm8013, %v8014, %v8005
  %v8016 = vsel %vm8009, %v8012, %v8015
  %v8017 = vsel %vm8006, nan, %v8016
  %v8018 = vand.u32 2147483647, %v6558
  %vm8019 = vcmp.le.f32.partialorder %v8018, 0.7853982
  %vm8020 = vcmp.lt.s32.totalorder %v6558, 0
  %v8021 = vand.u32 %v6558, 2139095040
  %v8022 = vshrl.u32 %v8021, 23
  %v8023 = vsub.s32 %v8022, 127
  %v8024 = vand.u32 2147483647, %v6558
  %v8025 = vand.u32 %v8024, 8388607
  %v8026 = vor.u32 %v8025, 8388608
  %v8027 = vsub.s32 0, %v8026
  %v8028 = vadd.s32 %v8023, 1
  %vm8029 = vcmp.gt.s32.totalorder %v8028, 0
  %v8030 = vsel %vm8029, %v8028, 0
  %v8031 = vshrl.u32 %v8030, 5
  %v8032 = vand.u32 %v8030, 31
  %v8033 = vsub.s32 32, %v8032
  %v8034 = vshrl.u32 683565275, %v8033
  %v8035 = vshll.u32 683565275, %v8032
  %v8036 = vshrl.u32 2475754826, %v8033
  %v8037 = vor.u32 %v8035, %v8036
  %v8038 = vshll.u32 2475754826, %v8032
  %v8039 = vshrl.u32 2131351028, %v8033
  %v8040 = vor.u32 %v8038, %v8039
  %v8041 = vshll.u32 2131351028, %v8032
  %v8042 = vshrl.u32 2102212464, %v8033
  %v8043 = vor.u32 %v8041, %v8042
  %v8044 = vshll.u32 2102212464, %v8032
  %v8045 = vshrl.u32 920167782, %v8033
  %v8046 = vor.u32 %v8044, %v8045
  %v8047 = vshll.u32 920167782, %v8032
  %v8048 = vshrl.u32 1326507024, %v8033
  %v8049 = vor.u32 %v8047, %v8048
  %vm8050 = vcmp.lt.s32.totalorder %v8031, 1
  %vm8051 = vcmp.lt.s32.totalorder %v8031, 2
  %vm8052 = vcmp.lt.s32.totalorder %v8031, 3
  %vm8053 = vcmp.lt.s32.totalorder %v8031, 4
  %v8054 = vsel %vm8050, %v8034, %v8037
  %v8055 = vsel %vm8053, %v8043, 2102212464
  %v8056 = vsel %vm8052, %v8040, %v8055
  %v8057 = vsel %vm8051, %v8054, %v8056
  %v8058 = vsel %vm8050, %v8037, %v8040
  %v8059 = vsel %vm8053, %v8046, 920167782
  %v8060 = vsel %vm8052, %v8043, %v8059
  %v8061 = vsel %vm8051, %v8058, %v8060
  %v8062 = vsel %vm8050, %v8040, %v8043
  %v8063 = vsel %vm8053, %v8049, 1326507024
  %v8064 = vsel %vm8052, %v8046, %v8063
  %v8065 = vsel %vm8051, %v8062, %v8064
  %v8066 = vshll.u32 %v8026, 8
  %v8067 = vmul.u32.u64.compose %v8066, %v8065
  %v8068 = vextract.low.u32 %v8067
  %v8069 = vextract.high.u32 %v8067
  %v8070 = vmul.u32.u64.compose %v8066, %v8061
  %v8071 = vextract.low.u32 %v8070
  %v8072 = vextract.high.u32 %v8070
  %v8073 = vmul.u32 %v8066, %v8057
  %v8074 = vadd.s32 %v8069, %v8071
  %vm8075 = vc.u32 %v8069, %v8071
  %v8076 = vadd.s32 %v8072, 1
  %v8077 = vsel %vm8075, %v8076, %v8072
  %v8078 = vadd.s32 %v8073, %v8077
  %v8079 = vadd.s32 %v8078, 536870912
  %v8080 = vshrl.u32 %v8079, 30
  %v8081 = vshll.u32 %v8080, 30
  %v8082 = vsub.s32 %v8078, %v8081
  %vm8083 = vcmp.lt.s32.totalorder %v8082, 0
  %v8084 = vsub.s32 0, %v8082
  %v8085 = vsel %vm8083, %v8084, %v8082
  %v8086 = vclz %v8085
  %v8087 = vsub.s32 %v8086, 2
  %vm8088 = vcmp.gt.s32.totalorder 0, %v8087
  %v8089 = vsel %vm8088, 0, %v8087
  %v8090 = vsub.s32 32, %v8089
  %v8091 = vshll.u32 %v8082, %v8089
  %v8092 = vshrl.u32 %v8074, %v8090
  %v8093 = vor.u32 %v8091, %v8092
  %v8094 = vsub.s32 4294967266, %v8089
  %v8095 = vadd.s32 %v8094, 127
  %v8096 = vshll.u32 %v8095, 23
  %v8097 = vor.u32 4788187, %v8096
  %v8098 = vand.u32 2147483647, %v8097
  %v8100 = vcvt.s32.f32 %v8093
  %v8101 = vmul.f32 %v8100, %v8098
  %v8102 = vxor.u32 %v8101, 2147483648
  %v8103 = vsel %vm8020, %v8102, %v8101
  %v8104 = vsub.s32 4, %v8080
  %v8105 = vsel %vm8020, %v8104, %v8080
  %v8106 = vsel %vm8019, %v6558, %v8103
  %v8107 = vsel %vm8019, 0, %v8105
  %v8108 = vcosq.f32.pop %v8106
  %v8109 = vsinq.f32.pop %v8106
  %vm8110 = vweird.f32 %v6558
  %v8111 = vadd.s32 %v8107, 3
  %v8112 = vand.u32 %v8111, 3
  %vm8113 = vcmp.lt.s32.totalorder %v8112, 2
  %vm8114 = vcmp.eq.s32.totalorder %v8112, 0
  %v8115 = vxor.u32 %v8109, 2147483648
  %v8116 = vsel %vm8114, %v8108, %v8115
  %vm8117 = vcmp.eq.s32.totalorder %v8112, 2
  %v8118 = vxor.u32 %v8108, 2147483648
  %v8119 = vsel %vm8117, %v8118, %v8109
  %v8120 = vsel %vm8113, %v8116, %v8119
  %v8121 = vsel %vm8110, nan, %v8120
  %v8122 = vand.u32 2147483647, %v6560
  %vm8123 = vcmp.le.f32.partialorder %v8122, 0.7853982
  %vm8124 = vcmp.lt.s32.totalorder %v6560, 0
  %v8125 = vand.u32 %v6560, 2139095040
  %v8126 = vshrl.u32 %v8125, 23
  %v8127 = vsub.s32 %v8126, 127
  %v8128 = vand.u32 2147483647, %v6560
  %v8129 = vand.u32 %v8128, 8388607
  %v8130 = vor.u32 %v8129, 8388608
  %v8131 = vsub.s32 0, %v8130
  %v8132 = vadd.s32 %v8127, 1
  %vm8133 = vcmp.gt.s32.totalorder %v8132, 0
  %v8134 = vsel %vm8133, %v8132, 0
  %v8135 = vshrl.u32 %v8134, 5
  %v8136 = vand.u32 %v8134, 31
  %v8137 = vsub.s32 32, %v8136
  %v8138 = vshrl.u32 683565275, %v8137
  %v8139 = vshll.u32 683565275, %v8136
  %v8140 = vshrl.u32 2475754826, %v8137
  %v8141 = vor.u32 %v8139, %v8140
  %v8142 = vshll.u32 2475754826, %v8136
  %v8143 = vshrl.u32 2131351028, %v8137
  %v8144 = vor.u32 %v8142, %v8143
  %v8145 = vshll.u32 2131351028, %v8136
  %v8146 = vshrl.u32 2102212464, %v8137
  %v8147 = vor.u32 %v8145, %v8146
  %v8148 = vshll.u32 2102212464, %v8136
  %v8149 = vshrl.u32 920167782, %v8137
  %v8150 = vor.u32 %v8148, %v8149
  %v8151 = vshll.u32 920167782, %v8136
  %v8152 = vshrl.u32 1326507024, %v8137
  %v8153 = vor.u32 %v8151, %v8152
  %vm8154 = vcmp.lt.s32.totalorder %v8135, 1
  %vm8155 = vcmp.lt.s32.totalorder %v8135, 2
  %vm8156 = vcmp.lt.s32.totalorder %v8135, 3
  %vm8157 = vcmp.lt.s32.totalorder %v8135, 4
  %v8158 = vsel %vm8154, %v8138, %v8141
  %v8159 = vsel %vm8157, %v8147, 2102212464
  %v8160 = vsel %vm8156, %v8144, %v8159
  %v8161 = vsel %vm8155, %v8158, %v8160
  %v8162 = vsel %vm8154, %v8141, %v8144
  %v8163 = vsel %vm8157, %v8150, 920167782
  %v8164 = vsel %vm8156, %v8147, %v8163
  %v8165 = vsel %vm8155, %v8162, %v8164
  %v8166 = vsel %vm8154, %v8144, %v8147
  %v8167 = vsel %vm8157, %v8153, 1326507024
  %v8168 = vsel %vm8156, %v8150, %v8167
  %v8169 = vsel %vm8155, %v8166, %v8168
  %v8170 = vshll.u32 %v8130, 8
  %v8171 = vmul.u32.u64.compose %v8170, %v8169
  %v8172 = vextract.low.u32 %v8171
  %v8173 = vextract.high.u32 %v8171
  %v8174 = vmul.u32.u64.compose %v8170, %v8165
  %v8175 = vextract.low.u32 %v8174
  %v8176 = vextract.high.u32 %v8174
  %v8177 = vmul.u32 %v8170, %v8161
  %v8178 = vadd.s32 %v8173, %v8175
  %vm8179 = vc.u32 %v8173, %v8175
  %v8180 = vadd.s32 %v8176, 1
  %v8181 = vsel %vm8179, %v8180, %v8176
  %v8182 = vadd.s32 %v8177, %v8181
  %v8183 = vadd.s32 %v8182, 536870912
  %v8184 = vshrl.u32 %v8183, 30
  %v8185 = vshll.u32 %v8184, 30
  %v8186 = vsub.s32 %v8182, %v8185
  %vm8187 = vcmp.lt.s32.totalorder %v8186, 0
  %v8188 = vsub.s32 0, %v8186
  %v8189 = vsel %vm8187, %v8188, %v8186
  %v8190 = vclz %v8189
  %v8191 = vsub.s32 %v8190, 2
  %vm8192 = vcmp.gt.s32.totalorder 0, %v8191
  %v8193 = vsel %vm8192, 0, %v8191
  %v8194 = vsub.s32 32, %v8193
  %v8195 = vshll.u32 %v8186, %v8193
  %v8196 = vshrl.u32 %v8178, %v8194
  %v8197 = vor.u32 %v8195, %v8196
  %v8198 = vsub.s32 4294967266, %v8193
  %v8199 = vadd.s32 %v8198, 127
  %v8200 = vshll.u32 %v8199, 23
  %v8201 = vor.u32 4788187, %v8200
  %v8202 = vand.u32 2147483647, %v8201
  %v8204 = vcvt.s32.f32 %v8197
  %v8205 = vmul.f32 %v8204, %v8202
  %v8206 = vxor.u32 %v8205, 2147483648
  %v8207 = vsel %vm8124, %v8206, %v8205
  %v8208 = vsub.s32 4, %v8184
  %v8209 = vsel %vm8124, %v8208, %v8184
  %v8210 = vsel %vm8123, %v6560, %v8207
  %v8211 = vsel %vm8123, 0, %v8209
  %v8212 = vcosq.f32.pop %v8210
  %v8213 = vsinq.f32.pop %v8210
  %vm8214 = vweird.f32 %v6560
  %v8215 = vadd.s32 %v8211, 3
  %v8216 = vand.u32 %v8215, 3
  %vm8217 = vcmp.lt.s32.totalorder %v8216, 2
  %vm8218 = vcmp.eq.s32.totalorder %v8216, 0
  %v8219 = vxor.u32 %v8213, 2147483648
  %v8220 = vsel %vm8218, %v8212, %v8219
  %vm8221 = vcmp.eq.s32.totalorder %v8216, 2
  %v8222 = vxor.u32 %v8212, 2147483648
  %v8223 = vsel %vm8221, %v8222, %v8213
  %v8224 = vsel %vm8217, %v8220, %v8223
  %v8225 = vsel %vm8214, nan, %v8224
  %v8226 = vld [vmem:[%s3] sm:$0xff]
  %v8227 = vld [vmem:[%s3 + $0x8] sm:$0xff]
  %v8228 = vld [vmem:[%s3 + $0x10] sm:$0xff]
  %v8229 = vld [vmem:[%s3 + $0x18] sm:$0xff]
  %v8230 = vld [vmem:[%s4] sm:$0xff]
  %v8231 = vld [vmem:[%s4 + $0x8] sm:$0xff]
  %v8232 = vld [vmem:[%s4 + $0x10] sm:$0xff]
  %v8233 = vld [vmem:[%s4 + $0x18] sm:$0xff]
  %8235 = vset.pattern.permute.xlu0 0
  %8236 = vperm.xlu0 %8235, %v8230
  %v8237 = vpop.permute.xlu0 %8236
  %8240 = vset.pattern.permute.xlu0 0
  %8241 = vperm.xlu0 %8240, %v8231
  %v8242 = vpop.permute.xlu0 %8241
  %8245 = vset.pattern.permute.xlu0 0
  %8246 = vperm.xlu0 %8245, %v8232
  %v8247 = vpop.permute.xlu0 %8246
  %8250 = vset.pattern.permute.xlu0 0
  %8251 = vperm.xlu0 %8250, %v8233
  %v8252 = vpop.permute.xlu0 %8251
  %v8255 = vsel %vm1973, %v8226, 0
  %v8258 = vsel %vm1973, %v8227, 0
  %v8261 = vsel %vm1973, %v8228, 0
  %v8264 = vsel %vm1973, %v8229, 0
  %8266 = vmatprep.subr.mxu0 %v6769
  %8267 = vmatpush1.msra.mxu0 %v6665
  %8268 = vmatprep.subr.mxu0 %v7185
  %8269 = vmatpush1.msra.mxu0 %v7081
  %8270 = vmatprep.subr.mxu0 %v7601
  %8271 = vmatpush1.msra.mxu0 %v7497
  %8272 = vmatprep.subr.mxu0 %v8017
  %8273 = vmatpush1.msra.mxu0 %v7913
  %8274 = vmatprep.subr.mxu0 0.0
  %8275 = vmatpush1.msra.mxu0 0.0
  %8276 = vmatprep.subr.mxu0 0.0
  %8277 = vmatpush1.msra.mxu0 0.0
  %8278 = vmatprep.subr.mxu0 0.0
  %8279 = vmatpush1.msra.mxu0 0.0
  %8280 = vmatprep.subr.mxu0 0.0
  %8281 = vmatpush1.msra.mxu0 0.0
  %8282 = vmatprep.subr.mxu0 0.0
  %8283 = vmatpush1.msra.mxu0 0.0
  %8284 = vmatprep.subr.mxu0 0.0
  %8285 = vmatpush1.msra.mxu0 0.0
  %8286 = vmatprep.subr.mxu0 0.0
  %8287 = vmatpush1.msra.mxu0 0.0
  %8288 = vmatprep.subr.mxu0 0.0
  %8289 = vmatpush1.msra.mxu0 0.0
  %8290 = vmatprep.subr.mxu0 0.0
  %8291 = vmatpush1.msra.mxu0 0.0
  %8292 = vmatprep.subr.mxu0 0.0
  %8293 = vmatpush1.msra.mxu0 0.0
  %8294 = vmatprep.subr.mxu0 0.0
  %8295 = vmatpush1.msra.mxu0 0.0
  %8296 = vmatprep.subr.mxu0 0.0
  %8297 = vmatpush1.msra.mxu0 0.0
  %8298 = vmatprep.subr.mxu0 0.0
  %8299 = vmatpush1.msra.mxu0 0.0
  %8300 = vmatprep.subr.mxu0 0.0
  %8301 = vmatpush1.msra.mxu0 0.0
  %8302 = vmatprep.subr.mxu0 0.0
  %8303 = vmatpush1.msra.mxu0 0.0
  %8304 = vmatprep.subr.mxu0 0.0
  %8305 = vmatpush1.msra.mxu0 0.0
  %8306 = vmatprep.subr.mxu0 0.0
  %8307 = vmatpush1.msra.mxu0 0.0
  %8308 = vmatprep.subr.mxu0 0.0
  %8309 = vmatpush1.msra.mxu0 0.0
  %8310 = vmatprep.subr.mxu0 0.0
  %8311 = vmatpush1.msra.mxu0 0.0
  %8312 = vmatprep.subr.mxu0 0.0
  %8313 = vmatpush1.msra.mxu0 0.0
  %8314 = vmatprep.subr.mxu0 0.0
  %8315 = vmatpush1.msra.mxu0 0.0
  %8316 = vmatprep.subr.mxu0 0.0
  %8317 = vmatpush1.msra.mxu0 0.0
  %8318 = vmatprep.subr.mxu0 0.0
  %8319 = vmatpush1.msra.mxu0 0.0
  %8320 = vmatprep.subr.mxu0 0.0
  %8321 = vmatpush1.msra.mxu0 0.0
  %8322 = vmatprep.subr.mxu0 0.0
  %8323 = vmatpush1.msra.mxu0 0.0
  %8324 = vmatprep.subr.mxu0 0.0
  %8325 = vmatpush1.msra.mxu0 0.0
  %8326 = vmatprep.subr.mxu0 0.0
  %8327 = vmatpush1.msra.mxu0 0.0
  %8328 = vmatprep.subr.mxu0 0.0
  %8329 = vmatpush1.msra.mxu0 0.0
  %8330 = vmatprep.mubr.f32.mxu0 0.0
  %8331 = vmatmul.mubr.f32.gmra.mrb[0].mxu0 %v8255
  %v8332 = vpop.f32.mrb[0].mxu0
  %v8333 = vadd.f32 %v8237, %v8332
  %v8334 = vpop.f32.mrb[0].mxu0
  %v8335 = vadd.f32 %v8237, %v8334
  %8336 = vmatprep.mubr.f32.mxu0 0.0
  %8337 = vmatmul.mubr.f32.gmra.mrb[0].mxu0 %v8258
  %v8338 = vpop.f32.mrb[0].mxu0
  %v8339 = vadd.f32 %v8242, %v8338
  %v8340 = vpop.f32.mrb[0].mxu0
  %v8341 = vadd.f32 %v8242, %v8340
  %8342 = vmatprep.mubr.f32.mxu0 0.0
  %8343 = vmatmul.mubr.f32.gmra.mrb[0].mxu0 %v8261
  %v8344 = vpop.f32.mrb[0].mxu0
  %v8345 = vadd.f32 %v8247, %v8344
  %v8346 = vpop.f32.mrb[0].mxu0
  %v8347 = vadd.f32 %v8247, %v8346
  %8348 = vmatprep.mubr.f32.mxu0 0.0
  %8349 = vmatmul.mubr.f32.gmra.mrb[0].mxu0 %v8264
  %v8350 = vpop.f32.mrb[0].mxu0
  %v8351 = vadd.f32 %v8252, %v8350
  %v8352 = vpop.f32.mrb[0].mxu0
  %v8353 = vadd.f32 %v8252, %v8352
  %8354 = vdwg.mxu0
  %8355 = vmatprep.subr.mxu0 %v6977
  %8356 = vmatpush1.msra.mxu0 %v6873
  %8357 = vmatprep.subr.mxu0 %v7393
  %8358 = vmatpush1.msra.mxu0 %v7289
  %8359 = vmatprep.subr.mxu0 %v7809
  %8360 = vmatpush1.msra.mxu0 %v7705
  %8361 = vmatprep.subr.mxu0 %v8225
  %8362 = vmatpush1.msra.mxu0 %v8121
  %8363 = vmatprep.subr.mxu0 0.0
  %8364 = vmatpush1.msra.mxu0 0.0
  %8365 = vmatprep.subr.mxu0 0.0
  %8366 = vmatpush1.msra.mxu0 0.0
  %8367 = vmatprep.subr.mxu0 0.0
  %8368 = vmatpush1.msra.mxu0 0.0
  %8369 = vmatprep.subr.mxu0 0.0
  %8370 = vmatpush1.msra.mxu0 0.0
  %8371 = vmatprep.subr.mxu0 0.0
  %8372 = vmatpush1.msra.mxu0 0.0
  %8373 = vmatprep.subr.mxu0 0.0
  %8374 = vmatpush1.msra.mxu0 0.0
  %8375 = vmatprep.subr.mxu0 0.0
  %8376 = vmatpush1.msra.mxu0 0.0
  %8377 = vmatprep.subr.mxu0 0.0
  %8378 = vmatpush1.msra.mxu0 0.0
  %8379 = vmatprep.subr.mxu0 0.0
  %8380 = vmatpush1.msra.mxu0 0.0
  %8381 = vmatprep.subr.mxu0 0.0
  %8382 = vmatpush1.msra.mxu0 0.0
  %8383 = vmatprep.subr.mxu0 0.0
  %8384 = vmatpush1.msra.mxu0 0.0
  %8385 = vmatprep.subr.mxu0 0.0
  %8386 = vmatpush1.msra.mxu0 0.0
  %8387 = vmatprep.subr.mxu0 0.0
  %8388 = vmatpush1.msra.mxu0 0.0
  %8389 = vmatprep.subr.mxu0 0.0
  %8390 = vmatpush1.msra.mxu0 0.0
  %8391 = vmatprep.subr.mxu0 0.0
  %8392 = vmatpush1.msra.mxu0 0.0
  %8393 = vmatprep.subr.mxu0 0.0
  %8394 = vmatpush1.msra.mxu0 0.0
  %8395 = vmatprep.subr.mxu0 0.0
  %8396 = vmatpush1.msra.mxu0 0.0
  %8397 = vmatprep.subr.mxu0 0.0
  %8398 = vmatpush1.msra.mxu0 0.0
  %8399 = vmatprep.subr.mxu0 0.0
  %8400 = vmatpush1.msra.mxu0 0.0
  %8401 = vmatprep.subr.mxu0 0.0
  %8402 = vmatpush1.msra.mxu0 0.0
  %8403 = vmatprep.subr.mxu0 0.0
  %8404 = vmatpush1.msra.mxu0 0.0
  %8405 = vmatprep.subr.mxu0 0.0
  %8406 = vmatpush1.msra.mxu0 0.0
  %8407 = vmatprep.subr.mxu0 0.0
  %8408 = vmatpush1.msra.mxu0 0.0
  %8409 = vmatprep.subr.mxu0 0.0
  %8410 = vmatpush1.msra.mxu0 0.0
  %8411 = vmatprep.subr.mxu0 0.0
  %8412 = vmatpush1.msra.mxu0 0.0
  %8413 = vmatprep.subr.mxu0 0.0
  %8414 = vmatpush1.msra.mxu0 0.0
  %8415 = vmatprep.subr.mxu0 0.0
  %8416 = vmatpush1.msra.mxu0 0.0
  %8417 = vmatprep.subr.mxu0 0.0
  %8418 = vmatpush1.msra.mxu0 0.0
  %8419 = vmatprep.mubr.f32.mxu0 0.0
  %8420 = vmatmul.mubr.f32.gmra.mrb[0].mxu0 %v8255
  %v8421 = vpop.f32.mrb[0].mxu0
  %v8422 = vadd.f32 %v8237, %v8421
  %v8423 = vpop.f32.mrb[0].mxu0
  %v8424 = vadd.f32 %v8237, %v8423
  %8425 = vmatprep.mubr.f32.mxu0 0.0
  %8426 = vmatmul.mubr.f32.gmra.mrb[0].mxu0 %v8258
  %v8427 = vpop.f32.mrb[0].mxu0
  %v8428 = vadd.f32 %v8242, %v8427
  %v8429 = vpop.f32.mrb[0].mxu0
  %v8430 = vadd.f32 %v8242, %v8429
  %8431 = vmatprep.mubr.f32.mxu0 0.0
  %8432 = vmatmul.mubr.f32.gmra.mrb[0].mxu0 %v8261
  %v8433 = vpop.f32.mrb[0].mxu0
  %v8434 = vadd.f32 %v8247, %v8433
  %v8435 = vpop.f32.mrb[0].mxu0
  %v8436 = vadd.f32 %v8247, %v8435
  %8437 = vmatprep.mubr.f32.mxu0 0.0
  %8438 = vmatmul.mubr.f32.gmra.mrb[0].mxu0 %v8264
  %v8439 = vpop.f32.mrb[0].mxu0
  %v8440 = vadd.f32 %v8252, %v8439
  %v8441 = vpop.f32.mrb[0].mxu0
  %v8442 = vadd.f32 %v8252, %v8441
  %8443 = vdwg.mxu0
  %v8444 = vand.u32 2147483647, %v8333
  %vm8445 = vcmp.le.f32.partialorder %v8444, 0.7853982
  %vm8446 = vcmp.lt.s32.totalorder %v8333, 0
  %v8447 = vand.u32 %v8333, 2139095040
  %v8448 = vshrl.u32 %v8447, 23
  %v8449 = vsub.s32 %v8448, 127
  %v8450 = vand.u32 2147483647, %v8333
  %v8451 = vand.u32 %v8450, 8388607
  %v8452 = vor.u32 %v8451, 8388608
  %v8453 = vsub.s32 0, %v8452
  %v8454 = vadd.s32 %v8449, 1
  %vm8455 = vcmp.gt.s32.totalorder %v8454, 0
  %v8456 = vsel %vm8455, %v8454, 0
  %v8457 = vshrl.u32 %v8456, 5
  %v8458 = vand.u32 %v8456, 31
  %v8459 = vsub.s32 32, %v8458
  %v8460 = vshrl.u32 683565275, %v8459
  %v8461 = vshll.u32 683565275, %v8458
  %v8462 = vshrl.u32 2475754826, %v8459
  %v8463 = vor.u32 %v8461, %v8462
  %v8464 = vshll.u32 2475754826, %v8458
  %v8465 = vshrl.u32 2131351028, %v8459
  %v8466 = vor.u32 %v8464, %v8465
  %v8467 = vshll.u32 2131351028, %v8458
  %v8468 = vshrl.u32 2102212464, %v8459
  %v8469 = vor.u32 %v8467, %v8468
  %v8470 = vshll.u32 2102212464, %v8458
  %v8471 = vshrl.u32 920167782, %v8459
  %v8472 = vor.u32 %v8470, %v8471
  %v8473 = vshll.u32 920167782, %v8458
  %v8474 = vshrl.u32 1326507024, %v8459
  %v8475 = vor.u32 %v8473, %v8474
  %vm8476 = vcmp.lt.s32.totalorder %v8457, 1
  %vm8477 = vcmp.lt.s32.totalorder %v8457, 2
  %vm8478 = vcmp.lt.s32.totalorder %v8457, 3
  %vm8479 = vcmp.lt.s32.totalorder %v8457, 4
  %v8480 = vsel %vm8476, %v8460, %v8463
  %v8481 = vsel %vm8479, %v8469, 2102212464
  %v8482 = vsel %vm8478, %v8466, %v8481
  %v8483 = vsel %vm8477, %v8480, %v8482
  %v8484 = vsel %vm8476, %v8463, %v8466
  %v8485 = vsel %vm8479, %v8472, 920167782
  %v8486 = vsel %vm8478, %v8469, %v8485
  %v8487 = vsel %vm8477, %v8484, %v8486
  %v8488 = vsel %vm8476, %v8466, %v8469
  %v8489 = vsel %vm8479, %v8475, 1326507024
  %v8490 = vsel %vm8478, %v8472, %v8489
  %v8491 = vsel %vm8477, %v8488, %v8490
  %v8492 = vshll.u32 %v8452, 8
  %v8493 = vmul.u32.u64.compose %v8492, %v8491
  %v8494 = vextract.low.u32 %v8493
  %v8495 = vextract.high.u32 %v8493
  %v8496 = vmul.u32.u64.compose %v8492, %v8487
  %v8497 = vextract.low.u32 %v8496
  %v8498 = vextract.high.u32 %v8496
  %v8499 = vmul.u32 %v8492, %v8483
  %v8500 = vadd.s32 %v8495, %v8497
  %vm8501 = vc.u32 %v8495, %v8497
  %v8502 = vadd.s32 %v8498, 1
  %v8503 = vsel %vm8501, %v8502, %v8498
  %v8504 = vadd.s32 %v8499, %v8503
  %v8505 = vadd.s32 %v8504, 536870912
  %v8506 = vshrl.u32 %v8505, 30
  %v8507 = vshll.u32 %v8506, 30
  %v8508 = vsub.s32 %v8504, %v8507
  %vm8509 = vcmp.lt.s32.totalorder %v8508, 0
  %v8510 = vsub.s32 0, %v8508
  %v8511 = vsel %vm8509, %v8510, %v8508
  %v8512 = vclz %v8511
  %v8513 = vsub.s32 %v8512, 2
  %vm8514 = vcmp.gt.s32.totalorder 0, %v8513
  %v8515 = vsel %vm8514, 0, %v8513
  %v8516 = vsub.s32 32, %v8515
  %v8517 = vshll.u32 %v8508, %v8515
  %v8518 = vshrl.u32 %v8500, %v8516
  %v8519 = vor.u32 %v8517, %v8518
  %v8520 = vsub.s32 4294967266, %v8515
  %v8521 = vadd.s32 %v8520, 127
  %v8522 = vshll.u32 %v8521, 23
  %v8523 = vor.u32 4788187, %v8522
  %v8524 = vand.u32 2147483647, %v8523
  %v8526 = vcvt.s32.f32 %v8519
  %v8527 = vmul.f32 %v8526, %v8524
  %v8528 = vxor.u32 %v8527, 2147483648
  %v8529 = vsel %vm8446, %v8528, %v8527
  %v8530 = vsub.s32 4, %v8506
  %v8531 = vsel %vm8446, %v8530, %v8506
  %v8532 = vsel %vm8445, %v8333, %v8529
  %v8533 = vsel %vm8445, 0, %v8531
  %v8534 = vcosq.f32.pop %v8532
  %v8535 = vsinq.f32.pop %v8532
  %vm8536 = vweird.f32 %v8333
  %v8537 = vadd.s32 %v8533, 3
  %v8538 = vand.u32 %v8537, 3
  %vm8539 = vcmp.lt.s32.totalorder %v8538, 2
  %vm8540 = vcmp.eq.s32.totalorder %v8538, 0
  %v8541 = vxor.u32 %v8535, 2147483648
  %v8542 = vsel %vm8540, %v8534, %v8541
  %vm8543 = vcmp.eq.s32.totalorder %v8538, 2
  %v8544 = vxor.u32 %v8534, 2147483648
  %v8545 = vsel %vm8543, %v8544, %v8535
  %v8546 = vsel %vm8539, %v8542, %v8545
  %v8547 = vsel %vm8536, nan, %v8546
  %v8548 = vand.u32 2147483647, %v8335
  %vm8549 = vcmp.le.f32.partialorder %v8548, 0.7853982
  %vm8550 = vcmp.lt.s32.totalorder %v8335, 0
  %v8551 = vand.u32 %v8335, 2139095040
  %v8552 = vshrl.u32 %v8551, 23
  %v8553 = vsub.s32 %v8552, 127
  %v8554 = vand.u32 2147483647, %v8335
  %v8555 = vand.u32 %v8554, 8388607
  %v8556 = vor.u32 %v8555, 8388608
  %v8557 = vsub.s32 0, %v8556
  %v8558 = vadd.s32 %v8553, 1
  %vm8559 = vcmp.gt.s32.totalorder %v8558, 0
  %v8560 = vsel %vm8559, %v8558, 0
  %v8561 = vshrl.u32 %v8560, 5
  %v8562 = vand.u32 %v8560, 31
  %v8563 = vsub.s32 32, %v8562
  %v8564 = vshrl.u32 683565275, %v8563
  %v8565 = vshll.u32 683565275, %v8562
  %v8566 = vshrl.u32 2475754826, %v8563
  %v8567 = vor.u32 %v8565, %v8566
  %v8568 = vshll.u32 2475754826, %v8562
  %v8569 = vshrl.u32 2131351028, %v8563
  %v8570 = vor.u32 %v8568, %v8569
  %v8571 = vshll.u32 2131351028, %v8562
  %v8572 = vshrl.u32 2102212464, %v8563
  %v8573 = vor.u32 %v8571, %v8572
  %v8574 = vshll.u32 2102212464, %v8562
  %v8575 = vshrl.u32 920167782, %v8563
  %v8576 = vor.u32 %v8574, %v8575
  %v8577 = vshll.u32 920167782, %v8562
  %v8578 = vshrl.u32 1326507024, %v8563
  %v8579 = vor.u32 %v8577, %v8578
  %vm8580 = vcmp.lt.s32.totalorder %v8561, 1
  %vm8581 = vcmp.lt.s32.totalorder %v8561, 2
  %vm8582 = vcmp.lt.s32.totalorder %v8561, 3
  %vm8583 = vcmp.lt.s32.totalorder %v8561, 4
  %v8584 = vsel %vm8580, %v8564, %v8567
  %v8585 = vsel %vm8583, %v8573, 2102212464
  %v8586 = vsel %vm8582, %v8570, %v8585
  %v8587 = vsel %vm8581, %v8584, %v8586
  %v8588 = vsel %vm8580, %v8567, %v8570
  %v8589 = vsel %vm8583, %v8576, 920167782
  %v8590 = vsel %vm8582, %v8573, %v8589
  %v8591 = vsel %vm8581, %v8588, %v8590
  %v8592 = vsel %vm8580, %v8570, %v8573
  %v8593 = vsel %vm8583, %v8579, 1326507024
  %v8594 = vsel %vm8582, %v8576, %v8593
  %v8595 = vsel %vm8581, %v8592, %v8594
  %v8596 = vshll.u32 %v8556, 8
  %v8597 = vmul.u32.u64.compose %v8596, %v8595
  %v8598 = vextract.low.u32 %v8597
  %v8599 = vextract.high.u32 %v8597
  %v8600 = vmul.u32.u64.compose %v8596, %v8591
  %v8601 = vextract.low.u32 %v8600
  %v8602 = vextract.high.u32 %v8600
  %v8603 = vmul.u32 %v8596, %v8587
  %v8604 = vadd.s32 %v8599, %v8601
  %vm8605 = vc.u32 %v8599, %v8601
  %v8606 = vadd.s32 %v8602, 1
  %v8607 = vsel %vm8605, %v8606, %v8602
  %v8608 = vadd.s32 %v8603, %v8607
  %v8609 = vadd.s32 %v8608, 536870912
  %v8610 = vshrl.u32 %v8609, 30
  %v8611 = vshll.u32 %v8610, 30
  %v8612 = vsub.s32 %v8608, %v8611
  %vm8613 = vcmp.lt.s32.totalorder %v8612, 0
  %v8614 = vsub.s32 0, %v8612
  %v8615 = vsel %vm8613, %v8614, %v8612
  %v8616 = vclz %v8615
  %v8617 = vsub.s32 %v8616, 2
  %vm8618 = vcmp.gt.s32.totalorder 0, %v8617
  %v8619 = vsel %vm8618, 0, %v8617
  %v8620 = vsub.s32 32, %v8619
  %v8621 = vshll.u32 %v8612, %v8619
  %v8622 = vshrl.u32 %v8604, %v8620
  %v8623 = vor.u32 %v8621, %v8622
  %v8624 = vsub.s32 4294967266, %v8619
  %v8625 = vadd.s32 %v8624, 127
  %v8626 = vshll.u32 %v8625, 23
  %v8627 = vor.u32 4788187, %v8626
  %v8628 = vand.u32 2147483647, %v8627
  %v8630 = vcvt.s32.f32 %v8623
  %v8631 = vmul.f32 %v8630, %v8628
  %v8632 = vxor.u32 %v8631, 2147483648
  %v8633 = vsel %vm8550, %v8632, %v8631
  %v8634 = vsub.s32 4, %v8610
  %v8635 = vsel %vm8550, %v8634, %v8610
  %v8636 = vsel %vm8549, %v8335, %v8633
  %v8637 = vsel %vm8549, 0, %v8635
  %v8638 = vcosq.f32.pop %v8636
  %v8639 = vsinq.f32.pop %v8636
  %vm8640 = vweird.f32 %v8335
  %v8641 = vadd.s32 %v8637, 3
  %v8642 = vand.u32 %v8641, 3
  %vm8643 = vcmp.lt.s32.totalorder %v8642, 2
  %vm8644 = vcmp.eq.s32.totalorder %v8642, 0
  %v8645 = vxor.u32 %v8639, 2147483648
  %v8646 = vsel %vm8644, %v8638, %v8645
  %vm8647 = vcmp.eq.s32.totalorder %v8642, 2
  %v8648 = vxor.u32 %v8638, 2147483648
  %v8649 = vsel %vm8647, %v8648, %v8639
  %v8650 = vsel %vm8643, %v8646, %v8649
  %v8651 = vsel %vm8640, nan, %v8650
  %v8652 = vand.u32 2147483647, %v8422
  %vm8653 = vcmp.le.f32.partialorder %v8652, 0.7853982
  %vm8654 = vcmp.lt.s32.totalorder %v8422, 0
  %v8655 = vand.u32 %v8422, 2139095040
  %v8656 = vshrl.u32 %v8655, 23
  %v8657 = vsub.s32 %v8656, 127
  %v8658 = vand.u32 2147483647, %v8422
  %v8659 = vand.u32 %v8658, 8388607
  %v8660 = vor.u32 %v8659, 8388608
  %v8661 = vsub.s32 0, %v8660
  %v8662 = vadd.s32 %v8657, 1
  %vm8663 = vcmp.gt.s32.totalorder %v8662, 0
  %v8664 = vsel %vm8663, %v8662, 0
  %v8665 = vshrl.u32 %v8664, 5
  %v8666 = vand.u32 %v8664, 31
  %v8667 = vsub.s32 32, %v8666
  %v8668 = vshrl.u32 683565275, %v8667
  %v8669 = vshll.u32 683565275, %v8666
  %v8670 = vshrl.u32 2475754826, %v8667
  %v8671 = vor.u32 %v8669, %v8670
  %v8672 = vshll.u32 2475754826, %v8666
  %v8673 = vshrl.u32 2131351028, %v8667
  %v8674 = vor.u32 %v8672, %v8673
  %v8675 = vshll.u32 2131351028, %v8666
  %v8676 = vshrl.u32 2102212464, %v8667
  %v8677 = vor.u32 %v8675, %v8676
  %v8678 = vshll.u32 2102212464, %v8666
  %v8679 = vshrl.u32 920167782, %v8667
  %v8680 = vor.u32 %v8678, %v8679
  %v8681 = vshll.u32 920167782, %v8666
  %v8682 = vshrl.u32 1326507024, %v8667
  %v8683 = vor.u32 %v8681, %v8682
  %vm8684 = vcmp.lt.s32.totalorder %v8665, 1
  %vm8685 = vcmp.lt.s32.totalorder %v8665, 2
  %vm8686 = vcmp.lt.s32.totalorder %v8665, 3
  %vm8687 = vcmp.lt.s32.totalorder %v8665, 4
  %v8688 = vsel %vm8684, %v8668, %v8671
  %v8689 = vsel %vm8687, %v8677, 2102212464
  %v8690 = vsel %vm8686, %v8674, %v8689
  %v8691 = vsel %vm8685, %v8688, %v8690
  %v8692 = vsel %vm8684, %v8671, %v8674
  %v8693 = vsel %vm8687, %v8680, 920167782
  %v8694 = vsel %vm8686, %v8677, %v8693
  %v8695 = vsel %vm8685, %v8692, %v8694
  %v8696 = vsel %vm8684, %v8674, %v8677
  %v8697 = vsel %vm8687, %v8683, 1326507024
  %v8698 = vsel %vm8686, %v8680, %v8697
  %v8699 = vsel %vm8685, %v8696, %v8698
  %v8700 = vshll.u32 %v8660, 8
  %v8701 = vmul.u32.u64.compose %v8700, %v8699
  %v8702 = vextract.low.u32 %v8701
  %v8703 = vextract.high.u32 %v8701
  %v8704 = vmul.u32.u64.compose %v8700, %v8695
  %v8705 = vextract.low.u32 %v8704
  %v8706 = vextract.high.u32 %v8704
  %v8707 = vmul.u32 %v8700, %v8691
  %v8708 = vadd.s32 %v8703, %v8705
  %vm8709 = vc.u32 %v8703, %v8705
  %v8710 = vadd.s32 %v8706, 1
  %v8711 = vsel %vm8709, %v8710, %v8706
  %v8712 = vadd.s32 %v8707, %v8711
  %v8713 = vadd.s32 %v8712, 536870912
  %v8714 = vshrl.u32 %v8713, 30
  %v8715 = vshll.u32 %v8714, 30
  %v8716 = vsub.s32 %v8712, %v8715
  %vm8717 = vcmp.lt.s32.totalorder %v8716, 0
  %v8718 = vsub.s32 0, %v8716
  %v8719 = vsel %vm8717, %v8718, %v8716
  %v8720 = vclz %v8719
  %v8721 = vsub.s32 %v8720, 2
  %vm8722 = vcmp.gt.s32.totalorder 0, %v8721
  %v8723 = vsel %vm8722, 0, %v8721
  %v8724 = vsub.s32 32, %v8723
  %v8725 = vshll.u32 %v8716, %v8723
  %v8726 = vshrl.u32 %v8708, %v8724
  %v8727 = vor.u32 %v8725, %v8726
  %v8728 = vsub.s32 4294967266, %v8723
  %v8729 = vadd.s32 %v8728, 127
  %v8730 = vshll.u32 %v8729, 23
  %v8731 = vor.u32 4788187, %v8730
  %v8732 = vand.u32 2147483647, %v8731
  %v8734 = vcvt.s32.f32 %v8727
  %v8735 = vmul.f32 %v8734, %v8732
  %v8736 = vxor.u32 %v8735, 2147483648
  %v8737 = vsel %vm8654, %v8736, %v8735
  %v8738 = vsub.s32 4, %v8714
  %v8739 = vsel %vm8654, %v8738, %v8714
  %v8740 = vsel %vm8653, %v8422, %v8737
  %v8741 = vsel %vm8653, 0, %v8739
  %v8742 = vcosq.f32.pop %v8740
  %v8743 = vsinq.f32.pop %v8740
  %vm8744 = vweird.f32 %v8422
  %v8745 = vadd.s32 %v8741, 3
  %v8746 = vand.u32 %v8745, 3
  %vm8747 = vcmp.lt.s32.totalorder %v8746, 2
  %vm8748 = vcmp.eq.s32.totalorder %v8746, 0
  %v8749 = vxor.u32 %v8743, 2147483648
  %v8750 = vsel %vm8748, %v8742, %v8749
  %vm8751 = vcmp.eq.s32.totalorder %v8746, 2
  %v8752 = vxor.u32 %v8742, 2147483648
  %v8753 = vsel %vm8751, %v8752, %v8743
  %v8754 = vsel %vm8747, %v8750, %v8753
  %v8755 = vsel %vm8744, nan, %v8754
  %v8756 = vand.u32 2147483647, %v8424
  %vm8757 = vcmp.le.f32.partialorder %v8756, 0.7853982
  %vm8758 = vcmp.lt.s32.totalorder %v8424, 0
  %v8759 = vand.u32 %v8424, 2139095040
  %v8760 = vshrl.u32 %v8759, 23
  %v8761 = vsub.s32 %v8760, 127
  %v8762 = vand.u32 2147483647, %v8424
  %v8763 = vand.u32 %v8762, 8388607
  %v8764 = vor.u32 %v8763, 8388608
  %v8765 = vsub.s32 0, %v8764
  %v8766 = vadd.s32 %v8761, 1
  %vm8767 = vcmp.gt.s32.totalorder %v8766, 0
  %v8768 = vsel %vm8767, %v8766, 0
  %v8769 = vshrl.u32 %v8768, 5
  %v8770 = vand.u32 %v8768, 31
  %v8771 = vsub.s32 32, %v8770
  %v8772 = vshrl.u32 683565275, %v8771
  %v8773 = vshll.u32 683565275, %v8770
  %v8774 = vshrl.u32 2475754826, %v8771
  %v8775 = vor.u32 %v8773, %v8774
  %v8776 = vshll.u32 2475754826, %v8770
  %v8777 = vshrl.u32 2131351028, %v8771
  %v8778 = vor.u32 %v8776, %v8777
  %v8779 = vshll.u32 2131351028, %v8770
  %v8780 = vshrl.u32 2102212464, %v8771
  %v8781 = vor.u32 %v8779, %v8780
  %v8782 = vshll.u32 2102212464, %v8770
  %v8783 = vshrl.u32 920167782, %v8771
  %v8784 = vor.u32 %v8782, %v8783
  %v8785 = vshll.u32 920167782, %v8770
  %v8786 = vshrl.u32 1326507024, %v8771
  %v8787 = vor.u32 %v8785, %v8786
  %vm8788 = vcmp.lt.s32.totalorder %v8769, 1
  %vm8789 = vcmp.lt.s32.totalorder %v8769, 2
  %vm8790 = vcmp.lt.s32.totalorder %v8769, 3
  %vm8791 = vcmp.lt.s32.totalorder %v8769, 4
  %v8792 = vsel %vm8788, %v8772, %v8775
  %v8793 = vsel %vm8791, %v8781, 2102212464
  %v8794 = vsel %vm8790, %v8778, %v8793
  %v8795 = vsel %vm8789, %v8792, %v8794
  %v8796 = vsel %vm8788, %v8775, %v8778
  %v8797 = vsel %vm8791, %v8784, 920167782
  %v8798 = vsel %vm8790, %v8781, %v8797
  %v8799 = vsel %vm8789, %v8796, %v8798
  %v8800 = vsel %vm8788, %v8778, %v8781
  %v8801 = vsel %vm8791, %v8787, 1326507024
  %v8802 = vsel %vm8790, %v8784, %v8801
  %v8803 = vsel %vm8789, %v8800, %v8802
  %v8804 = vshll.u32 %v8764, 8
  %v8805 = vmul.u32.u64.compose %v8804, %v8803
  %v8806 = vextract.low.u32 %v8805
  %v8807 = vextract.high.u32 %v8805
  %v8808 = vmul.u32.u64.compose %v8804, %v8799
  %v8809 = vextract.low.u32 %v8808
  %v8810 = vextract.high.u32 %v8808
  %v8811 = vmul.u32 %v8804, %v8795
  %v8812 = vadd.s32 %v8807, %v8809
  %vm8813 = vc.u32 %v8807, %v8809
  %v8814 = vadd.s32 %v8810, 1
  %v8815 = vsel %vm8813, %v8814, %v8810
  %v8816 = vadd.s32 %v8811, %v8815
  %v8817 = vadd.s32 %v8816, 536870912
  %v8818 = vshrl.u32 %v8817, 30
  %v8819 = vshll.u32 %v8818, 30
  %v8820 = vsub.s32 %v8816, %v8819
  %vm8821 = vcmp.lt.s32.totalorder %v8820, 0
  %v8822 = vsub.s32 0, %v8820
  %v8823 = vsel %vm8821, %v8822, %v8820
  %v8824 = vclz %v8823
  %v8825 = vsub.s32 %v8824, 2
  %vm8826 = vcmp.gt.s32.totalorder 0, %v8825
  %v8827 = vsel %vm8826, 0, %v8825
  %v8828 = vsub.s32 32, %v8827
  %v8829 = vshll.u32 %v8820, %v8827
  %v8830 = vshrl.u32 %v8812, %v8828
  %v8831 = vor.u32 %v8829, %v8830
  %v8832 = vsub.s32 4294967266, %v8827
  %v8833 = vadd.s32 %v8832, 127
  %v8834 = vshll.u32 %v8833, 23
  %v8835 = vor.u32 4788187, %v8834
  %v8836 = vand.u32 2147483647, %v8835
  %v8838 = vcvt.s32.f32 %v8831
  %v8839 = vmul.f32 %v8838, %v8836
  %v8840 = vxor.u32 %v8839, 2147483648
  %v8841 = vsel %vm8758, %v8840, %v8839
  %v8842 = vsub.s32 4, %v8818
  %v8843 = vsel %vm8758, %v8842, %v8818
  %v8844 = vsel %vm8757, %v8424, %v8841
  %v8845 = vsel %vm8757, 0, %v8843
  %v8846 = vcosq.f32.pop %v8844
  %v8847 = vsinq.f32.pop %v8844
  %vm8848 = vweird.f32 %v8424
  %v8849 = vadd.s32 %v8845, 3
  %v8850 = vand.u32 %v8849, 3
  %vm8851 = vcmp.lt.s32.totalorder %v8850, 2
  %vm8852 = vcmp.eq.s32.totalorder %v8850, 0
  %v8853 = vxor.u32 %v8847, 2147483648
  %v8854 = vsel %vm8852, %v8846, %v8853
  %vm8855 = vcmp.eq.s32.totalorder %v8850, 2
  %v8856 = vxor.u32 %v8846, 2147483648
  %v8857 = vsel %vm8855, %v8856, %v8847
  %v8858 = vsel %vm8851, %v8854, %v8857
  %v8859 = vsel %vm8848, nan, %v8858
  %v8860 = vand.u32 2147483647, %v8339
  %vm8861 = vcmp.le.f32.partialorder %v8860, 0.7853982
  %vm8862 = vcmp.lt.s32.totalorder %v8339, 0
  %v8863 = vand.u32 %v8339, 2139095040
  %v8864 = vshrl.u32 %v8863, 23
  %v8865 = vsub.s32 %v8864, 127
  %v8866 = vand.u32 2147483647, %v8339
  %v8867 = vand.u32 %v8866, 8388607
  %v8868 = vor.u32 %v8867, 8388608
  %v8869 = vsub.s32 0, %v8868
  %v8870 = vadd.s32 %v8865, 1
  %vm8871 = vcmp.gt.s32.totalorder %v8870, 0
  %v8872 = vsel %vm8871, %v8870, 0
  %v8873 = vshrl.u32 %v8872, 5
  %v8874 = vand.u32 %v8872, 31
  %v8875 = vsub.s32 32, %v8874
  %v8876 = vshrl.u32 683565275, %v8875
  %v8877 = vshll.u32 683565275, %v8874
  %v8878 = vshrl.u32 2475754826, %v8875
  %v8879 = vor.u32 %v8877, %v8878
  %v8880 = vshll.u32 2475754826, %v8874
  %v8881 = vshrl.u32 2131351028, %v8875
  %v8882 = vor.u32 %v8880, %v8881
  %v8883 = vshll.u32 2131351028, %v8874
  %v8884 = vshrl.u32 2102212464, %v8875
  %v8885 = vor.u32 %v8883, %v8884
  %v8886 = vshll.u32 2102212464, %v8874
  %v8887 = vshrl.u32 920167782, %v8875
  %v8888 = vor.u32 %v8886, %v8887
  %v8889 = vshll.u32 920167782, %v8874
  %v8890 = vshrl.u32 1326507024, %v8875
  %v8891 = vor.u32 %v8889, %v8890
  %vm8892 = vcmp.lt.s32.totalorder %v8873, 1
  %vm8893 = vcmp.lt.s32.totalorder %v8873, 2
  %vm8894 = vcmp.lt.s32.totalorder %v8873, 3
  %vm8895 = vcmp.lt.s32.totalorder %v8873, 4
  %v8896 = vsel %vm8892, %v8876, %v8879
  %v8897 = vsel %vm8895, %v8885, 2102212464
  %v8898 = vsel %vm8894, %v8882, %v8897
  %v8899 = vsel %vm8893, %v8896, %v8898
  %v8900 = vsel %vm8892, %v8879, %v8882
  %v8901 = vsel %vm8895, %v8888, 920167782
  %v8902 = vsel %vm8894, %v8885, %v8901
  %v8903 = vsel %vm8893, %v8900, %v8902
  %v8904 = vsel %vm8892, %v8882, %v8885
  %v8905 = vsel %vm8895, %v8891, 1326507024
  %v8906 = vsel %vm8894, %v8888, %v8905
  %v8907 = vsel %vm8893, %v8904, %v8906
  %v8908 = vshll.u32 %v8868, 8
  %v8909 = vmul.u32.u64.compose %v8908, %v8907
  %v8910 = vextract.low.u32 %v8909
  %v8911 = vextract.high.u32 %v8909
  %v8912 = vmul.u32.u64.compose %v8908, %v8903
  %v8913 = vextract.low.u32 %v8912
  %v8914 = vextract.high.u32 %v8912
  %v8915 = vmul.u32 %v8908, %v8899
  %v8916 = vadd.s32 %v8911, %v8913
  %vm8917 = vc.u32 %v8911, %v8913
  %v8918 = vadd.s32 %v8914, 1
  %v8919 = vsel %vm8917, %v8918, %v8914
  %v8920 = vadd.s32 %v8915, %v8919
  %v8921 = vadd.s32 %v8920, 536870912
  %v8922 = vshrl.u32 %v8921, 30
  %v8923 = vshll.u32 %v8922, 30
  %v8924 = vsub.s32 %v8920, %v8923
  %vm8925 = vcmp.lt.s32.totalorder %v8924, 0
  %v8926 = vsub.s32 0, %v8924
  %v8927 = vsel %vm8925, %v8926, %v8924
  %v8928 = vclz %v8927
  %v8929 = vsub.s32 %v8928, 2
  %vm8930 = vcmp.gt.s32.totalorder 0, %v8929
  %v8931 = vsel %vm8930, 0, %v8929
  %v8932 = vsub.s32 32, %v8931
  %v8933 = vshll.u32 %v8924, %v8931
  %v8934 = vshrl.u32 %v8916, %v8932
  %v8935 = vor.u32 %v8933, %v8934
  %v8936 = vsub.s32 4294967266, %v8931
  %v8937 = vadd.s32 %v8936, 127
  %v8938 = vshll.u32 %v8937, 23
  %v8939 = vor.u32 4788187, %v8938
  %v8940 = vand.u32 2147483647, %v8939
  %v8942 = vcvt.s32.f32 %v8935
  %v8943 = vmul.f32 %v8942, %v8940
  %v8944 = vxor.u32 %v8943, 2147483648
  %v8945 = vsel %vm8862, %v8944, %v8943
  %v8946 = vsub.s32 4, %v8922
  %v8947 = vsel %vm8862, %v8946, %v8922
  %v8948 = vsel %vm8861, %v8339, %v8945
  %v8949 = vsel %vm8861, 0, %v8947
  %v8950 = vcosq.f32.pop %v8948
  %v8951 = vsinq.f32.pop %v8948
  %vm8952 = vweird.f32 %v8339
  %v8953 = vadd.s32 %v8949, 3
  %v8954 = vand.u32 %v8953, 3
  %vm8955 = vcmp.lt.s32.totalorder %v8954, 2
  %vm8956 = vcmp.eq.s32.totalorder %v8954, 0
  %v8957 = vxor.u32 %v8951, 2147483648
  %v8958 = vsel %vm8956, %v8950, %v8957
  %vm8959 = vcmp.eq.s32.totalorder %v8954, 2
  %v8960 = vxor.u32 %v8950, 2147483648
  %v8961 = vsel %vm8959, %v8960, %v8951
  %v8962 = vsel %vm8955, %v8958, %v8961
  %v8963 = vsel %vm8952, nan, %v8962
  %v8964 = vand.u32 2147483647, %v8341
  %vm8965 = vcmp.le.f32.partialorder %v8964, 0.7853982
  %vm8966 = vcmp.lt.s32.totalorder %v8341, 0
  %v8967 = vand.u32 %v8341, 2139095040
  %v8968 = vshrl.u32 %v8967, 23
  %v8969 = vsub.s32 %v8968, 127
  %v8970 = vand.u32 2147483647, %v8341
  %v8971 = vand.u32 %v8970, 8388607
  %v8972 = vor.u32 %v8971, 8388608
  %v8973 = vsub.s32 0, %v8972
  %v8974 = vadd.s32 %v8969, 1
  %vm8975 = vcmp.gt.s32.totalorder %v8974, 0
  %v8976 = vsel %vm8975, %v8974, 0
  %v8977 = vshrl.u32 %v8976, 5
  %v8978 = vand.u32 %v8976, 31
  %v8979 = vsub.s32 32, %v8978
  %v8980 = vshrl.u32 683565275, %v8979
  %v8981 = vshll.u32 683565275, %v8978
  %v8982 = vshrl.u32 2475754826, %v8979
  %v8983 = vor.u32 %v8981, %v8982
  %v8984 = vshll.u32 2475754826, %v8978
  %v8985 = vshrl.u32 2131351028, %v8979
  %v8986 = vor.u32 %v8984, %v8985
  %v8987 = vshll.u32 2131351028, %v8978
  %v8988 = vshrl.u32 2102212464, %v8979
  %v8989 = vor.u32 %v8987, %v8988
  %v8990 = vshll.u32 2102212464, %v8978
  %v8991 = vshrl.u32 920167782, %v8979
  %v8992 = vor.u32 %v8990, %v8991
  %v8993 = vshll.u32 920167782, %v8978
  %v8994 = vshrl.u32 1326507024, %v8979
  %v8995 = vor.u32 %v8993, %v8994
  %vm8996 = vcmp.lt.s32.totalorder %v8977, 1
  %vm8997 = vcmp.lt.s32.totalorder %v8977, 2
  %vm8998 = vcmp.lt.s32.totalorder %v8977, 3
  %vm8999 = vcmp.lt.s32.totalorder %v8977, 4
  %v9000 = vsel %vm8996, %v8980, %v8983
  %v9001 = vsel %vm8999, %v8989, 2102212464
  %v9002 = vsel %vm8998, %v8986, %v9001
  %v9003 = vsel %vm8997, %v9000, %v9002
  %v9004 = vsel %vm8996, %v8983, %v8986
  %v9005 = vsel %vm8999, %v8992, 920167782
  %v9006 = vsel %vm8998, %v8989, %v9005
  %v9007 = vsel %vm8997, %v9004, %v9006
  %v9008 = vsel %vm8996, %v8986, %v8989
  %v9009 = vsel %vm8999, %v8995, 1326507024
  %v9010 = vsel %vm8998, %v8992, %v9009
  %v9011 = vsel %vm8997, %v9008, %v9010
  %v9012 = vshll.u32 %v8972, 8
  %v9013 = vmul.u32.u64.compose %v9012, %v9011
  %v9014 = vextract.low.u32 %v9013
  %v9015 = vextract.high.u32 %v9013
  %v9016 = vmul.u32.u64.compose %v9012, %v9007
  %v9017 = vextract.low.u32 %v9016
  %v9018 = vextract.high.u32 %v9016
  %v9019 = vmul.u32 %v9012, %v9003
  %v9020 = vadd.s32 %v9015, %v9017
  %vm9021 = vc.u32 %v9015, %v9017
  %v9022 = vadd.s32 %v9018, 1
  %v9023 = vsel %vm9021, %v9022, %v9018
  %v9024 = vadd.s32 %v9019, %v9023
  %v9025 = vadd.s32 %v9024, 536870912
  %v9026 = vshrl.u32 %v9025, 30
  %v9027 = vshll.u32 %v9026, 30
  %v9028 = vsub.s32 %v9024, %v9027
  %vm9029 = vcmp.lt.s32.totalorder %v9028, 0
  %v9030 = vsub.s32 0, %v9028
  %v9031 = vsel %vm9029, %v9030, %v9028
  %v9032 = vclz %v9031
  %v9033 = vsub.s32 %v9032, 2
  %vm9034 = vcmp.gt.s32.totalorder 0, %v9033
  %v9035 = vsel %vm9034, 0, %v9033
  %v9036 = vsub.s32 32, %v9035
  %v9037 = vshll.u32 %v9028, %v9035
  %v9038 = vshrl.u32 %v9020, %v9036
  %v9039 = vor.u32 %v9037, %v9038
  %v9040 = vsub.s32 4294967266, %v9035
  %v9041 = vadd.s32 %v9040, 127
  %v9042 = vshll.u32 %v9041, 23
  %v9043 = vor.u32 4788187, %v9042
  %v9044 = vand.u32 2147483647, %v9043
  %v9046 = vcvt.s32.f32 %v9039
  %v9047 = vmul.f32 %v9046, %v9044
  %v9048 = vxor.u32 %v9047, 2147483648
  %v9049 = vsel %vm8966, %v9048, %v9047
  %v9050 = vsub.s32 4, %v9026
  %v9051 = vsel %vm8966, %v9050, %v9026
  %v9052 = vsel %vm8965, %v8341, %v9049
  %v9053 = vsel %vm8965, 0, %v9051
  %v9054 = vcosq.f32.pop %v9052
  %v9055 = vsinq.f32.pop %v9052
  %vm9056 = vweird.f32 %v8341
  %v9057 = vadd.s32 %v9053, 3
  %v9058 = vand.u32 %v9057, 3
  %vm9059 = vcmp.lt.s32.totalorder %v9058, 2
  %vm9060 = vcmp.eq.s32.totalorder %v9058, 0
  %v9061 = vxor.u32 %v9055, 2147483648
  %v9062 = vsel %vm9060, %v9054, %v9061
  %vm9063 = vcmp.eq.s32.totalorder %v9058, 2
  %v9064 = vxor.u32 %v9054, 2147483648
  %v9065 = vsel %vm9063, %v9064, %v9055
  %v9066 = vsel %vm9059, %v9062, %v9065
  %v9067 = vsel %vm9056, nan, %v9066
  %v9068 = vand.u32 2147483647, %v8428
  %vm9069 = vcmp.le.f32.partialorder %v9068, 0.7853982
  %vm9070 = vcmp.lt.s32.totalorder %v8428, 0
  %v9071 = vand.u32 %v8428, 2139095040
  %v9072 = vshrl.u32 %v9071, 23
  %v9073 = vsub.s32 %v9072, 127
  %v9074 = vand.u32 2147483647, %v8428
  %v9075 = vand.u32 %v9074, 8388607
  %v9076 = vor.u32 %v9075, 8388608
  %v9077 = vsub.s32 0, %v9076
  %v9078 = vadd.s32 %v9073, 1
  %vm9079 = vcmp.gt.s32.totalorder %v9078, 0
  %v9080 = vsel %vm9079, %v9078, 0
  %v9081 = vshrl.u32 %v9080, 5
  %v9082 = vand.u32 %v9080, 31
  %v9083 = vsub.s32 32, %v9082
  %v9084 = vshrl.u32 683565275, %v9083
  %v9085 = vshll.u32 683565275, %v9082
  %v9086 = vshrl.u32 2475754826, %v9083
  %v9087 = vor.u32 %v9085, %v9086
  %v9088 = vshll.u32 2475754826, %v9082
  %v9089 = vshrl.u32 2131351028, %v9083
  %v9090 = vor.u32 %v9088, %v9089
  %v9091 = vshll.u32 2131351028, %v9082
  %v9092 = vshrl.u32 2102212464, %v9083
  %v9093 = vor.u32 %v9091, %v9092
  %v9094 = vshll.u32 2102212464, %v9082
  %v9095 = vshrl.u32 920167782, %v9083
  %v9096 = vor.u32 %v9094, %v9095
  %v9097 = vshll.u32 920167782, %v9082
  %v9098 = vshrl.u32 1326507024, %v9083
  %v9099 = vor.u32 %v9097, %v9098
  %vm9100 = vcmp.lt.s32.totalorder %v9081, 1
  %vm9101 = vcmp.lt.s32.totalorder %v9081, 2
  %vm9102 = vcmp.lt.s32.totalorder %v9081, 3
  %vm9103 = vcmp.lt.s32.totalorder %v9081, 4
  %v9104 = vsel %vm9100, %v9084, %v9087
  %v9105 = vsel %vm9103, %v9093, 2102212464
  %v9106 = vsel %vm9102, %v9090, %v9105
  %v9107 = vsel %vm9101, %v9104, %v9106
  %v9108 = vsel %vm9100, %v9087, %v9090
  %v9109 = vsel %vm9103, %v9096, 920167782
  %v9110 = vsel %vm9102, %v9093, %v9109
  %v9111 = vsel %vm9101, %v9108, %v9110
  %v9112 = vsel %vm9100, %v9090, %v9093
  %v9113 = vsel %vm9103, %v9099, 1326507024
  %v9114 = vsel %vm9102, %v9096, %v9113
  %v9115 = vsel %vm9101, %v9112, %v9114
  %v9116 = vshll.u32 %v9076, 8
  %v9117 = vmul.u32.u64.compose %v9116, %v9115
  %v9118 = vextract.low.u32 %v9117
  %v9119 = vextract.high.u32 %v9117
  %v9120 = vmul.u32.u64.compose %v9116, %v9111
  %v9121 = vextract.low.u32 %v9120
  %v9122 = vextract.high.u32 %v9120
  %v9123 = vmul.u32 %v9116, %v9107
  %v9124 = vadd.s32 %v9119, %v9121
  %vm9125 = vc.u32 %v9119, %v9121
  %v9126 = vadd.s32 %v9122, 1
  %v9127 = vsel %vm9125, %v9126, %v9122
  %v9128 = vadd.s32 %v9123, %v9127
  %v9129 = vadd.s32 %v9128, 536870912
  %v9130 = vshrl.u32 %v9129, 30
  %v9131 = vshll.u32 %v9130, 30
  %v9132 = vsub.s32 %v9128, %v9131
  %vm9133 = vcmp.lt.s32.totalorder %v9132, 0
  %v9134 = vsub.s32 0, %v9132
  %v9135 = vsel %vm9133, %v9134, %v9132
  %v9136 = vclz %v9135
  %v9137 = vsub.s32 %v9136, 2
  %vm9138 = vcmp.gt.s32.totalorder 0, %v9137
  %v9139 = vsel %vm9138, 0, %v9137
  %v9140 = vsub.s32 32, %v9139
  %v9141 = vshll.u32 %v9132, %v9139
  %v9142 = vshrl.u32 %v9124, %v9140
  %v9143 = vor.u32 %v9141, %v9142
  %v9144 = vsub.s32 4294967266, %v9139
  %v9145 = vadd.s32 %v9144, 127
  %v9146 = vshll.u32 %v9145, 23
  %v9147 = vor.u32 4788187, %v9146
  %v9148 = vand.u32 2147483647, %v9147
  %v9150 = vcvt.s32.f32 %v9143
  %v9151 = vmul.f32 %v9150, %v9148
  %v9152 = vxor.u32 %v9151, 2147483648
  %v9153 = vsel %vm9070, %v9152, %v9151
  %v9154 = vsub.s32 4, %v9130
  %v9155 = vsel %vm9070, %v9154, %v9130
  %v9156 = vsel %vm9069, %v8428, %v9153
  %v9157 = vsel %vm9069, 0, %v9155
  %v9158 = vcosq.f32.pop %v9156
  %v9159 = vsinq.f32.pop %v9156
  %vm9160 = vweird.f32 %v8428
  %v9161 = vadd.s32 %v9157, 3
  %v9162 = vand.u32 %v9161, 3
  %vm9163 = vcmp.lt.s32.totalorder %v9162, 2
  %vm9164 = vcmp.eq.s32.totalorder %v9162, 0
  %v9165 = vxor.u32 %v9159, 2147483648
  %v9166 = vsel %vm9164, %v9158, %v9165
  %vm9167 = vcmp.eq.s32.totalorder %v9162, 2
  %v9168 = vxor.u32 %v9158, 2147483648
  %v9169 = vsel %vm9167, %v9168, %v9159
  %v9170 = vsel %vm9163, %v9166, %v9169
  %v9171 = vsel %vm9160, nan, %v9170
  %v9172 = vand.u32 2147483647, %v8430
  %vm9173 = vcmp.le.f32.partialorder %v9172, 0.7853982
  %vm9174 = vcmp.lt.s32.totalorder %v8430, 0
  %v9175 = vand.u32 %v8430, 2139095040
  %v9176 = vshrl.u32 %v9175, 23
  %v9177 = vsub.s32 %v9176, 127
  %v9178 = vand.u32 2147483647, %v8430
  %v9179 = vand.u32 %v9178, 8388607
  %v9180 = vor.u32 %v9179, 8388608
  %v9181 = vsub.s32 0, %v9180
  %v9182 = vadd.s32 %v9177, 1
  %vm9183 = vcmp.gt.s32.totalorder %v9182, 0
  %v9184 = vsel %vm9183, %v9182, 0
  %v9185 = vshrl.u32 %v9184, 5
  %v9186 = vand.u32 %v9184, 31
  %v9187 = vsub.s32 32, %v9186
  %v9188 = vshrl.u32 683565275, %v9187
  %v9189 = vshll.u32 683565275, %v9186
  %v9190 = vshrl.u32 2475754826, %v9187
  %v9191 = vor.u32 %v9189, %v9190
  %v9192 = vshll.u32 2475754826, %v9186
  %v9193 = vshrl.u32 2131351028, %v9187
  %v9194 = vor.u32 %v9192, %v9193
  %v9195 = vshll.u32 2131351028, %v9186
  %v9196 = vshrl.u32 2102212464, %v9187
  %v9197 = vor.u32 %v9195, %v9196
  %v9198 = vshll.u32 2102212464, %v9186
  %v9199 = vshrl.u32 920167782, %v9187
  %v9200 = vor.u32 %v9198, %v9199
  %v9201 = vshll.u32 920167782, %v9186
  %v9202 = vshrl.u32 1326507024, %v9187
  %v9203 = vor.u32 %v9201, %v9202
  %vm9204 = vcmp.lt.s32.totalorder %v9185, 1
  %vm9205 = vcmp.lt.s32.totalorder %v9185, 2
  %vm9206 = vcmp.lt.s32.totalorder %v9185, 3
  %vm9207 = vcmp.lt.s32.totalorder %v9185, 4
  %v9208 = vsel %vm9204, %v9188, %v9191
  %v9209 = vsel %vm9207, %v9197, 2102212464
  %v9210 = vsel %vm9206, %v9194, %v9209
  %v9211 = vsel %vm9205, %v9208, %v9210
  %v9212 = vsel %vm9204, %v9191, %v9194
  %v9213 = vsel %vm9207, %v9200, 920167782
  %v9214 = vsel %vm9206, %v9197, %v9213
  %v9215 = vsel %vm9205, %v9212, %v9214
  %v9216 = vsel %vm9204, %v9194, %v9197
  %v9217 = vsel %vm9207, %v9203, 1326507024
  %v9218 = vsel %vm9206, %v9200, %v9217
  %v9219 = vsel %vm9205, %v9216, %v9218
  %v9220 = vshll.u32 %v9180, 8
  %v9221 = vmul.u32.u64.compose %v9220, %v9219
  %v9222 = vextract.low.u32 %v9221
  %v9223 = vextract.high.u32 %v9221
  %v9224 = vmul.u32.u64.compose %v9220, %v9215
  %v9225 = vextract.low.u32 %v9224
  %v9226 = vextract.high.u32 %v9224
  %v9227 = vmul.u32 %v9220, %v9211
  %v9228 = vadd.s32 %v9223, %v9225
  %vm9229 = vc.u32 %v9223, %v9225
  %v9230 = vadd.s32 %v9226, 1
  %v9231 = vsel %vm9229, %v9230, %v9226
  %v9232 = vadd.s32 %v9227, %v9231
  %v9233 = vadd.s32 %v9232, 536870912
  %v9234 = vshrl.u32 %v9233, 30
  %v9235 = vshll.u32 %v9234, 30
  %v9236 = vsub.s32 %v9232, %v9235
  %vm9237 = vcmp.lt.s32.totalorder %v9236, 0
  %v9238 = vsub.s32 0, %v9236
  %v9239 = vsel %vm9237, %v9238, %v9236
  %v9240 = vclz %v9239
  %v9241 = vsub.s32 %v9240, 2
  %vm9242 = vcmp.gt.s32.totalorder 0, %v9241
  %v9243 = vsel %vm9242, 0, %v9241
  %v9244 = vsub.s32 32, %v9243
  %v9245 = vshll.u32 %v9236, %v9243
  %v9246 = vshrl.u32 %v9228, %v9244
  %v9247 = vor.u32 %v9245, %v9246
  %v9248 = vsub.s32 4294967266, %v9243
  %v9249 = vadd.s32 %v9248, 127
  %v9250 = vshll.u32 %v9249, 23
  %v9251 = vor.u32 4788187, %v9250
  %v9252 = vand.u32 2147483647, %v9251
  %v9254 = vcvt.s32.f32 %v9247
  %v9255 = vmul.f32 %v9254, %v9252
  %v9256 = vxor.u32 %v9255, 2147483648
  %v9257 = vsel %vm9174, %v9256, %v9255
  %v9258 = vsub.s32 4, %v9234
  %v9259 = vsel %vm9174, %v9258, %v9234
  %v9260 = vsel %vm9173, %v8430, %v9257
  %v9261 = vsel %vm9173, 0, %v9259
  %v9262 = vcosq.f32.pop %v9260
  %v9263 = vsinq.f32.pop %v9260
  %vm9264 = vweird.f32 %v8430
  %v9265 = vadd.s32 %v9261, 3
  %v9266 = vand.u32 %v9265, 3
  %vm9267 = vcmp.lt.s32.totalorder %v9266, 2
  %vm9268 = vcmp.eq.s32.totalorder %v9266, 0
  %v9269 = vxor.u32 %v9263, 2147483648
  %v9270 = vsel %vm9268, %v9262, %v9269
  %vm9271 = vcmp.eq.s32.totalorder %v9266, 2
  %v9272 = vxor.u32 %v9262, 2147483648
  %v9273 = vsel %vm9271, %v9272, %v9263
  %v9274 = vsel %vm9267, %v9270, %v9273
  %v9275 = vsel %vm9264, nan, %v9274
  %v9276 = vand.u32 2147483647, %v8345
  %vm9277 = vcmp.le.f32.partialorder %v9276, 0.7853982
  %vm9278 = vcmp.lt.s32.totalorder %v8345, 0
  %v9279 = vand.u32 %v8345, 2139095040
  %v9280 = vshrl.u32 %v9279, 23
  %v9281 = vsub.s32 %v9280, 127
  %v9282 = vand.u32 2147483647, %v8345
  %v9283 = vand.u32 %v9282, 8388607
  %v9284 = vor.u32 %v9283, 8388608
  %v9285 = vsub.s32 0, %v9284
  %v9286 = vadd.s32 %v9281, 1
  %vm9287 = vcmp.gt.s32.totalorder %v9286, 0
  %v9288 = vsel %vm9287, %v9286, 0
  %v9289 = vshrl.u32 %v9288, 5
  %v9290 = vand.u32 %v9288, 31
  %v9291 = vsub.s32 32, %v9290
  %v9292 = vshrl.u32 683565275, %v9291
  %v9293 = vshll.u32 683565275, %v9290
  %v9294 = vshrl.u32 2475754826, %v9291
  %v9295 = vor.u32 %v9293, %v9294
  %v9296 = vshll.u32 2475754826, %v9290
  %v9297 = vshrl.u32 2131351028, %v9291
  %v9298 = vor.u32 %v9296, %v9297
  %v9299 = vshll.u32 2131351028, %v9290
  %v9300 = vshrl.u32 2102212464, %v9291
  %v9301 = vor.u32 %v9299, %v9300
  %v9302 = vshll.u32 2102212464, %v9290
  %v9303 = vshrl.u32 920167782, %v9291
  %v9304 = vor.u32 %v9302, %v9303
  %v9305 = vshll.u32 920167782, %v9290
  %v9306 = vshrl.u32 1326507024, %v9291
  %v9307 = vor.u32 %v9305, %v9306
  %vm9308 = vcmp.lt.s32.totalorder %v9289, 1
  %vm9309 = vcmp.lt.s32.totalorder %v9289, 2
  %vm9310 = vcmp.lt.s32.totalorder %v9289, 3
  %vm9311 = vcmp.lt.s32.totalorder %v9289, 4
  %v9312 = vsel %vm9308, %v9292, %v9295
  %v9313 = vsel %vm9311, %v9301, 2102212464
  %v9314 = vsel %vm9310, %v9298, %v9313
  %v9315 = vsel %vm9309, %v9312, %v9314
  %v9316 = vsel %vm9308, %v9295, %v9298
  %v9317 = vsel %vm9311, %v9304, 920167782
  %v9318 = vsel %vm9310, %v9301, %v9317
  %v9319 = vsel %vm9309, %v9316, %v9318
  %v9320 = vsel %vm9308, %v9298, %v9301
  %v9321 = vsel %vm9311, %v9307, 1326507024
  %v9322 = vsel %vm9310, %v9304, %v9321
  %v9323 = vsel %vm9309, %v9320, %v9322
  %v9324 = vshll.u32 %v9284, 8
  %v9325 = vmul.u32.u64.compose %v9324, %v9323
  %v9326 = vextract.low.u32 %v9325
  %v9327 = vextract.high.u32 %v9325
  %v9328 = vmul.u32.u64.compose %v9324, %v9319
  %v9329 = vextract.low.u32 %v9328
  %v9330 = vextract.high.u32 %v9328
  %v9331 = vmul.u32 %v9324, %v9315
  %v9332 = vadd.s32 %v9327, %v9329
  %vm9333 = vc.u32 %v9327, %v9329
  %v9334 = vadd.s32 %v9330, 1
  %v9335 = vsel %vm9333, %v9334, %v9330
  %v9336 = vadd.s32 %v9331, %v9335
  %v9337 = vadd.s32 %v9336, 536870912
  %v9338 = vshrl.u32 %v9337, 30
  %v9339 = vshll.u32 %v9338, 30
  %v9340 = vsub.s32 %v9336, %v9339
  %vm9341 = vcmp.lt.s32.totalorder %v9340, 0
  %v9342 = vsub.s32 0, %v9340
  %v9343 = vsel %vm9341, %v9342, %v9340
  %v9344 = vclz %v9343
  %v9345 = vsub.s32 %v9344, 2
  %vm9346 = vcmp.gt.s32.totalorder 0, %v9345
  %v9347 = vsel %vm9346, 0, %v9345
  %v9348 = vsub.s32 32, %v9347
  %v9349 = vshll.u32 %v9340, %v9347
  %v9350 = vshrl.u32 %v9332, %v9348
  %v9351 = vor.u32 %v9349, %v9350
  %v9352 = vsub.s32 4294967266, %v9347
  %v9353 = vadd.s32 %v9352, 127
  %v9354 = vshll.u32 %v9353, 23
  %v9355 = vor.u32 4788187, %v9354
  %v9356 = vand.u32 2147483647, %v9355
  %v9358 = vcvt.s32.f32 %v9351
  %v9359 = vmul.f32 %v9358, %v9356
  %v9360 = vxor.u32 %v9359, 2147483648
  %v9361 = vsel %vm9278, %v9360, %v9359
  %v9362 = vsub.s32 4, %v9338
  %v9363 = vsel %vm9278, %v9362, %v9338
  %v9364 = vsel %vm9277, %v8345, %v9361
  %v9365 = vsel %vm9277, 0, %v9363
  %v9366 = vcosq.f32.pop %v9364
  %v9367 = vsinq.f32.pop %v9364
  %vm9368 = vweird.f32 %v8345
  %v9369 = vadd.s32 %v9365, 3
  %v9370 = vand.u32 %v9369, 3
  %vm9371 = vcmp.lt.s32.totalorder %v9370, 2
  %vm9372 = vcmp.eq.s32.totalorder %v9370, 0
  %v9373 = vxor.u32 %v9367, 2147483648
  %v9374 = vsel %vm9372, %v9366, %v9373
  %vm9375 = vcmp.eq.s32.totalorder %v9370, 2
  %v9376 = vxor.u32 %v9366, 2147483648
  %v9377 = vsel %vm9375, %v9376, %v9367
  %v9378 = vsel %vm9371, %v9374, %v9377
  %v9379 = vsel %vm9368, nan, %v9378
  %v9380 = vand.u32 2147483647, %v8347
  %vm9381 = vcmp.le.f32.partialorder %v9380, 0.7853982
  %vm9382 = vcmp.lt.s32.totalorder %v8347, 0
  %v9383 = vand.u32 %v8347, 2139095040
  %v9384 = vshrl.u32 %v9383, 23
  %v9385 = vsub.s32 %v9384, 127
  %v9386 = vand.u32 2147483647, %v8347
  %v9387 = vand.u32 %v9386, 8388607
  %v9388 = vor.u32 %v9387, 8388608
  %v9389 = vsub.s32 0, %v9388
  %v9390 = vadd.s32 %v9385, 1
  %vm9391 = vcmp.gt.s32.totalorder %v9390, 0
  %v9392 = vsel %vm9391, %v9390, 0
  %v9393 = vshrl.u32 %v9392, 5
  %v9394 = vand.u32 %v9392, 31
  %v9395 = vsub.s32 32, %v9394
  %v9396 = vshrl.u32 683565275, %v9395
  %v9397 = vshll.u32 683565275, %v9394
  %v9398 = vshrl.u32 2475754826, %v9395
  %v9399 = vor.u32 %v9397, %v9398
  %v9400 = vshll.u32 2475754826, %v9394
  %v9401 = vshrl.u32 2131351028, %v9395
  %v9402 = vor.u32 %v9400, %v9401
  %v9403 = vshll.u32 2131351028, %v9394
  %v9404 = vshrl.u32 2102212464, %v9395
  %v9405 = vor.u32 %v9403, %v9404
  %v9406 = vshll.u32 2102212464, %v9394
  %v9407 = vshrl.u32 920167782, %v9395
  %v9408 = vor.u32 %v9406, %v9407
  %v9409 = vshll.u32 920167782, %v9394
  %v9410 = vshrl.u32 1326507024, %v9395
  %v9411 = vor.u32 %v9409, %v9410
  %vm9412 = vcmp.lt.s32.totalorder %v9393, 1
  %vm9413 = vcmp.lt.s32.totalorder %v9393, 2
  %vm9414 = vcmp.lt.s32.totalorder %v9393, 3
  %vm9415 = vcmp.lt.s32.totalorder %v9393, 4
  %v9416 = vsel %vm9412, %v9396, %v9399
  %v9417 = vsel %vm9415, %v9405, 2102212464
  %v9418 = vsel %vm9414, %v9402, %v9417
  %v9419 = vsel %vm9413, %v9416, %v9418
  %v9420 = vsel %vm9412, %v9399, %v9402
  %v9421 = vsel %vm9415, %v9408, 920167782
  %v9422 = vsel %vm9414, %v9405, %v9421
  %v9423 = vsel %vm9413, %v9420, %v9422
  %v9424 = vsel %vm9412, %v9402, %v9405
  %v9425 = vsel %vm9415, %v9411, 1326507024
  %v9426 = vsel %vm9414, %v9408, %v9425
  %v9427 = vsel %vm9413, %v9424, %v9426
  %v9428 = vshll.u32 %v9388, 8
  %v9429 = vmul.u32.u64.compose %v9428, %v9427
  %v9430 = vextract.low.u32 %v9429
  %v9431 = vextract.high.u32 %v9429
  %v9432 = vmul.u32.u64.compose %v9428, %v9423
  %v9433 = vextract.low.u32 %v9432
  %v9434 = vextract.high.u32 %v9432
  %v9435 = vmul.u32 %v9428, %v9419
  %v9436 = vadd.s32 %v9431, %v9433
  %vm9437 = vc.u32 %v9431, %v9433
  %v9438 = vadd.s32 %v9434, 1
  %v9439 = vsel %vm9437, %v9438, %v9434
  %v9440 = vadd.s32 %v9435, %v9439
  %v9441 = vadd.s32 %v9440, 536870912
  %v9442 = vshrl.u32 %v9441, 30
  %v9443 = vshll.u32 %v9442, 30
  %v9444 = vsub.s32 %v9440, %v9443
  %vm9445 = vcmp.lt.s32.totalorder %v9444, 0
  %v9446 = vsub.s32 0, %v9444
  %v9447 = vsel %vm9445, %v9446, %v9444
  %v9448 = vclz %v9447
  %v9449 = vsub.s32 %v9448, 2
  %vm9450 = vcmp.gt.s32.totalorder 0, %v9449
  %v9451 = vsel %vm9450, 0, %v9449
  %v9452 = vsub.s32 32, %v9451
  %v9453 = vshll.u32 %v9444, %v9451
  %v9454 = vshrl.u32 %v9436, %v9452
  %v9455 = vor.u32 %v9453, %v9454
  %v9456 = vsub.s32 4294967266, %v9451
  %v9457 = vadd.s32 %v9456, 127
  %v9458 = vshll.u32 %v9457, 23
  %v9459 = vor.u32 4788187, %v9458
  %v9460 = vand.u32 2147483647, %v9459
  %v9462 = vcvt.s32.f32 %v9455
  %v9463 = vmul.f32 %v9462, %v9460
  %v9464 = vxor.u32 %v9463, 2147483648
  %v9465 = vsel %vm9382, %v9464, %v9463
  %v9466 = vsub.s32 4, %v9442
  %v9467 = vsel %vm9382, %v9466, %v9442
  %v9468 = vsel %vm9381, %v8347, %v9465
  %v9469 = vsel %vm9381, 0, %v9467
  %v9470 = vcosq.f32.pop %v9468
  %v9471 = vsinq.f32.pop %v9468
  %vm9472 = vweird.f32 %v8347
  %v9473 = vadd.s32 %v9469, 3
  %v9474 = vand.u32 %v9473, 3
  %vm9475 = vcmp.lt.s32.totalorder %v9474, 2
  %vm9476 = vcmp.eq.s32.totalorder %v9474, 0
  %v9477 = vxor.u32 %v9471, 2147483648
  %v9478 = vsel %vm9476, %v9470, %v9477
  %vm9479 = vcmp.eq.s32.totalorder %v9474, 2
  %v9480 = vxor.u32 %v9470, 2147483648
  %v9481 = vsel %vm9479, %v9480, %v9471
  %v9482 = vsel %vm9475, %v9478, %v9481
  %v9483 = vsel %vm9472, nan, %v9482
  %v9484 = vand.u32 2147483647, %v8434
  %vm9485 = vcmp.le.f32.partialorder %v9484, 0.7853982
  %vm9486 = vcmp.lt.s32.totalorder %v8434, 0
  %v9487 = vand.u32 %v8434, 2139095040
  %v9488 = vshrl.u32 %v9487, 23
  %v9489 = vsub.s32 %v9488, 127
  %v9490 = vand.u32 2147483647, %v8434
  %v9491 = vand.u32 %v9490, 8388607
  %v9492 = vor.u32 %v9491, 8388608
  %v9493 = vsub.s32 0, %v9492
  %v9494 = vadd.s32 %v9489, 1
  %vm9495 = vcmp.gt.s32.totalorder %v9494, 0
  %v9496 = vsel %vm9495, %v9494, 0
  %v9497 = vshrl.u32 %v9496, 5
  %v9498 = vand.u32 %v9496, 31
  %v9499 = vsub.s32 32, %v9498
  %v9500 = vshrl.u32 683565275, %v9499
  %v9501 = vshll.u32 683565275, %v9498
  %v9502 = vshrl.u32 2475754826, %v9499
  %v9503 = vor.u32 %v9501, %v9502
  %v9504 = vshll.u32 2475754826, %v9498
  %v9505 = vshrl.u32 2131351028, %v9499
  %v9506 = vor.u32 %v9504, %v9505
  %v9507 = vshll.u32 2131351028, %v9498
  %v9508 = vshrl.u32 2102212464, %v9499
  %v9509 = vor.u32 %v9507, %v9508
  %v9510 = vshll.u32 2102212464, %v9498
  %v9511 = vshrl.u32 920167782, %v9499
  %v9512 = vor.u32 %v9510, %v9511
  %v9513 = vshll.u32 920167782, %v9498
  %v9514 = vshrl.u32 1326507024, %v9499
  %v9515 = vor.u32 %v9513, %v9514
  %vm9516 = vcmp.lt.s32.totalorder %v9497, 1
  %vm9517 = vcmp.lt.s32.totalorder %v9497, 2
  %vm9518 = vcmp.lt.s32.totalorder %v9497, 3
  %vm9519 = vcmp.lt.s32.totalorder %v9497, 4
  %v9520 = vsel %vm9516, %v9500, %v9503
  %v9521 = vsel %vm9519, %v9509, 2102212464
  %v9522 = vsel %vm9518, %v9506, %v9521
  %v9523 = vsel %vm9517, %v9520, %v9522
  %v9524 = vsel %vm9516, %v9503, %v9506
  %v9525 = vsel %vm9519, %v9512, 920167782
  %v9526 = vsel %vm9518, %v9509, %v9525
  %v9527 = vsel %vm9517, %v9524, %v9526
  %v9528 = vsel %vm9516, %v9506, %v9509
  %v9529 = vsel %vm9519, %v9515, 1326507024
  %v9530 = vsel %vm9518, %v9512, %v9529
  %v9531 = vsel %vm9517, %v9528, %v9530
  %v9532 = vshll.u32 %v9492, 8
  %v9533 = vmul.u32.u64.compose %v9532, %v9531
  %v9534 = vextract.low.u32 %v9533
  %v9535 = vextract.high.u32 %v9533
  %v9536 = vmul.u32.u64.compose %v9532, %v9527
  %v9537 = vextract.low.u32 %v9536
  %v9538 = vextract.high.u32 %v9536
  %v9539 = vmul.u32 %v9532, %v9523
  %v9540 = vadd.s32 %v9535, %v9537
  %vm9541 = vc.u32 %v9535, %v9537
  %v9542 = vadd.s32 %v9538, 1
  %v9543 = vsel %vm9541, %v9542, %v9538
  %v9544 = vadd.s32 %v9539, %v9543
  %v9545 = vadd.s32 %v9544, 536870912
  %v9546 = vshrl.u32 %v9545, 30
  %v9547 = vshll.u32 %v9546, 30
  %v9548 = vsub.s32 %v9544, %v9547
  %vm9549 = vcmp.lt.s32.totalorder %v9548, 0
  %v9550 = vsub.s32 0, %v9548
  %v9551 = vsel %vm9549, %v9550, %v9548
  %v9552 = vclz %v9551
  %v9553 = vsub.s32 %v9552, 2
  %vm9554 = vcmp.gt.s32.totalorder 0, %v9553
  %v9555 = vsel %vm9554, 0, %v9553
  %v9556 = vsub.s32 32, %v9555
  %v9557 = vshll.u32 %v9548, %v9555
  %v9558 = vshrl.u32 %v9540, %v9556
  %v9559 = vor.u32 %v9557, %v9558
  %v9560 = vsub.s32 4294967266, %v9555
  %v9561 = vadd.s32 %v9560, 127
  %v9562 = vshll.u32 %v9561, 23
  %v9563 = vor.u32 4788187, %v9562
  %v9564 = vand.u32 2147483647, %v9563
  %v9566 = vcvt.s32.f32 %v9559
  %v9567 = vmul.f32 %v9566, %v9564
  %v9568 = vxor.u32 %v9567, 2147483648
  %v9569 = vsel %vm9486, %v9568, %v9567
  %v9570 = vsub.s32 4, %v9546
  %v9571 = vsel %vm9486, %v9570, %v9546
  %v9572 = vsel %vm9485, %v8434, %v9569
  %v9573 = vsel %vm9485, 0, %v9571
  %v9574 = vcosq.f32.pop %v9572
  %v9575 = vsinq.f32.pop %v9572
  %vm9576 = vweird.f32 %v8434
  %v9577 = vadd.s32 %v9573, 3
  %v9578 = vand.u32 %v9577, 3
  %vm9579 = vcmp.lt.s32.totalorder %v9578, 2
  %vm9580 = vcmp.eq.s32.totalorder %v9578, 0
  %v9581 = vxor.u32 %v9575, 2147483648
  %v9582 = vsel %vm9580, %v9574, %v9581
  %vm9583 = vcmp.eq.s32.totalorder %v9578, 2
  %v9584 = vxor.u32 %v9574, 2147483648
  %v9585 = vsel %vm9583, %v9584, %v9575
  %v9586 = vsel %vm9579, %v9582, %v9585
  %v9587 = vsel %vm9576, nan, %v9586
  %v9588 = vand.u32 2147483647, %v8436
  %vm9589 = vcmp.le.f32.partialorder %v9588, 0.7853982
  %vm9590 = vcmp.lt.s32.totalorder %v8436, 0
  %v9591 = vand.u32 %v8436, 2139095040
  %v9592 = vshrl.u32 %v9591, 23
  %v9593 = vsub.s32 %v9592, 127
  %v9594 = vand.u32 2147483647, %v8436
  %v9595 = vand.u32 %v9594, 8388607
  %v9596 = vor.u32 %v9595, 8388608
  %v9597 = vsub.s32 0, %v9596
  %v9598 = vadd.s32 %v9593, 1
  %vm9599 = vcmp.gt.s32.totalorder %v9598, 0
  %v9600 = vsel %vm9599, %v9598, 0
  %v9601 = vshrl.u32 %v9600, 5
  %v9602 = vand.u32 %v9600, 31
  %v9603 = vsub.s32 32, %v9602
  %v9604 = vshrl.u32 683565275, %v9603
  %v9605 = vshll.u32 683565275, %v9602
  %v9606 = vshrl.u32 2475754826, %v9603
  %v9607 = vor.u32 %v9605, %v9606
  %v9608 = vshll.u32 2475754826, %v9602
  %v9609 = vshrl.u32 2131351028, %v9603
  %v9610 = vor.u32 %v9608, %v9609
  %v9611 = vshll.u32 2131351028, %v9602
  %v9612 = vshrl.u32 2102212464, %v9603
  %v9613 = vor.u32 %v9611, %v9612
  %v9614 = vshll.u32 2102212464, %v9602
  %v9615 = vshrl.u32 920167782, %v9603
  %v9616 = vor.u32 %v9614, %v9615
  %v9617 = vshll.u32 920167782, %v9602
  %v9618 = vshrl.u32 1326507024, %v9603
  %v9619 = vor.u32 %v9617, %v9618
  %vm9620 = vcmp.lt.s32.totalorder %v9601, 1
  %vm9621 = vcmp.lt.s32.totalorder %v9601, 2
  %vm9622 = vcmp.lt.s32.totalorder %v9601, 3
  %vm9623 = vcmp.lt.s32.totalorder %v9601, 4
  %v9624 = vsel %vm9620, %v9604, %v9607
  %v9625 = vsel %vm9623, %v9613, 2102212464
  %v9626 = vsel %vm9622, %v9610, %v9625
  %v9627 = vsel %vm9621, %v9624, %v9626
  %v9628 = vsel %vm9620, %v9607, %v9610
  %v9629 = vsel %vm9623, %v9616, 920167782
  %v9630 = vsel %vm9622, %v9613, %v9629
  %v9631 = vsel %vm9621, %v9628, %v9630
  %v9632 = vsel %vm9620, %v9610, %v9613
  %v9633 = vsel %vm9623, %v9619, 1326507024
  %v9634 = vsel %vm9622, %v9616, %v9633
  %v9635 = vsel %vm9621, %v9632, %v9634
  %v9636 = vshll.u32 %v9596, 8
  %v9637 = vmul.u32.u64.compose %v9636, %v9635
  %v9638 = vextract.low.u32 %v9637
  %v9639 = vextract.high.u32 %v9637
  %v9640 = vmul.u32.u64.compose %v9636, %v9631
  %v9641 = vextract.low.u32 %v9640
  %v9642 = vextract.high.u32 %v9640
  %v9643 = vmul.u32 %v9636, %v9627
  %v9644 = vadd.s32 %v9639, %v9641
  %vm9645 = vc.u32 %v9639, %v9641
  %v9646 = vadd.s32 %v9642, 1
  %v9647 = vsel %vm9645, %v9646, %v9642
  %v9648 = vadd.s32 %v9643, %v9647
  %v9649 = vadd.s32 %v9648, 536870912
  %v9650 = vshrl.u32 %v9649, 30
  %v9651 = vshll.u32 %v9650, 30
  %v9652 = vsub.s32 %v9648, %v9651
  %vm9653 = vcmp.lt.s32.totalorder %v9652, 0
  %v9654 = vsub.s32 0, %v9652
  %v9655 = vsel %vm9653, %v9654, %v9652
  %v9656 = vclz %v9655
  %v9657 = vsub.s32 %v9656, 2
  %vm9658 = vcmp.gt.s32.totalorder 0, %v9657
  %v9659 = vsel %vm9658, 0, %v9657
  %v9660 = vsub.s32 32, %v9659
  %v9661 = vshll.u32 %v9652, %v9659
  %v9662 = vshrl.u32 %v9644, %v9660
  %v9663 = vor.u32 %v9661, %v9662
  %v9664 = vsub.s32 4294967266, %v9659
  %v9665 = vadd.s32 %v9664, 127
  %v9666 = vshll.u32 %v9665, 23
  %v9667 = vor.u32 4788187, %v9666
  %v9668 = vand.u32 2147483647, %v9667
  %v9670 = vcvt.s32.f32 %v9663
  %v9671 = vmul.f32 %v9670, %v9668
  %v9672 = vxor.u32 %v9671, 2147483648
  %v9673 = vsel %vm9590, %v9672, %v9671
  %v9674 = vsub.s32 4, %v9650
  %v9675 = vsel %vm9590, %v9674, %v9650
  %v9676 = vsel %vm9589, %v8436, %v9673
  %v9677 = vsel %vm9589, 0, %v9675
  %v9678 = vcosq.f32.pop %v9676
  %v9679 = vsinq.f32.pop %v9676
  %vm9680 = vweird.f32 %v8436
  %v9681 = vadd.s32 %v9677, 3
  %v9682 = vand.u32 %v9681, 3
  %vm9683 = vcmp.lt.s32.totalorder %v9682, 2
  %vm9684 = vcmp.eq.s32.totalorder %v9682, 0
  %v9685 = vxor.u32 %v9679, 2147483648
  %v9686 = vsel %vm9684, %v9678, %v9685
  %vm9687 = vcmp.eq.s32.totalorder %v9682, 2
  %v9688 = vxor.u32 %v9678, 2147483648
  %v9689 = vsel %vm9687, %v9688, %v9679
  %v9690 = vsel %vm9683, %v9686, %v9689
  %v9691 = vsel %vm9680, nan, %v9690
  %v9692 = vand.u32 2147483647, %v8351
  %vm9693 = vcmp.le.f32.partialorder %v9692, 0.7853982
  %vm9694 = vcmp.lt.s32.totalorder %v8351, 0
  %v9695 = vand.u32 %v8351, 2139095040
  %v9696 = vshrl.u32 %v9695, 23
  %v9697 = vsub.s32 %v9696, 127
  %v9698 = vand.u32 2147483647, %v8351
  %v9699 = vand.u32 %v9698, 8388607
  %v9700 = vor.u32 %v9699, 8388608
  %v9701 = vsub.s32 0, %v9700
  %v9702 = vadd.s32 %v9697, 1
  %vm9703 = vcmp.gt.s32.totalorder %v9702, 0
  %v9704 = vsel %vm9703, %v9702, 0
  %v9705 = vshrl.u32 %v9704, 5
  %v9706 = vand.u32 %v9704, 31
  %v9707 = vsub.s32 32, %v9706
  %v9708 = vshrl.u32 683565275, %v9707
  %v9709 = vshll.u32 683565275, %v9706
  %v9710 = vshrl.u32 2475754826, %v9707
  %v9711 = vor.u32 %v9709, %v9710
  %v9712 = vshll.u32 2475754826, %v9706
  %v9713 = vshrl.u32 2131351028, %v9707
  %v9714 = vor.u32 %v9712, %v9713
  %v9715 = vshll.u32 2131351028, %v9706
  %v9716 = vshrl.u32 2102212464, %v9707
  %v9717 = vor.u32 %v9715, %v9716
  %v9718 = vshll.u32 2102212464, %v9706
  %v9719 = vshrl.u32 920167782, %v9707
  %v9720 = vor.u32 %v9718, %v9719
  %v9721 = vshll.u32 920167782, %v9706
  %v9722 = vshrl.u32 1326507024, %v9707
  %v9723 = vor.u32 %v9721, %v9722
  %vm9724 = vcmp.lt.s32.totalorder %v9705, 1
  %vm9725 = vcmp.lt.s32.totalorder %v9705, 2
  %vm9726 = vcmp.lt.s32.totalorder %v9705, 3
  %vm9727 = vcmp.lt.s32.totalorder %v9705, 4
  %v9728 = vsel %vm9724, %v9708, %v9711
  %v9729 = vsel %vm9727, %v9717, 2102212464
  %v9730 = vsel %vm9726, %v9714, %v9729
  %v9731 = vsel %vm9725, %v9728, %v9730
  %v9732 = vsel %vm9724, %v9711, %v9714
  %v9733 = vsel %vm9727, %v9720, 920167782
  %v9734 = vsel %vm9726, %v9717, %v9733
  %v9735 = vsel %vm9725, %v9732, %v9734
  %v9736 = vsel %vm9724, %v9714, %v9717
  %v9737 = vsel %vm9727, %v9723, 1326507024
  %v9738 = vsel %vm9726, %v9720, %v9737
  %v9739 = vsel %vm9725, %v9736, %v9738
  %v9740 = vshll.u32 %v9700, 8
  %v9741 = vmul.u32.u64.compose %v9740, %v9739
  %v9742 = vextract.low.u32 %v9741
  %v9743 = vextract.high.u32 %v9741
  %v9744 = vmul.u32.u64.compose %v9740, %v9735
  %v9745 = vextract.low.u32 %v9744
  %v9746 = vextract.high.u32 %v9744
  %v9747 = vmul.u32 %v9740, %v9731
  %v9748 = vadd.s32 %v9743, %v9745
  %vm9749 = vc.u32 %v9743, %v9745
  %v9750 = vadd.s32 %v9746, 1
  %v9751 = vsel %vm9749, %v9750, %v9746
  %v9752 = vadd.s32 %v9747, %v9751
  %v9753 = vadd.s32 %v9752, 536870912
  %v9754 = vshrl.u32 %v9753, 30
  %v9755 = vshll.u32 %v9754, 30
  %v9756 = vsub.s32 %v9752, %v9755
  %vm9757 = vcmp.lt.s32.totalorder %v9756, 0
  %v9758 = vsub.s32 0, %v9756
  %v9759 = vsel %vm9757, %v9758, %v9756
  %v9760 = vclz %v9759
  %v9761 = vsub.s32 %v9760, 2
  %vm9762 = vcmp.gt.s32.totalorder 0, %v9761
  %v9763 = vsel %vm9762, 0, %v9761
  %v9764 = vsub.s32 32, %v9763
  %v9765 = vshll.u32 %v9756, %v9763
  %v9766 = vshrl.u32 %v9748, %v9764
  %v9767 = vor.u32 %v9765, %v9766
  %v9768 = vsub.s32 4294967266, %v9763
  %v9769 = vadd.s32 %v9768, 127
  %v9770 = vshll.u32 %v9769, 23
  %v9771 = vor.u32 4788187, %v9770
  %v9772 = vand.u32 2147483647, %v9771
  %v9774 = vcvt.s32.f32 %v9767
  %v9775 = vmul.f32 %v9774, %v9772
  %v9776 = vxor.u32 %v9775, 2147483648
  %v9777 = vsel %vm9694, %v9776, %v9775
  %v9778 = vsub.s32 4, %v9754
  %v9779 = vsel %vm9694, %v9778, %v9754
  %v9780 = vsel %vm9693, %v8351, %v9777
  %v9781 = vsel %vm9693, 0, %v9779
  %v9782 = vcosq.f32.pop %v9780
  %v9783 = vsinq.f32.pop %v9780
  %vm9784 = vweird.f32 %v8351
  %v9785 = vadd.s32 %v9781, 3
  %v9786 = vand.u32 %v9785, 3
  %vm9787 = vcmp.lt.s32.totalorder %v9786, 2
  %vm9788 = vcmp.eq.s32.totalorder %v9786, 0
  %v9789 = vxor.u32 %v9783, 2147483648
  %v9790 = vsel %vm9788, %v9782, %v9789
  %vm9791 = vcmp.eq.s32.totalorder %v9786, 2
  %v9792 = vxor.u32 %v9782, 2147483648
  %v9793 = vsel %vm9791, %v9792, %v9783
  %v9794 = vsel %vm9787, %v9790, %v9793
  %v9795 = vsel %vm9784, nan, %v9794
  %v9796 = vand.u32 2147483647, %v8353
  %vm9797 = vcmp.le.f32.partialorder %v9796, 0.7853982
  %vm9798 = vcmp.lt.s32.totalorder %v8353, 0
  %v9799 = vand.u32 %v8353, 2139095040
  %v9800 = vshrl.u32 %v9799, 23
  %v9801 = vsub.s32 %v9800, 127
  %v9802 = vand.u32 2147483647, %v8353
  %v9803 = vand.u32 %v9802, 8388607
  %v9804 = vor.u32 %v9803, 8388608
  %v9805 = vsub.s32 0, %v9804
  %v9806 = vadd.s32 %v9801, 1
  %vm9807 = vcmp.gt.s32.totalorder %v9806, 0
  %v9808 = vsel %vm9807, %v9806, 0
  %v9809 = vshrl.u32 %v9808, 5
  %v9810 = vand.u32 %v9808, 31
  %v9811 = vsub.s32 32, %v9810
  %v9812 = vshrl.u32 683565275, %v9811
  %v9813 = vshll.u32 683565275, %v9810
  %v9814 = vshrl.u32 2475754826, %v9811
  %v9815 = vor.u32 %v9813, %v9814
  %v9816 = vshll.u32 2475754826, %v9810
  %v9817 = vshrl.u32 2131351028, %v9811
  %v9818 = vor.u32 %v9816, %v9817
  %v9819 = vshll.u32 2131351028, %v9810
  %v9820 = vshrl.u32 2102212464, %v9811
  %v9821 = vor.u32 %v9819, %v9820
  %v9822 = vshll.u32 2102212464, %v9810
  %v9823 = vshrl.u32 920167782, %v9811
  %v9824 = vor.u32 %v9822, %v9823
  %v9825 = vshll.u32 920167782, %v9810
  %v9826 = vshrl.u32 1326507024, %v9811
  %v9827 = vor.u32 %v9825, %v9826
  %vm9828 = vcmp.lt.s32.totalorder %v9809, 1
  %vm9829 = vcmp.lt.s32.totalorder %v9809, 2
  %vm9830 = vcmp.lt.s32.totalorder %v9809, 3
  %vm9831 = vcmp.lt.s32.totalorder %v9809, 4
  %v9832 = vsel %vm9828, %v9812, %v9815
  %v9833 = vsel %vm9831, %v9821, 2102212464
  %v9834 = vsel %vm9830, %v9818, %v9833
  %v9835 = vsel %vm9829, %v9832, %v9834
  %v9836 = vsel %vm9828, %v9815, %v9818
  %v9837 = vsel %vm9831, %v9824, 920167782
  %v9838 = vsel %vm9830, %v9821, %v9837
  %v9839 = vsel %vm9829, %v9836, %v9838
  %v9840 = vsel %vm9828, %v9818, %v9821
  %v9841 = vsel %vm9831, %v9827, 1326507024
  %v9842 = vsel %vm9830, %v9824, %v9841
  %v9843 = vsel %vm9829, %v9840, %v9842
  %v9844 = vshll.u32 %v9804, 8
  %v9845 = vmul.u32.u64.compose %v9844, %v9843
  %v9846 = vextract.low.u32 %v9845
  %v9847 = vextract.high.u32 %v9845
  %v9848 = vmul.u32.u64.compose %v9844, %v9839
  %v9849 = vextract.low.u32 %v9848
  %v9850 = vextract.high.u32 %v9848
  %v9851 = vmul.u32 %v9844, %v9835
  %v9852 = vadd.s32 %v9847, %v9849
  %vm9853 = vc.u32 %v9847, %v9849
  %v9854 = vadd.s32 %v9850, 1
  %v9855 = vsel %vm9853, %v9854, %v9850
  %v9856 = vadd.s32 %v9851, %v9855
  %v9857 = vadd.s32 %v9856, 536870912
  %v9858 = vshrl.u32 %v9857, 30
  %v9859 = vshll.u32 %v9858, 30
  %v9860 = vsub.s32 %v9856, %v9859
  %vm9861 = vcmp.lt.s32.totalorder %v9860, 0
  %v9862 = vsub.s32 0, %v9860
  %v9863 = vsel %vm9861, %v9862, %v9860
  %v9864 = vclz %v9863
  %v9865 = vsub.s32 %v9864, 2
  %vm9866 = vcmp.gt.s32.totalorder 0, %v9865
  %v9867 = vsel %vm9866, 0, %v9865
  %v9868 = vsub.s32 32, %v9867
  %v9869 = vshll.u32 %v9860, %v9867
  %v9870 = vshrl.u32 %v9852, %v9868
  %v9871 = vor.u32 %v9869, %v9870
  %v9872 = vsub.s32 4294967266, %v9867
  %v9873 = vadd.s32 %v9872, 127
  %v9874 = vshll.u32 %v9873, 23
  %v9875 = vor.u32 4788187, %v9874
  %v9876 = vand.u32 2147483647, %v9875
  %v9878 = vcvt.s32.f32 %v9871
  %v9879 = vmul.f32 %v9878, %v9876
  %v9880 = vxor.u32 %v9879, 2147483648
  %v9881 = vsel %vm9798, %v9880, %v9879
  %v9882 = vsub.s32 4, %v9858
  %v9883 = vsel %vm9798, %v9882, %v9858
  %v9884 = vsel %vm9797, %v8353, %v9881
  %v9885 = vsel %vm9797, 0, %v9883
  %v9886 = vcosq.f32.pop %v9884
  %v9887 = vsinq.f32.pop %v9884
  %vm9888 = vweird.f32 %v8353
  %v9889 = vadd.s32 %v9885, 3
  %v9890 = vand.u32 %v9889, 3
  %vm9891 = vcmp.lt.s32.totalorder %v9890, 2
  %vm9892 = vcmp.eq.s32.totalorder %v9890, 0
  %v9893 = vxor.u32 %v9887, 2147483648
  %v9894 = vsel %vm9892, %v9886, %v9893
  %vm9895 = vcmp.eq.s32.totalorder %v9890, 2
  %v9896 = vxor.u32 %v9886, 2147483648
  %v9897 = vsel %vm9895, %v9896, %v9887
  %v9898 = vsel %vm9891, %v9894, %v9897
  %v9899 = vsel %vm9888, nan, %v9898
  %v9900 = vand.u32 2147483647, %v8440
  %vm9901 = vcmp.le.f32.partialorder %v9900, 0.7853982
  %vm9902 = vcmp.lt.s32.totalorder %v8440, 0
  %v9903 = vand.u32 %v8440, 2139095040
  %v9904 = vshrl.u32 %v9903, 23
  %v9905 = vsub.s32 %v9904, 127
  %v9906 = vand.u32 2147483647, %v8440
  %v9907 = vand.u32 %v9906, 8388607
  %v9908 = vor.u32 %v9907, 8388608
  %v9909 = vsub.s32 0, %v9908
  %v9910 = vadd.s32 %v9905, 1
  %vm9911 = vcmp.gt.s32.totalorder %v9910, 0
  %v9912 = vsel %vm9911, %v9910, 0
  %v9913 = vshrl.u32 %v9912, 5
  %v9914 = vand.u32 %v9912, 31
  %v9915 = vsub.s32 32, %v9914
  %v9916 = vshrl.u32 683565275, %v9915
  %v9917 = vshll.u32 683565275, %v9914
  %v9918 = vshrl.u32 2475754826, %v9915
  %v9919 = vor.u32 %v9917, %v9918
  %v9920 = vshll.u32 2475754826, %v9914
  %v9921 = vshrl.u32 2131351028, %v9915
  %v9922 = vor.u32 %v9920, %v9921
  %v9923 = vshll.u32 2131351028, %v9914
  %v9924 = vshrl.u32 2102212464, %v9915
  %v9925 = vor.u32 %v9923, %v9924
  %v9926 = vshll.u32 2102212464, %v9914
  %v9927 = vshrl.u32 920167782, %v9915
  %v9928 = vor.u32 %v9926, %v9927
  %v9929 = vshll.u32 920167782, %v9914
  %v9930 = vshrl.u32 1326507024, %v9915
  %v9931 = vor.u32 %v9929, %v9930
  %vm9932 = vcmp.lt.s32.totalorder %v9913, 1
  %vm9933 = vcmp.lt.s32.totalorder %v9913, 2
  %vm9934 = vcmp.lt.s32.totalorder %v9913, 3
  %vm9935 = vcmp.lt.s32.totalorder %v9913, 4
  %v9936 = vsel %vm9932, %v9916, %v9919
  %v9937 = vsel %vm9935, %v9925, 2102212464
  %v9938 = vsel %vm9934, %v9922, %v9937
  %v9939 = vsel %vm9933, %v9936, %v9938
  %v9940 = vsel %vm9932, %v9919, %v9922
  %v9941 = vsel %vm9935, %v9928, 920167782
  %v9942 = vsel %vm9934, %v9925, %v9941
  %v9943 = vsel %vm9933, %v9940, %v9942
  %v9944 = vsel %vm9932, %v9922, %v9925
  %v9945 = vsel %vm9935, %v9931, 1326507024
  %v9946 = vsel %vm9934, %v9928, %v9945
  %v9947 = vsel %vm9933, %v9944, %v9946
  %v9948 = vshll.u32 %v9908, 8
  %v9949 = vmul.u32.u64.compose %v9948, %v9947
  %v9950 = vextract.low.u32 %v9949
  %v9951 = vextract.high.u32 %v9949
  %v9952 = vmul.u32.u64.compose %v9948, %v9943
  %v9953 = vextract.low.u32 %v9952
  %v9954 = vextract.high.u32 %v9952
  %v9955 = vmul.u32 %v9948, %v9939
  %v9956 = vadd.s32 %v9951, %v9953
  %vm9957 = vc.u32 %v9951, %v9953
  %v9958 = vadd.s32 %v9954, 1
  %v9959 = vsel %vm9957, %v9958, %v9954
  %v9960 = vadd.s32 %v9955, %v9959
  %v9961 = vadd.s32 %v9960, 536870912
  %v9962 = vshrl.u32 %v9961, 30
  %v9963 = vshll.u32 %v9962, 30
  %v9964 = vsub.s32 %v9960, %v9963
  %vm9965 = vcmp.lt.s32.totalorder %v9964, 0
  %v9966 = vsub.s32 0, %v9964
  %v9967 = vsel %vm9965, %v9966, %v9964
  %v9968 = vclz %v9967
  %v9969 = vsub.s32 %v9968, 2
  %vm9970 = vcmp.gt.s32.totalorder 0, %v9969
  %v9971 = vsel %vm9970, 0, %v9969
  %v9972 = vsub.s32 32, %v9971
  %v9973 = vshll.u32 %v9964, %v9971
  %v9974 = vshrl.u32 %v9956, %v9972
  %v9975 = vor.u32 %v9973, %v9974
  %v9976 = vsub.s32 4294967266, %v9971
  %v9977 = vadd.s32 %v9976, 127
  %v9978 = vshll.u32 %v9977, 23
  %v9979 = vor.u32 4788187, %v9978
  %v9980 = vand.u32 2147483647, %v9979
  %v9982 = vcvt.s32.f32 %v9975
  %v9983 = vmul.f32 %v9982, %v9980
  %v9984 = vxor.u32 %v9983, 2147483648
  %v9985 = vsel %vm9902, %v9984, %v9983
  %v9986 = vsub.s32 4, %v9962
  %v9987 = vsel %vm9902, %v9986, %v9962
  %v9988 = vsel %vm9901, %v8440, %v9985
  %v9989 = vsel %vm9901, 0, %v9987
  %v9990 = vcosq.f32.pop %v9988
  %v9991 = vsinq.f32.pop %v9988
  %vm9992 = vweird.f32 %v8440
  %v9993 = vadd.s32 %v9989, 3
  %v9994 = vand.u32 %v9993, 3
  %vm9995 = vcmp.lt.s32.totalorder %v9994, 2
  %vm9996 = vcmp.eq.s32.totalorder %v9994, 0
  %v9997 = vxor.u32 %v9991, 2147483648
  %v9998 = vsel %vm9996, %v9990, %v9997
  %vm9999 = vcmp.eq.s32.totalorder %v9994, 2
  %v10000 = vxor.u32 %v9990, 2147483648
  %v10001 = vsel %vm9999, %v10000, %v9991
  %v10002 = vsel %vm9995, %v9998, %v10001
  %v10003 = vsel %vm9992, nan, %v10002
  %v10004 = vand.u32 2147483647, %v8442
  %vm10005 = vcmp.le.f32.partialorder %v10004, 0.7853982
  %vm10006 = vcmp.lt.s32.totalorder %v8442, 0
  %v10007 = vand.u32 %v8442, 2139095040
  %v10008 = vshrl.u32 %v10007, 23
  %v10009 = vsub.s32 %v10008, 127
  %v10010 = vand.u32 2147483647, %v8442
  %v10011 = vand.u32 %v10010, 8388607
  %v10012 = vor.u32 %v10011, 8388608
  %v10013 = vsub.s32 0, %v10012
  %v10014 = vadd.s32 %v10009, 1
  %vm10015 = vcmp.gt.s32.totalorder %v10014, 0
  %v10016 = vsel %vm10015, %v10014, 0
  %v10017 = vshrl.u32 %v10016, 5
  %v10018 = vand.u32 %v10016, 31
  %v10019 = vsub.s32 32, %v10018
  %v10020 = vshrl.u32 683565275, %v10019
  %v10021 = vshll.u32 683565275, %v10018
  %v10022 = vshrl.u32 2475754826, %v10019
  %v10023 = vor.u32 %v10021, %v10022
  %v10024 = vshll.u32 2475754826, %v10018
  %v10025 = vshrl.u32 2131351028, %v10019
  %v10026 = vor.u32 %v10024, %v10025
  %v10027 = vshll.u32 2131351028, %v10018
  %v10028 = vshrl.u32 2102212464, %v10019
  %v10029 = vor.u32 %v10027, %v10028
  %v10030 = vshll.u32 2102212464, %v10018
  %v10031 = vshrl.u32 920167782, %v10019
  %v10032 = vor.u32 %v10030, %v10031
  %v10033 = vshll.u32 920167782, %v10018
  %v10034 = vshrl.u32 1326507024, %v10019
  %v10035 = vor.u32 %v10033, %v10034
  %vm10036 = vcmp.lt.s32.totalorder %v10017, 1
  %vm10037 = vcmp.lt.s32.totalorder %v10017, 2
  %vm10038 = vcmp.lt.s32.totalorder %v10017, 3
  %vm10039 = vcmp.lt.s32.totalorder %v10017, 4
  %v10040 = vsel %vm10036, %v10020, %v10023
  %v10041 = vsel %vm10039, %v10029, 2102212464
  %v10042 = vsel %vm10038, %v10026, %v10041
  %v10043 = vsel %vm10037, %v10040, %v10042
  %v10044 = vsel %vm10036, %v10023, %v10026
  %v10045 = vsel %vm10039, %v10032, 920167782
  %v10046 = vsel %vm10038, %v10029, %v10045
  %v10047 = vsel %vm10037, %v10044, %v10046
  %v10048 = vsel %vm10036, %v10026, %v10029
  %v10049 = vsel %vm10039, %v10035, 1326507024
  %v10050 = vsel %vm10038, %v10032, %v10049
  %v10051 = vsel %vm10037, %v10048, %v10050
  %v10052 = vshll.u32 %v10012, 8
  %v10053 = vmul.u32.u64.compose %v10052, %v10051
  %v10054 = vextract.low.u32 %v10053
  %v10055 = vextract.high.u32 %v10053
  %v10056 = vmul.u32.u64.compose %v10052, %v10047
  %v10057 = vextract.low.u32 %v10056
  %v10058 = vextract.high.u32 %v10056
  %v10059 = vmul.u32 %v10052, %v10043
  %v10060 = vadd.s32 %v10055, %v10057
  %vm10061 = vc.u32 %v10055, %v10057
  %v10062 = vadd.s32 %v10058, 1
  %v10063 = vsel %vm10061, %v10062, %v10058
  %v10064 = vadd.s32 %v10059, %v10063
  %v10065 = vadd.s32 %v10064, 536870912
  %v10066 = vshrl.u32 %v10065, 30
  %v10067 = vshll.u32 %v10066, 30
  %v10068 = vsub.s32 %v10064, %v10067
  %vm10069 = vcmp.lt.s32.totalorder %v10068, 0
  %v10070 = vsub.s32 0, %v10068
  %v10071 = vsel %vm10069, %v10070, %v10068
  %v10072 = vclz %v10071
  %v10073 = vsub.s32 %v10072, 2
  %vm10074 = vcmp.gt.s32.totalorder 0, %v10073
  %v10075 = vsel %vm10074, 0, %v10073
  %v10076 = vsub.s32 32, %v10075
  %v10077 = vshll.u32 %v10068, %v10075
  %v10078 = vshrl.u32 %v10060, %v10076
  %v10079 = vor.u32 %v10077, %v10078
  %v10080 = vsub.s32 4294967266, %v10075
  %v10081 = vadd.s32 %v10080, 127
  %v10082 = vshll.u32 %v10081, 23
  %v10083 = vor.u32 4788187, %v10082
  %v10084 = vand.u32 2147483647, %v10083
  %v10086 = vcvt.s32.f32 %v10079
  %v10087 = vmul.f32 %v10086, %v10084
  %v10088 = vxor.u32 %v10087, 2147483648
  %v10089 = vsel %vm10006, %v10088, %v10087
  %v10090 = vsub.s32 4, %v10066
  %v10091 = vsel %vm10006, %v10090, %v10066
  %v10092 = vsel %vm10005, %v8442, %v10089
  %v10093 = vsel %vm10005, 0, %v10091
  %v10094 = vcosq.f32.pop %v10092
  %v10095 = vsinq.f32.pop %v10092
  %vm10096 = vweird.f32 %v8442
  %v10097 = vadd.s32 %v10093, 3
  %v10098 = vand.u32 %v10097, 3
  %vm10099 = vcmp.lt.s32.totalorder %v10098, 2
  %vm10100 = vcmp.eq.s32.totalorder %v10098, 0
  %v10101 = vxor.u32 %v10095, 2147483648
  %v10102 = vsel %vm10100, %v10094, %v10101
  %vm10103 = vcmp.eq.s32.totalorder %v10098, 2
  %v10104 = vxor.u32 %v10094, 2147483648
  %v10105 = vsel %vm10103, %v10104, %v10095
  %v10106 = vsel %vm10099, %v10102, %v10105
  %v10107 = vsel %vm10096, nan, %v10106
  %v10108 = vld [vmem:[%s5] sm:$0xff]
  %v10109 = vld [vmem:[%s5 + $0x8] sm:$0xff]
  %v10110 = vld [vmem:[%s5 + $0x10] sm:$0xff]
  %v10111 = vld [vmem:[%s5 + $0x18] sm:$0xff]
  %v10112 = vld [vmem:[%s6] sm:$0xff]
  %v10113 = vld [vmem:[%s6 + $0x8] sm:$0xff]
  %v10114 = vld [vmem:[%s6 + $0x10] sm:$0xff]
  %v10115 = vld [vmem:[%s6 + $0x18] sm:$0xff]
  %10117 = vset.pattern.permute.xlu0 0
  %10118 = vperm.xlu0 %10117, %v10112
  %v10119 = vpop.permute.xlu0 %10118
  %10122 = vset.pattern.permute.xlu0 0
  %10123 = vperm.xlu0 %10122, %v10113
  %v10124 = vpop.permute.xlu0 %10123
  %10127 = vset.pattern.permute.xlu0 0
  %10128 = vperm.xlu0 %10127, %v10114
  %v10129 = vpop.permute.xlu0 %10128
  %10132 = vset.pattern.permute.xlu0 0
  %10133 = vperm.xlu0 %10132, %v10115
  %v10134 = vpop.permute.xlu0 %10133
  %v10137 = vsel %vm1973, %v10108, 0
  %v10140 = vsel %vm1973, %v10109, 0
  %v10143 = vsel %vm1973, %v10110, 0
  %v10146 = vsel %vm1973, %v10111, 0
  %10148 = vmatprep.subr.mxu0 %v8651
  %10149 = vmatpush1.msra.mxu0 %v8547
  %10150 = vmatprep.subr.mxu0 %v9067
  %10151 = vmatpush1.msra.mxu0 %v8963
  %10152 = vmatprep.subr.mxu0 %v9483
  %10153 = vmatpush1.msra.mxu0 %v9379
  %10154 = vmatprep.subr.mxu0 %v9899
  %10155 = vmatpush1.msra.mxu0 %v9795
  %10156 = vmatprep.subr.mxu0 0.0
  %10157 = vmatpush1.msra.mxu0 0.0
  %10158 = vmatprep.subr.mxu0 0.0
  %10159 = vmatpush1.msra.mxu0 0.0
  %10160 = vmatprep.subr.mxu0 0.0
  %10161 = vmatpush1.msra.mxu0 0.0
  %10162 = vmatprep.subr.mxu0 0.0
  %10163 = vmatpush1.msra.mxu0 0.0
  %10164 = vmatprep.subr.mxu0 0.0
  %10165 = vmatpush1.msra.mxu0 0.0
  %10166 = vmatprep.subr.mxu0 0.0
  %10167 = vmatpush1.msra.mxu0 0.0
  %10168 = vmatprep.subr.mxu0 0.0
  %10169 = vmatpush1.msra.mxu0 0.0
  %10170 = vmatprep.subr.mxu0 0.0
  %10171 = vmatpush1.msra.mxu0 0.0
  %10172 = vmatprep.subr.mxu0 0.0
  %10173 = vmatpush1.msra.mxu0 0.0
  %10174 = vmatprep.subr.mxu0 0.0
  %10175 = vmatpush1.msra.mxu0 0.0
  %10176 = vmatprep.subr.mxu0 0.0
  %10177 = vmatpush1.msra.mxu0 0.0
  %10178 = vmatprep.subr.mxu0 0.0
  %10179 = vmatpush1.msra.mxu0 0.0
  %10180 = vmatprep.subr.mxu0 0.0
  %10181 = vmatpush1.msra.mxu0 0.0
  %10182 = vmatprep.subr.mxu0 0.0
  %10183 = vmatpush1.msra.mxu0 0.0
  %10184 = vmatprep.subr.mxu0 0.0
  %10185 = vmatpush1.msra.mxu0 0.0
  %10186 = vmatprep.subr.mxu0 0.0
  %10187 = vmatpush1.msra.mxu0 0.0
  %10188 = vmatprep.subr.mxu0 0.0
  %10189 = vmatpush1.msra.mxu0 0.0
  %10190 = vmatprep.subr.mxu0 0.0
  %10191 = vmatpush1.msra.mxu0 0.0
  %10192 = vmatprep.subr.mxu0 0.0
  %10193 = vmatpush1.msra.mxu0 0.0
  %10194 = vmatprep.subr.mxu0 0.0
  %10195 = vmatpush1.msra.mxu0 0.0
  %10196 = vmatprep.subr.mxu0 0.0
  %10197 = vmatpush1.msra.mxu0 0.0
  %10198 = vmatprep.subr.mxu0 0.0
  %10199 = vmatpush1.msra.mxu0 0.0
  %10200 = vmatprep.subr.mxu0 0.0
  %10201 = vmatpush1.msra.mxu0 0.0
  %10202 = vmatprep.subr.mxu0 0.0
  %10203 = vmatpush1.msra.mxu0 0.0
  %10204 = vmatprep.subr.mxu0 0.0
  %10205 = vmatpush1.msra.mxu0 0.0
  %10206 = vmatprep.subr.mxu0 0.0
  %10207 = vmatpush1.msra.mxu0 0.0
  %10208 = vmatprep.subr.mxu0 0.0
  %10209 = vmatpush1.msra.mxu0 0.0
  %10210 = vmatprep.subr.mxu0 0.0
  %10211 = vmatpush1.msra.mxu0 0.0
  %10212 = vmatprep.mubr.f32.mxu0 0.0
  %10213 = vmatmul.mubr.f32.gmra.mrb[0].mxu0 %v10137
  %v10214 = vpop.f32.mrb[0].mxu0
  %v10215 = vadd.f32 %v10119, %v10214
  %v10216 = vpop.f32.mrb[0].mxu0
  %v10217 = vadd.f32 %v10119, %v10216
  %10218 = vmatprep.mubr.f32.mxu0 0.0
  %10219 = vmatmul.mubr.f32.gmra.mrb[0].mxu0 %v10140
  %v10220 = vpop.f32.mrb[0].mxu0
  %v10221 = vadd.f32 %v10124, %v10220
  %v10222 = vpop.f32.mrb[0].mxu0
  %v10223 = vadd.f32 %v10124, %v10222
  %10224 = vmatprep.mubr.f32.mxu0 0.0
  %10225 = vmatmul.mubr.f32.gmra.mrb[0].mxu0 %v10143
  %v10226 = vpop.f32.mrb[0].mxu0
  %v10227 = vadd.f32 %v10129, %v10226
  %v10228 = vpop.f32.mrb[0].mxu0
  %v10229 = vadd.f32 %v10129, %v10228
  %10230 = vmatprep.mubr.f32.mxu0 0.0
  %10231 = vmatmul.mubr.f32.gmra.mrb[0].mxu0 %v10146
  %v10232 = vpop.f32.mrb[0].mxu0
  %v10233 = vadd.f32 %v10134, %v10232
  %v10234 = vpop.f32.mrb[0].mxu0
  %v10235 = vadd.f32 %v10134, %v10234
  %10236 = vdwg.mxu0
  %10237 = vmatprep.subr.mxu0 %v8859
  %10238 = vmatpush1.msra.mxu0 %v8755
  %10239 = vmatprep.subr.mxu0 %v9275
  %10240 = vmatpush1.msra.mxu0 %v9171
  %10241 = vmatprep.subr.mxu0 %v9691
  %10242 = vmatpush1.msra.mxu0 %v9587
  %10243 = vmatprep.subr.mxu0 %v10107
  %10244 = vmatpush1.msra.mxu0 %v10003
  %10245 = vmatprep.subr.mxu0 0.0
  %10246 = vmatpush1.msra.mxu0 0.0
  %10247 = vmatprep.subr.mxu0 0.0
  %10248 = vmatpush1.msra.mxu0 0.0
  %10249 = vmatprep.subr.mxu0 0.0
  %10250 = vmatpush1.msra.mxu0 0.0
  %10251 = vmatprep.subr.mxu0 0.0
  %10252 = vmatpush1.msra.mxu0 0.0
  %10253 = vmatprep.subr.mxu0 0.0
  %10254 = vmatpush1.msra.mxu0 0.0
  %10255 = vmatprep.subr.mxu0 0.0
  %10256 = vmatpush1.msra.mxu0 0.0
  %10257 = vmatprep.subr.mxu0 0.0
  %10258 = vmatpush1.msra.mxu0 0.0
  %10259 = vmatprep.subr.mxu0 0.0
  %10260 = vmatpush1.msra.mxu0 0.0
  %10261 = vmatprep.subr.mxu0 0.0
  %10262 = vmatpush1.msra.mxu0 0.0
  %10263 = vmatprep.subr.mxu0 0.0
  %10264 = vmatpush1.msra.mxu0 0.0
  %10265 = vmatprep.subr.mxu0 0.0
  %10266 = vmatpush1.msra.mxu0 0.0
  %10267 = vmatprep.subr.mxu0 0.0
  %10268 = vmatpush1.msra.mxu0 0.0
  %10269 = vmatprep.subr.mxu0 0.0
  %10270 = vmatpush1.msra.mxu0 0.0
  %10271 = vmatprep.subr.mxu0 0.0
  %10272 = vmatpush1.msra.mxu0 0.0
  %10273 = vmatprep.subr.mxu0 0.0
  %10274 = vmatpush1.msra.mxu0 0.0
  %10275 = vmatprep.subr.mxu0 0.0
  %10276 = vmatpush1.msra.mxu0 0.0
  %10277 = vmatprep.subr.mxu0 0.0
  %10278 = vmatpush1.msra.mxu0 0.0
  %10279 = vmatprep.subr.mxu0 0.0
  %10280 = vmatpush1.msra.mxu0 0.0
  %10281 = vmatprep.subr.mxu0 0.0
  %10282 = vmatpush1.msra.mxu0 0.0
  %10283 = vmatprep.subr.mxu0 0.0
  %10284 = vmatpush1.msra.mxu0 0.0
  %10285 = vmatprep.subr.mxu0 0.0
  %10286 = vmatpush1.msra.mxu0 0.0
  %10287 = vmatprep.subr.mxu0 0.0
  %10288 = vmatpush1.msra.mxu0 0.0
  %10289 = vmatprep.subr.mxu0 0.0
  %10290 = vmatpush1.msra.mxu0 0.0
  %10291 = vmatprep.subr.mxu0 0.0
  %10292 = vmatpush1.msra.mxu0 0.0
  %10293 = vmatprep.subr.mxu0 0.0
  %10294 = vmatpush1.msra.mxu0 0.0
  %10295 = vmatprep.subr.mxu0 0.0
  %10296 = vmatpush1.msra.mxu0 0.0
  %10297 = vmatprep.subr.mxu0 0.0
  %10298 = vmatpush1.msra.mxu0 0.0
  %10299 = vmatprep.subr.mxu0 0.0
  %10300 = vmatpush1.msra.mxu0 0.0
  %10301 = vmatprep.mubr.f32.mxu0 0.0
  %10302 = vmatmul.mubr.f32.gmra.mrb[0].mxu0 %v10137
  %v10303 = vpop.f32.mrb[0].mxu0
  %v10304 = vadd.f32 %v10119, %v10303
  %v10305 = vpop.f32.mrb[0].mxu0
  %v10306 = vadd.f32 %v10119, %v10305
  %10307 = vmatprep.mubr.f32.mxu0 0.0
  %10308 = vmatmul.mubr.f32.gmra.mrb[0].mxu0 %v10140
  %v10309 = vpop.f32.mrb[0].mxu0
  %v10310 = vadd.f32 %v10124, %v10309
  %v10311 = vpop.f32.mrb[0].mxu0
  %v10312 = vadd.f32 %v10124, %v10311
  %10313 = vmatprep.mubr.f32.mxu0 0.0
  %10314 = vmatmul.mubr.f32.gmra.mrb[0].mxu0 %v10143
  %v10315 = vpop.f32.mrb[0].mxu0
  %v10316 = vadd.f32 %v10129, %v10315
  %v10317 = vpop.f32.mrb[0].mxu0
  %v10318 = vadd.f32 %v10129, %v10317
  %10319 = vmatprep.mubr.f32.mxu0 0.0
  %10320 = vmatmul.mubr.f32.gmra.mrb[0].mxu0 %v10146
  %v10321 = vpop.f32.mrb[0].mxu0
  %v10322 = vadd.f32 %v10134, %v10321
  %v10323 = vpop.f32.mrb[0].mxu0
  %v10324 = vadd.f32 %v10134, %v10323
  %10325 = vdwg.mxu0
  %v10326 = vand.u32 2147483647, %v10215
  %vm10327 = vcmp.le.f32.partialorder %v10326, 0.7853982
  %vm10328 = vcmp.lt.s32.totalorder %v10215, 0
  %v10329 = vand.u32 %v10215, 2139095040
  %v10330 = vshrl.u32 %v10329, 23
  %v10331 = vsub.s32 %v10330, 127
  %v10332 = vand.u32 2147483647, %v10215
  %v10333 = vand.u32 %v10332, 8388607
  %v10334 = vor.u32 %v10333, 8388608
  %v10335 = vsub.s32 0, %v10334
  %v10336 = vadd.s32 %v10331, 1
  %vm10337 = vcmp.gt.s32.totalorder %v10336, 0
  %v10338 = vsel %vm10337, %v10336, 0
  %v10339 = vshrl.u32 %v10338, 5
  %v10340 = vand.u32 %v10338, 31
  %v10341 = vsub.s32 32, %v10340
  %v10342 = vshrl.u32 683565275, %v10341
  %v10343 = vshll.u32 683565275, %v10340
  %v10344 = vshrl.u32 2475754826, %v10341
  %v10345 = vor.u32 %v10343, %v10344
  %v10346 = vshll.u32 2475754826, %v10340
  %v10347 = vshrl.u32 2131351028, %v10341
  %v10348 = vor.u32 %v10346, %v10347
  %v10349 = vshll.u32 2131351028, %v10340
  %v10350 = vshrl.u32 2102212464, %v10341
  %v10351 = vor.u32 %v10349, %v10350
  %v10352 = vshll.u32 2102212464, %v10340
  %v10353 = vshrl.u32 920167782, %v10341
  %v10354 = vor.u32 %v10352, %v10353
  %v10355 = vshll.u32 920167782, %v10340
  %v10356 = vshrl.u32 1326507024, %v10341
  %v10357 = vor.u32 %v10355, %v10356
  %vm10358 = vcmp.lt.s32.totalorder %v10339, 1
  %vm10359 = vcmp.lt.s32.totalorder %v10339, 2
  %vm10360 = vcmp.lt.s32.totalorder %v10339, 3
  %vm10361 = vcmp.lt.s32.totalorder %v10339, 4
  %v10362 = vsel %vm10358, %v10342, %v10345
  %v10363 = vsel %vm10361, %v10351, 2102212464
  %v10364 = vsel %vm10360, %v10348, %v10363
  %v10365 = vsel %vm10359, %v10362, %v10364
  %v10366 = vsel %vm10358, %v10345, %v10348
  %v10367 = vsel %vm10361, %v10354, 920167782
  %v10368 = vsel %vm10360, %v10351, %v10367
  %v10369 = vsel %vm10359, %v10366, %v10368
  %v10370 = vsel %vm10358, %v10348, %v10351
  %v10371 = vsel %vm10361, %v10357, 1326507024
  %v10372 = vsel %vm10360, %v10354, %v10371
  %v10373 = vsel %vm10359, %v10370, %v10372
  %v10374 = vshll.u32 %v10334, 8
  %v10375 = vmul.u32.u64.compose %v10374, %v10373
  %v10376 = vextract.low.u32 %v10375
  %v10377 = vextract.high.u32 %v10375
  %v10378 = vmul.u32.u64.compose %v10374, %v10369
  %v10379 = vextract.low.u32 %v10378
  %v10380 = vextract.high.u32 %v10378
  %v10381 = vmul.u32 %v10374, %v10365
  %v10382 = vadd.s32 %v10377, %v10379
  %vm10383 = vc.u32 %v10377, %v10379
  %v10384 = vadd.s32 %v10380, 1
  %v10385 = vsel %vm10383, %v10384, %v10380
  %v10386 = vadd.s32 %v10381, %v10385
  %v10387 = vadd.s32 %v10386, 536870912
  %v10388 = vshrl.u32 %v10387, 30
  %v10389 = vshll.u32 %v10388, 30
  %v10390 = vsub.s32 %v10386, %v10389
  %vm10391 = vcmp.lt.s32.totalorder %v10390, 0
  %v10392 = vsub.s32 0, %v10390
  %v10393 = vsel %vm10391, %v10392, %v10390
  %v10394 = vclz %v10393
  %v10395 = vsub.s32 %v10394, 2
  %vm10396 = vcmp.gt.s32.totalorder 0, %v10395
  %v10397 = vsel %vm10396, 0, %v10395
  %v10398 = vsub.s32 32, %v10397
  %v10399 = vshll.u32 %v10390, %v10397
  %v10400 = vshrl.u32 %v10382, %v10398
  %v10401 = vor.u32 %v10399, %v10400
  %v10402 = vsub.s32 4294967266, %v10397
  %v10403 = vadd.s32 %v10402, 127
  %v10404 = vshll.u32 %v10403, 23
  %v10405 = vor.u32 4788187, %v10404
  %v10406 = vand.u32 2147483647, %v10405
  %v10408 = vcvt.s32.f32 %v10401
  %v10409 = vmul.f32 %v10408, %v10406
  %v10410 = vxor.u32 %v10409, 2147483648
  %v10411 = vsel %vm10328, %v10410, %v10409
  %v10412 = vsub.s32 4, %v10388
  %v10413 = vsel %vm10328, %v10412, %v10388
  %v10414 = vsel %vm10327, %v10215, %v10411
  %v10415 = vsel %vm10327, 0, %v10413
  %v10416 = vcosq.f32.pop %v10414
  %v10417 = vsinq.f32.pop %v10414
  %vm10418 = vweird.f32 %v10215
  %v10419 = vadd.s32 %v10415, 3
  %v10420 = vand.u32 %v10419, 3
  %vm10421 = vcmp.lt.s32.totalorder %v10420, 2
  %vm10422 = vcmp.eq.s32.totalorder %v10420, 0
  %v10423 = vxor.u32 %v10417, 2147483648
  %v10424 = vsel %vm10422, %v10416, %v10423
  %vm10425 = vcmp.eq.s32.totalorder %v10420, 2
  %v10426 = vxor.u32 %v10416, 2147483648
  %v10427 = vsel %vm10425, %v10426, %v10417
  %v10428 = vsel %vm10421, %v10424, %v10427
  %v10429 = vsel %vm10418, nan, %v10428
  %v10430 = vand.u32 2147483647, %v10217
  %vm10431 = vcmp.le.f32.partialorder %v10430, 0.7853982
  %vm10432 = vcmp.lt.s32.totalorder %v10217, 0
  %v10433 = vand.u32 %v10217, 2139095040
  %v10434 = vshrl.u32 %v10433, 23
  %v10435 = vsub.s32 %v10434, 127
  %v10436 = vand.u32 2147483647, %v10217
  %v10437 = vand.u32 %v10436, 8388607
  %v10438 = vor.u32 %v10437, 8388608
  %v10439 = vsub.s32 0, %v10438
  %v10440 = vadd.s32 %v10435, 1
  %vm10441 = vcmp.gt.s32.totalorder %v10440, 0
  %v10442 = vsel %vm10441, %v10440, 0
  %v10443 = vshrl.u32 %v10442, 5
  %v10444 = vand.u32 %v10442, 31
  %v10445 = vsub.s32 32, %v10444
  %v10446 = vshrl.u32 683565275, %v10445
  %v10447 = vshll.u32 683565275, %v10444
  %v10448 = vshrl.u32 2475754826, %v10445
  %v10449 = vor.u32 %v10447, %v10448
  %v10450 = vshll.u32 2475754826, %v10444
  %v10451 = vshrl.u32 2131351028, %v10445
  %v10452 = vor.u32 %v10450, %v10451
  %v10453 = vshll.u32 2131351028, %v10444
  %v10454 = vshrl.u32 2102212464, %v10445
  %v10455 = vor.u32 %v10453, %v10454
  %v10456 = vshll.u32 2102212464, %v10444
  %v10457 = vshrl.u32 920167782, %v10445
  %v10458 = vor.u32 %v10456, %v10457
  %v10459 = vshll.u32 920167782, %v10444
  %v10460 = vshrl.u32 1326507024, %v10445
  %v10461 = vor.u32 %v10459, %v10460
  %vm10462 = vcmp.lt.s32.totalorder %v10443, 1
  %vm10463 = vcmp.lt.s32.totalorder %v10443, 2
  %vm10464 = vcmp.lt.s32.totalorder %v10443, 3
  %vm10465 = vcmp.lt.s32.totalorder %v10443, 4
  %v10466 = vsel %vm10462, %v10446, %v10449
  %v10467 = vsel %vm10465, %v10455, 2102212464
  %v10468 = vsel %vm10464, %v10452, %v10467
  %v10469 = vsel %vm10463, %v10466, %v10468
  %v10470 = vsel %vm10462, %v10449, %v10452
  %v10471 = vsel %vm10465, %v10458, 920167782
  %v10472 = vsel %vm10464, %v10455, %v10471
  %v10473 = vsel %vm10463, %v10470, %v10472
  %v10474 = vsel %vm10462, %v10452, %v10455
  %v10475 = vsel %vm10465, %v10461, 1326507024
  %v10476 = vsel %vm10464, %v10458, %v10475
  %v10477 = vsel %vm10463, %v10474, %v10476
  %v10478 = vshll.u32 %v10438, 8
  %v10479 = vmul.u32.u64.compose %v10478, %v10477
  %v10480 = vextract.low.u32 %v10479
  %v10481 = vextract.high.u32 %v10479
  %v10482 = vmul.u32.u64.compose %v10478, %v10473
  %v10483 = vextract.low.u32 %v10482
  %v10484 = vextract.high.u32 %v10482
  %v10485 = vmul.u32 %v10478, %v10469
  %v10486 = vadd.s32 %v10481, %v10483
  %vm10487 = vc.u32 %v10481, %v10483
  %v10488 = vadd.s32 %v10484, 1
  %v10489 = vsel %vm10487, %v10488, %v10484
  %v10490 = vadd.s32 %v10485, %v10489
  %v10491 = vadd.s32 %v10490, 536870912
  %v10492 = vshrl.u32 %v10491, 30
  %v10493 = vshll.u32 %v10492, 30
  %v10494 = vsub.s32 %v10490, %v10493
  %vm10495 = vcmp.lt.s32.totalorder %v10494, 0
  %v10496 = vsub.s32 0, %v10494
  %v10497 = vsel %vm10495, %v10496, %v10494
  %v10498 = vclz %v10497
  %v10499 = vsub.s32 %v10498, 2
  %vm10500 = vcmp.gt.s32.totalorder 0, %v10499
  %v10501 = vsel %vm10500, 0, %v10499
  %v10502 = vsub.s32 32, %v10501
  %v10503 = vshll.u32 %v10494, %v10501
  %v10504 = vshrl.u32 %v10486, %v10502
  %v10505 = vor.u32 %v10503, %v10504
  %v10506 = vsub.s32 4294967266, %v10501
  %v10507 = vadd.s32 %v10506, 127
  %v10508 = vshll.u32 %v10507, 23
  %v10509 = vor.u32 4788187, %v10508
  %v10510 = vand.u32 2147483647, %v10509
  %v10512 = vcvt.s32.f32 %v10505
  %v10513 = vmul.f32 %v10512, %v10510
  %v10514 = vxor.u32 %v10513, 2147483648
  %v10515 = vsel %vm10432, %v10514, %v10513
  %v10516 = vsub.s32 4, %v10492
  %v10517 = vsel %vm10432, %v10516, %v10492
  %v10518 = vsel %vm10431, %v10217, %v10515
  %v10519 = vsel %vm10431, 0, %v10517
  %v10520 = vcosq.f32.pop %v10518
  %v10521 = vsinq.f32.pop %v10518
  %vm10522 = vweird.f32 %v10217
  %v10523 = vadd.s32 %v10519, 3
  %v10524 = vand.u32 %v10523, 3
  %vm10525 = vcmp.lt.s32.totalorder %v10524, 2
  %vm10526 = vcmp.eq.s32.totalorder %v10524, 0
  %v10527 = vxor.u32 %v10521, 2147483648
  %v10528 = vsel %vm10526, %v10520, %v10527
  %vm10529 = vcmp.eq.s32.totalorder %v10524, 2
  %v10530 = vxor.u32 %v10520, 2147483648
  %v10531 = vsel %vm10529, %v10530, %v10521
  %v10532 = vsel %vm10525, %v10528, %v10531
  %v10533 = vsel %vm10522, nan, %v10532
  %v10534 = vand.u32 2147483647, %v10304
  %vm10535 = vcmp.le.f32.partialorder %v10534, 0.7853982
  %vm10536 = vcmp.lt.s32.totalorder %v10304, 0
  %v10537 = vand.u32 %v10304, 2139095040
  %v10538 = vshrl.u32 %v10537, 23
  %v10539 = vsub.s32 %v10538, 127
  %v10540 = vand.u32 2147483647, %v10304
  %v10541 = vand.u32 %v10540, 8388607
  %v10542 = vor.u32 %v10541, 8388608
  %v10543 = vsub.s32 0, %v10542
  %v10544 = vadd.s32 %v10539, 1
  %vm10545 = vcmp.gt.s32.totalorder %v10544, 0
  %v10546 = vsel %vm10545, %v10544, 0
  %v10547 = vshrl.u32 %v10546, 5
  %v10548 = vand.u32 %v10546, 31
  %v10549 = vsub.s32 32, %v10548
  %v10550 = vshrl.u32 683565275, %v10549
  %v10551 = vshll.u32 683565275, %v10548
  %v10552 = vshrl.u32 2475754826, %v10549
  %v10553 = vor.u32 %v10551, %v10552
  %v10554 = vshll.u32 2475754826, %v10548
  %v10555 = vshrl.u32 2131351028, %v10549
  %v10556 = vor.u32 %v10554, %v10555
  %v10557 = vshll.u32 2131351028, %v10548
  %v10558 = vshrl.u32 2102212464, %v10549
  %v10559 = vor.u32 %v10557, %v10558
  %v10560 = vshll.u32 2102212464, %v10548
  %v10561 = vshrl.u32 920167782, %v10549
  %v10562 = vor.u32 %v10560, %v10561
  %v10563 = vshll.u32 920167782, %v10548
  %v10564 = vshrl.u32 1326507024, %v10549
  %v10565 = vor.u32 %v10563, %v10564
  %vm10566 = vcmp.lt.s32.totalorder %v10547, 1
  %vm10567 = vcmp.lt.s32.totalorder %v10547, 2
  %vm10568 = vcmp.lt.s32.totalorder %v10547, 3
  %vm10569 = vcmp.lt.s32.totalorder %v10547, 4
  %v10570 = vsel %vm10566, %v10550, %v10553
  %v10571 = vsel %vm10569, %v10559, 2102212464
  %v10572 = vsel %vm10568, %v10556, %v10571
  %v10573 = vsel %vm10567, %v10570, %v10572
  %v10574 = vsel %vm10566, %v10553, %v10556
  %v10575 = vsel %vm10569, %v10562, 920167782
  %v10576 = vsel %vm10568, %v10559, %v10575
  %v10577 = vsel %vm10567, %v10574, %v10576
  %v10578 = vsel %vm10566, %v10556, %v10559
  %v10579 = vsel %vm10569, %v10565, 1326507024
  %v10580 = vsel %vm10568, %v10562, %v10579
  %v10581 = vsel %vm10567, %v10578, %v10580
  %v10582 = vshll.u32 %v10542, 8
  %v10583 = vmul.u32.u64.compose %v10582, %v10581
  %v10584 = vextract.low.u32 %v10583
  %v10585 = vextract.high.u32 %v10583
  %v10586 = vmul.u32.u64.compose %v10582, %v10577
  %v10587 = vextract.low.u32 %v10586
  %v10588 = vextract.high.u32 %v10586
  %v10589 = vmul.u32 %v10582, %v10573
  %v10590 = vadd.s32 %v10585, %v10587
  %vm10591 = vc.u32 %v10585, %v10587
  %v10592 = vadd.s32 %v10588, 1
  %v10593 = vsel %vm10591, %v10592, %v10588
  %v10594 = vadd.s32 %v10589, %v10593
  %v10595 = vadd.s32 %v10594, 536870912
  %v10596 = vshrl.u32 %v10595, 30
  %v10597 = vshll.u32 %v10596, 30
  %v10598 = vsub.s32 %v10594, %v10597
  %vm10599 = vcmp.lt.s32.totalorder %v10598, 0
  %v10600 = vsub.s32 0, %v10598
  %v10601 = vsel %vm10599, %v10600, %v10598
  %v10602 = vclz %v10601
  %v10603 = vsub.s32 %v10602, 2
  %vm10604 = vcmp.gt.s32.totalorder 0, %v10603
  %v10605 = vsel %vm10604, 0, %v10603
  %v10606 = vsub.s32 32, %v10605
  %v10607 = vshll.u32 %v10598, %v10605
  %v10608 = vshrl.u32 %v10590, %v10606
  %v10609 = vor.u32 %v10607, %v10608
  %v10610 = vsub.s32 4294967266, %v10605
  %v10611 = vadd.s32 %v10610, 127
  %v10612 = vshll.u32 %v10611, 23
  %v10613 = vor.u32 4788187, %v10612
  %v10614 = vand.u32 2147483647, %v10613
  %v10616 = vcvt.s32.f32 %v10609
  %v10617 = vmul.f32 %v10616, %v10614
  %v10618 = vxor.u32 %v10617, 2147483648
  %v10619 = vsel %vm10536, %v10618, %v10617
  %v10620 = vsub.s32 4, %v10596
  %v10621 = vsel %vm10536, %v10620, %v10596
  %v10622 = vsel %vm10535, %v10304, %v10619
  %v10623 = vsel %vm10535, 0, %v10621
  %v10624 = vcosq.f32.pop %v10622
  %v10625 = vsinq.f32.pop %v10622
  %vm10626 = vweird.f32 %v10304
  %v10627 = vadd.s32 %v10623, 3
  %v10628 = vand.u32 %v10627, 3
  %vm10629 = vcmp.lt.s32.totalorder %v10628, 2
  %vm10630 = vcmp.eq.s32.totalorder %v10628, 0
  %v10631 = vxor.u32 %v10625, 2147483648
  %v10632 = vsel %vm10630, %v10624, %v10631
  %vm10633 = vcmp.eq.s32.totalorder %v10628, 2
  %v10634 = vxor.u32 %v10624, 2147483648
  %v10635 = vsel %vm10633, %v10634, %v10625
  %v10636 = vsel %vm10629, %v10632, %v10635
  %v10637 = vsel %vm10626, nan, %v10636
  %v10638 = vand.u32 2147483647, %v10306
  %vm10639 = vcmp.le.f32.partialorder %v10638, 0.7853982
  %vm10640 = vcmp.lt.s32.totalorder %v10306, 0
  %v10641 = vand.u32 %v10306, 2139095040
  %v10642 = vshrl.u32 %v10641, 23
  %v10643 = vsub.s32 %v10642, 127
  %v10644 = vand.u32 2147483647, %v10306
  %v10645 = vand.u32 %v10644, 8388607
  %v10646 = vor.u32 %v10645, 8388608
  %v10647 = vsub.s32 0, %v10646
  %v10648 = vadd.s32 %v10643, 1
  %vm10649 = vcmp.gt.s32.totalorder %v10648, 0
  %v10650 = vsel %vm10649, %v10648, 0
  %v10651 = vshrl.u32 %v10650, 5
  %v10652 = vand.u32 %v10650, 31
  %v10653 = vsub.s32 32, %v10652
  %v10654 = vshrl.u32 683565275, %v10653
  %v10655 = vshll.u32 683565275, %v10652
  %v10656 = vshrl.u32 2475754826, %v10653
  %v10657 = vor.u32 %v10655, %v10656
  %v10658 = vshll.u32 2475754826, %v10652
  %v10659 = vshrl.u32 2131351028, %v10653
  %v10660 = vor.u32 %v10658, %v10659
  %v10661 = vshll.u32 2131351028, %v10652
  %v10662 = vshrl.u32 2102212464, %v10653
  %v10663 = vor.u32 %v10661, %v10662
  %v10664 = vshll.u32 2102212464, %v10652
  %v10665 = vshrl.u32 920167782, %v10653
  %v10666 = vor.u32 %v10664, %v10665
  %v10667 = vshll.u32 920167782, %v10652
  %v10668 = vshrl.u32 1326507024, %v10653
  %v10669 = vor.u32 %v10667, %v10668
  %vm10670 = vcmp.lt.s32.totalorder %v10651, 1
  %vm10671 = vcmp.lt.s32.totalorder %v10651, 2
  %vm10672 = vcmp.lt.s32.totalorder %v10651, 3
  %vm10673 = vcmp.lt.s32.totalorder %v10651, 4
  %v10674 = vsel %vm10670, %v10654, %v10657
  %v10675 = vsel %vm10673, %v10663, 2102212464
  %v10676 = vsel %vm10672, %v10660, %v10675
  %v10677 = vsel %vm10671, %v10674, %v10676
  %v10678 = vsel %vm10670, %v10657, %v10660
  %v10679 = vsel %vm10673, %v10666, 920167782
  %v10680 = vsel %vm10672, %v10663, %v10679
  %v10681 = vsel %vm10671, %v10678, %v10680
  %v10682 = vsel %vm10670, %v10660, %v10663
  %v10683 = vsel %vm10673, %v10669, 1326507024
  %v10684 = vsel %vm10672, %v10666, %v10683
  %v10685 = vsel %vm10671, %v10682, %v10684
  %v10686 = vshll.u32 %v10646, 8
  %v10687 = vmul.u32.u64.compose %v10686, %v10685
  %v10688 = vextract.low.u32 %v10687
  %v10689 = vextract.high.u32 %v10687
  %v10690 = vmul.u32.u64.compose %v10686, %v10681
  %v10691 = vextract.low.u32 %v10690
  %v10692 = vextract.high.u32 %v10690
  %v10693 = vmul.u32 %v10686, %v10677
  %v10694 = vadd.s32 %v10689, %v10691
  %vm10695 = vc.u32 %v10689, %v10691
  %v10696 = vadd.s32 %v10692, 1
  %v10697 = vsel %vm10695, %v10696, %v10692
  %v10698 = vadd.s32 %v10693, %v10697
  %v10699 = vadd.s32 %v10698, 536870912
  %v10700 = vshrl.u32 %v10699, 30
  %v10701 = vshll.u32 %v10700, 30
  %v10702 = vsub.s32 %v10698, %v10701
  %vm10703 = vcmp.lt.s32.totalorder %v10702, 0
  %v10704 = vsub.s32 0, %v10702
  %v10705 = vsel %vm10703, %v10704, %v10702
  %v10706 = vclz %v10705
  %v10707 = vsub.s32 %v10706, 2
  %vm10708 = vcmp.gt.s32.totalorder 0, %v10707
  %v10709 = vsel %vm10708, 0, %v10707
  %v10710 = vsub.s32 32, %v10709
  %v10711 = vshll.u32 %v10702, %v10709
  %v10712 = vshrl.u32 %v10694, %v10710
  %v10713 = vor.u32 %v10711, %v10712
  %v10714 = vsub.s32 4294967266, %v10709
  %v10715 = vadd.s32 %v10714, 127
  %v10716 = vshll.u32 %v10715, 23
  %v10717 = vor.u32 4788187, %v10716
  %v10718 = vand.u32 2147483647, %v10717
  %v10720 = vcvt.s32.f32 %v10713
  %v10721 = vmul.f32 %v10720, %v10718
  %v10722 = vxor.u32 %v10721, 2147483648
  %v10723 = vsel %vm10640, %v10722, %v10721
  %v10724 = vsub.s32 4, %v10700
  %v10725 = vsel %vm10640, %v10724, %v10700
  %v10726 = vsel %vm10639, %v10306, %v10723
  %v10727 = vsel %vm10639, 0, %v10725
  %v10728 = vcosq.f32.pop %v10726
  %v10729 = vsinq.f32.pop %v10726
  %vm10730 = vweird.f32 %v10306
  %v10731 = vadd.s32 %v10727, 3
  %v10732 = vand.u32 %v10731, 3
  %vm10733 = vcmp.lt.s32.totalorder %v10732, 2
  %vm10734 = vcmp.eq.s32.totalorder %v10732, 0
  %v10735 = vxor.u32 %v10729, 2147483648
  %v10736 = vsel %vm10734, %v10728, %v10735
  %vm10737 = vcmp.eq.s32.totalorder %v10732, 2
  %v10738 = vxor.u32 %v10728, 2147483648
  %v10739 = vsel %vm10737, %v10738, %v10729
  %v10740 = vsel %vm10733, %v10736, %v10739
  %v10741 = vsel %vm10730, nan, %v10740
  %v10742 = vand.u32 2147483647, %v10221
  %vm10743 = vcmp.le.f32.partialorder %v10742, 0.7853982
  %vm10744 = vcmp.lt.s32.totalorder %v10221, 0
  %v10745 = vand.u32 %v10221, 2139095040
  %v10746 = vshrl.u32 %v10745, 23
  %v10747 = vsub.s32 %v10746, 127
  %v10748 = vand.u32 2147483647, %v10221
  %v10749 = vand.u32 %v10748, 8388607
  %v10750 = vor.u32 %v10749, 8388608
  %v10751 = vsub.s32 0, %v10750
  %v10752 = vadd.s32 %v10747, 1
  %vm10753 = vcmp.gt.s32.totalorder %v10752, 0
  %v10754 = vsel %vm10753, %v10752, 0
  %v10755 = vshrl.u32 %v10754, 5
  %v10756 = vand.u32 %v10754, 31
  %v10757 = vsub.s32 32, %v10756
  %v10758 = vshrl.u32 683565275, %v10757
  %v10759 = vshll.u32 683565275, %v10756
  %v10760 = vshrl.u32 2475754826, %v10757
  %v10761 = vor.u32 %v10759, %v10760
  %v10762 = vshll.u32 2475754826, %v10756
  %v10763 = vshrl.u32 2131351028, %v10757
  %v10764 = vor.u32 %v10762, %v10763
  %v10765 = vshll.u32 2131351028, %v10756
  %v10766 = vshrl.u32 2102212464, %v10757
  %v10767 = vor.u32 %v10765, %v10766
  %v10768 = vshll.u32 2102212464, %v10756
  %v10769 = vshrl.u32 920167782, %v10757
  %v10770 = vor.u32 %v10768, %v10769
  %v10771 = vshll.u32 920167782, %v10756
  %v10772 = vshrl.u32 1326507024, %v10757
  %v10773 = vor.u32 %v10771, %v10772
  %vm10774 = vcmp.lt.s32.totalorder %v10755, 1
  %vm10775 = vcmp.lt.s32.totalorder %v10755, 2
  %vm10776 = vcmp.lt.s32.totalorder %v10755, 3
  %vm10777 = vcmp.lt.s32.totalorder %v10755, 4
  %v10778 = vsel %vm10774, %v10758, %v10761
  %v10779 = vsel %vm10777, %v10767, 2102212464
  %v10780 = vsel %vm10776, %v10764, %v10779
  %v10781 = vsel %vm10775, %v10778, %v10780
  %v10782 = vsel %vm10774, %v10761, %v10764
  %v10783 = vsel %vm10777, %v10770, 920167782
  %v10784 = vsel %vm10776, %v10767, %v10783
  %v10785 = vsel %vm10775, %v10782, %v10784
  %v10786 = vsel %vm10774, %v10764, %v10767
  %v10787 = vsel %vm10777, %v10773, 1326507024
  %v10788 = vsel %vm10776, %v10770, %v10787
  %v10789 = vsel %vm10775, %v10786, %v10788
  %v10790 = vshll.u32 %v10750, 8
  %v10791 = vmul.u32.u64.compose %v10790, %v10789
  %v10792 = vextract.low.u32 %v10791
  %v10793 = vextract.high.u32 %v10791
  %v10794 = vmul.u32.u64.compose %v10790, %v10785
  %v10795 = vextract.low.u32 %v10794
  %v10796 = vextract.high.u32 %v10794
  %v10797 = vmul.u32 %v10790, %v10781
  %v10798 = vadd.s32 %v10793, %v10795
  %vm10799 = vc.u32 %v10793, %v10795
  %v10800 = vadd.s32 %v10796, 1
  %v10801 = vsel %vm10799, %v10800, %v10796
  %v10802 = vadd.s32 %v10797, %v10801
  %v10803 = vadd.s32 %v10802, 536870912
  %v10804 = vshrl.u32 %v10803, 30
  %v10805 = vshll.u32 %v10804, 30
  %v10806 = vsub.s32 %v10802, %v10805
  %vm10807 = vcmp.lt.s32.totalorder %v10806, 0
  %v10808 = vsub.s32 0, %v10806
  %v10809 = vsel %vm10807, %v10808, %v10806
  %v10810 = vclz %v10809
  %v10811 = vsub.s32 %v10810, 2
  %vm10812 = vcmp.gt.s32.totalorder 0, %v10811
  %v10813 = vsel %vm10812, 0, %v10811
  %v10814 = vsub.s32 32, %v10813
  %v10815 = vshll.u32 %v10806, %v10813
  %v10816 = vshrl.u32 %v10798, %v10814
  %v10817 = vor.u32 %v10815, %v10816
  %v10818 = vsub.s32 4294967266, %v10813
  %v10819 = vadd.s32 %v10818, 127
  %v10820 = vshll.u32 %v10819, 23
  %v10821 = vor.u32 4788187, %v10820
  %v10822 = vand.u32 2147483647, %v10821
  %v10824 = vcvt.s32.f32 %v10817
  %v10825 = vmul.f32 %v10824, %v10822
  %v10826 = vxor.u32 %v10825, 2147483648
  %v10827 = vsel %vm10744, %v10826, %v10825
  %v10828 = vsub.s32 4, %v10804
  %v10829 = vsel %vm10744, %v10828, %v10804
  %v10830 = vsel %vm10743, %v10221, %v10827
  %v10831 = vsel %vm10743, 0, %v10829
  %v10832 = vcosq.f32.pop %v10830
  %v10833 = vsinq.f32.pop %v10830
  %vm10834 = vweird.f32 %v10221
  %v10835 = vadd.s32 %v10831, 3
  %v10836 = vand.u32 %v10835, 3
  %vm10837 = vcmp.lt.s32.totalorder %v10836, 2
  %vm10838 = vcmp.eq.s32.totalorder %v10836, 0
  %v10839 = vxor.u32 %v10833, 2147483648
  %v10840 = vsel %vm10838, %v10832, %v10839
  %vm10841 = vcmp.eq.s32.totalorder %v10836, 2
  %v10842 = vxor.u32 %v10832, 2147483648
  %v10843 = vsel %vm10841, %v10842, %v10833
  %v10844 = vsel %vm10837, %v10840, %v10843
  %v10845 = vsel %vm10834, nan, %v10844
  %v10846 = vand.u32 2147483647, %v10223
  %vm10847 = vcmp.le.f32.partialorder %v10846, 0.7853982
  %vm10848 = vcmp.lt.s32.totalorder %v10223, 0
  %v10849 = vand.u32 %v10223, 2139095040
  %v10850 = vshrl.u32 %v10849, 23
  %v10851 = vsub.s32 %v10850, 127
  %v10852 = vand.u32 2147483647, %v10223
  %v10853 = vand.u32 %v10852, 8388607
  %v10854 = vor.u32 %v10853, 8388608
  %v10855 = vsub.s32 0, %v10854
  %v10856 = vadd.s32 %v10851, 1
  %vm10857 = vcmp.gt.s32.totalorder %v10856, 0
  %v10858 = vsel %vm10857, %v10856, 0
  %v10859 = vshrl.u32 %v10858, 5
  %v10860 = vand.u32 %v10858, 31
  %v10861 = vsub.s32 32, %v10860
  %v10862 = vshrl.u32 683565275, %v10861
  %v10863 = vshll.u32 683565275, %v10860
  %v10864 = vshrl.u32 2475754826, %v10861
  %v10865 = vor.u32 %v10863, %v10864
  %v10866 = vshll.u32 2475754826, %v10860
  %v10867 = vshrl.u32 2131351028, %v10861
  %v10868 = vor.u32 %v10866, %v10867
  %v10869 = vshll.u32 2131351028, %v10860
  %v10870 = vshrl.u32 2102212464, %v10861
  %v10871 = vor.u32 %v10869, %v10870
  %v10872 = vshll.u32 2102212464, %v10860
  %v10873 = vshrl.u32 920167782, %v10861
  %v10874 = vor.u32 %v10872, %v10873
  %v10875 = vshll.u32 920167782, %v10860
  %v10876 = vshrl.u32 1326507024, %v10861
  %v10877 = vor.u32 %v10875, %v10876
  %vm10878 = vcmp.lt.s32.totalorder %v10859, 1
  %vm10879 = vcmp.lt.s32.totalorder %v10859, 2
  %vm10880 = vcmp.lt.s32.totalorder %v10859, 3
  %vm10881 = vcmp.lt.s32.totalorder %v10859, 4
  %v10882 = vsel %vm10878, %v10862, %v10865
  %v10883 = vsel %vm10881, %v10871, 2102212464
  %v10884 = vsel %vm10880, %v10868, %v10883
  %v10885 = vsel %vm10879, %v10882, %v10884
  %v10886 = vsel %vm10878, %v10865, %v10868
  %v10887 = vsel %vm10881, %v10874, 920167782
  %v10888 = vsel %vm10880, %v10871, %v10887
  %v10889 = vsel %vm10879, %v10886, %v10888
  %v10890 = vsel %vm10878, %v10868, %v10871
  %v10891 = vsel %vm10881, %v10877, 1326507024
  %v10892 = vsel %vm10880, %v10874, %v10891
  %v10893 = vsel %vm10879, %v10890, %v10892
  %v10894 = vshll.u32 %v10854, 8
  %v10895 = vmul.u32.u64.compose %v10894, %v10893
  %v10896 = vextract.low.u32 %v10895
  %v10897 = vextract.high.u32 %v10895
  %v10898 = vmul.u32.u64.compose %v10894, %v10889
  %v10899 = vextract.low.u32 %v10898
  %v10900 = vextract.high.u32 %v10898
  %v10901 = vmul.u32 %v10894, %v10885
  %v10902 = vadd.s32 %v10897, %v10899
  %vm10903 = vc.u32 %v10897, %v10899
  %v10904 = vadd.s32 %v10900, 1
  %v10905 = vsel %vm10903, %v10904, %v10900
  %v10906 = vadd.s32 %v10901, %v10905
  %v10907 = vadd.s32 %v10906, 536870912
  %v10908 = vshrl.u32 %v10907, 30
  %v10909 = vshll.u32 %v10908, 30
  %v10910 = vsub.s32 %v10906, %v10909
  %vm10911 = vcmp.lt.s32.totalorder %v10910, 0
  %v10912 = vsub.s32 0, %v10910
  %v10913 = vsel %vm10911, %v10912, %v10910
  %v10914 = vclz %v10913
  %v10915 = vsub.s32 %v10914, 2
  %vm10916 = vcmp.gt.s32.totalorder 0, %v10915
  %v10917 = vsel %vm10916, 0, %v10915
  %v10918 = vsub.s32 32, %v10917
  %v10919 = vshll.u32 %v10910, %v10917
  %v10920 = vshrl.u32 %v10902, %v10918
  %v10921 = vor.u32 %v10919, %v10920
  %v10922 = vsub.s32 4294967266, %v10917
  %v10923 = vadd.s32 %v10922, 127
  %v10924 = vshll.u32 %v10923, 23
  %v10925 = vor.u32 4788187, %v10924
  %v10926 = vand.u32 2147483647, %v10925
  %v10928 = vcvt.s32.f32 %v10921
  %v10929 = vmul.f32 %v10928, %v10926
  %v10930 = vxor.u32 %v10929, 2147483648
  %v10931 = vsel %vm10848, %v10930, %v10929
  %v10932 = vsub.s32 4, %v10908
  %v10933 = vsel %vm10848, %v10932, %v10908
  %v10934 = vsel %vm10847, %v10223, %v10931
  %v10935 = vsel %vm10847, 0, %v10933
  %v10936 = vcosq.f32.pop %v10934
  %v10937 = vsinq.f32.pop %v10934
  %vm10938 = vweird.f32 %v10223
  %v10939 = vadd.s32 %v10935, 3
  %v10940 = vand.u32 %v10939, 3
  %vm10941 = vcmp.lt.s32.totalorder %v10940, 2
  %vm10942 = vcmp.eq.s32.totalorder %v10940, 0
  %v10943 = vxor.u32 %v10937, 2147483648
  %v10944 = vsel %vm10942, %v10936, %v10943
  %vm10945 = vcmp.eq.s32.totalorder %v10940, 2
  %v10946 = vxor.u32 %v10936, 2147483648
  %v10947 = vsel %vm10945, %v10946, %v10937
  %v10948 = vsel %vm10941, %v10944, %v10947
  %v10949 = vsel %vm10938, nan, %v10948
  %v10950 = vand.u32 2147483647, %v10310
  %vm10951 = vcmp.le.f32.partialorder %v10950, 0.7853982
  %vm10952 = vcmp.lt.s32.totalorder %v10310, 0
  %v10953 = vand.u32 %v10310, 2139095040
  %v10954 = vshrl.u32 %v10953, 23
  %v10955 = vsub.s32 %v10954, 127
  %v10956 = vand.u32 2147483647, %v10310
  %v10957 = vand.u32 %v10956, 8388607
  %v10958 = vor.u32 %v10957, 8388608
  %v10959 = vsub.s32 0, %v10958
  %v10960 = vadd.s32 %v10955, 1
  %vm10961 = vcmp.gt.s32.totalorder %v10960, 0
  %v10962 = vsel %vm10961, %v10960, 0
  %v10963 = vshrl.u32 %v10962, 5
  %v10964 = vand.u32 %v10962, 31
  %v10965 = vsub.s32 32, %v10964
  %v10966 = vshrl.u32 683565275, %v10965
  %v10967 = vshll.u32 683565275, %v10964
  %v10968 = vshrl.u32 2475754826, %v10965
  %v10969 = vor.u32 %v10967, %v10968
  %v10970 = vshll.u32 2475754826, %v10964
  %v10971 = vshrl.u32 2131351028, %v10965
  %v10972 = vor.u32 %v10970, %v10971
  %v10973 = vshll.u32 2131351028, %v10964
  %v10974 = vshrl.u32 2102212464, %v10965
  %v10975 = vor.u32 %v10973, %v10974
  %v10976 = vshll.u32 2102212464, %v10964
  %v10977 = vshrl.u32 920167782, %v10965
  %v10978 = vor.u32 %v10976, %v10977
  %v10979 = vshll.u32 920167782, %v10964
  %v10980 = vshrl.u32 1326507024, %v10965
  %v10981 = vor.u32 %v10979, %v10980
  %vm10982 = vcmp.lt.s32.totalorder %v10963, 1
  %vm10983 = vcmp.lt.s32.totalorder %v10963, 2
  %vm10984 = vcmp.lt.s32.totalorder %v10963, 3
  %vm10985 = vcmp.lt.s32.totalorder %v10963, 4
  %v10986 = vsel %vm10982, %v10966, %v10969
  %v10987 = vsel %vm10985, %v10975, 2102212464
  %v10988 = vsel %vm10984, %v10972, %v10987
  %v10989 = vsel %vm10983, %v10986, %v10988
  %v10990 = vsel %vm10982, %v10969, %v10972
  %v10991 = vsel %vm10985, %v10978, 920167782
  %v10992 = vsel %vm10984, %v10975, %v10991
  %v10993 = vsel %vm10983, %v10990, %v10992
  %v10994 = vsel %vm10982, %v10972, %v10975
  %v10995 = vsel %vm10985, %v10981, 1326507024
  %v10996 = vsel %vm10984, %v10978, %v10995
  %v10997 = vsel %vm10983, %v10994, %v10996
  %v10998 = vshll.u32 %v10958, 8
  %v10999 = vmul.u32.u64.compose %v10998, %v10997
  %v11000 = vextract.low.u32 %v10999
  %v11001 = vextract.high.u32 %v10999
  %v11002 = vmul.u32.u64.compose %v10998, %v10993
  %v11003 = vextract.low.u32 %v11002
  %v11004 = vextract.high.u32 %v11002
  %v11005 = vmul.u32 %v10998, %v10989
  %v11006 = vadd.s32 %v11001, %v11003
  %vm11007 = vc.u32 %v11001, %v11003
  %v11008 = vadd.s32 %v11004, 1
  %v11009 = vsel %vm11007, %v11008, %v11004
  %v11010 = vadd.s32 %v11005, %v11009
  %v11011 = vadd.s32 %v11010, 536870912
  %v11012 = vshrl.u32 %v11011, 30
  %v11013 = vshll.u32 %v11012, 30
  %v11014 = vsub.s32 %v11010, %v11013
  %vm11015 = vcmp.lt.s32.totalorder %v11014, 0
  %v11016 = vsub.s32 0, %v11014
  %v11017 = vsel %vm11015, %v11016, %v11014
  %v11018 = vclz %v11017
  %v11019 = vsub.s32 %v11018, 2
  %vm11020 = vcmp.gt.s32.totalorder 0, %v11019
  %v11021 = vsel %vm11020, 0, %v11019
  %v11022 = vsub.s32 32, %v11021
  %v11023 = vshll.u32 %v11014, %v11021
  %v11024 = vshrl.u32 %v11006, %v11022
  %v11025 = vor.u32 %v11023, %v11024
  %v11026 = vsub.s32 4294967266, %v11021
  %v11027 = vadd.s32 %v11026, 127
  %v11028 = vshll.u32 %v11027, 23
  %v11029 = vor.u32 4788187, %v11028
  %v11030 = vand.u32 2147483647, %v11029
  %v11032 = vcvt.s32.f32 %v11025
  %v11033 = vmul.f32 %v11032, %v11030
  %v11034 = vxor.u32 %v11033, 2147483648
  %v11035 = vsel %vm10952, %v11034, %v11033
  %v11036 = vsub.s32 4, %v11012
  %v11037 = vsel %vm10952, %v11036, %v11012
  %v11038 = vsel %vm10951, %v10310, %v11035
  %v11039 = vsel %vm10951, 0, %v11037
  %v11040 = vcosq.f32.pop %v11038
  %v11041 = vsinq.f32.pop %v11038
  %vm11042 = vweird.f32 %v10310
  %v11043 = vadd.s32 %v11039, 3
  %v11044 = vand.u32 %v11043, 3
  %vm11045 = vcmp.lt.s32.totalorder %v11044, 2
  %vm11046 = vcmp.eq.s32.totalorder %v11044, 0
  %v11047 = vxor.u32 %v11041, 2147483648
  %v11048 = vsel %vm11046, %v11040, %v11047
  %vm11049 = vcmp.eq.s32.totalorder %v11044, 2
  %v11050 = vxor.u32 %v11040, 2147483648
  %v11051 = vsel %vm11049, %v11050, %v11041
  %v11052 = vsel %vm11045, %v11048, %v11051
  %v11053 = vsel %vm11042, nan, %v11052
  %v11054 = vand.u32 2147483647, %v10312
  %vm11055 = vcmp.le.f32.partialorder %v11054, 0.7853982
  %vm11056 = vcmp.lt.s32.totalorder %v10312, 0
  %v11057 = vand.u32 %v10312, 2139095040
  %v11058 = vshrl.u32 %v11057, 23
  %v11059 = vsub.s32 %v11058, 127
  %v11060 = vand.u32 2147483647, %v10312
  %v11061 = vand.u32 %v11060, 8388607
  %v11062 = vor.u32 %v11061, 8388608
  %v11063 = vsub.s32 0, %v11062
  %v11064 = vadd.s32 %v11059, 1
  %vm11065 = vcmp.gt.s32.totalorder %v11064, 0
  %v11066 = vsel %vm11065, %v11064, 0
  %v11067 = vshrl.u32 %v11066, 5
  %v11068 = vand.u32 %v11066, 31
  %v11069 = vsub.s32 32, %v11068
  %v11070 = vshrl.u32 683565275, %v11069
  %v11071 = vshll.u32 683565275, %v11068
  %v11072 = vshrl.u32 2475754826, %v11069
  %v11073 = vor.u32 %v11071, %v11072
  %v11074 = vshll.u32 2475754826, %v11068
  %v11075 = vshrl.u32 2131351028, %v11069
  %v11076 = vor.u32 %v11074, %v11075
  %v11077 = vshll.u32 2131351028, %v11068
  %v11078 = vshrl.u32 2102212464, %v11069
  %v11079 = vor.u32 %v11077, %v11078
  %v11080 = vshll.u32 2102212464, %v11068
  %v11081 = vshrl.u32 920167782, %v11069
  %v11082 = vor.u32 %v11080, %v11081
  %v11083 = vshll.u32 920167782, %v11068
  %v11084 = vshrl.u32 1326507024, %v11069
  %v11085 = vor.u32 %v11083, %v11084
  %vm11086 = vcmp.lt.s32.totalorder %v11067, 1
  %vm11087 = vcmp.lt.s32.totalorder %v11067, 2
  %vm11088 = vcmp.lt.s32.totalorder %v11067, 3
  %vm11089 = vcmp.lt.s32.totalorder %v11067, 4
  %v11090 = vsel %vm11086, %v11070, %v11073
  %v11091 = vsel %vm11089, %v11079, 2102212464
  %v11092 = vsel %vm11088, %v11076, %v11091
  %v11093 = vsel %vm11087, %v11090, %v11092
  %v11094 = vsel %vm11086, %v11073, %v11076
  %v11095 = vsel %vm11089, %v11082, 920167782
  %v11096 = vsel %vm11088, %v11079, %v11095
  %v11097 = vsel %vm11087, %v11094, %v11096
  %v11098 = vsel %vm11086, %v11076, %v11079
  %v11099 = vsel %vm11089, %v11085, 1326507024
  %v11100 = vsel %vm11088, %v11082, %v11099
  %v11101 = vsel %vm11087, %v11098, %v11100
  %v11102 = vshll.u32 %v11062, 8
  %v11103 = vmul.u32.u64.compose %v11102, %v11101
  %v11104 = vextract.low.u32 %v11103
  %v11105 = vextract.high.u32 %v11103
  %v11106 = vmul.u32.u64.compose %v11102, %v11097
  %v11107 = vextract.low.u32 %v11106
  %v11108 = vextract.high.u32 %v11106
  %v11109 = vmul.u32 %v11102, %v11093
  %v11110 = vadd.s32 %v11105, %v11107
  %vm11111 = vc.u32 %v11105, %v11107
  %v11112 = vadd.s32 %v11108, 1
  %v11113 = vsel %vm11111, %v11112, %v11108
  %v11114 = vadd.s32 %v11109, %v11113
  %v11115 = vadd.s32 %v11114, 536870912
  %v11116 = vshrl.u32 %v11115, 30
  %v11117 = vshll.u32 %v11116, 30
  %v11118 = vsub.s32 %v11114, %v11117
  %vm11119 = vcmp.lt.s32.totalorder %v11118, 0
  %v11120 = vsub.s32 0, %v11118
  %v11121 = vsel %vm11119, %v11120, %v11118
  %v11122 = vclz %v11121
  %v11123 = vsub.s32 %v11122, 2
  %vm11124 = vcmp.gt.s32.totalorder 0, %v11123
  %v11125 = vsel %vm11124, 0, %v11123
  %v11126 = vsub.s32 32, %v11125
  %v11127 = vshll.u32 %v11118, %v11125
  %v11128 = vshrl.u32 %v11110, %v11126
  %v11129 = vor.u32 %v11127, %v11128
  %v11130 = vsub.s32 4294967266, %v11125
  %v11131 = vadd.s32 %v11130, 127
  %v11132 = vshll.u32 %v11131, 23
  %v11133 = vor.u32 4788187, %v11132
  %v11134 = vand.u32 2147483647, %v11133
  %v11136 = vcvt.s32.f32 %v11129
  %v11137 = vmul.f32 %v11136, %v11134
  %v11138 = vxor.u32 %v11137, 2147483648
  %v11139 = vsel %vm11056, %v11138, %v11137
  %v11140 = vsub.s32 4, %v11116
  %v11141 = vsel %vm11056, %v11140, %v11116
  %v11142 = vsel %vm11055, %v10312, %v11139
  %v11143 = vsel %vm11055, 0, %v11141
  %v11144 = vcosq.f32.pop %v11142
  %v11145 = vsinq.f32.pop %v11142
  %vm11146 = vweird.f32 %v10312
  %v11147 = vadd.s32 %v11143, 3
  %v11148 = vand.u32 %v11147, 3
  %vm11149 = vcmp.lt.s32.totalorder %v11148, 2
  %vm11150 = vcmp.eq.s32.totalorder %v11148, 0
  %v11151 = vxor.u32 %v11145, 2147483648
  %v11152 = vsel %vm11150, %v11144, %v11151
  %vm11153 = vcmp.eq.s32.totalorder %v11148, 2
  %v11154 = vxor.u32 %v11144, 2147483648
  %v11155 = vsel %vm11153, %v11154, %v11145
  %v11156 = vsel %vm11149, %v11152, %v11155
  %v11157 = vsel %vm11146, nan, %v11156
  %v11158 = vand.u32 2147483647, %v10227
  %vm11159 = vcmp.le.f32.partialorder %v11158, 0.7853982
  %vm11160 = vcmp.lt.s32.totalorder %v10227, 0
  %v11161 = vand.u32 %v10227, 2139095040
  %v11162 = vshrl.u32 %v11161, 23
  %v11163 = vsub.s32 %v11162, 127
  %v11164 = vand.u32 2147483647, %v10227
  %v11165 = vand.u32 %v11164, 8388607
  %v11166 = vor.u32 %v11165, 8388608
  %v11167 = vsub.s32 0, %v11166
  %v11168 = vadd.s32 %v11163, 1
  %vm11169 = vcmp.gt.s32.totalorder %v11168, 0
  %v11170 = vsel %vm11169, %v11168, 0
  %v11171 = vshrl.u32 %v11170, 5
  %v11172 = vand.u32 %v11170, 31
  %v11173 = vsub.s32 32, %v11172
  %v11174 = vshrl.u32 683565275, %v11173
  %v11175 = vshll.u32 683565275, %v11172
  %v11176 = vshrl.u32 2475754826, %v11173
  %v11177 = vor.u32 %v11175, %v11176
  %v11178 = vshll.u32 2475754826, %v11172
  %v11179 = vshrl.u32 2131351028, %v11173
  %v11180 = vor.u32 %v11178, %v11179
  %v11181 = vshll.u32 2131351028, %v11172
  %v11182 = vshrl.u32 2102212464, %v11173
  %v11183 = vor.u32 %v11181, %v11182
  %v11184 = vshll.u32 2102212464, %v11172
  %v11185 = vshrl.u32 920167782, %v11173
  %v11186 = vor.u32 %v11184, %v11185
  %v11187 = vshll.u32 920167782, %v11172
  %v11188 = vshrl.u32 1326507024, %v11173
  %v11189 = vor.u32 %v11187, %v11188
  %vm11190 = vcmp.lt.s32.totalorder %v11171, 1
  %vm11191 = vcmp.lt.s32.totalorder %v11171, 2
  %vm11192 = vcmp.lt.s32.totalorder %v11171, 3
  %vm11193 = vcmp.lt.s32.totalorder %v11171, 4
  %v11194 = vsel %vm11190, %v11174, %v11177
  %v11195 = vsel %vm11193, %v11183, 2102212464
  %v11196 = vsel %vm11192, %v11180, %v11195
  %v11197 = vsel %vm11191, %v11194, %v11196
  %v11198 = vsel %vm11190, %v11177, %v11180
  %v11199 = vsel %vm11193, %v11186, 920167782
  %v11200 = vsel %vm11192, %v11183, %v11199
  %v11201 = vsel %vm11191, %v11198, %v11200
  %v11202 = vsel %vm11190, %v11180, %v11183
  %v11203 = vsel %vm11193, %v11189, 1326507024
  %v11204 = vsel %vm11192, %v11186, %v11203
  %v11205 = vsel %vm11191, %v11202, %v11204
  %v11206 = vshll.u32 %v11166, 8
  %v11207 = vmul.u32.u64.compose %v11206, %v11205
  %v11208 = vextract.low.u32 %v11207
  %v11209 = vextract.high.u32 %v11207
  %v11210 = vmul.u32.u64.compose %v11206, %v11201
  %v11211 = vextract.low.u32 %v11210
  %v11212 = vextract.high.u32 %v11210
  %v11213 = vmul.u32 %v11206, %v11197
  %v11214 = vadd.s32 %v11209, %v11211
  %vm11215 = vc.u32 %v11209, %v11211
  %v11216 = vadd.s32 %v11212, 1
  %v11217 = vsel %vm11215, %v11216, %v11212
  %v11218 = vadd.s32 %v11213, %v11217
  %v11219 = vadd.s32 %v11218, 536870912
  %v11220 = vshrl.u32 %v11219, 30
  %v11221 = vshll.u32 %v11220, 30
  %v11222 = vsub.s32 %v11218, %v11221
  %vm11223 = vcmp.lt.s32.totalorder %v11222, 0
  %v11224 = vsub.s32 0, %v11222
  %v11225 = vsel %vm11223, %v11224, %v11222
  %v11226 = vclz %v11225
  %v11227 = vsub.s32 %v11226, 2
  %vm11228 = vcmp.gt.s32.totalorder 0, %v11227
  %v11229 = vsel %vm11228, 0, %v11227
  %v11230 = vsub.s32 32, %v11229
  %v11231 = vshll.u32 %v11222, %v11229
  %v11232 = vshrl.u32 %v11214, %v11230
  %v11233 = vor.u32 %v11231, %v11232
  %v11234 = vsub.s32 4294967266, %v11229
  %v11235 = vadd.s32 %v11234, 127
  %v11236 = vshll.u32 %v11235, 23
  %v11237 = vor.u32 4788187, %v11236
  %v11238 = vand.u32 2147483647, %v11237
  %v11240 = vcvt.s32.f32 %v11233
  %v11241 = vmul.f32 %v11240, %v11238
  %v11242 = vxor.u32 %v11241, 2147483648
  %v11243 = vsel %vm11160, %v11242, %v11241
  %v11244 = vsub.s32 4, %v11220
  %v11245 = vsel %vm11160, %v11244, %v11220
  %v11246 = vsel %vm11159, %v10227, %v11243
  %v11247 = vsel %vm11159, 0, %v11245
  %v11248 = vcosq.f32.pop %v11246
  %v11249 = vsinq.f32.pop %v11246
  %vm11250 = vweird.f32 %v10227
  %v11251 = vadd.s32 %v11247, 3
  %v11252 = vand.u32 %v11251, 3
  %vm11253 = vcmp.lt.s32.totalorder %v11252, 2
  %vm11254 = vcmp.eq.s32.totalorder %v11252, 0
  %v11255 = vxor.u32 %v11249, 2147483648
  %v11256 = vsel %vm11254, %v11248, %v11255
  %vm11257 = vcmp.eq.s32.totalorder %v11252, 2
  %v11258 = vxor.u32 %v11248, 2147483648
  %v11259 = vsel %vm11257, %v11258, %v11249
  %v11260 = vsel %vm11253, %v11256, %v11259
  %v11261 = vsel %vm11250, nan, %v11260
  %v11262 = vand.u32 2147483647, %v10229
  %vm11263 = vcmp.le.f32.partialorder %v11262, 0.7853982
  %vm11264 = vcmp.lt.s32.totalorder %v10229, 0
  %v11265 = vand.u32 %v10229, 2139095040
  %v11266 = vshrl.u32 %v11265, 23
  %v11267 = vsub.s32 %v11266, 127
  %v11268 = vand.u32 2147483647, %v10229
  %v11269 = vand.u32 %v11268, 8388607
  %v11270 = vor.u32 %v11269, 8388608
  %v11271 = vsub.s32 0, %v11270
  %v11272 = vadd.s32 %v11267, 1
  %vm11273 = vcmp.gt.s32.totalorder %v11272, 0
  %v11274 = vsel %vm11273, %v11272, 0
  %v11275 = vshrl.u32 %v11274, 5
  %v11276 = vand.u32 %v11274, 31
  %v11277 = vsub.s32 32, %v11276
  %v11278 = vshrl.u32 683565275, %v11277
  %v11279 = vshll.u32 683565275, %v11276
  %v11280 = vshrl.u32 2475754826, %v11277
  %v11281 = vor.u32 %v11279, %v11280
  %v11282 = vshll.u32 2475754826, %v11276
  %v11283 = vshrl.u32 2131351028, %v11277
  %v11284 = vor.u32 %v11282, %v11283
  %v11285 = vshll.u32 2131351028, %v11276
  %v11286 = vshrl.u32 2102212464, %v11277
  %v11287 = vor.u32 %v11285, %v11286
  %v11288 = vshll.u32 2102212464, %v11276
  %v11289 = vshrl.u32 920167782, %v11277
  %v11290 = vor.u32 %v11288, %v11289
  %v11291 = vshll.u32 920167782, %v11276
  %v11292 = vshrl.u32 1326507024, %v11277
  %v11293 = vor.u32 %v11291, %v11292
  %vm11294 = vcmp.lt.s32.totalorder %v11275, 1
  %vm11295 = vcmp.lt.s32.totalorder %v11275, 2
  %vm11296 = vcmp.lt.s32.totalorder %v11275, 3
  %vm11297 = vcmp.lt.s32.totalorder %v11275, 4
  %v11298 = vsel %vm11294, %v11278, %v11281
  %v11299 = vsel %vm11297, %v11287, 2102212464
  %v11300 = vsel %vm11296, %v11284, %v11299
  %v11301 = vsel %vm11295, %v11298, %v11300
  %v11302 = vsel %vm11294, %v11281, %v11284
  %v11303 = vsel %vm11297, %v11290, 920167782
  %v11304 = vsel %vm11296, %v11287, %v11303
  %v11305 = vsel %vm11295, %v11302, %v11304
  %v11306 = vsel %vm11294, %v11284, %v11287
  %v11307 = vsel %vm11297, %v11293, 1326507024
  %v11308 = vsel %vm11296, %v11290, %v11307
  %v11309 = vsel %vm11295, %v11306, %v11308
  %v11310 = vshll.u32 %v11270, 8
  %v11311 = vmul.u32.u64.compose %v11310, %v11309
  %v11312 = vextract.low.u32 %v11311
  %v11313 = vextract.high.u32 %v11311
  %v11314 = vmul.u32.u64.compose %v11310, %v11305
  %v11315 = vextract.low.u32 %v11314
  %v11316 = vextract.high.u32 %v11314
  %v11317 = vmul.u32 %v11310, %v11301
  %v11318 = vadd.s32 %v11313, %v11315
  %vm11319 = vc.u32 %v11313, %v11315
  %v11320 = vadd.s32 %v11316, 1
  %v11321 = vsel %vm11319, %v11320, %v11316
  %v11322 = vadd.s32 %v11317, %v11321
  %v11323 = vadd.s32 %v11322, 536870912
  %v11324 = vshrl.u32 %v11323, 30
  %v11325 = vshll.u32 %v11324, 30
  %v11326 = vsub.s32 %v11322, %v11325
  %vm11327 = vcmp.lt.s32.totalorder %v11326, 0
  %v11328 = vsub.s32 0, %v11326
  %v11329 = vsel %vm11327, %v11328, %v11326
  %v11330 = vclz %v11329
  %v11331 = vsub.s32 %v11330, 2
  %vm11332 = vcmp.gt.s32.totalorder 0, %v11331
  %v11333 = vsel %vm11332, 0, %v11331
  %v11334 = vsub.s32 32, %v11333
  %v11335 = vshll.u32 %v11326, %v11333
  %v11336 = vshrl.u32 %v11318, %v11334
  %v11337 = vor.u32 %v11335, %v11336
  %v11338 = vsub.s32 4294967266, %v11333
  %v11339 = vadd.s32 %v11338, 127
  %v11340 = vshll.u32 %v11339, 23
  %v11341 = vor.u32 4788187, %v11340
  %v11342 = vand.u32 2147483647, %v11341
  %v11344 = vcvt.s32.f32 %v11337
  %v11345 = vmul.f32 %v11344, %v11342
  %v11346 = vxor.u32 %v11345, 2147483648
  %v11347 = vsel %vm11264, %v11346, %v11345
  %v11348 = vsub.s32 4, %v11324
  %v11349 = vsel %vm11264, %v11348, %v11324
  %v11350 = vsel %vm11263, %v10229, %v11347
  %v11351 = vsel %vm11263, 0, %v11349
  %v11352 = vcosq.f32.pop %v11350
  %v11353 = vsinq.f32.pop %v11350
  %vm11354 = vweird.f32 %v10229
  %v11355 = vadd.s32 %v11351, 3
  %v11356 = vand.u32 %v11355, 3
  %vm11357 = vcmp.lt.s32.totalorder %v11356, 2
  %vm11358 = vcmp.eq.s32.totalorder %v11356, 0
  %v11359 = vxor.u32 %v11353, 2147483648
  %v11360 = vsel %vm11358, %v11352, %v11359
  %vm11361 = vcmp.eq.s32.totalorder %v11356, 2
  %v11362 = vxor.u32 %v11352, 2147483648
  %v11363 = vsel %vm11361, %v11362, %v11353
  %v11364 = vsel %vm11357, %v11360, %v11363
  %v11365 = vsel %vm11354, nan, %v11364
  %v11366 = vand.u32 2147483647, %v10316
  %vm11367 = vcmp.le.f32.partialorder %v11366, 0.7853982
  %vm11368 = vcmp.lt.s32.totalorder %v10316, 0
  %v11369 = vand.u32 %v10316, 2139095040
  %v11370 = vshrl.u32 %v11369, 23
  %v11371 = vsub.s32 %v11370, 127
  %v11372 = vand.u32 2147483647, %v10316
  %v11373 = vand.u32 %v11372, 8388607
  %v11374 = vor.u32 %v11373, 8388608
  %v11375 = vsub.s32 0, %v11374
  %v11376 = vadd.s32 %v11371, 1
  %vm11377 = vcmp.gt.s32.totalorder %v11376, 0
  %v11378 = vsel %vm11377, %v11376, 0
  %v11379 = vshrl.u32 %v11378, 5
  %v11380 = vand.u32 %v11378, 31
  %v11381 = vsub.s32 32, %v11380
  %v11382 = vshrl.u32 683565275, %v11381
  %v11383 = vshll.u32 683565275, %v11380
  %v11384 = vshrl.u32 2475754826, %v11381
  %v11385 = vor.u32 %v11383, %v11384
  %v11386 = vshll.u32 2475754826, %v11380
  %v11387 = vshrl.u32 2131351028, %v11381
  %v11388 = vor.u32 %v11386, %v11387
  %v11389 = vshll.u32 2131351028, %v11380
  %v11390 = vshrl.u32 2102212464, %v11381
  %v11391 = vor.u32 %v11389, %v11390
  %v11392 = vshll.u32 2102212464, %v11380
  %v11393 = vshrl.u32 920167782, %v11381
  %v11394 = vor.u32 %v11392, %v11393
  %v11395 = vshll.u32 920167782, %v11380
  %v11396 = vshrl.u32 1326507024, %v11381
  %v11397 = vor.u32 %v11395, %v11396
  %vm11398 = vcmp.lt.s32.totalorder %v11379, 1
  %vm11399 = vcmp.lt.s32.totalorder %v11379, 2
  %vm11400 = vcmp.lt.s32.totalorder %v11379, 3
  %vm11401 = vcmp.lt.s32.totalorder %v11379, 4
  %v11402 = vsel %vm11398, %v11382, %v11385
  %v11403 = vsel %vm11401, %v11391, 2102212464
  %v11404 = vsel %vm11400, %v11388, %v11403
  %v11405 = vsel %vm11399, %v11402, %v11404
  %v11406 = vsel %vm11398, %v11385, %v11388
  %v11407 = vsel %vm11401, %v11394, 920167782
  %v11408 = vsel %vm11400, %v11391, %v11407
  %v11409 = vsel %vm11399, %v11406, %v11408
  %v11410 = vsel %vm11398, %v11388, %v11391
  %v11411 = vsel %vm11401, %v11397, 1326507024
  %v11412 = vsel %vm11400, %v11394, %v11411
  %v11413 = vsel %vm11399, %v11410, %v11412
  %v11414 = vshll.u32 %v11374, 8
  %v11415 = vmul.u32.u64.compose %v11414, %v11413
  %v11416 = vextract.low.u32 %v11415
  %v11417 = vextract.high.u32 %v11415
  %v11418 = vmul.u32.u64.compose %v11414, %v11409
  %v11419 = vextract.low.u32 %v11418
  %v11420 = vextract.high.u32 %v11418
  %v11421 = vmul.u32 %v11414, %v11405
  %v11422 = vadd.s32 %v11417, %v11419
  %vm11423 = vc.u32 %v11417, %v11419
  %v11424 = vadd.s32 %v11420, 1
  %v11425 = vsel %vm11423, %v11424, %v11420
  %v11426 = vadd.s32 %v11421, %v11425
  %v11427 = vadd.s32 %v11426, 536870912
  %v11428 = vshrl.u32 %v11427, 30
  %v11429 = vshll.u32 %v11428, 30
  %v11430 = vsub.s32 %v11426, %v11429
  %vm11431 = vcmp.lt.s32.totalorder %v11430, 0
  %v11432 = vsub.s32 0, %v11430
  %v11433 = vsel %vm11431, %v11432, %v11430
  %v11434 = vclz %v11433
  %v11435 = vsub.s32 %v11434, 2
  %vm11436 = vcmp.gt.s32.totalorder 0, %v11435
  %v11437 = vsel %vm11436, 0, %v11435
  %v11438 = vsub.s32 32, %v11437
  %v11439 = vshll.u32 %v11430, %v11437
  %v11440 = vshrl.u32 %v11422, %v11438
  %v11441 = vor.u32 %v11439, %v11440
  %v11442 = vsub.s32 4294967266, %v11437
  %v11443 = vadd.s32 %v11442, 127
  %v11444 = vshll.u32 %v11443, 23
  %v11445 = vor.u32 4788187, %v11444
  %v11446 = vand.u32 2147483647, %v11445
  %v11448 = vcvt.s32.f32 %v11441
  %v11449 = vmul.f32 %v11448, %v11446
  %v11450 = vxor.u32 %v11449, 2147483648
  %v11451 = vsel %vm11368, %v11450, %v11449
  %v11452 = vsub.s32 4, %v11428
  %v11453 = vsel %vm11368, %v11452, %v11428
  %v11454 = vsel %vm11367, %v10316, %v11451
  %v11455 = vsel %vm11367, 0, %v11453
  %v11456 = vcosq.f32.pop %v11454
  %v11457 = vsinq.f32.pop %v11454
  %vm11458 = vweird.f32 %v10316
  %v11459 = vadd.s32 %v11455, 3
  %v11460 = vand.u32 %v11459, 3
  %vm11461 = vcmp.lt.s32.totalorder %v11460, 2
  %vm11462 = vcmp.eq.s32.totalorder %v11460, 0
  %v11463 = vxor.u32 %v11457, 2147483648
  %v11464 = vsel %vm11462, %v11456, %v11463
  %vm11465 = vcmp.eq.s32.totalorder %v11460, 2
  %v11466 = vxor.u32 %v11456, 2147483648
  %v11467 = vsel %vm11465, %v11466, %v11457
  %v11468 = vsel %vm11461, %v11464, %v11467
  %v11469 = vsel %vm11458, nan, %v11468
  %v11470 = vand.u32 2147483647, %v10318
  %vm11471 = vcmp.le.f32.partialorder %v11470, 0.7853982
  %vm11472 = vcmp.lt.s32.totalorder %v10318, 0
  %v11473 = vand.u32 %v10318, 2139095040
  %v11474 = vshrl.u32 %v11473, 23
  %v11475 = vsub.s32 %v11474, 127
  %v11476 = vand.u32 2147483647, %v10318
  %v11477 = vand.u32 %v11476, 8388607
  %v11478 = vor.u32 %v11477, 8388608
  %v11479 = vsub.s32 0, %v11478
  %v11480 = vadd.s32 %v11475, 1
  %vm11481 = vcmp.gt.s32.totalorder %v11480, 0
  %v11482 = vsel %vm11481, %v11480, 0
  %v11483 = vshrl.u32 %v11482, 5
  %v11484 = vand.u32 %v11482, 31
  %v11485 = vsub.s32 32, %v11484
  %v11486 = vshrl.u32 683565275, %v11485
  %v11487 = vshll.u32 683565275, %v11484
  %v11488 = vshrl.u32 2475754826, %v11485
  %v11489 = vor.u32 %v11487, %v11488
  %v11490 = vshll.u32 2475754826, %v11484
  %v11491 = vshrl.u32 2131351028, %v11485
  %v11492 = vor.u32 %v11490, %v11491
  %v11493 = vshll.u32 2131351028, %v11484
  %v11494 = vshrl.u32 2102212464, %v11485
  %v11495 = vor.u32 %v11493, %v11494
  %v11496 = vshll.u32 2102212464, %v11484
  %v11497 = vshrl.u32 920167782, %v11485
  %v11498 = vor.u32 %v11496, %v11497
  %v11499 = vshll.u32 920167782, %v11484
  %v11500 = vshrl.u32 1326507024, %v11485
  %v11501 = vor.u32 %v11499, %v11500
  %vm11502 = vcmp.lt.s32.totalorder %v11483, 1
  %vm11503 = vcmp.lt.s32.totalorder %v11483, 2
  %vm11504 = vcmp.lt.s32.totalorder %v11483, 3
  %vm11505 = vcmp.lt.s32.totalorder %v11483, 4
  %v11506 = vsel %vm11502, %v11486, %v11489
  %v11507 = vsel %vm11505, %v11495, 2102212464
  %v11508 = vsel %vm11504, %v11492, %v11507
  %v11509 = vsel %vm11503, %v11506, %v11508
  %v11510 = vsel %vm11502, %v11489, %v11492
  %v11511 = vsel %vm11505, %v11498, 920167782
  %v11512 = vsel %vm11504, %v11495, %v11511
  %v11513 = vsel %vm11503, %v11510, %v11512
  %v11514 = vsel %vm11502, %v11492, %v11495
  %v11515 = vsel %vm11505, %v11501, 1326507024
  %v11516 = vsel %vm11504, %v11498, %v11515
  %v11517 = vsel %vm11503, %v11514, %v11516
  %v11518 = vshll.u32 %v11478, 8
  %v11519 = vmul.u32.u64.compose %v11518, %v11517
  %v11520 = vextract.low.u32 %v11519
  %v11521 = vextract.high.u32 %v11519
  %v11522 = vmul.u32.u64.compose %v11518, %v11513
  %v11523 = vextract.low.u32 %v11522
  %v11524 = vextract.high.u32 %v11522
  %v11525 = vmul.u32 %v11518, %v11509
  %v11526 = vadd.s32 %v11521, %v11523
  %vm11527 = vc.u32 %v11521, %v11523
  %v11528 = vadd.s32 %v11524, 1
  %v11529 = vsel %vm11527, %v11528, %v11524
  %v11530 = vadd.s32 %v11525, %v11529
  %v11531 = vadd.s32 %v11530, 536870912
  %v11532 = vshrl.u32 %v11531, 30
  %v11533 = vshll.u32 %v11532, 30
  %v11534 = vsub.s32 %v11530, %v11533
  %vm11535 = vcmp.lt.s32.totalorder %v11534, 0
  %v11536 = vsub.s32 0, %v11534
  %v11537 = vsel %vm11535, %v11536, %v11534
  %v11538 = vclz %v11537
  %v11539 = vsub.s32 %v11538, 2
  %vm11540 = vcmp.gt.s32.totalorder 0, %v11539
  %v11541 = vsel %vm11540, 0, %v11539
  %v11542 = vsub.s32 32, %v11541
  %v11543 = vshll.u32 %v11534, %v11541
  %v11544 = vshrl.u32 %v11526, %v11542
  %v11545 = vor.u32 %v11543, %v11544
  %v11546 = vsub.s32 4294967266, %v11541
  %v11547 = vadd.s32 %v11546, 127
  %v11548 = vshll.u32 %v11547, 23
  %v11549 = vor.u32 4788187, %v11548
  %v11550 = vand.u32 2147483647, %v11549
  %v11552 = vcvt.s32.f32 %v11545
  %v11553 = vmul.f32 %v11552, %v11550
  %v11554 = vxor.u32 %v11553, 2147483648
  %v11555 = vsel %vm11472, %v11554, %v11553
  %v11556 = vsub.s32 4, %v11532
  %v11557 = vsel %vm11472, %v11556, %v11532
  %v11558 = vsel %vm11471, %v10318, %v11555
  %v11559 = vsel %vm11471, 0, %v11557
  %v11560 = vcosq.f32.pop %v11558
  %v11561 = vsinq.f32.pop %v11558
  %vm11562 = vweird.f32 %v10318
  %v11563 = vadd.s32 %v11559, 3
  %v11564 = vand.u32 %v11563, 3
  %vm11565 = vcmp.lt.s32.totalorder %v11564, 2
  %vm11566 = vcmp.eq.s32.totalorder %v11564, 0
  %v11567 = vxor.u32 %v11561, 2147483648
  %v11568 = vsel %vm11566, %v11560, %v11567
  %vm11569 = vcmp.eq.s32.totalorder %v11564, 2
  %v11570 = vxor.u32 %v11560, 2147483648
  %v11571 = vsel %vm11569, %v11570, %v11561
  %v11572 = vsel %vm11565, %v11568, %v11571
  %v11573 = vsel %vm11562, nan, %v11572
  %v11574 = vand.u32 2147483647, %v10233
  %vm11575 = vcmp.le.f32.partialorder %v11574, 0.7853982
  %vm11576 = vcmp.lt.s32.totalorder %v10233, 0
  %v11577 = vand.u32 %v10233, 2139095040
  %v11578 = vshrl.u32 %v11577, 23
  %v11579 = vsub.s32 %v11578, 127
  %v11580 = vand.u32 2147483647, %v10233
  %v11581 = vand.u32 %v11580, 8388607
  %v11582 = vor.u32 %v11581, 8388608
  %v11583 = vsub.s32 0, %v11582
  %v11584 = vadd.s32 %v11579, 1
  %vm11585 = vcmp.gt.s32.totalorder %v11584, 0
  %v11586 = vsel %vm11585, %v11584, 0
  %v11587 = vshrl.u32 %v11586, 5
  %v11588 = vand.u32 %v11586, 31
  %v11589 = vsub.s32 32, %v11588
  %v11590 = vshrl.u32 683565275, %v11589
  %v11591 = vshll.u32 683565275, %v11588
  %v11592 = vshrl.u32 2475754826, %v11589
  %v11593 = vor.u32 %v11591, %v11592
  %v11594 = vshll.u32 2475754826, %v11588
  %v11595 = vshrl.u32 2131351028, %v11589
  %v11596 = vor.u32 %v11594, %v11595
  %v11597 = vshll.u32 2131351028, %v11588
  %v11598 = vshrl.u32 2102212464, %v11589
  %v11599 = vor.u32 %v11597, %v11598
  %v11600 = vshll.u32 2102212464, %v11588
  %v11601 = vshrl.u32 920167782, %v11589
  %v11602 = vor.u32 %v11600, %v11601
  %v11603 = vshll.u32 920167782, %v11588
  %v11604 = vshrl.u32 1326507024, %v11589
  %v11605 = vor.u32 %v11603, %v11604
  %vm11606 = vcmp.lt.s32.totalorder %v11587, 1
  %vm11607 = vcmp.lt.s32.totalorder %v11587, 2
  %vm11608 = vcmp.lt.s32.totalorder %v11587, 3
  %vm11609 = vcmp.lt.s32.totalorder %v11587, 4
  %v11610 = vsel %vm11606, %v11590, %v11593
  %v11611 = vsel %vm11609, %v11599, 2102212464
  %v11612 = vsel %vm11608, %v11596, %v11611
  %v11613 = vsel %vm11607, %v11610, %v11612
  %v11614 = vsel %vm11606, %v11593, %v11596
  %v11615 = vsel %vm11609, %v11602, 920167782
  %v11616 = vsel %vm11608, %v11599, %v11615
  %v11617 = vsel %vm11607, %v11614, %v11616
  %v11618 = vsel %vm11606, %v11596, %v11599
  %v11619 = vsel %vm11609, %v11605, 1326507024
  %v11620 = vsel %vm11608, %v11602, %v11619
  %v11621 = vsel %vm11607, %v11618, %v11620
  %v11622 = vshll.u32 %v11582, 8
  %v11623 = vmul.u32.u64.compose %v11622, %v11621
  %v11624 = vextract.low.u32 %v11623
  %v11625 = vextract.high.u32 %v11623
  %v11626 = vmul.u32.u64.compose %v11622, %v11617
  %v11627 = vextract.low.u32 %v11626
  %v11628 = vextract.high.u32 %v11626
  %v11629 = vmul.u32 %v11622, %v11613
  %v11630 = vadd.s32 %v11625, %v11627
  %vm11631 = vc.u32 %v11625, %v11627
  %v11632 = vadd.s32 %v11628, 1
  %v11633 = vsel %vm11631, %v11632, %v11628
  %v11634 = vadd.s32 %v11629, %v11633
  %v11635 = vadd.s32 %v11634, 536870912
  %v11636 = vshrl.u32 %v11635, 30
  %v11637 = vshll.u32 %v11636, 30
  %v11638 = vsub.s32 %v11634, %v11637
  %vm11639 = vcmp.lt.s32.totalorder %v11638, 0
  %v11640 = vsub.s32 0, %v11638
  %v11641 = vsel %vm11639, %v11640, %v11638
  %v11642 = vclz %v11641
  %v11643 = vsub.s32 %v11642, 2
  %vm11644 = vcmp.gt.s32.totalorder 0, %v11643
  %v11645 = vsel %vm11644, 0, %v11643
  %v11646 = vsub.s32 32, %v11645
  %v11647 = vshll.u32 %v11638, %v11645
  %v11648 = vshrl.u32 %v11630, %v11646
  %v11649 = vor.u32 %v11647, %v11648
  %v11650 = vsub.s32 4294967266, %v11645
  %v11651 = vadd.s32 %v11650, 127
  %v11652 = vshll.u32 %v11651, 23
  %v11653 = vor.u32 4788187, %v11652
  %v11654 = vand.u32 2147483647, %v11653
  %v11656 = vcvt.s32.f32 %v11649
  %v11657 = vmul.f32 %v11656, %v11654
  %v11658 = vxor.u32 %v11657, 2147483648
  %v11659 = vsel %vm11576, %v11658, %v11657
  %v11660 = vsub.s32 4, %v11636
  %v11661 = vsel %vm11576, %v11660, %v11636
  %v11662 = vsel %vm11575, %v10233, %v11659
  %v11663 = vsel %vm11575, 0, %v11661
  %v11664 = vcosq.f32.pop %v11662
  %v11665 = vsinq.f32.pop %v11662
  %vm11666 = vweird.f32 %v10233
  %v11667 = vadd.s32 %v11663, 3
  %v11668 = vand.u32 %v11667, 3
  %vm11669 = vcmp.lt.s32.totalorder %v11668, 2
  %vm11670 = vcmp.eq.s32.totalorder %v11668, 0
  %v11671 = vxor.u32 %v11665, 2147483648
  %v11672 = vsel %vm11670, %v11664, %v11671
  %vm11673 = vcmp.eq.s32.totalorder %v11668, 2
  %v11674 = vxor.u32 %v11664, 2147483648
  %v11675 = vsel %vm11673, %v11674, %v11665
  %v11676 = vsel %vm11669, %v11672, %v11675
  %v11677 = vsel %vm11666, nan, %v11676
  %v11678 = vand.u32 2147483647, %v10235
  %vm11679 = vcmp.le.f32.partialorder %v11678, 0.7853982
  %vm11680 = vcmp.lt.s32.totalorder %v10235, 0
  %v11681 = vand.u32 %v10235, 2139095040
  %v11682 = vshrl.u32 %v11681, 23
  %v11683 = vsub.s32 %v11682, 127
  %v11684 = vand.u32 2147483647, %v10235
  %v11685 = vand.u32 %v11684, 8388607
  %v11686 = vor.u32 %v11685, 8388608
  %v11687 = vsub.s32 0, %v11686
  %v11688 = vadd.s32 %v11683, 1
  %vm11689 = vcmp.gt.s32.totalorder %v11688, 0
  %v11690 = vsel %vm11689, %v11688, 0
  %v11691 = vshrl.u32 %v11690, 5
  %v11692 = vand.u32 %v11690, 31
  %v11693 = vsub.s32 32, %v11692
  %v11694 = vshrl.u32 683565275, %v11693
  %v11695 = vshll.u32 683565275, %v11692
  %v11696 = vshrl.u32 2475754826, %v11693
  %v11697 = vor.u32 %v11695, %v11696
  %v11698 = vshll.u32 2475754826, %v11692
  %v11699 = vshrl.u32 2131351028, %v11693
  %v11700 = vor.u32 %v11698, %v11699
  %v11701 = vshll.u32 2131351028, %v11692
  %v11702 = vshrl.u32 2102212464, %v11693
  %v11703 = vor.u32 %v11701, %v11702
  %v11704 = vshll.u32 2102212464, %v11692
  %v11705 = vshrl.u32 920167782, %v11693
  %v11706 = vor.u32 %v11704, %v11705
  %v11707 = vshll.u32 920167782, %v11692
  %v11708 = vshrl.u32 1326507024, %v11693
  %v11709 = vor.u32 %v11707, %v11708
  %vm11710 = vcmp.lt.s32.totalorder %v11691, 1
  %vm11711 = vcmp.lt.s32.totalorder %v11691, 2
  %vm11712 = vcmp.lt.s32.totalorder %v11691, 3
  %vm11713 = vcmp.lt.s32.totalorder %v11691, 4
  %v11714 = vsel %vm11710, %v11694, %v11697
  %v11715 = vsel %vm11713, %v11703, 2102212464
  %v11716 = vsel %vm11712, %v11700, %v11715
  %v11717 = vsel %vm11711, %v11714, %v11716
  %v11718 = vsel %vm11710, %v11697, %v11700
  %v11719 = vsel %vm11713, %v11706, 920167782
  %v11720 = vsel %vm11712, %v11703, %v11719
  %v11721 = vsel %vm11711, %v11718, %v11720
  %v11722 = vsel %vm11710, %v11700, %v11703
  %v11723 = vsel %vm11713, %v11709, 1326507024
  %v11724 = vsel %vm11712, %v11706, %v11723
  %v11725 = vsel %vm11711, %v11722, %v11724
  %v11726 = vshll.u32 %v11686, 8
  %v11727 = vmul.u32.u64.compose %v11726, %v11725
  %v11728 = vextract.low.u32 %v11727
  %v11729 = vextract.high.u32 %v11727
  %v11730 = vmul.u32.u64.compose %v11726, %v11721
  %v11731 = vextract.low.u32 %v11730
  %v11732 = vextract.high.u32 %v11730
  %v11733 = vmul.u32 %v11726, %v11717
  %v11734 = vadd.s32 %v11729, %v11731
  %vm11735 = vc.u32 %v11729, %v11731
  %v11736 = vadd.s32 %v11732, 1
  %v11737 = vsel %vm11735, %v11736, %v11732
  %v11738 = vadd.s32 %v11733, %v11737
  %v11739 = vadd.s32 %v11738, 536870912
  %v11740 = vshrl.u32 %v11739, 30
  %v11741 = vshll.u32 %v11740, 30
  %v11742 = vsub.s32 %v11738, %v11741
  %vm11743 = vcmp.lt.s32.totalorder %v11742, 0
  %v11744 = vsub.s32 0, %v11742
  %v11745 = vsel %vm11743, %v11744, %v11742
  %v11746 = vclz %v11745
  %v11747 = vsub.s32 %v11746, 2
  %vm11748 = vcmp.gt.s32.totalorder 0, %v11747
  %v11749 = vsel %vm11748, 0, %v11747
  %v11750 = vsub.s32 32, %v11749
  %v11751 = vshll.u32 %v11742, %v11749
  %v11752 = vshrl.u32 %v11734, %v11750
  %v11753 = vor.u32 %v11751, %v11752
  %v11754 = vsub.s32 4294967266, %v11749
  %v11755 = vadd.s32 %v11754, 127
  %v11756 = vshll.u32 %v11755, 23
  %v11757 = vor.u32 4788187, %v11756
  %v11758 = vand.u32 2147483647, %v11757
  %v11760 = vcvt.s32.f32 %v11753
  %v11761 = vmul.f32 %v11760, %v11758
  %v11762 = vxor.u32 %v11761, 2147483648
  %v11763 = vsel %vm11680, %v11762, %v11761
  %v11764 = vsub.s32 4, %v11740
  %v11765 = vsel %vm11680, %v11764, %v11740
  %v11766 = vsel %vm11679, %v10235, %v11763
  %v11767 = vsel %vm11679, 0, %v11765
  %v11768 = vcosq.f32.pop %v11766
  %v11769 = vsinq.f32.pop %v11766
  %vm11770 = vweird.f32 %v10235
  %v11771 = vadd.s32 %v11767, 3
  %v11772 = vand.u32 %v11771, 3
  %vm11773 = vcmp.lt.s32.totalorder %v11772, 2
  %vm11774 = vcmp.eq.s32.totalorder %v11772, 0
  %v11775 = vxor.u32 %v11769, 2147483648
  %v11776 = vsel %vm11774, %v11768, %v11775
  %vm11777 = vcmp.eq.s32.totalorder %v11772, 2
  %v11778 = vxor.u32 %v11768, 2147483648
  %v11779 = vsel %vm11777, %v11778, %v11769
  %v11780 = vsel %vm11773, %v11776, %v11779
  %v11781 = vsel %vm11770, nan, %v11780
  %v11782 = vand.u32 2147483647, %v10322
  %vm11783 = vcmp.le.f32.partialorder %v11782, 0.7853982
  %vm11784 = vcmp.lt.s32.totalorder %v10322, 0
  %v11785 = vand.u32 %v10322, 2139095040
  %v11786 = vshrl.u32 %v11785, 23
  %v11787 = vsub.s32 %v11786, 127
  %v11788 = vand.u32 2147483647, %v10322
  %v11789 = vand.u32 %v11788, 8388607
  %v11790 = vor.u32 %v11789, 8388608
  %v11791 = vsub.s32 0, %v11790
  %v11792 = vadd.s32 %v11787, 1
  %vm11793 = vcmp.gt.s32.totalorder %v11792, 0
  %v11794 = vsel %vm11793, %v11792, 0
  %v11795 = vshrl.u32 %v11794, 5
  %v11796 = vand.u32 %v11794, 31
  %v11797 = vsub.s32 32, %v11796
  %v11798 = vshrl.u32 683565275, %v11797
  %v11799 = vshll.u32 683565275, %v11796
  %v11800 = vshrl.u32 2475754826, %v11797
  %v11801 = vor.u32 %v11799, %v11800
  %v11802 = vshll.u32 2475754826, %v11796
  %v11803 = vshrl.u32 2131351028, %v11797
  %v11804 = vor.u32 %v11802, %v11803
  %v11805 = vshll.u32 2131351028, %v11796
  %v11806 = vshrl.u32 2102212464, %v11797
  %v11807 = vor.u32 %v11805, %v11806
  %v11808 = vshll.u32 2102212464, %v11796
  %v11809 = vshrl.u32 920167782, %v11797
  %v11810 = vor.u32 %v11808, %v11809
  %v11811 = vshll.u32 920167782, %v11796
  %v11812 = vshrl.u32 1326507024, %v11797
  %v11813 = vor.u32 %v11811, %v11812
  %vm11814 = vcmp.lt.s32.totalorder %v11795, 1
  %vm11815 = vcmp.lt.s32.totalorder %v11795, 2
  %vm11816 = vcmp.lt.s32.totalorder %v11795, 3
  %vm11817 = vcmp.lt.s32.totalorder %v11795, 4
  %v11818 = vsel %vm11814, %v11798, %v11801
  %v11819 = vsel %vm11817, %v11807, 2102212464
  %v11820 = vsel %vm11816, %v11804, %v11819
  %v11821 = vsel %vm11815, %v11818, %v11820
  %v11822 = vsel %vm11814, %v11801, %v11804
  %v11823 = vsel %vm11817, %v11810, 920167782
  %v11824 = vsel %vm11816, %v11807, %v11823
  %v11825 = vsel %vm11815, %v11822, %v11824
  %v11826 = vsel %vm11814, %v11804, %v11807
  %v11827 = vsel %vm11817, %v11813, 1326507024
  %v11828 = vsel %vm11816, %v11810, %v11827
  %v11829 = vsel %vm11815, %v11826, %v11828
  %v11830 = vshll.u32 %v11790, 8
  %v11831 = vmul.u32.u64.compose %v11830, %v11829
  %v11832 = vextract.low.u32 %v11831
  %v11833 = vextract.high.u32 %v11831
  %v11834 = vmul.u32.u64.compose %v11830, %v11825
  %v11835 = vextract.low.u32 %v11834
  %v11836 = vextract.high.u32 %v11834
  %v11837 = vmul.u32 %v11830, %v11821
  %v11838 = vadd.s32 %v11833, %v11835
  %vm11839 = vc.u32 %v11833, %v11835
  %v11840 = vadd.s32 %v11836, 1
  %v11841 = vsel %vm11839, %v11840, %v11836
  %v11842 = vadd.s32 %v11837, %v11841
  %v11843 = vadd.s32 %v11842, 536870912
  %v11844 = vshrl.u32 %v11843, 30
  %v11845 = vshll.u32 %v11844, 30
  %v11846 = vsub.s32 %v11842, %v11845
  %vm11847 = vcmp.lt.s32.totalorder %v11846, 0
  %v11848 = vsub.s32 0, %v11846
  %v11849 = vsel %vm11847, %v11848, %v11846
  %v11850 = vclz %v11849
  %v11851 = vsub.s32 %v11850, 2
  %vm11852 = vcmp.gt.s32.totalorder 0, %v11851
  %v11853 = vsel %vm11852, 0, %v11851
  %v11854 = vsub.s32 32, %v11853
  %v11855 = vshll.u32 %v11846, %v11853
  %v11856 = vshrl.u32 %v11838, %v11854
  %v11857 = vor.u32 %v11855, %v11856
  %v11858 = vsub.s32 4294967266, %v11853
  %v11859 = vadd.s32 %v11858, 127
  %v11860 = vshll.u32 %v11859, 23
  %v11861 = vor.u32 4788187, %v11860
  %v11862 = vand.u32 2147483647, %v11861
  %v11864 = vcvt.s32.f32 %v11857
  %v11865 = vmul.f32 %v11864, %v11862
  %v11866 = vxor.u32 %v11865, 2147483648
  %v11867 = vsel %vm11784, %v11866, %v11865
  %v11868 = vsub.s32 4, %v11844
  %v11869 = vsel %vm11784, %v11868, %v11844
  %v11870 = vsel %vm11783, %v10322, %v11867
  %v11871 = vsel %vm11783, 0, %v11869
  %v11872 = vcosq.f32.pop %v11870
  %v11873 = vsinq.f32.pop %v11870
  %vm11874 = vweird.f32 %v10322
  %v11875 = vadd.s32 %v11871, 3
  %v11876 = vand.u32 %v11875, 3
  %vm11877 = vcmp.lt.s32.totalorder %v11876, 2
  %vm11878 = vcmp.eq.s32.totalorder %v11876, 0
  %v11879 = vxor.u32 %v11873, 2147483648
  %v11880 = vsel %vm11878, %v11872, %v11879
  %vm11881 = vcmp.eq.s32.totalorder %v11876, 2
  %v11882 = vxor.u32 %v11872, 2147483648
  %v11883 = vsel %vm11881, %v11882, %v11873
  %v11884 = vsel %vm11877, %v11880, %v11883
  %v11885 = vsel %vm11874, nan, %v11884
  %v11886 = vand.u32 2147483647, %v10324
  %vm11887 = vcmp.le.f32.partialorder %v11886, 0.7853982
  %vm11888 = vcmp.lt.s32.totalorder %v10324, 0
  %v11889 = vand.u32 %v10324, 2139095040
  %v11890 = vshrl.u32 %v11889, 23
  %v11891 = vsub.s32 %v11890, 127
  %v11892 = vand.u32 2147483647, %v10324
  %v11893 = vand.u32 %v11892, 8388607
  %v11894 = vor.u32 %v11893, 8388608
  %v11895 = vsub.s32 0, %v11894
  %v11896 = vadd.s32 %v11891, 1
  %vm11897 = vcmp.gt.s32.totalorder %v11896, 0
  %v11898 = vsel %vm11897, %v11896, 0
  %v11899 = vshrl.u32 %v11898, 5
  %v11900 = vand.u32 %v11898, 31
  %v11901 = vsub.s32 32, %v11900
  %v11902 = vshrl.u32 683565275, %v11901
  %v11903 = vshll.u32 683565275, %v11900
  %v11904 = vshrl.u32 2475754826, %v11901
  %v11905 = vor.u32 %v11903, %v11904
  %v11906 = vshll.u32 2475754826, %v11900
  %v11907 = vshrl.u32 2131351028, %v11901
  %v11908 = vor.u32 %v11906, %v11907
  %v11909 = vshll.u32 2131351028, %v11900
  %v11910 = vshrl.u32 2102212464, %v11901
  %v11911 = vor.u32 %v11909, %v11910
  %v11912 = vshll.u32 2102212464, %v11900
  %v11913 = vshrl.u32 920167782, %v11901
  %v11914 = vor.u32 %v11912, %v11913
  %v11915 = vshll.u32 920167782, %v11900
  %v11916 = vshrl.u32 1326507024, %v11901
  %v11917 = vor.u32 %v11915, %v11916
  %vm11918 = vcmp.lt.s32.totalorder %v11899, 1
  %vm11919 = vcmp.lt.s32.totalorder %v11899, 2
  %vm11920 = vcmp.lt.s32.totalorder %v11899, 3
  %vm11921 = vcmp.lt.s32.totalorder %v11899, 4
  %v11922 = vsel %vm11918, %v11902, %v11905
  %v11923 = vsel %vm11921, %v11911, 2102212464
  %v11924 = vsel %vm11920, %v11908, %v11923
  %v11925 = vsel %vm11919, %v11922, %v11924
  %v11926 = vsel %vm11918, %v11905, %v11908
  %v11927 = vsel %vm11921, %v11914, 920167782
  %v11928 = vsel %vm11920, %v11911, %v11927
  %v11929 = vsel %vm11919, %v11926, %v11928
  %v11930 = vsel %vm11918, %v11908, %v11911
  %v11931 = vsel %vm11921, %v11917, 1326507024
  %v11932 = vsel %vm11920, %v11914, %v11931
  %v11933 = vsel %vm11919, %v11930, %v11932
  %v11934 = vshll.u32 %v11894, 8
  %v11935 = vmul.u32.u64.compose %v11934, %v11933
  %v11936 = vextract.low.u32 %v11935
  %v11937 = vextract.high.u32 %v11935
  %v11938 = vmul.u32.u64.compose %v11934, %v11929
  %v11939 = vextract.low.u32 %v11938
  %v11940 = vextract.high.u32 %v11938
  %v11941 = vmul.u32 %v11934, %v11925
  %v11942 = vadd.s32 %v11937, %v11939
  %vm11943 = vc.u32 %v11937, %v11939
  %v11944 = vadd.s32 %v11940, 1
  %v11945 = vsel %vm11943, %v11944, %v11940
  %v11946 = vadd.s32 %v11941, %v11945
  %v11947 = vadd.s32 %v11946, 536870912
  %v11948 = vshrl.u32 %v11947, 30
  %v11949 = vshll.u32 %v11948, 30
  %v11950 = vsub.s32 %v11946, %v11949
  %vm11951 = vcmp.lt.s32.totalorder %v11950, 0
  %v11952 = vsub.s32 0, %v11950
  %v11953 = vsel %vm11951, %v11952, %v11950
  %v11954 = vclz %v11953
  %v11955 = vsub.s32 %v11954, 2
  %vm11956 = vcmp.gt.s32.totalorder 0, %v11955
  %v11957 = vsel %vm11956, 0, %v11955
  %v11958 = vsub.s32 32, %v11957
  %v11959 = vshll.u32 %v11950, %v11957
  %v11960 = vshrl.u32 %v11942, %v11958
  %v11961 = vor.u32 %v11959, %v11960
  %v11962 = vsub.s32 4294967266, %v11957
  %v11963 = vadd.s32 %v11962, 127
  %v11964 = vshll.u32 %v11963, 23
  %v11965 = vor.u32 4788187, %v11964
  %v11966 = vand.u32 2147483647, %v11965
  %v11968 = vcvt.s32.f32 %v11961
  %v11969 = vmul.f32 %v11968, %v11966
  %v11970 = vxor.u32 %v11969, 2147483648
  %v11971 = vsel %vm11888, %v11970, %v11969
  %v11972 = vsub.s32 4, %v11948
  %v11973 = vsel %vm11888, %v11972, %v11948
  %v11974 = vsel %vm11887, %v10324, %v11971
  %v11975 = vsel %vm11887, 0, %v11973
  %v11976 = vcosq.f32.pop %v11974
  %v11977 = vsinq.f32.pop %v11974
  %vm11978 = vweird.f32 %v10324
  %v11979 = vadd.s32 %v11975, 3
  %v11980 = vand.u32 %v11979, 3
  %vm11981 = vcmp.lt.s32.totalorder %v11980, 2
  %vm11982 = vcmp.eq.s32.totalorder %v11980, 0
  %v11983 = vxor.u32 %v11977, 2147483648
  %v11984 = vsel %vm11982, %v11976, %v11983
  %vm11985 = vcmp.eq.s32.totalorder %v11980, 2
  %v11986 = vxor.u32 %v11976, 2147483648
  %v11987 = vsel %vm11985, %v11986, %v11977
  %v11988 = vsel %vm11981, %v11984, %v11987
  %v11989 = vsel %vm11978, nan, %v11988
  %v11990 = vld [vmem:[%s7] sm:$0x1]
  %v11991 = vld [vmem:[#allocation2] sm:$0x1]
  %11993 = vset.pattern.permute.xlu0 0
  %11994 = vperm.xlu0 %11993, %v11991
  %v11995 = vpop.permute.xlu0 %11994
  %v11997 = vlaneseq
  %v11998 = vshrl.u32 %v11997, 7
  %v11999 = vsub.s32 0, %v11998
  %v12000 = vrot.slane %v11995, %v11999
  %v12002 = vsel %vm1973, %v11990, 0
  %12004 = vmatprep.subr.mxu0 %v10533
  %12005 = vmatpush1.msra.mxu0 %v10429
  %12006 = vmatprep.subr.mxu0 %v10949
  %12007 = vmatpush1.msra.mxu0 %v10845
  %12008 = vmatprep.subr.mxu0 %v11365
  %12009 = vmatpush1.msra.mxu0 %v11261
  %12010 = vmatprep.subr.mxu0 %v11781
  %12011 = vmatpush1.msra.mxu0 %v11677
  %12012 = vmatprep.subr.mxu0 0.0
  %12013 = vmatpush1.msra.mxu0 0.0
  %12014 = vmatprep.subr.mxu0 0.0
  %12015 = vmatpush1.msra.mxu0 0.0
  %12016 = vmatprep.subr.mxu0 0.0
  %12017 = vmatpush1.msra.mxu0 0.0
  %12018 = vmatprep.subr.mxu0 0.0
  %12019 = vmatpush1.msra.mxu0 0.0
  %12020 = vmatprep.subr.mxu0 0.0
  %12021 = vmatpush1.msra.mxu0 0.0
  %12022 = vmatprep.subr.mxu0 0.0
  %12023 = vmatpush1.msra.mxu0 0.0
  %12024 = vmatprep.subr.mxu0 0.0
  %12025 = vmatpush1.msra.mxu0 0.0
  %12026 = vmatprep.subr.mxu0 0.0
  %12027 = vmatpush1.msra.mxu0 0.0
  %12028 = vmatprep.subr.mxu0 0.0
  %12029 = vmatpush1.msra.mxu0 0.0
  %12030 = vmatprep.subr.mxu0 0.0
  %12031 = vmatpush1.msra.mxu0 0.0
  %12032 = vmatprep.subr.mxu0 0.0
  %12033 = vmatpush1.msra.mxu0 0.0
  %12034 = vmatprep.subr.mxu0 0.0
  %12035 = vmatpush1.msra.mxu0 0.0
  %12036 = vmatprep.subr.mxu0 0.0
  %12037 = vmatpush1.msra.mxu0 0.0
  %12038 = vmatprep.subr.mxu0 0.0
  %12039 = vmatpush1.msra.mxu0 0.0
  %12040 = vmatprep.subr.mxu0 0.0
  %12041 = vmatpush1.msra.mxu0 0.0
  %12042 = vmatprep.subr.mxu0 0.0
  %12043 = vmatpush1.msra.mxu0 0.0
  %12044 = vmatprep.subr.mxu0 0.0
  %12045 = vmatpush1.msra.mxu0 0.0
  %12046 = vmatprep.subr.mxu0 0.0
  %12047 = vmatpush1.msra.mxu0 0.0
  %12048 = vmatprep.subr.mxu0 0.0
  %12049 = vmatpush1.msra.mxu0 0.0
  %12050 = vmatprep.subr.mxu0 0.0
  %12051 = vmatpush1.msra.mxu0 0.0
  %12052 = vmatprep.subr.mxu0 0.0
  %12053 = vmatpush1.msra.mxu0 0.0
  %12054 = vmatprep.subr.mxu0 0.0
  %12055 = vmatpush1.msra.mxu0 0.0
  %12056 = vmatprep.subr.mxu0 0.0
  %12057 = vmatpush1.msra.mxu0 0.0
  %12058 = vmatprep.subr.mxu0 0.0
  %12059 = vmatpush1.msra.mxu0 0.0
  %12060 = vmatprep.subr.mxu0 0.0
  %12061 = vmatpush1.msra.mxu0 0.0
  %12062 = vmatprep.subr.mxu0 0.0
  %12063 = vmatpush1.msra.mxu0 0.0
  %12064 = vmatprep.subr.mxu0 0.0
  %12065 = vmatpush1.msra.mxu0 0.0
  %12066 = vmatprep.subr.mxu0 0.0
  %12067 = vmatpush1.msra.mxu0 0.0
  %12068 = vmatprep.mubr.f32.mxu0 0.0
  %12069 = vmatmul.mubr.f32.gmra.mrb[0].mxu0 %v12002
  %v12070 = vpop.f32.mrb[0].mxu0
  %v12071 = vadd.f32 %v12000, %v12070
  %v12072 = vpop.f32.mrb[0].mxu0
  %v12073 = vadd.f32 %v12000, %v12072
  %12074 = vdwg.mxu0
  %12075 = vmatprep.subr.mxu0 %v10741
  %12076 = vmatpush1.msra.mxu0 %v10637
  %12077 = vmatprep.subr.mxu0 %v11157
  %12078 = vmatpush1.msra.mxu0 %v11053
  %12079 = vmatprep.subr.mxu0 %v11573
  %12080 = vmatpush1.msra.mxu0 %v11469
  %12081 = vmatprep.subr.mxu0 %v11989
  %12082 = vmatpush1.msra.mxu0 %v11885
  %12083 = vmatprep.subr.mxu0 0.0
  %12084 = vmatpush1.msra.mxu0 0.0
  %12085 = vmatprep.subr.mxu0 0.0
  %12086 = vmatpush1.msra.mxu0 0.0
  %12087 = vmatprep.subr.mxu0 0.0
  %12088 = vmatpush1.msra.mxu0 0.0
  %12089 = vmatprep.subr.mxu0 0.0
  %12090 = vmatpush1.msra.mxu0 0.0
  %12091 = vmatprep.subr.mxu0 0.0
  %12092 = vmatpush1.msra.mxu0 0.0
  %12093 = vmatprep.subr.mxu0 0.0
  %12094 = vmatpush1.msra.mxu0 0.0
  %12095 = vmatprep.subr.mxu0 0.0
  %12096 = vmatpush1.msra.mxu0 0.0
  %12097 = vmatprep.subr.mxu0 0.0
  %12098 = vmatpush1.msra.mxu0 0.0
  %12099 = vmatprep.subr.mxu0 0.0
  %12100 = vmatpush1.msra.mxu0 0.0
  %12101 = vmatprep.subr.mxu0 0.0
  %12102 = vmatpush1.msra.mxu0 0.0
  %12103 = vmatprep.subr.mxu0 0.0
  %12104 = vmatpush1.msra.mxu0 0.0
  %12105 = vmatprep.subr.mxu0 0.0
  %12106 = vmatpush1.msra.mxu0 0.0
  %12107 = vmatprep.subr.mxu0 0.0
  %12108 = vmatpush1.msra.mxu0 0.0
  %12109 = vmatprep.subr.mxu0 0.0
  %12110 = vmatpush1.msra.mxu0 0.0
  %12111 = vmatprep.subr.mxu0 0.0
  %12112 = vmatpush1.msra.mxu0 0.0
  %12113 = vmatprep.subr.mxu0 0.0
  %12114 = vmatpush1.msra.mxu0 0.0
  %12115 = vmatprep.subr.mxu0 0.0
  %12116 = vmatpush1.msra.mxu0 0.0
  %12117 = vmatprep.subr.mxu0 0.0
  %12118 = vmatpush1.msra.mxu0 0.0
  %12119 = vmatprep.subr.mxu0 0.0
  %12120 = vmatpush1.msra.mxu0 0.0
  %12121 = vmatprep.subr.mxu0 0.0
  %12122 = vmatpush1.msra.mxu0 0.0
  %12123 = vmatprep.subr.mxu0 0.0
  %12124 = vmatpush1.msra.mxu0 0.0
  %12125 = vmatprep.subr.mxu0 0.0
  %12126 = vmatpush1.msra.mxu0 0.0
  %12127 = vmatprep.subr.mxu0 0.0
  %12128 = vmatpush1.msra.mxu0 0.0
  %12129 = vmatprep.subr.mxu0 0.0
  %12130 = vmatpush1.msra.mxu0 0.0
  %12131 = vmatprep.subr.mxu0 0.0
  %12132 = vmatpush1.msra.mxu0 0.0
  %12133 = vmatprep.subr.mxu0 0.0
  %12134 = vmatpush1.msra.mxu0 0.0
  %12135 = vmatprep.subr.mxu0 0.0
  %12136 = vmatpush1.msra.mxu0 0.0
  %12137 = vmatprep.subr.mxu0 0.0
  %12138 = vmatpush1.msra.mxu0 0.0
  %12139 = vmatprep.mubr.f32.mxu0 0.0
  %12140 = vmatmul.mubr.f32.gmra.mrb[0].mxu0 %v12002
  %v12141 = vpop.f32.mrb[0].mxu0
  %v12142 = vadd.f32 %v12000, %v12141
  %v12143 = vpop.f32.mrb[0].mxu0
  %v12144 = vadd.f32 %v12000, %v12143
  %12145 = vdwg.mxu0
  %v12146 = vand.u32 2147483647, %v12071
  %vm12147 = vcmp.le.f32.partialorder %v12146, 0.7853982
  %vm12148 = vcmp.lt.s32.totalorder %v12071, 0
  %v12149 = vand.u32 %v12071, 2139095040
  %v12150 = vshrl.u32 %v12149, 23
  %v12151 = vsub.s32 %v12150, 127
  %v12152 = vand.u32 2147483647, %v12071
  %v12153 = vand.u32 %v12152, 8388607
  %v12154 = vor.u32 %v12153, 8388608
  %v12155 = vsub.s32 0, %v12154
  %v12156 = vadd.s32 %v12151, 1
  %vm12157 = vcmp.gt.s32.totalorder %v12156, 0
  %v12158 = vsel %vm12157, %v12156, 0
  %v12159 = vshrl.u32 %v12158, 5
  %v12160 = vand.u32 %v12158, 31
  %v12161 = vsub.s32 32, %v12160
  %v12162 = vshrl.u32 683565275, %v12161
  %v12163 = vshll.u32 683565275, %v12160
  %v12164 = vshrl.u32 2475754826, %v12161
  %v12165 = vor.u32 %v12163, %v12164
  %v12166 = vshll.u32 2475754826, %v12160
  %v12167 = vshrl.u32 2131351028, %v12161
  %v12168 = vor.u32 %v12166, %v12167
  %v12169 = vshll.u32 2131351028, %v12160
  %v12170 = vshrl.u32 2102212464, %v12161
  %v12171 = vor.u32 %v12169, %v12170
  %v12172 = vshll.u32 2102212464, %v12160
  %v12173 = vshrl.u32 920167782, %v12161
  %v12174 = vor.u32 %v12172, %v12173
  %v12175 = vshll.u32 920167782, %v12160
  %v12176 = vshrl.u32 1326507024, %v12161
  %v12177 = vor.u32 %v12175, %v12176
  %vm12178 = vcmp.lt.s32.totalorder %v12159, 1
  %vm12179 = vcmp.lt.s32.totalorder %v12159, 2
  %vm12180 = vcmp.lt.s32.totalorder %v12159, 3
  %vm12181 = vcmp.lt.s32.totalorder %v12159, 4
  %v12182 = vsel %vm12178, %v12162, %v12165
  %v12183 = vsel %vm12181, %v12171, 2102212464
  %v12184 = vsel %vm12180, %v12168, %v12183
  %v12185 = vsel %vm12179, %v12182, %v12184
  %v12186 = vsel %vm12178, %v12165, %v12168
  %v12187 = vsel %vm12181, %v12174, 920167782
  %v12188 = vsel %vm12180, %v12171, %v12187
  %v12189 = vsel %vm12179, %v12186, %v12188
  %v12190 = vsel %vm12178, %v12168, %v12171
  %v12191 = vsel %vm12181, %v12177, 1326507024
  %v12192 = vsel %vm12180, %v12174, %v12191
  %v12193 = vsel %vm12179, %v12190, %v12192
  %v12194 = vshll.u32 %v12154, 8
  %v12195 = vmul.u32.u64.compose %v12194, %v12193
  %v12196 = vextract.low.u32 %v12195
  %v12197 = vextract.high.u32 %v12195
  %v12198 = vmul.u32.u64.compose %v12194, %v12189
  %v12199 = vextract.low.u32 %v12198
  %v12200 = vextract.high.u32 %v12198
  %v12201 = vmul.u32 %v12194, %v12185
  %v12202 = vadd.s32 %v12197, %v12199
  %vm12203 = vc.u32 %v12197, %v12199
  %v12204 = vadd.s32 %v12200, 1
  %v12205 = vsel %vm12203, %v12204, %v12200
  %v12206 = vadd.s32 %v12201, %v12205
  %v12207 = vadd.s32 %v12206, 536870912
  %v12208 = vshrl.u32 %v12207, 30
  %v12209 = vshll.u32 %v12208, 30
  %v12210 = vsub.s32 %v12206, %v12209
  %vm12211 = vcmp.lt.s32.totalorder %v12210, 0
  %v12212 = vsub.s32 0, %v12210
  %v12213 = vsel %vm12211, %v12212, %v12210
  %v12214 = vclz %v12213
  %v12215 = vsub.s32 %v12214, 2
  %vm12216 = vcmp.gt.s32.totalorder 0, %v12215
  %v12217 = vsel %vm12216, 0, %v12215
  %v12218 = vsub.s32 32, %v12217
  %v12219 = vshll.u32 %v12210, %v12217
  %v12220 = vshrl.u32 %v12202, %v12218
  %v12221 = vor.u32 %v12219, %v12220
  %v12222 = vsub.s32 4294967266, %v12217
  %v12223 = vadd.s32 %v12222, 127
  %v12224 = vshll.u32 %v12223, 23
  %v12225 = vor.u32 4788187, %v12224
  %v12226 = vand.u32 2147483647, %v12225
  %v12228 = vcvt.s32.f32 %v12221
  %v12229 = vmul.f32 %v12228, %v12226
  %v12230 = vxor.u32 %v12229, 2147483648
  %v12231 = vsel %vm12148, %v12230, %v12229
  %v12232 = vsub.s32 4, %v12208
  %v12233 = vsel %vm12148, %v12232, %v12208
  %v12234 = vsel %vm12147, %v12071, %v12231
  %v12235 = vsel %vm12147, 0, %v12233
  %v12236 = vcosq.f32.pop %v12234
  %v12237 = vsinq.f32.pop %v12234
  %vm12238 = vweird.f32 %v12071
  %v12239 = vadd.s32 %v12235, 3
  %v12240 = vand.u32 %v12239, 3
  %vm12241 = vcmp.lt.s32.totalorder %v12240, 2
  %vm12242 = vcmp.eq.s32.totalorder %v12240, 0
  %v12243 = vxor.u32 %v12237, 2147483648
  %v12244 = vsel %vm12242, %v12236, %v12243
  %vm12245 = vcmp.eq.s32.totalorder %v12240, 2
  %v12246 = vxor.u32 %v12236, 2147483648
  %v12247 = vsel %vm12245, %v12246, %v12237
  %v12248 = vsel %vm12241, %v12244, %v12247
  %v12249 = vsel %vm12238, nan, %v12248
  %v12250 = vand.u32 2147483647, %v12073
  %vm12251 = vcmp.le.f32.partialorder %v12250, 0.7853982
  %vm12252 = vcmp.lt.s32.totalorder %v12073, 0
  %v12253 = vand.u32 %v12073, 2139095040
  %v12254 = vshrl.u32 %v12253, 23
  %v12255 = vsub.s32 %v12254, 127
  %v12256 = vand.u32 2147483647, %v12073
  %v12257 = vand.u32 %v12256, 8388607
  %v12258 = vor.u32 %v12257, 8388608
  %v12259 = vsub.s32 0, %v12258
  %v12260 = vadd.s32 %v12255, 1
  %vm12261 = vcmp.gt.s32.totalorder %v12260, 0
  %v12262 = vsel %vm12261, %v12260, 0
  %v12263 = vshrl.u32 %v12262, 5
  %v12264 = vand.u32 %v12262, 31
  %v12265 = vsub.s32 32, %v12264
  %v12266 = vshrl.u32 683565275, %v12265
  %v12267 = vshll.u32 683565275, %v12264
  %v12268 = vshrl.u32 2475754826, %v12265
  %v12269 = vor.u32 %v12267, %v12268
  %v12270 = vshll.u32 2475754826, %v12264
  %v12271 = vshrl.u32 2131351028, %v12265
  %v12272 = vor.u32 %v12270, %v12271
  %v12273 = vshll.u32 2131351028, %v12264
  %v12274 = vshrl.u32 2102212464, %v12265
  %v12275 = vor.u32 %v12273, %v12274
  %v12276 = vshll.u32 2102212464, %v12264
  %v12277 = vshrl.u32 920167782, %v12265
  %v12278 = vor.u32 %v12276, %v12277
  %v12279 = vshll.u32 920167782, %v12264
  %v12280 = vshrl.u32 1326507024, %v12265
  %v12281 = vor.u32 %v12279, %v12280
  %vm12282 = vcmp.lt.s32.totalorder %v12263, 1
  %vm12283 = vcmp.lt.s32.totalorder %v12263, 2
  %vm12284 = vcmp.lt.s32.totalorder %v12263, 3
  %vm12285 = vcmp.lt.s32.totalorder %v12263, 4
  %v12286 = vsel %vm12282, %v12266, %v12269
  %v12287 = vsel %vm12285, %v12275, 2102212464
  %v12288 = vsel %vm12284, %v12272, %v12287
  %v12289 = vsel %vm12283, %v12286, %v12288
  %v12290 = vsel %vm12282, %v12269, %v12272
  %v12291 = vsel %vm12285, %v12278, 920167782
  %v12292 = vsel %vm12284, %v12275, %v12291
  %v12293 = vsel %vm12283, %v12290, %v12292
  %v12294 = vsel %vm12282, %v12272, %v12275
  %v12295 = vsel %vm12285, %v12281, 1326507024
  %v12296 = vsel %vm12284, %v12278, %v12295
  %v12297 = vsel %vm12283, %v12294, %v12296
  %v12298 = vshll.u32 %v12258, 8
  %v12299 = vmul.u32.u64.compose %v12298, %v12297
  %v12300 = vextract.low.u32 %v12299
  %v12301 = vextract.high.u32 %v12299
  %v12302 = vmul.u32.u64.compose %v12298, %v12293
  %v12303 = vextract.low.u32 %v12302
  %v12304 = vextract.high.u32 %v12302
  %v12305 = vmul.u32 %v12298, %v12289
  %v12306 = vadd.s32 %v12301, %v12303
  %vm12307 = vc.u32 %v12301, %v12303
  %v12308 = vadd.s32 %v12304, 1
  %v12309 = vsel %vm12307, %v12308, %v12304
  %v12310 = vadd.s32 %v12305, %v12309
  %v12311 = vadd.s32 %v12310, 536870912
  %v12312 = vshrl.u32 %v12311, 30
  %v12313 = vshll.u32 %v12312, 30
  %v12314 = vsub.s32 %v12310, %v12313
  %vm12315 = vcmp.lt.s32.totalorder %v12314, 0
  %v12316 = vsub.s32 0, %v12314
  %v12317 = vsel %vm12315, %v12316, %v12314
  %v12318 = vclz %v12317
  %v12319 = vsub.s32 %v12318, 2
  %vm12320 = vcmp.gt.s32.totalorder 0, %v12319
  %v12321 = vsel %vm12320, 0, %v12319
  %v12322 = vsub.s32 32, %v12321
  %v12323 = vshll.u32 %v12314, %v12321
  %v12324 = vshrl.u32 %v12306, %v12322
  %v12325 = vor.u32 %v12323, %v12324
  %v12326 = vsub.s32 4294967266, %v12321
  %v12327 = vadd.s32 %v12326, 127
  %v12328 = vshll.u32 %v12327, 23
  %v12329 = vor.u32 4788187, %v12328
  %v12330 = vand.u32 2147483647, %v12329
  %v12332 = vcvt.s32.f32 %v12325
  %v12333 = vmul.f32 %v12332, %v12330
  %v12334 = vxor.u32 %v12333, 2147483648
  %v12335 = vsel %vm12252, %v12334, %v12333
  %v12336 = vsub.s32 4, %v12312
  %v12337 = vsel %vm12252, %v12336, %v12312
  %v12338 = vsel %vm12251, %v12073, %v12335
  %v12339 = vsel %vm12251, 0, %v12337
  %v12340 = vcosq.f32.pop %v12338
  %v12341 = vsinq.f32.pop %v12338
  %vm12342 = vweird.f32 %v12073
  %v12343 = vadd.s32 %v12339, 3
  %v12344 = vand.u32 %v12343, 3
  %vm12345 = vcmp.lt.s32.totalorder %v12344, 2
  %vm12346 = vcmp.eq.s32.totalorder %v12344, 0
  %v12347 = vxor.u32 %v12341, 2147483648
  %v12348 = vsel %vm12346, %v12340, %v12347
  %vm12349 = vcmp.eq.s32.totalorder %v12344, 2
  %v12350 = vxor.u32 %v12340, 2147483648
  %v12351 = vsel %vm12349, %v12350, %v12341
  %v12352 = vsel %vm12345, %v12348, %v12351
  %v12353 = vsel %vm12342, nan, %v12352
  %v12354 = vand.u32 2147483647, %v12142
  %vm12355 = vcmp.le.f32.partialorder %v12354, 0.7853982
  %vm12356 = vcmp.lt.s32.totalorder %v12142, 0
  %v12357 = vand.u32 %v12142, 2139095040
  %v12358 = vshrl.u32 %v12357, 23
  %v12359 = vsub.s32 %v12358, 127
  %v12360 = vand.u32 2147483647, %v12142
  %v12361 = vand.u32 %v12360, 8388607
  %v12362 = vor.u32 %v12361, 8388608
  %v12363 = vsub.s32 0, %v12362
  %v12364 = vadd.s32 %v12359, 1
  %vm12365 = vcmp.gt.s32.totalorder %v12364, 0
  %v12366 = vsel %vm12365, %v12364, 0
  %v12367 = vshrl.u32 %v12366, 5
  %v12368 = vand.u32 %v12366, 31
  %v12369 = vsub.s32 32, %v12368
  %v12370 = vshrl.u32 683565275, %v12369
  %v12371 = vshll.u32 683565275, %v12368
  %v12372 = vshrl.u32 2475754826, %v12369
  %v12373 = vor.u32 %v12371, %v12372
  %v12374 = vshll.u32 2475754826, %v12368
  %v12375 = vshrl.u32 2131351028, %v12369
  %v12376 = vor.u32 %v12374, %v12375
  %v12377 = vshll.u32 2131351028, %v12368
  %v12378 = vshrl.u32 2102212464, %v12369
  %v12379 = vor.u32 %v12377, %v12378
  %v12380 = vshll.u32 2102212464, %v12368
  %v12381 = vshrl.u32 920167782, %v12369
  %v12382 = vor.u32 %v12380, %v12381
  %v12383 = vshll.u32 920167782, %v12368
  %v12384 = vshrl.u32 1326507024, %v12369
  %v12385 = vor.u32 %v12383, %v12384
  %vm12386 = vcmp.lt.s32.totalorder %v12367, 1
  %vm12387 = vcmp.lt.s32.totalorder %v12367, 2
  %vm12388 = vcmp.lt.s32.totalorder %v12367, 3
  %vm12389 = vcmp.lt.s32.totalorder %v12367, 4
  %v12390 = vsel %vm12386, %v12370, %v12373
  %v12391 = vsel %vm12389, %v12379, 2102212464
  %v12392 = vsel %vm12388, %v12376, %v12391
  %v12393 = vsel %vm12387, %v12390, %v12392
  %v12394 = vsel %vm12386, %v12373, %v12376
  %v12395 = vsel %vm12389, %v12382, 920167782
  %v12396 = vsel %vm12388, %v12379, %v12395
  %v12397 = vsel %vm12387, %v12394, %v12396
  %v12398 = vsel %vm12386, %v12376, %v12379
  %v12399 = vsel %vm12389, %v12385, 1326507024
  %v12400 = vsel %vm12388, %v12382, %v12399
  %v12401 = vsel %vm12387, %v12398, %v12400
  %v12402 = vshll.u32 %v12362, 8
  %v12403 = vmul.u32.u64.compose %v12402, %v12401
  %v12404 = vextract.low.u32 %v12403
  %v12405 = vextract.high.u32 %v12403
  %v12406 = vmul.u32.u64.compose %v12402, %v12397
  %v12407 = vextract.low.u32 %v12406
  %v12408 = vextract.high.u32 %v12406
  %v12409 = vmul.u32 %v12402, %v12393
  %v12410 = vadd.s32 %v12405, %v12407
  %vm12411 = vc.u32 %v12405, %v12407
  %v12412 = vadd.s32 %v12408, 1
  %v12413 = vsel %vm12411, %v12412, %v12408
  %v12414 = vadd.s32 %v12409, %v12413
  %v12415 = vadd.s32 %v12414, 536870912
  %v12416 = vshrl.u32 %v12415, 30
  %v12417 = vshll.u32 %v12416, 30
  %v12418 = vsub.s32 %v12414, %v12417
  %vm12419 = vcmp.lt.s32.totalorder %v12418, 0
  %v12420 = vsub.s32 0, %v12418
  %v12421 = vsel %vm12419, %v12420, %v12418
  %v12422 = vclz %v12421
  %v12423 = vsub.s32 %v12422, 2
  %vm12424 = vcmp.gt.s32.totalorder 0, %v12423
  %v12425 = vsel %vm12424, 0, %v12423
  %v12426 = vsub.s32 32, %v12425
  %v12427 = vshll.u32 %v12418, %v12425
  %v12428 = vshrl.u32 %v12410, %v12426
  %v12429 = vor.u32 %v12427, %v12428
  %v12430 = vsub.s32 4294967266, %v12425
  %v12431 = vadd.s32 %v12430, 127
  %v12432 = vshll.u32 %v12431, 23
  %v12433 = vor.u32 4788187, %v12432
  %v12434 = vand.u32 2147483647, %v12433
  %v12436 = vcvt.s32.f32 %v12429
  %v12437 = vmul.f32 %v12436, %v12434
  %v12438 = vxor.u32 %v12437, 2147483648
  %v12439 = vsel %vm12356, %v12438, %v12437
  %v12440 = vsub.s32 4, %v12416
  %v12441 = vsel %vm12356, %v12440, %v12416
  %v12442 = vsel %vm12355, %v12142, %v12439
  %v12443 = vsel %vm12355, 0, %v12441
  %v12444 = vcosq.f32.pop %v12442
  %v12445 = vsinq.f32.pop %v12442
  %vm12446 = vweird.f32 %v12142
  %v12447 = vadd.s32 %v12443, 3
  %v12448 = vand.u32 %v12447, 3
  %vm12449 = vcmp.lt.s32.totalorder %v12448, 2
  %vm12450 = vcmp.eq.s32.totalorder %v12448, 0
  %v12451 = vxor.u32 %v12445, 2147483648
  %v12452 = vsel %vm12450, %v12444, %v12451
  %vm12453 = vcmp.eq.s32.totalorder %v12448, 2
  %v12454 = vxor.u32 %v12444, 2147483648
  %v12455 = vsel %vm12453, %v12454, %v12445
  %v12456 = vsel %vm12449, %v12452, %v12455
  %v12457 = vsel %vm12446, nan, %v12456
  %v12458 = vand.u32 2147483647, %v12144
  %vm12459 = vcmp.le.f32.partialorder %v12458, 0.7853982
  %vm12460 = vcmp.lt.s32.totalorder %v12144, 0
  %v12461 = vand.u32 %v12144, 2139095040
  %v12462 = vshrl.u32 %v12461, 23
  %v12463 = vsub.s32 %v12462, 127
  %v12464 = vand.u32 2147483647, %v12144
  %v12465 = vand.u32 %v12464, 8388607
  %v12466 = vor.u32 %v12465, 8388608
  %v12467 = vsub.s32 0, %v12466
  %v12468 = vadd.s32 %v12463, 1
  %vm12469 = vcmp.gt.s32.totalorder %v12468, 0
  %v12470 = vsel %vm12469, %v12468, 0
  %v12471 = vshrl.u32 %v12470, 5
  %v12472 = vand.u32 %v12470, 31
  %v12473 = vsub.s32 32, %v12472
  %v12474 = vshrl.u32 683565275, %v12473
  %v12475 = vshll.u32 683565275, %v12472
  %v12476 = vshrl.u32 2475754826, %v12473
  %v12477 = vor.u32 %v12475, %v12476
  %v12478 = vshll.u32 2475754826, %v12472
  %v12479 = vshrl.u32 2131351028, %v12473
  %v12480 = vor.u32 %v12478, %v12479
  %v12481 = vshll.u32 2131351028, %v12472
  %v12482 = vshrl.u32 2102212464, %v12473
  %v12483 = vor.u32 %v12481, %v12482
  %v12484 = vshll.u32 2102212464, %v12472
  %v12485 = vshrl.u32 920167782, %v12473
  %v12486 = vor.u32 %v12484, %v12485
  %v12487 = vshll.u32 920167782, %v12472
  %v12488 = vshrl.u32 1326507024, %v12473
  %v12489 = vor.u32 %v12487, %v12488
  %vm12490 = vcmp.lt.s32.totalorder %v12471, 1
  %vm12491 = vcmp.lt.s32.totalorder %v12471, 2
  %vm12492 = vcmp.lt.s32.totalorder %v12471, 3
  %vm12493 = vcmp.lt.s32.totalorder %v12471, 4
  %v12494 = vsel %vm12490, %v12474, %v12477
  %v12495 = vsel %vm12493, %v12483, 2102212464
  %v12496 = vsel %vm12492, %v12480, %v12495
  %v12497 = vsel %vm12491, %v12494, %v12496
  %v12498 = vsel %vm12490, %v12477, %v12480
  %v12499 = vsel %vm12493, %v12486, 920167782
  %v12500 = vsel %vm12492, %v12483, %v12499
  %v12501 = vsel %vm12491, %v12498, %v12500
  %v12502 = vsel %vm12490, %v12480, %v12483
  %v12503 = vsel %vm12493, %v12489, 1326507024
  %v12504 = vsel %vm12492, %v12486, %v12503
  %v12505 = vsel %vm12491, %v12502, %v12504
  %v12506 = vshll.u32 %v12466, 8
  %v12507 = vmul.u32.u64.compose %v12506, %v12505
  %v12508 = vextract.low.u32 %v12507
  %v12509 = vextract.high.u32 %v12507
  %v12510 = vmul.u32.u64.compose %v12506, %v12501
  %v12511 = vextract.low.u32 %v12510
  %v12512 = vextract.high.u32 %v12510
  %v12513 = vmul.u32 %v12506, %v12497
  %v12514 = vadd.s32 %v12509, %v12511
  %vm12515 = vc.u32 %v12509, %v12511
  %v12516 = vadd.s32 %v12512, 1
  %v12517 = vsel %vm12515, %v12516, %v12512
  %v12518 = vadd.s32 %v12513, %v12517
  %v12519 = vadd.s32 %v12518, 536870912
  %v12520 = vshrl.u32 %v12519, 30
  %v12521 = vshll.u32 %v12520, 30
  %v12522 = vsub.s32 %v12518, %v12521
  %vm12523 = vcmp.lt.s32.totalorder %v12522, 0
  %v12524 = vsub.s32 0, %v12522
  %v12525 = vsel %vm12523, %v12524, %v12522
  %v12526 = vclz %v12525
  %v12527 = vsub.s32 %v12526, 2
  %vm12528 = vcmp.gt.s32.totalorder 0, %v12527
  %v12529 = vsel %vm12528, 0, %v12527
  %v12530 = vsub.s32 32, %v12529
  %v12531 = vshll.u32 %v12522, %v12529
  %v12532 = vshrl.u32 %v12514, %v12530
  %v12533 = vor.u32 %v12531, %v12532
  %v12534 = vsub.s32 4294967266, %v12529
  %v12535 = vadd.s32 %v12534, 127
  %v12536 = vshll.u32 %v12535, 23
  %v12537 = vor.u32 4788187, %v12536
  %v12538 = vand.u32 2147483647, %v12537
  %v12540 = vcvt.s32.f32 %v12533
  %v12541 = vmul.f32 %v12540, %v12538
  %v12542 = vxor.u32 %v12541, 2147483648
  %v12543 = vsel %vm12460, %v12542, %v12541
  %v12544 = vsub.s32 4, %v12520
  %v12545 = vsel %vm12460, %v12544, %v12520
  %v12546 = vsel %vm12459, %v12144, %v12543
  %v12547 = vsel %vm12459, 0, %v12545
  %v12548 = vcosq.f32.pop %v12546
  %v12549 = vsinq.f32.pop %v12546
  %vm12550 = vweird.f32 %v12144
  %v12551 = vadd.s32 %v12547, 3
  %v12552 = vand.u32 %v12551, 3
  %vm12553 = vcmp.lt.s32.totalorder %v12552, 2
  %vm12554 = vcmp.eq.s32.totalorder %v12552, 0
  %v12555 = vxor.u32 %v12549, 2147483648
  %v12556 = vsel %vm12554, %v12548, %v12555
  %vm12557 = vcmp.eq.s32.totalorder %v12552, 2
  %v12558 = vxor.u32 %v12548, 2147483648
  %v12559 = vsel %vm12557, %v12558, %v12549
  %v12560 = vsel %vm12553, %v12556, %v12559
  %v12561 = vsel %vm12550, nan, %v12560
  %v12566 = vcombine.low %v12249, %v12353
  %v12567 = vcombine.low %v12457, %v12561
  %v12569 = vunpack.c.l.s4 1966171168
  %v12570 = vunpack.c.0.s8 %v12569
  %v12571 = vlaneseq
  %v12572 = vshrl.u32 %v12571, 7
  %v12573 = vsub.s32 %v12570, %v12572
  %v12574 = vrot.slane %v12566, %v12573
  %v12576 = vunpack.c.l.s4 1966171168
  %v12577 = vunpack.c.0.s8 %v12576
  %v12578 = vlaneseq
  %v12579 = vshrl.u32 %v12578, 7
  %v12580 = vsub.s32 %v12577, %v12579
  %v12581 = vrot.slane %v12567, %v12580
  %v12582 = vcombine.low %v12574, %v12581
  %v12584 = vunpack.c.l.s4 1966171168
  %v12585 = vunpack.c.0.s8 %v12584
  %v12586 = vlaneseq
  %v12587 = vshrl.u32 %v12586, 7
  %v12588 = vsub.s32 %v12585, %v12587
  %v12589 = vrot.slane %v12582, %v12588
  %s12591 = scalar_lea.vmem %s9, 4
  %12592 = vst.msk [vmem:[%s12591] sm:$0xf] %vm6314, %v12589
  // Predicated region
  $region38: #{siren_forward.1} parent=0 // pred_check
    _
  $region39: #{siren_forward.1} parent=0 // pred_check_branch
    %12594 = sbr.rel (0) target = $region41
  $region40: #{siren_forward.1} parent=0 // pred_region
    _
  $region41: #{siren_forward.1} parent=0 // pred_fallthru
    _
  // Predicated region
  $region42: #{siren_forward.1} parent=0 // pred_check
    _
  $region43: #{siren_forward.1} parent=0 // pred_check_branch
    %12596 = sbr.rel (0) target = $region45
  $region44: #{siren_forward.1} parent=0 // pred_region
    _
  $region45: #{siren_forward.1} parent=0 // pred_fallthru
    _

</llo_original>
